<compile_context>
chip_gen: v5e
topology: v5e:2x2
jax: 0.10.0
libtpu: 0.0.40
codegen_flags: <defaults>
</compile_context>

<pallas_src>
import functools

import numpy as np
import jax
import jax.numpy as jnp
from jax.experimental import pallas as pl
from jax.experimental.pallas import tpu as pltpu

EPS = 1e-5                      # PyTorch InstanceNorm3d default eps
KPAD_SINGLE = 4096              # K <= this -> single K step (no K tiling)


def _round_up(x, m):
    return (x + m - 1) // m * m


def _vmem_capacity_bytes():
    try:
        info = pltpu.get_tpu_info()
        for name in ("vmem_capacity_bytes", "vmem_size_bytes", "vmem_bytes"):
            v = getattr(info, name, None)
            if v:
                return int(v)
    except Exception:
        pass
    return 64 * 1024 * 1024      # conservative (64-MiB-VMEM) fallback


_VMEM_CAP = _vmem_capacity_bytes()
# 64 MiB request on 128-MiB-VMEM parts, 32 MiB on 64-MiB-VMEM parts.
MM_VMEM_LIMIT = min(64 * 1024 * 1024, _VMEM_CAP // 2)
MM_TILE_BUDGET = int(MM_VMEM_LIMIT * 0.7)


def _apply_act(y, act):
    if act == "relu":
        return jnp.maximum(y, 0.0)
    if act == "sigmoid":
        return jax.nn.sigmoid(y)
    return y


def _pick_tn(Np):
    if Np <= 512:
        return Np
    if Np % 512 == 0:
        return 512
    if Np % 256 == 0:
        return 256
    return 128


def _pick_tk(Kp):
    return Kp if Kp <= KPAD_SINGLE else 2048


def _mm_footprint(tm, tk, tn):
    # double-buffered bf16 A/B tiles + f32 acc scratch + double-buffered f32 out
    return 2 * tm * tk * 2 + 2 * tk * tn * 2 + tm * tn * 4 + 2 * tm * tn * 4


# --------------------------------------------------------------------------
# Pallas matmul kernel: fused bias + activation (+ optional full InstanceNorm)
# epilogue on the MXU hot path.
# --------------------------------------------------------------------------
def _mm_kernel(a_ref, b_ref, bias_ref, o_ref, acc_ref, *, act, norm_s):
    @pl.when(pl.program_id(2) == 0)
    def _():
        acc_ref[...] = jnp.zeros_like(acc_ref)

    acc_ref[...] += jnp.dot(a_ref[...], b_ref[...],
                            preferred_element_type=jnp.float32)

    @pl.when(pl.program_id(2) == pl.num_programs(2) - 1)
    def _():
        y = acc_ref[...] + bias_ref[...]
        if norm_s is not None:
            # InstanceNorm3d(affine=False) over the spatial rows of this
            # single-sample tile, fused into the epilogue.  One-pass
            # statistics; variance clamped at 0 before +eps.
            inv_s = 1.0 / norm_s
            if norm_s == y.shape[0]:
                mean = jnp.sum(y, axis=0, keepdims=True) * inv_s
                sq = jnp.sum(y * y, axis=0, keepdims=True) * inv_s
            else:
                mask = (jax.lax.broadcasted_iota(jnp.int32, y.shape, 0)
                        < norm_s).astype(jnp.float32)
                ym = y * mask
                mean = jnp.sum(ym, axis=0, keepdims=True) * inv_s
                sq = jnp.sum(ym * ym, axis=0, keepdims=True) * inv_s
            var = jnp.maximum(sq - mean * mean, 0.0)
            y = (y - mean) * jax.lax.rsqrt(var + EPS)
        o_ref[...] = _apply_act(y, act)


def matmul_bias_act(a, wm, bp, act="none", norm_s=None):
    """(M, K) @ pre-packed bf16 weight (Kp, Np) + bias -> f32 (Mp, Np).

    `wm` is pre-reshaped / zero-padded / bf16-cast at build time; `bp` is the
    bias pre-padded to (1, Np).  Bias add + activation (and, when `norm_s` is
    given, the full per-sample InstanceNorm over the `norm_s` valid rows) run
    in the epilogue of the last K grid step.  Caller slices the result.
    """
    M, K = a.shape
    Kp, Np = wm.shape

    tk = _pick_tk(Kp)
    tn = _pick_tn(Np)

    if norm_s is not None:
        assert M == norm_s, "fused-norm matmul requires one sample per call"
        tm = _round_up(norm_s, 16)
    elif M >= 2048 and _mm_footprint(1024, tk, tn) <= MM_TILE_BUDGET:
        tm = 1024
    elif M >= 512:
        tm = 512
    else:
        tm = _round_up(M, 16)
    if norm_s is None:
        while tm > 256 and _mm_footprint(tm, tk, tn) > MM_TILE_BUDGET:
            tm //= 2
    Mp = _round_up(M, tm)

    if a.dtype != jnp.bfloat16:
        a = a.astype(jnp.bfloat16)
    if (Mp, Kp) != (M, K):
        a = jnp.pad(a, ((0, Mp - M), (0, Kp - K)))

    cost = pl.CostEstimate(
        flops=2 * Mp * Np * Kp,
        transcendentals=Mp * Np if act == "sigmoid" else 0,
        bytes_accessed=Mp * Kp * 2 + Kp * Np * 2 + Np * 4 + Mp * Np * 4)

    return pl.pallas_call(
        functools.partial(_mm_kernel, act=act, norm_s=norm_s),
        out_shape=jax.ShapeDtypeStruct((Mp, Np), jnp.float32),
        grid=(Mp // tm, Np // tn, Kp // tk),
        in_specs=[pl.BlockSpec((tm, tk), lambda i, j, k: (i, k)),
                  pl.BlockSpec((tk, tn), lambda i, j, k: (k, j)),
                  pl.BlockSpec((1, tn), lambda i, j, k: (0, j))],
        out_specs=pl.BlockSpec((tm, tn), lambda i, j, k: (i, j)),
        scratch_shapes=[pltpu.VMEM((tm, tn), jnp.float32)],
        compiler_params=pltpu.CompilerParams(
            dimension_semantics=("parallel", "parallel", "arbitrary"),
            vmem_limit_bytes=MM_VMEM_LIMIT),
        cost_estimate=cost,
    )(a, wm, bp)


# --------------------------------------------------------------------------
# Fused InstanceNorm3d + residual + activation Pallas kernel (one-pass stats)
# Used for the residual-carrying convs (Bottleneck conv3 / BasicBlock conv2)
# and as a generic fallback.
# --------------------------------------------------------------------------
def _norm_kernel(y_ref, o_ref, *, act):
    y = y_ref[...]                                    # (1, S, tc) float32
    inv_s = 1.0 / y.shape[1]
    mean = jnp.sum(y, axis=1, keepdims=True) * inv_s
    sq = jnp.sum(y * y, axis=1, keepdims=True) * inv_s
    var = jnp.maximum(sq - mean * mean, 0.0)
    o_ref[...] = _apply_act((y - mean) * jax.lax.rsqrt(var + EPS), act)


def _norm_res_kernel(y_ref, r_ref, o_ref, *, act):
    y = y_ref[...]
    inv_s = 1.0 / y.shape[1]
    mean = jnp.sum(y, axis=1, keepdims=True) * inv_s
    sq = jnp.sum(y * y, axis=1, keepdims=True) * inv_s
    var = jnp.maximum(sq - mean * mean, 0.0)
    o_ref[...] = _apply_act(
        (y - mean) * jax.lax.rsqrt(var + EPS) + r_ref[...], act)


def _instance_norm_act(y, residual, act):
    # y: (N, S, C) f32.  InstanceNorm per (n, c) over S, then optional residual
    # add (post-norm, as in Bottleneck/BasicBlock), then activation — fused.
    N, S, C = y.shape
    tc = 128 if C % 128 == 0 else C
    blk = pl.BlockSpec((1, S, tc), lambda n, c: (n, 0, c))
    cp = pltpu.CompilerParams(dimension_semantics=("parallel", "parallel"))
    if residual is None:
        return pl.pallas_call(
            functools.partial(_norm_kernel, act=act),
            out_shape=jax.ShapeDtypeStruct((N, S, C), jnp.float32),
            grid=(N, C // tc), in_specs=[blk], out_specs=blk,
            compiler_params=cp)(y)
    return pl.pallas_call(
        functools.partial(_norm_res_kernel, act=act),
        out_shape=jax.ShapeDtypeStruct((N, S, C), jnp.float32),
        grid=(N, C // tc), in_specs=[blk, blk], out_specs=blk,
        compiler_params=cp)(y, residual)


# --------------------------------------------------------------------------
# Elementwise add + activation (lane-dense view, >=2 parallel blocks when
# possible so dual-TensorCore parts keep both cores busy)
# --------------------------------------------------------------------------
def _add_act_kernel(a_ref, b_ref, o_ref, *, act):
    o_ref[...] = _apply_act(a_ref[...] + b_ref[...], act)


@functools.partial(jax.jit, static_argnames=("act",))
def _add_act_jit(a, b, *, act):
    N = a.shape[0]
    per_n = int(np.prod(a.shape[1:]))
    if per_n % 128 == 0:                # lane-dense: full 128-wide lanes
        rows, lanes = per_n // 128, 128
    else:
        rows, lanes = int(np.prod(a.shape[1:-1])), int(a.shape[-1])
    nb = 2 if (rows >= 16 and rows % 16 == 0) else 1
    rb = rows // nb
    shp = (N, rows, lanes)
    blk = pl.BlockSpec((1, rb, lanes), lambda n, r: (n, r, 0))
    y = pl.pallas_call(
        functools.partial(_add_act_kernel, act=act),
        out_shape=jax.ShapeDtypeStruct(shp, jnp.float32),
        grid=(N, nb), in_specs=[blk, blk], out_specs=blk,
        compiler_params=pltpu.CompilerParams(
            dimension_semantics=("parallel", "parallel")),
    )(a.reshape(shp), b.reshape(shp))
    return y.reshape(a.shape)


def add_act(a, b, act="none"):
    return _add_act_jit(a, b, act=act)


# --------------------------------------------------------------------------
# Conv3d = im2col (bf16 glue) + Pallas matmul (bias / act / norm fused)
# --------------------------------------------------------------------------
# TODO(synk): im2col gathering remains plain-JAX glue (now in bf16); a direct
# haloed-tile Pallas conv would remove the 27x activation materialization.
def _im2col(x, k, stride, padding):
    N, D, H, W, Cin = x.shape
    if padding:
        x = jnp.pad(x, ((0, 0), (padding, padding), (padding, padding),
                        (padding, padding), (0, 0)))
    Dp, Hp, Wp = x.shape[1], x.shape[2], x.shape[3]
    Do = (Dp - k) // stride + 1
    Ho = (Hp - k) // stride + 1
    Wo = (Wp - k) // stride + 1
    cols = []
    for kd in range(k):
        for kh in range(k):
            for kw in range(k):
                cols.append(x[:, kd:kd + (Do - 1) * stride + 1:stride,
                              kh:kh + (Ho - 1) * stride + 1:stride,
                              kw:kw + (Wo - 1) * stride + 1:stride, :])
    col = cols[0] if len(cols) == 1 else jnp.concatenate(cols, axis=-1)
    return col.reshape(N * Do * Ho * Wo, k * k * k * Cin), (Do, Ho, Wo)


def _conv_core(x, wm, bp, residual, k, cout, stride, padding, norm, act):
    N = x.shape[0]
    # bf16 before the im2col expansion halves the glue pass' HBM traffic.
    a, (Do, Ho, Wo) = _im2col(x.astype(jnp.bfloat16), k, stride, padding)
    M = a.shape[0]
    S = Do * Ho * Wo
    Kp, Np = wm.shape

    # Fuse InstanceNorm + act into the matmul epilogue when the whole sample's
    # spatial extent fits a single resident M tile and there is no residual.
    fuse = (norm and residual is None and N == 1 and S <= 4096
            and _mm_footprint(_round_up(S, 16), _pick_tk(Kp), _pick_tn(Np))
            <= MM_TILE_BUDGET)

    if fuse:
        y = matmul_bias_act(a, wm, bp, act=act, norm_s=S)
        y = y[:M, :cout].reshape(N, S, cout)
    else:
        epi_act = act if (not norm and residual is None) else "none"
        y = matmul_bias_act(a, wm, bp, act=epi_act)
        y = y[:M, :cout].reshape(N, S, cout)
        if norm:
            res = None if residual is None else residual.reshape(N, S, cout)
            y = _instance_norm_act(y, res, act)
        elif residual is not None:      # not hit in this network
            y = _apply_act(y + residual.reshape(N, S, cout), act)
    return y.reshape(N, Do, Ho, Wo, cout)


@functools.partial(jax.jit,
                   static_argnames=("k", "cout", "stride", "padding",
                                    "norm", "act"))
def _conv3d_nores(x, wm, bp, *, k, cout, stride, padding, norm, act):
    return _conv_core(x, wm, bp, None, k, cout, stride, padding, norm, act)


@functools.partial(jax.jit,
                   static_argnames=("k", "cout", "stride", "padding",
                                    "norm", "act"))
def _conv3d_res(x, wm, bp, residual, *, k, cout, stride, padding, norm, act):
    return _conv_core(x, wm, bp, residual, k, cout, stride, padding, norm, act)


def conv3d(x, p, *, stride=1, padding=0, norm=False, act="none", residual=None):
    if residual is None:
        return _conv3d_nores(x, p["wm"], p["bp"], k=p["k"], cout=p["cout"],
                             stride=stride, padding=padding, norm=norm, act=act)
    return _conv3d_res(x, p["wm"], p["bp"], residual, k=p["k"], cout=p["cout"],
                       stride=stride, padding=padding, norm=norm, act=act)


# --------------------------------------------------------------------------
# ConvTranspose3d (kernel=2, stride=2), bias fused into the matmul epilogue
# --------------------------------------------------------------------------
@functools.partial(jax.jit, static_argnames=("cout",))
def _conv_t_jit(x, wm, bp, *, cout):
    N, D, H, W, Cin = x.shape
    M = N * D * H * W
    y = matmul_bias_act(x.astype(jnp.bfloat16).reshape(M, Cin), wm, bp,
                        act="none")
    y = y[:M, :8 * cout].reshape(N, D, H, W, 2, 2, 2, cout)
    # TODO(synk): the 2x2x2 interleave is a strided scatter whose rectangular
    # blocks need a size-1 slice of a size-2 next-to-lane axis, which the
    # (8,128) BlockSpec rule rejects; it stays as one XLA transpose pass.
    y = y.transpose(0, 1, 4, 2, 5, 3, 6, 7).reshape(N, 2 * D, 2 * H, 2 * W, cout)
    return y


def conv_transpose3d(x, p):
    return _conv_t_jit(x, p["wm"], p["bp"], cout=p["cout"])


# --------------------------------------------------------------------------
# Trilinear upsample, align_corners=True — single Pallas VPU kernel,
# separable per-axis lerp with statically unrolled taps (no matmuls).
# --------------------------------------------------------------------------
def _lerp_coeffs(n_in, n_out):
    if n_in == 1:
        return [0] * n_out, [0] * n_out, [0.0] * n_out
    ratio = (n_in - 1) / (n_out - 1)
    lo, hi, w = [], [], []
    for o in range(n_out):
        src = o * ratio
        l = min(int(np.floor(src)), n_in - 1)
        h = min(l + 1, n_in - 1)
        lo.append(l)
        hi.append(h)
        w.append(float(src - l))
    return lo, hi, w


def _upsample_kernel(x_ref, o_ref, s1_ref, s2_ref, *, pd, ph, pw):
    # x_ref: (1, D, H, W, C) ; o_ref: (1, Do, Ho, Wo, C)
    for o, (lo, hi, wt) in enumerate(zip(*pd)):          # depth axis
        if wt == 0.0:
            s1_ref[o] = x_ref[0, lo]
        else:
            s1_ref[o] = (1.0 - wt) * x_ref[0, lo] + wt * x_ref[0, hi]
    for o, (lo, hi, wt) in enumerate(zip(*ph)):          # height axis
        if wt == 0.0:
            s2_ref[:, o] = s1_ref[:, lo]
        else:
            s2_ref[:, o] = (1.0 - wt) * s1_ref[:, lo] + wt * s1_ref[:, hi]
    for o, (lo, hi, wt) in enumerate(zip(*pw)):          # width axis
        if wt == 0.0:
            o_ref[0, :, :, o] = s2_ref[:, :, lo]
        else:
            o_ref[0, :, :, o] = (1.0 - wt) * s2_ref[:, :, lo] \
                + wt * s2_ref[:, :, hi]


@functools.partial(jax.jit, static_argnames=("scale",))
def upsample_trilinear(x, *, scale):
    N, D, H, W, C = x.shape
    Do, Ho, Wo = D * scale, H * scale, W * scale
    kernel = functools.partial(
        _upsample_kernel, pd=_lerp_coeffs(D, Do), ph=_lerp_coeffs(H, Ho),
        pw=_lerp_coeffs(W, Wo))
    # TODO(synk): with C=48/96/192 the stores are lane-masked; a (W*C)-flattened
    # lane layout would be denser but the fuse-layer volumes here are tiny.
    return pl.pallas_call(
        kernel,
        out_shape=jax.ShapeDtypeStruct((N, Do, Ho, Wo, C), jnp.float32),
        grid=(N,),
        in_specs=[pl.BlockSpec((1, D, H, W, C), lambda n: (n, 0, 0, 0, 0))],
        out_specs=pl.BlockSpec((1, Do, Ho, Wo, C), lambda n: (n, 0, 0, 0, 0)),
        scratch_shapes=[pltpu.VMEM((Do, H, W, C), jnp.float32),
                        pltpu.VMEM((Do, Ho, W, C), jnp.float32)],
        compiler_params=pltpu.CompilerParams(
            dimension_semantics=("parallel",),
            vmem_limit_bytes=MM_VMEM_LIMIT),
    )(x)


# --------------------------------------------------------------------------
# FeatureRecalibration: single Pallas kernel (pool + fc + relu + fc + sigmoid
# + channel scale)
# --------------------------------------------------------------------------
def _fr_kernel(x_ref, w1_ref, b1_ref, w2_ref, b2_ref, o_ref):
    x = x_ref[...]                                  # (1, S, C)
    m = jnp.mean(x, axis=1)                         # (1, C) global avg pool
    m8 = jnp.broadcast_to(m, (8, m.shape[1]))       # MXU-friendly row count
    h = jnp.maximum(
        jnp.dot(m8.astype(jnp.bfloat16), w1_ref[...].astype(jnp.bfloat16),
                preferred_element_type=jnp.float32) + b1_ref[...], 0.0)
    s = jax.nn.sigmoid(
        jnp.dot(h.astype(jnp.bfloat16), w2_ref[...].astype(jnp.bfloat16),
                preferred_element_type=jnp.float32) + b2_ref[...])
    o_ref[...] = x * s[0:1]


@jax.jit
def feature_recalibration(x, w1, b1, w2, b2):
    N, D, H, W, C = x.shape
    S = D * H * W
    xr = x.reshape(N, S, C)
    out = pl.pallas_call(
        _fr_kernel,
        out_shape=jax.ShapeDtypeStruct((N, S, C), jnp.float32),
        grid=(N,),
        in_specs=[pl.BlockSpec((1, S, C), lambda n: (n, 0, 0)),
                  pl.BlockSpec(w1.shape, lambda n: (0, 0)),
                  pl.BlockSpec(b1.shape, lambda n: (0, 0)),
                  pl.BlockSpec(w2.shape, lambda n: (0, 0)),
                  pl.BlockSpec(b2.shape, lambda n: (0, 0))],
        out_specs=pl.BlockSpec((1, S, C), lambda n: (n, 0, 0)),
        compiler_params=pltpu.CompilerParams(
            dimension_semantics=("parallel",)),
    )(xr, w1, b1, w2, b2)
    return out.reshape(x.shape)


# --------------------------------------------------------------------------
# Parameter construction (deterministic, synthetic) — weights pre-packed:
# reshaped to (K, Cout), zero-padded to MXU-friendly (Kp, Np), cast to bf16.
# --------------------------------------------------------------------------
class ParamGen:
    def __init__(self, seed):
        self._key = jax.random.PRNGKey(seed)

    def _next(self):
        self._key, sub = jax.random.split(self._key)
        return sub

    def conv(self, cin, cout, k):
        fan_in = cin * k ** 3
        w = jax.random.normal(self._next(), (k, k, k, cin, cout),
                              jnp.float32) / np.sqrt(fan_in)
        b = 0.01 * jax.random.normal(self._next(), (cout,), jnp.float32)
        K = k ** 3 * cin
        Kp = _round_up(K, 16) if K <= KPAD_SINGLE else _round_up(K, 2048)
        Np = _round_up(cout, 128)
        wm = jnp.zeros((Kp, Np), jnp.bfloat16).at[:K, :cout].set(
            w.reshape(K, cout).astype(jnp.bfloat16))
        bp = jnp.zeros((1, Np), jnp.float32).at[0, :cout].set(b)
        return {"wm": wm, "bp": bp, "cout": cout, "k": k}

    def conv_t(self, cin, cout):
        fan_in = cin * 8
        w = jax.random.normal(self._next(), (cin, 2, 2, 2, cout),
                              jnp.float32) / np.sqrt(fan_in)
        b = 0.01 * jax.random.normal(self._next(), (cout,), jnp.float32)
        K, N8 = cin, 8 * cout
        Kp = _round_up(K, 16)
        Np = _round_up(N8, 128)
        wm = jnp.zeros((Kp, Np), jnp.bfloat16).at[:K, :N8].set(
            w.reshape(K, N8).astype(jnp.bfloat16))
        bp = jnp.zeros((1, Np), jnp.float32).at[0, :N8].set(jnp.tile(b, 8))
        return {"wm": wm, "bp": bp, "cout": cout}

    def fr(self, channels):
        c2 = channels // 2
        w1 = jax.random.normal(self._next(), (channels, c2),
                               jnp.float32) / np.sqrt(channels)
        b1 = 0.01 * jax.random.normal(self._next(), (1, c2), jnp.float32)
        w2 = jax.random.normal(self._next(), (c2, channels),
                               jnp.float32) / np.sqrt(c2)
        b2 = 0.01 * jax.random.normal(self._next(), (1, channels), jnp.float32)
        return (w1, b1, w2, b2)


def make_bottleneck(pg, inplanes, planes, downsample=False):
    p = {"conv1": pg.conv(inplanes, planes, 1),
         "conv2": pg.conv(planes, planes, 3),
         "conv3": pg.conv(planes, planes * 4, 1)}
    if downsample:
        p["down"] = pg.conv(inplanes, planes * 4, 1)
    return p


def make_basic_block(pg, w):
    return {"conv1": pg.conv(w, w, 3), "conv2": pg.conv(w, w, 3)}


def make_stage_module(pg, stage, output_branches, c):
    branches = [[make_basic_block(pg, c * 2 ** i) for _ in range(4)]
                for i in range(stage)]
    fuse = []
    for i in range(output_branches):
        row = []
        for j in range(stage):
            if i == j:
                row.append(("id",))
            elif i < j:
                row.append(("up", pg.conv(c * 2 ** j, c * 2 ** i, 1),
                            2 ** (j - i)))
            else:
                ops = [pg.conv(c * 2 ** j, c * 2 ** j, 3)
                       for _ in range(i - j - 1)]
                ops.append(pg.conv(c * 2 ** j, c * 2 ** i, 3))
                row.append(("down", ops))
        fuse.append(row)
    return {"branches": branches, "fuse": fuse, "stage": stage,
            "nout": output_branches}


def build_params(c=48, nof_joints=1, seed=42):
    pg = ParamGen(seed)
    P = {}
    P["hconv"] = [pg.conv(a, b, 3) for a, b in
                  [(1, 3), (3, 6), (6, 12), (12, 24), (24, 48)]]
    P["conv1"] = pg.conv(1, 64, 3)
    P["conv2"] = pg.conv(64, 64, 3)
    P["layer1"] = [make_bottleneck(pg, 64, 64, downsample=True)] + \
                  [make_bottleneck(pg, 256, 64) for _ in range(3)]
    P["trans1"] = [pg.conv(256, c, 3), pg.conv(256, c * 2, 3)]
    P["stage2"] = [make_stage_module(pg, 2, 2, c)]
    P["trans2"] = pg.conv(c * 2, c * 4, 3)
    P["stage3"] = [make_stage_module(pg, 3, 3, c) for _ in range(4)]
    P["trans3"] = pg.conv(c * 4, c * 8, 3)
    P["stage4"] = [make_stage_module(pg, 4, 4, c) for _ in range(3)]
    P["up0"] = pg.conv_t(c, c)
    P["up3"] = pg.conv_t(c * 8, c * 4)
    P["up2"] = pg.conv_t(c * 4, c * 2)
    P["up1"] = pg.conv_t(c * 2, c)
    P["f_conv3"] = pg.conv(c * 4, c * 4, 3)
    P["f_conv2"] = pg.conv(c * 2, c * 2, 3)
    P["f_conv1"] = pg.conv(c * 2, c, 3)
    P["fr3"] = pg.fr(c * 8)
    P["fr2"] = pg.fr(c * 4)
    P["fr1"] = pg.fr(c * 2)
    P["final"] = pg.conv(c * 2, nof_joints, 1)
    return P


# --------------------------------------------------------------------------
# Module application
# --------------------------------------------------------------------------
def apply_bottleneck(p, x):
    out = conv3d(x, p["conv1"], stride=1, padding=0, norm=True, act="relu")
    out = conv3d(out, p["conv2"], stride=1, padding=1, norm=True, act="relu")
    residual = x
    if "down" in p:
        residual = conv3d(x, p["down"], stride=1, padding=0, norm=True,
                          act="none")
    out = conv3d(out, p["conv3"], stride=1, padding=0, norm=True, act="relu",
                 residual=residual)
    return out


def apply_basic_block(p, x):
    out = conv3d(x, p["conv1"], stride=1, padding=1, norm=True, act="relu")
    out = conv3d(out, p["conv2"], stride=1, padding=1, norm=True, act="relu",
                 residual=x)
    return out


def apply_stage_module(p, xs):
    xs = list(xs)
    for i, blocks in enumerate(p["branches"]):
        b = xs[i]
        for blk in blocks:
            b = apply_basic_block(blk, b)
        xs[i] = b
    fused = []
    for i in range(p["nout"]):
        acc = None
        for j in range(p["stage"]):
            f = p["fuse"][i][j]
            if f[0] == "id":
                y = xs[j]
            elif f[0] == "up":
                y = conv3d(xs[j], f[1], stride=1, padding=0, norm=True,
                           act="none")
                y = upsample_trilinear(y, scale=f[2])
            else:
                y = xs[j]
                for idx, op in enumerate(f[1]):
                    last = idx == len(f[1]) - 1
                    y = conv3d(y, op, stride=2, padding=1, norm=True,
                               act="none" if last else "relu")
            if acc is None:
                acc = y
            else:
                acc = add_act(acc, y,
                              act="relu" if j == p["stage"] - 1 else "none")
            if p["stage"] == 1:  # never hit (stage >= 2); keep parity anyway
                acc = _apply_act(acc, "relu")
        fused.append(acc)
    return fused


def hrnet3d_forward(P, x_ncdhw):
    x = jnp.transpose(x_ncdhw, (0, 2, 3, 4, 1))  # NCDHW -> NDHWC
    h = x
    for p in P["hconv"]:
        h = conv3d(h, p, stride=1, padding=1, norm=True, act="relu")
    x_full_res = h

    y = conv3d(x, P["conv1"], stride=2, padding=1, norm=True, act="relu")
    y = conv3d(y, P["conv2"], stride=1, padding=1, norm=True, act="relu")
    for blk in P["layer1"]:
        y = apply_bottleneck(blk, y)

    xs = [conv3d(y, P["trans1"][0], stride=1, padding=1, norm=True, act="relu"),
          conv3d(y, P["trans1"][1], stride=2, padding=1, norm=True, act="relu")]
    for sm in P["stage2"]:
        xs = apply_stage_module(sm, xs)
    xs = [xs[0], xs[1],
          conv3d(xs[-1], P["trans2"], stride=2, padding=1, norm=True,
                 act="relu")]
    for sm in P["stage3"]:
        xs = apply_stage_module(sm, xs)
    xs = [xs[0], xs[1], xs[2],
          conv3d(xs[-1], P["trans3"], stride=2, padding=1, norm=True,
                 act="relu")]
    for sm in P["stage4"]:
        xs = apply_stage_module(sm, xs)

    fr3 = feature_recalibration(xs[3], *P["fr3"])
    fr2 = feature_recalibration(xs[2], *P["fr2"])
    fr1 = feature_recalibration(xs[1], *P["fr1"])

    t = add_act(conv_transpose3d(fr3, P["up3"]), fr2, act="none")
    t = conv3d(t, P["f_conv3"], stride=1, padding=1, norm=True, act="relu")
    t = add_act(conv_transpose3d(t, P["up2"]), fr1, act="none")
    t = conv3d(t, P["f_conv2"], stride=1, padding=1, norm=True, act="relu")
    t = jnp.concatenate([conv_transpose3d(t, P["up1"]), xs[0]], axis=-1)
    t = conv3d(t, P["f_conv1"], stride=1, padding=1, norm=True, act="relu")
    t = jnp.concatenate([conv_transpose3d(t, P["up0"]), x_full_res], axis=-1)
    out = conv3d(t, P["final"], stride=1, padding=0, norm=False, act="sigmoid")
    return jnp.transpose(out, (0, 4, 1, 2, 3))  # back to NCDHW


if __name__ == "__main__":
    # Input must be spatially divisible by 16 (4 levels of stride-2 downsampling).
    N, C_in, D, H, W = 1, 1, 16, 16, 16
    x = jax.random.normal(jax.random.PRNGKey(0), (N, C_in, D, H, W),
                          jnp.float32)
    params = build_params(c=48, nof_joints=1, seed=42)
    out = hrnet3d_forward(params, x)
    out = jax.block_until_ready(out)
    assert out.shape == (N, 1, D, H, W), out.shape
    assert bool(jnp.all(jnp.isfinite(out)))
    assert bool(jnp.all((out >= 0.0) & (out <= 1.0)))  # sigmoid output
    print("KERNEL_OK")
</pallas_src>

<mosaic_0001>
module attributes {stable_mosaic.version = 11 : i64} {
  func.func @_mm_kernel(%arg0: i32, %arg1: i32, %arg2: i32, %arg3: memref<4096x32xbf16, #tpu.memory_space<vmem>>, %arg4: memref<32x128xbf16, #tpu.memory_space<vmem>>, %arg5: memref<1x128xf32, #tpu.memory_space<vmem>>, %arg6: memref<4096x128xf32, #tpu.memory_space<vmem>>, %arg7: memref<4096x128xf32, #tpu.memory_space<vmem>>) attributes {dimension_semantics = [#tpu.dimension_semantics<parallel>, #tpu.dimension_semantics<parallel>, #tpu.dimension_semantics<arbitrary>], iteration_bounds = array<i64: 1, 1, 1>, scalar_prefetch = 0 : i64, scratch_operands = 1 : i64, tpu.core_type = #tpu.core_type<tc>, window_params = [{transform_indices = @transform_0, window_bounds = array<i64: 4096, 32>}, {transform_indices = @transform_1, window_bounds = array<i64: 32, 128>}, {transform_indices = @transform_2, window_bounds = array<i64: 1, 128>}, {transform_indices = @transform_3, window_bounds = array<i64: 4096, 128>}]} {
    %c0_i32 = arith.constant 0 : i32
    %0 = arith.cmpi eq, %arg2, %c0_i32 : i32
    %1 = arith.extui %0 : i1 to i32
    %c0_i32_0 = arith.constant 0 : i32
    %2 = arith.cmpi ne, %1, %c0_i32_0 : i32
    scf.if %2 {
      %cst_10 = arith.constant 0.000000e+00 : f32
      %12 = vector.broadcast %cst_10 : f32 to vector<4096x128xf32>
      %c0_11 = arith.constant 0 : index
      %c0_12 = arith.constant 0 : index
      %13 = vector.load %arg7[%c0_11, %c0_12] : memref<4096x128xf32, #tpu.memory_space<vmem>>, vector<4096x128xf32>
      tpu.vector_store %arg7[%c0_11, %c0_12], %12 {strides = array<i32>} : memref<4096x128xf32, #tpu.memory_space<vmem>>, vector<4096x128xf32>,
    } else {
    }
    %c0 = arith.constant 0 : index
    %c0_1 = arith.constant 0 : index
    %3 = vector.load %arg7[%c0, %c0_1] : memref<4096x128xf32, #tpu.memory_space<vmem>>, vector<4096x128xf32>
    %c0_2 = arith.constant 0 : index
    %c0_3 = arith.constant 0 : index
    %4 = vector.load %arg3[%c0_2, %c0_3] : memref<4096x32xbf16, #tpu.memory_space<vmem>>, vector<4096x32xbf16>
    %c0_4 = arith.constant 0 : index
    %c0_5 = arith.constant 0 : index
    %5 = vector.load %arg4[%c0_4, %c0_5] : memref<32x128xbf16, #tpu.memory_space<vmem>>, vector<32x128xbf16>
    %cst = arith.constant dense<0.000000e+00> : vector<4096x128xf32>
    %6 = tpu.matmul %4, %5, %cst {dimension_numbers = #tpu.dot_dimension_numbers<[1], [0], [0], [1], [0, 0, 1, 1], [], []>} : vector<4096x32xbf16>, vector<32x128xbf16>, vector<4096x128xf32> -> vector<4096x128xf32>
    %7 = arith.addf %3, %6 : vector<4096x128xf32>
    %c0_6 = arith.constant 0 : index
    %c0_7 = arith.constant 0 : index
    %8 = vector.load %arg7[%c0_6, %c0_7] : memref<4096x128xf32, #tpu.memory_space<vmem>>, vector<4096x128xf32>
    tpu.vector_store %arg7[%c0_6, %c0_7], %7 {strides = array<i32>} : memref<4096x128xf32, #tpu.memory_space<vmem>>, vector<4096x128xf32>,
    %c0_i32_8 = arith.constant 0 : i32
    %9 = arith.cmpi eq, %arg2, %c0_i32_8 : i32
    %10 = arith.extui %9 : i1 to i32
    %c0_i32_9 = arith.constant 0 : i32
    %11 = arith.cmpi ne, %10, %c0_i32_9 : i32
    scf.if %11 {
      %c0_10 = arith.constant 0 : index
      %c0_11 = arith.constant 0 : index
      %12 = vector.load %arg7[%c0_10, %c0_11] : memref<4096x128xf32, #tpu.memory_space<vmem>>, vector<4096x128xf32>
      %c0_12 = arith.constant 0 : index
      %c0_13 = arith.constant 0 : index
      %13 = vector.load %arg5[%c0_12, %c0_13] : memref<1x128xf32, #tpu.memory_space<vmem>>, vector<1x128xf32>
      %14 = vector.broadcast %13 : vector<1x128xf32> to vector<4096x128xf32>
      %15 = arith.addf %12, %14 : vector<4096x128xf32>
      %cst_14 = arith.constant dense<0.000000e+00> : vector<128xf32>
      %16 = vector.multi_reduction <add>, %15, %cst_14 [0] : vector<4096x128xf32> to vector<128xf32>
      %17 = vector.shape_cast %16 : vector<128xf32> to vector<1x128xf32>
      %cst_15 = arith.constant 2.44140625E-4 : f32
      %18 = vector.broadcast %cst_15 : f32 to vector<1x128xf32>
      %19 = arith.mulf %17, %18 : vector<1x128xf32>
      %20 = arith.mulf %15, %15 : vector<4096x128xf32>
      %cst_16 = arith.constant dense<0.000000e+00> : vector<128xf32>
      %21 = vector.multi_reduction <add>, %20, %cst_16 [0] : vector<4096x128xf32> to vector<128xf32>
      %22 = vector.shape_cast %21 : vector<128xf32> to vector<1x128xf32>
      %cst_17 = arith.constant 2.44140625E-4 : f32
      %23 = vector.broadcast %cst_17 : f32 to vector<1x128xf32>
      %24 = arith.mulf %22, %23 : vector<1x128xf32>
      %25 = arith.mulf %19, %19 : vector<1x128xf32>
      %26 = arith.subf %24, %25 : vector<1x128xf32>
      %cst_18 = arith.constant 0.000000e+00 : f32
      %27 = vector.broadcast %cst_18 : f32 to vector<1x128xf32>
      %28 = arith.maximumf %26, %27 : vector<1x128xf32>
      %29 = vector.broadcast %19 : vector<1x128xf32> to vector<4096x128xf32>
      %30 = arith.subf %15, %29 : vector<4096x128xf32>
      %cst_19 = arith.constant 9.99999974E-6 : f32
      %31 = vector.broadcast %cst_19 : f32 to vector<1x128xf32>
      %32 = arith.addf %28, %31 : vector<1x128xf32>
      %33 = math.rsqrt %32 : vector<1x128xf32>
      %34 = vector.broadcast %33 : vector<1x128xf32> to vector<4096x128xf32>
      %35 = arith.mulf %30, %34 : vector<4096x128xf32>
      %cst_20 = arith.constant 0.000000e+00 : f32
      %36 = vector.broadcast %cst_20 : f32 to vector<4096x128xf32>
      %37 = arith.maximumf %35, %36 : vector<4096x128xf32>
      %c0_21 = arith.constant 0 : index
      %c0_22 = arith.constant 0 : index
      %38 = vector.load %arg6[%c0_21, %c0_22] : memref<4096x128xf32, #tpu.memory_space<vmem>>, vector<4096x128xf32>
      tpu.vector_store %arg6[%c0_21, %c0_22], %37 {strides = array<i32>} : memref<4096x128xf32, #tpu.memory_space<vmem>>, vector<4096x128xf32>,
    } else {
    }
    return
  }
  func.func @transform_0(%arg0: i32, %arg1: i32, %arg2: i32) -> (i32, i32) {
    %c0_i32 = arith.constant 0 : i32
    return %arg0, %arg2 : i32, i32
  }
  func.func @transform_1(%arg0: i32, %arg1: i32, %arg2: i32) -> (i32, i32) {
    %c0_i32 = arith.constant 0 : i32
    return %arg2, %arg1 : i32, i32
  }
  func.func @transform_2(%arg0: i32, %arg1: i32, %arg2: i32) -> (i32, i32) {
    %c0_i32 = arith.constant 0 : i32
    %c0_i32_0 = arith.constant 0 : i32
    return %c0_i32, %arg1 : i32, i32
  }
  func.func @transform_3(%arg0: i32, %arg1: i32, %arg2: i32) -> (i32, i32) {
    %c0_i32 = arith.constant 0 : i32
    return %arg0, %arg1 : i32, i32
  }
}

</mosaic_0001>

<llo_original>
// kernel: _conv3d_nores.1
$region0: #{_conv3d_nores.1}
  #allocation0 [shape = 'u32[]', space=smem, size = 0x4, offset = 0x4, fixed_abs, tag = 'smem constant byte address 0x4 - core index']
  #allocation1 [shape = 'u32[72,128]{1,0:T(1,128)}', space=vmem, size = 0x9000, scoped, tag = 'internal scratch']
  #allocation2 [shape = 'f32[4096,128]{1,0:T(8,128)}', space=vmem, size = 0x200000, scoped, tag = 'scratch operand']
  %s0 = inlined_call_operand.vmem [shape: bf16[4096,32], index: 0, kind: input, shape index: {}]
  %s1 = inlined_call_operand.vmem [shape: bf16[32,128], index: 1, kind: input, shape index: {}]
  %s2 = inlined_call_operand.vmem [shape: f32[1,128], index: 2, kind: input, shape index: {}]
  %s3 = inlined_call_operand.vmem [shape: f32[4096,128], index: 3, kind: output, shape index: {}]
  %s4 = sld [smem:[#allocation0]]
  $region30: #{_conv3d_nores.1} parent=0
    _
  %s6 = ssub.s32 1, %s4
  %s7 = scalar_select 0, %s6, %s4
  // Predicated region
  $region2: #{_conv3d_nores.1} parent=0 // pred_check
    _
  $region3: #{_conv3d_nores.1} parent=0 // pred_check_branch
    %9 = sbr.rel (0) target = $region5
  $region4: #{_conv3d_nores.1} parent=0 // pred_region
    _
  $region5: #{_conv3d_nores.1} parent=0 // pred_fallthru
    _
  // Predicated region
  $region6: #{_conv3d_nores.1} parent=0 // pred_check
    _
  $region7: #{_conv3d_nores.1} parent=0 // pred_check_branch
    %11 = sbr.rel (0) target = $region9
  $region8: #{_conv3d_nores.1} parent=0 // pred_region
    _
  $region9: #{_conv3d_nores.1} parent=0 // pred_fallthru
    _
  // Predicated region
  $region10: #{_conv3d_nores.1} parent=0 // pred_check
    _
  $region11: #{_conv3d_nores.1} parent=0 // pred_check_branch
    %13 = sbr.rel (0) target = $region13
  $region12: #{_conv3d_nores.1} parent=0 // pred_region
    _
  $region13: #{_conv3d_nores.1} parent=0 // pred_fallthru
    _
  %p15 = scmp.eq.s32.totalorder 0, 0
  // Predicated region
  $region14: #{_conv3d_nores.1} parent=0 // pred_check
    %p16 = pneg %p15
  $region15: #{_conv3d_nores.1} parent=0 // pred_check_branch
    %18 = sbr.rel (%p16) target = $region17
  $region16: #{_conv3d_nores.1} parent=0 // pred_region
    %19 = vst [vmem:[#allocation2] sm:$0xff] 0.0
    %20 = vst [vmem:[#allocation2 + $0x8] sm:$0xff] 0.0
    %21 = vst [vmem:[#allocation2 + $0x10] sm:$0xff] 0.0
    %22 = vst [vmem:[#allocation2 + $0x18] sm:$0xff] 0.0
    %23 = vst [vmem:[#allocation2 + $0x20] sm:$0xff] 0.0
    %24 = vst [vmem:[#allocation2 + $0x28] sm:$0xff] 0.0
    %25 = vst [vmem:[#allocation2 + $0x30] sm:$0xff] 0.0
    %26 = vst [vmem:[#allocation2 + $0x38] sm:$0xff] 0.0
    %27 = vst [vmem:[#allocation2 + $0x40] sm:$0xff] 0.0
    %28 = vst [vmem:[#allocation2 + $0x48] sm:$0xff] 0.0
    %29 = vst [vmem:[#allocation2 + $0x50] sm:$0xff] 0.0
    %30 = vst [vmem:[#allocation2 + $0x58] sm:$0xff] 0.0
    %31 = vst [vmem:[#allocation2 + $0x60] sm:$0xff] 0.0
    %32 = vst [vmem:[#allocation2 + $0x68] sm:$0xff] 0.0
    %33 = vst [vmem:[#allocation2 + $0x70] sm:$0xff] 0.0
    %34 = vst [vmem:[#allocation2 + $0x78] sm:$0xff] 0.0
    %35 = vst [vmem:[#allocation2 + $0x80] sm:$0xff] 0.0
    %36 = vst [vmem:[#allocation2 + $0x88] sm:$0xff] 0.0
    %37 = vst [vmem:[#allocation2 + $0x90] sm:$0xff] 0.0
    %38 = vst [vmem:[#allocation2 + $0x98] sm:$0xff] 0.0
    %39 = vst [vmem:[#allocation2 + $0xa0] sm:$0xff] 0.0
    %40 = vst [vmem:[#allocation2 + $0xa8] sm:$0xff] 0.0
    %41 = vst [vmem:[#allocation2 + $0xb0] sm:$0xff] 0.0
    %42 = vst [vmem:[#allocation2 + $0xb8] sm:$0xff] 0.0
    %43 = vst [vmem:[#allocation2 + $0xc0] sm:$0xff] 0.0
    %44 = vst [vmem:[#allocation2 + $0xc8] sm:$0xff] 0.0
    %45 = vst [vmem:[#allocation2 + $0xd0] sm:$0xff] 0.0
    %46 = vst [vmem:[#allocation2 + $0xd8] sm:$0xff] 0.0
    %47 = vst [vmem:[#allocation2 + $0xe0] sm:$0xff] 0.0
    %48 = vst [vmem:[#allocation2 + $0xe8] sm:$0xff] 0.0
    %49 = vst [vmem:[#allocation2 + $0xf0] sm:$0xff] 0.0
    %50 = vst [vmem:[#allocation2 + $0xf8] sm:$0xff] 0.0
    %51 = vst [vmem:[#allocation2 + $0x100] sm:$0xff] 0.0
    %52 = vst [vmem:[#allocation2 + $0x108] sm:$0xff] 0.0
    %53 = vst [vmem:[#allocation2 + $0x110] sm:$0xff] 0.0
    %54 = vst [vmem:[#allocation2 + $0x118] sm:$0xff] 0.0
    %55 = vst [vmem:[#allocation2 + $0x120] sm:$0xff] 0.0
    %56 = vst [vmem:[#allocation2 + $0x128] sm:$0xff] 0.0
    %57 = vst [vmem:[#allocation2 + $0x130] sm:$0xff] 0.0
    %58 = vst [vmem:[#allocation2 + $0x138] sm:$0xff] 0.0
    %59 = vst [vmem:[#allocation2 + $0x140] sm:$0xff] 0.0
    %60 = vst [vmem:[#allocation2 + $0x148] sm:$0xff] 0.0
    %61 = vst [vmem:[#allocation2 + $0x150] sm:$0xff] 0.0
    %62 = vst [vmem:[#allocation2 + $0x158] sm:$0xff] 0.0
    %63 = vst [vmem:[#allocation2 + $0x160] sm:$0xff] 0.0
    %64 = vst [vmem:[#allocation2 + $0x168] sm:$0xff] 0.0
    %65 = vst [vmem:[#allocation2 + $0x170] sm:$0xff] 0.0
    %66 = vst [vmem:[#allocation2 + $0x178] sm:$0xff] 0.0
    %67 = vst [vmem:[#allocation2 + $0x180] sm:$0xff] 0.0
    %68 = vst [vmem:[#allocation2 + $0x188] sm:$0xff] 0.0
    %69 = vst [vmem:[#allocation2 + $0x190] sm:$0xff] 0.0
    %70 = vst [vmem:[#allocation2 + $0x198] sm:$0xff] 0.0
    %71 = vst [vmem:[#allocation2 + $0x1a0] sm:$0xff] 0.0
    %72 = vst [vmem:[#allocation2 + $0x1a8] sm:$0xff] 0.0
    %73 = vst [vmem:[#allocation2 + $0x1b0] sm:$0xff] 0.0
    %74 = vst [vmem:[#allocation2 + $0x1b8] sm:$0xff] 0.0
    %75 = vst [vmem:[#allocation2 + $0x1c0] sm:$0xff] 0.0
    %76 = vst [vmem:[#allocation2 + $0x1c8] sm:$0xff] 0.0
    %77 = vst [vmem:[#allocation2 + $0x1d0] sm:$0xff] 0.0
    %78 = vst [vmem:[#allocation2 + $0x1d8] sm:$0xff] 0.0
    %79 = vst [vmem:[#allocation2 + $0x1e0] sm:$0xff] 0.0
    %80 = vst [vmem:[#allocation2 + $0x1e8] sm:$0xff] 0.0
    %81 = vst [vmem:[#allocation2 + $0x1f0] sm:$0xff] 0.0
    %82 = vst [vmem:[#allocation2 + $0x1f8] sm:$0xff] 0.0
    %83 = vst [vmem:[#allocation2 + $0x200] sm:$0xff] 0.0
    %84 = vst [vmem:[#allocation2 + $0x208] sm:$0xff] 0.0
    %85 = vst [vmem:[#allocation2 + $0x210] sm:$0xff] 0.0
    %86 = vst [vmem:[#allocation2 + $0x218] sm:$0xff] 0.0
    %87 = vst [vmem:[#allocation2 + $0x220] sm:$0xff] 0.0
    %88 = vst [vmem:[#allocation2 + $0x228] sm:$0xff] 0.0
    %89 = vst [vmem:[#allocation2 + $0x230] sm:$0xff] 0.0
    %90 = vst [vmem:[#allocation2 + $0x238] sm:$0xff] 0.0
    %91 = vst [vmem:[#allocation2 + $0x240] sm:$0xff] 0.0
    %92 = vst [vmem:[#allocation2 + $0x248] sm:$0xff] 0.0
    %93 = vst [vmem:[#allocation2 + $0x250] sm:$0xff] 0.0
    %94 = vst [vmem:[#allocation2 + $0x258] sm:$0xff] 0.0
    %95 = vst [vmem:[#allocation2 + $0x260] sm:$0xff] 0.0
    %96 = vst [vmem:[#allocation2 + $0x268] sm:$0xff] 0.0
    %97 = vst [vmem:[#allocation2 + $0x270] sm:$0xff] 0.0
    %98 = vst [vmem:[#allocation2 + $0x278] sm:$0xff] 0.0
    %99 = vst [vmem:[#allocation2 + $0x280] sm:$0xff] 0.0
    %100 = vst [vmem:[#allocation2 + $0x288] sm:$0xff] 0.0
    %101 = vst [vmem:[#allocation2 + $0x290] sm:$0xff] 0.0
    %102 = vst [vmem:[#allocation2 + $0x298] sm:$0xff] 0.0
    %103 = vst [vmem:[#allocation2 + $0x2a0] sm:$0xff] 0.0
    %104 = vst [vmem:[#allocation2 + $0x2a8] sm:$0xff] 0.0
    %105 = vst [vmem:[#allocation2 + $0x2b0] sm:$0xff] 0.0
    %106 = vst [vmem:[#allocation2 + $0x2b8] sm:$0xff] 0.0
    %107 = vst [vmem:[#allocation2 + $0x2c0] sm:$0xff] 0.0
    %108 = vst [vmem:[#allocation2 + $0x2c8] sm:$0xff] 0.0
    %109 = vst [vmem:[#allocation2 + $0x2d0] sm:$0xff] 0.0
    %110 = vst [vmem:[#allocation2 + $0x2d8] sm:$0xff] 0.0
    %111 = vst [vmem:[#allocation2 + $0x2e0] sm:$0xff] 0.0
    %112 = vst [vmem:[#allocation2 + $0x2e8] sm:$0xff] 0.0
    %113 = vst [vmem:[#allocation2 + $0x2f0] sm:$0xff] 0.0
    %114 = vst [vmem:[#allocation2 + $0x2f8] sm:$0xff] 0.0
    %115 = vst [vmem:[#allocation2 + $0x300] sm:$0xff] 0.0
    %116 = vst [vmem:[#allocation2 + $0x308] sm:$0xff] 0.0
    %117 = vst [vmem:[#allocation2 + $0x310] sm:$0xff] 0.0
    %118 = vst [vmem:[#allocation2 + $0x318] sm:$0xff] 0.0
    %119 = vst [vmem:[#allocation2 + $0x320] sm:$0xff] 0.0
    %120 = vst [vmem:[#allocation2 + $0x328] sm:$0xff] 0.0
    %121 = vst [vmem:[#allocation2 + $0x330] sm:$0xff] 0.0
    %122 = vst [vmem:[#allocation2 + $0x338] sm:$0xff] 0.0
    %123 = vst [vmem:[#allocation2 + $0x340] sm:$0xff] 0.0
    %124 = vst [vmem:[#allocation2 + $0x348] sm:$0xff] 0.0
    %125 = vst [vmem:[#allocation2 + $0x350] sm:$0xff] 0.0
    %126 = vst [vmem:[#allocation2 + $0x358] sm:$0xff] 0.0
    %127 = vst [vmem:[#allocation2 + $0x360] sm:$0xff] 0.0
    %128 = vst [vmem:[#allocation2 + $0x368] sm:$0xff] 0.0
    %129 = vst [vmem:[#allocation2 + $0x370] sm:$0xff] 0.0
    %130 = vst [vmem:[#allocation2 + $0x378] sm:$0xff] 0.0
    %131 = vst [vmem:[#allocation2 + $0x380] sm:$0xff] 0.0
    %132 = vst [vmem:[#allocation2 + $0x388] sm:$0xff] 0.0
    %133 = vst [vmem:[#allocation2 + $0x390] sm:$0xff] 0.0
    %134 = vst [vmem:[#allocation2 + $0x398] sm:$0xff] 0.0
    %135 = vst [vmem:[#allocation2 + $0x3a0] sm:$0xff] 0.0
    %136 = vst [vmem:[#allocation2 + $0x3a8] sm:$0xff] 0.0
    %137 = vst [vmem:[#allocation2 + $0x3b0] sm:$0xff] 0.0
    %138 = vst [vmem:[#allocation2 + $0x3b8] sm:$0xff] 0.0
    %139 = vst [vmem:[#allocation2 + $0x3c0] sm:$0xff] 0.0
    %140 = vst [vmem:[#allocation2 + $0x3c8] sm:$0xff] 0.0
    %141 = vst [vmem:[#allocation2 + $0x3d0] sm:$0xff] 0.0
    %142 = vst [vmem:[#allocation2 + $0x3d8] sm:$0xff] 0.0
    %143 = vst [vmem:[#allocation2 + $0x3e0] sm:$0xff] 0.0
    %144 = vst [vmem:[#allocation2 + $0x3e8] sm:$0xff] 0.0
    %145 = vst [vmem:[#allocation2 + $0x3f0] sm:$0xff] 0.0
    %146 = vst [vmem:[#allocation2 + $0x3f8] sm:$0xff] 0.0
    %147 = vst [vmem:[#allocation2 + $0x400] sm:$0xff] 0.0
    %148 = vst [vmem:[#allocation2 + $0x408] sm:$0xff] 0.0
    %149 = vst [vmem:[#allocation2 + $0x410] sm:$0xff] 0.0
    %150 = vst [vmem:[#allocation2 + $0x418] sm:$0xff] 0.0
    %151 = vst [vmem:[#allocation2 + $0x420] sm:$0xff] 0.0
    %152 = vst [vmem:[#allocation2 + $0x428] sm:$0xff] 0.0
    %153 = vst [vmem:[#allocation2 + $0x430] sm:$0xff] 0.0
    %154 = vst [vmem:[#allocation2 + $0x438] sm:$0xff] 0.0
    %155 = vst [vmem:[#allocation2 + $0x440] sm:$0xff] 0.0
    %156 = vst [vmem:[#allocation2 + $0x448] sm:$0xff] 0.0
    %157 = vst [vmem:[#allocation2 + $0x450] sm:$0xff] 0.0
    %158 = vst [vmem:[#allocation2 + $0x458] sm:$0xff] 0.0
    %159 = vst [vmem:[#allocation2 + $0x460] sm:$0xff] 0.0
    %160 = vst [vmem:[#allocation2 + $0x468] sm:$0xff] 0.0
    %161 = vst [vmem:[#allocation2 + $0x470] sm:$0xff] 0.0
    %162 = vst [vmem:[#allocation2 + $0x478] sm:$0xff] 0.0
    %163 = vst [vmem:[#allocation2 + $0x480] sm:$0xff] 0.0
    %164 = vst [vmem:[#allocation2 + $0x488] sm:$0xff] 0.0
    %165 = vst [vmem:[#allocation2 + $0x490] sm:$0xff] 0.0
    %166 = vst [vmem:[#allocation2 + $0x498] sm:$0xff] 0.0
    %167 = vst [vmem:[#allocation2 + $0x4a0] sm:$0xff] 0.0
    %168 = vst [vmem:[#allocation2 + $0x4a8] sm:$0xff] 0.0
    %169 = vst [vmem:[#allocation2 + $0x4b0] sm:$0xff] 0.0
    %170 = vst [vmem:[#allocation2 + $0x4b8] sm:$0xff] 0.0
    %171 = vst [vmem:[#allocation2 + $0x4c0] sm:$0xff] 0.0
    %172 = vst [vmem:[#allocation2 + $0x4c8] sm:$0xff] 0.0
    %173 = vst [vmem:[#allocation2 + $0x4d0] sm:$0xff] 0.0
    %174 = vst [vmem:[#allocation2 + $0x4d8] sm:$0xff] 0.0
    %175 = vst [vmem:[#allocation2 + $0x4e0] sm:$0xff] 0.0
    %176 = vst [vmem:[#allocation2 + $0x4e8] sm:$0xff] 0.0
    %177 = vst [vmem:[#allocation2 + $0x4f0] sm:$0xff] 0.0
    %178 = vst [vmem:[#allocation2 + $0x4f8] sm:$0xff] 0.0
    %179 = vst [vmem:[#allocation2 + $0x500] sm:$0xff] 0.0
    %180 = vst [vmem:[#allocation2 + $0x508] sm:$0xff] 0.0
    %181 = vst [vmem:[#allocation2 + $0x510] sm:$0xff] 0.0
    %182 = vst [vmem:[#allocation2 + $0x518] sm:$0xff] 0.0
    %183 = vst [vmem:[#allocation2 + $0x520] sm:$0xff] 0.0
    %184 = vst [vmem:[#allocation2 + $0x528] sm:$0xff] 0.0
    %185 = vst [vmem:[#allocation2 + $0x530] sm:$0xff] 0.0
    %186 = vst [vmem:[#allocation2 + $0x538] sm:$0xff] 0.0
    %187 = vst [vmem:[#allocation2 + $0x540] sm:$0xff] 0.0
    %188 = vst [vmem:[#allocation2 + $0x548] sm:$0xff] 0.0
    %189 = vst [vmem:[#allocation2 + $0x550] sm:$0xff] 0.0
    %190 = vst [vmem:[#allocation2 + $0x558] sm:$0xff] 0.0
    %191 = vst [vmem:[#allocation2 + $0x560] sm:$0xff] 0.0
    %192 = vst [vmem:[#allocation2 + $0x568] sm:$0xff] 0.0
    %193 = vst [vmem:[#allocation2 + $0x570] sm:$0xff] 0.0
    %194 = vst [vmem:[#allocation2 + $0x578] sm:$0xff] 0.0
    %195 = vst [vmem:[#allocation2 + $0x580] sm:$0xff] 0.0
    %196 = vst [vmem:[#allocation2 + $0x588] sm:$0xff] 0.0
    %197 = vst [vmem:[#allocation2 + $0x590] sm:$0xff] 0.0
    %198 = vst [vmem:[#allocation2 + $0x598] sm:$0xff] 0.0
    %199 = vst [vmem:[#allocation2 + $0x5a0] sm:$0xff] 0.0
    %200 = vst [vmem:[#allocation2 + $0x5a8] sm:$0xff] 0.0
    %201 = vst [vmem:[#allocation2 + $0x5b0] sm:$0xff] 0.0
    %202 = vst [vmem:[#allocation2 + $0x5b8] sm:$0xff] 0.0
    %203 = vst [vmem:[#allocation2 + $0x5c0] sm:$0xff] 0.0
    %204 = vst [vmem:[#allocation2 + $0x5c8] sm:$0xff] 0.0
    %205 = vst [vmem:[#allocation2 + $0x5d0] sm:$0xff] 0.0
    %206 = vst [vmem:[#allocation2 + $0x5d8] sm:$0xff] 0.0
    %207 = vst [vmem:[#allocation2 + $0x5e0] sm:$0xff] 0.0
    %208 = vst [vmem:[#allocation2 + $0x5e8] sm:$0xff] 0.0
    %209 = vst [vmem:[#allocation2 + $0x5f0] sm:$0xff] 0.0
    %210 = vst [vmem:[#allocation2 + $0x5f8] sm:$0xff] 0.0
    %211 = vst [vmem:[#allocation2 + $0x600] sm:$0xff] 0.0
    %212 = vst [vmem:[#allocation2 + $0x608] sm:$0xff] 0.0
    %213 = vst [vmem:[#allocation2 + $0x610] sm:$0xff] 0.0
    %214 = vst [vmem:[#allocation2 + $0x618] sm:$0xff] 0.0
    %215 = vst [vmem:[#allocation2 + $0x620] sm:$0xff] 0.0
    %216 = vst [vmem:[#allocation2 + $0x628] sm:$0xff] 0.0
    %217 = vst [vmem:[#allocation2 + $0x630] sm:$0xff] 0.0
    %218 = vst [vmem:[#allocation2 + $0x638] sm:$0xff] 0.0
    %219 = vst [vmem:[#allocation2 + $0x640] sm:$0xff] 0.0
    %220 = vst [vmem:[#allocation2 + $0x648] sm:$0xff] 0.0
    %221 = vst [vmem:[#allocation2 + $0x650] sm:$0xff] 0.0
    %222 = vst [vmem:[#allocation2 + $0x658] sm:$0xff] 0.0
    %223 = vst [vmem:[#allocation2 + $0x660] sm:$0xff] 0.0
    %224 = vst [vmem:[#allocation2 + $0x668] sm:$0xff] 0.0
    %225 = vst [vmem:[#allocation2 + $0x670] sm:$0xff] 0.0
    %226 = vst [vmem:[#allocation2 + $0x678] sm:$0xff] 0.0
    %227 = vst [vmem:[#allocation2 + $0x680] sm:$0xff] 0.0
    %228 = vst [vmem:[#allocation2 + $0x688] sm:$0xff] 0.0
    %229 = vst [vmem:[#allocation2 + $0x690] sm:$0xff] 0.0
    %230 = vst [vmem:[#allocation2 + $0x698] sm:$0xff] 0.0
    %231 = vst [vmem:[#allocation2 + $0x6a0] sm:$0xff] 0.0
    %232 = vst [vmem:[#allocation2 + $0x6a8] sm:$0xff] 0.0
    %233 = vst [vmem:[#allocation2 + $0x6b0] sm:$0xff] 0.0
    %234 = vst [vmem:[#allocation2 + $0x6b8] sm:$0xff] 0.0
    %235 = vst [vmem:[#allocation2 + $0x6c0] sm:$0xff] 0.0
    %236 = vst [vmem:[#allocation2 + $0x6c8] sm:$0xff] 0.0
    %237 = vst [vmem:[#allocation2 + $0x6d0] sm:$0xff] 0.0
    %238 = vst [vmem:[#allocation2 + $0x6d8] sm:$0xff] 0.0
    %239 = vst [vmem:[#allocation2 + $0x6e0] sm:$0xff] 0.0
    %240 = vst [vmem:[#allocation2 + $0x6e8] sm:$0xff] 0.0
    %241 = vst [vmem:[#allocation2 + $0x6f0] sm:$0xff] 0.0
    %242 = vst [vmem:[#allocation2 + $0x6f8] sm:$0xff] 0.0
    %243 = vst [vmem:[#allocation2 + $0x700] sm:$0xff] 0.0
    %244 = vst [vmem:[#allocation2 + $0x708] sm:$0xff] 0.0
    %245 = vst [vmem:[#allocation2 + $0x710] sm:$0xff] 0.0
    %246 = vst [vmem:[#allocation2 + $0x718] sm:$0xff] 0.0
    %247 = vst [vmem:[#allocation2 + $0x720] sm:$0xff] 0.0
    %248 = vst [vmem:[#allocation2 + $0x728] sm:$0xff] 0.0
    %249 = vst [vmem:[#allocation2 + $0x730] sm:$0xff] 0.0
    %250 = vst [vmem:[#allocation2 + $0x738] sm:$0xff] 0.0
    %251 = vst [vmem:[#allocation2 + $0x740] sm:$0xff] 0.0
    %252 = vst [vmem:[#allocation2 + $0x748] sm:$0xff] 0.0
    %253 = vst [vmem:[#allocation2 + $0x750] sm:$0xff] 0.0
    %254 = vst [vmem:[#allocation2 + $0x758] sm:$0xff] 0.0
    %255 = vst [vmem:[#allocation2 + $0x760] sm:$0xff] 0.0
    %256 = vst [vmem:[#allocation2 + $0x768] sm:$0xff] 0.0
    %257 = vst [vmem:[#allocation2 + $0x770] sm:$0xff] 0.0
    %258 = vst [vmem:[#allocation2 + $0x778] sm:$0xff] 0.0
    %259 = vst [vmem:[#allocation2 + $0x780] sm:$0xff] 0.0
    %260 = vst [vmem:[#allocation2 + $0x788] sm:$0xff] 0.0
    %261 = vst [vmem:[#allocation2 + $0x790] sm:$0xff] 0.0
    %262 = vst [vmem:[#allocation2 + $0x798] sm:$0xff] 0.0
    %263 = vst [vmem:[#allocation2 + $0x7a0] sm:$0xff] 0.0
    %264 = vst [vmem:[#allocation2 + $0x7a8] sm:$0xff] 0.0
    %265 = vst [vmem:[#allocation2 + $0x7b0] sm:$0xff] 0.0
    %266 = vst [vmem:[#allocation2 + $0x7b8] sm:$0xff] 0.0
    %267 = vst [vmem:[#allocation2 + $0x7c0] sm:$0xff] 0.0
    %268 = vst [vmem:[#allocation2 + $0x7c8] sm:$0xff] 0.0
    %269 = vst [vmem:[#allocation2 + $0x7d0] sm:$0xff] 0.0
    %270 = vst [vmem:[#allocation2 + $0x7d8] sm:$0xff] 0.0
    %271 = vst [vmem:[#allocation2 + $0x7e0] sm:$0xff] 0.0
    %272 = vst [vmem:[#allocation2 + $0x7e8] sm:$0xff] 0.0
    %273 = vst [vmem:[#allocation2 + $0x7f0] sm:$0xff] 0.0
    %274 = vst [vmem:[#allocation2 + $0x7f8] sm:$0xff] 0.0
    %275 = vst [vmem:[#allocation2 + $0x800] sm:$0xff] 0.0
    %276 = vst [vmem:[#allocation2 + $0x808] sm:$0xff] 0.0
    %277 = vst [vmem:[#allocation2 + $0x810] sm:$0xff] 0.0
    %278 = vst [vmem:[#allocation2 + $0x818] sm:$0xff] 0.0
    %279 = vst [vmem:[#allocation2 + $0x820] sm:$0xff] 0.0
    %280 = vst [vmem:[#allocation2 + $0x828] sm:$0xff] 0.0
    %281 = vst [vmem:[#allocation2 + $0x830] sm:$0xff] 0.0
    %282 = vst [vmem:[#allocation2 + $0x838] sm:$0xff] 0.0
    %283 = vst [vmem:[#allocation2 + $0x840] sm:$0xff] 0.0
    %284 = vst [vmem:[#allocation2 + $0x848] sm:$0xff] 0.0
    %285 = vst [vmem:[#allocation2 + $0x850] sm:$0xff] 0.0
    %286 = vst [vmem:[#allocation2 + $0x858] sm:$0xff] 0.0
    %287 = vst [vmem:[#allocation2 + $0x860] sm:$0xff] 0.0
    %288 = vst [vmem:[#allocation2 + $0x868] sm:$0xff] 0.0
    %289 = vst [vmem:[#allocation2 + $0x870] sm:$0xff] 0.0
    %290 = vst [vmem:[#allocation2 + $0x878] sm:$0xff] 0.0
    %291 = vst [vmem:[#allocation2 + $0x880] sm:$0xff] 0.0
    %292 = vst [vmem:[#allocation2 + $0x888] sm:$0xff] 0.0
    %293 = vst [vmem:[#allocation2 + $0x890] sm:$0xff] 0.0
    %294 = vst [vmem:[#allocation2 + $0x898] sm:$0xff] 0.0
    %295 = vst [vmem:[#allocation2 + $0x8a0] sm:$0xff] 0.0
    %296 = vst [vmem:[#allocation2 + $0x8a8] sm:$0xff] 0.0
    %297 = vst [vmem:[#allocation2 + $0x8b0] sm:$0xff] 0.0
    %298 = vst [vmem:[#allocation2 + $0x8b8] sm:$0xff] 0.0
    %299 = vst [vmem:[#allocation2 + $0x8c0] sm:$0xff] 0.0
    %300 = vst [vmem:[#allocation2 + $0x8c8] sm:$0xff] 0.0
    %301 = vst [vmem:[#allocation2 + $0x8d0] sm:$0xff] 0.0
    %302 = vst [vmem:[#allocation2 + $0x8d8] sm:$0xff] 0.0
    %303 = vst [vmem:[#allocation2 + $0x8e0] sm:$0xff] 0.0
    %304 = vst [vmem:[#allocation2 + $0x8e8] sm:$0xff] 0.0
    %305 = vst [vmem:[#allocation2 + $0x8f0] sm:$0xff] 0.0
    %306 = vst [vmem:[#allocation2 + $0x8f8] sm:$0xff] 0.0
    %307 = vst [vmem:[#allocation2 + $0x900] sm:$0xff] 0.0
    %308 = vst [vmem:[#allocation2 + $0x908] sm:$0xff] 0.0
    %309 = vst [vmem:[#allocation2 + $0x910] sm:$0xff] 0.0
    %310 = vst [vmem:[#allocation2 + $0x918] sm:$0xff] 0.0
    %311 = vst [vmem:[#allocation2 + $0x920] sm:$0xff] 0.0
    %312 = vst [vmem:[#allocation2 + $0x928] sm:$0xff] 0.0
    %313 = vst [vmem:[#allocation2 + $0x930] sm:$0xff] 0.0
    %314 = vst [vmem:[#allocation2 + $0x938] sm:$0xff] 0.0
    %315 = vst [vmem:[#allocation2 + $0x940] sm:$0xff] 0.0
    %316 = vst [vmem:[#allocation2 + $0x948] sm:$0xff] 0.0
    %317 = vst [vmem:[#allocation2 + $0x950] sm:$0xff] 0.0
    %318 = vst [vmem:[#allocation2 + $0x958] sm:$0xff] 0.0
    %319 = vst [vmem:[#allocation2 + $0x960] sm:$0xff] 0.0
    %320 = vst [vmem:[#allocation2 + $0x968] sm:$0xff] 0.0
    %321 = vst [vmem:[#allocation2 + $0x970] sm:$0xff] 0.0
    %322 = vst [vmem:[#allocation2 + $0x978] sm:$0xff] 0.0
    %323 = vst [vmem:[#allocation2 + $0x980] sm:$0xff] 0.0
    %324 = vst [vmem:[#allocation2 + $0x988] sm:$0xff] 0.0
    %325 = vst [vmem:[#allocation2 + $0x990] sm:$0xff] 0.0
    %326 = vst [vmem:[#allocation2 + $0x998] sm:$0xff] 0.0
    %327 = vst [vmem:[#allocation2 + $0x9a0] sm:$0xff] 0.0
    %328 = vst [vmem:[#allocation2 + $0x9a8] sm:$0xff] 0.0
    %329 = vst [vmem:[#allocation2 + $0x9b0] sm:$0xff] 0.0
    %330 = vst [vmem:[#allocation2 + $0x9b8] sm:$0xff] 0.0
    %331 = vst [vmem:[#allocation2 + $0x9c0] sm:$0xff] 0.0
    %332 = vst [vmem:[#allocation2 + $0x9c8] sm:$0xff] 0.0
    %333 = vst [vmem:[#allocation2 + $0x9d0] sm:$0xff] 0.0
    %334 = vst [vmem:[#allocation2 + $0x9d8] sm:$0xff] 0.0
    %335 = vst [vmem:[#allocation2 + $0x9e0] sm:$0xff] 0.0
    %336 = vst [vmem:[#allocation2 + $0x9e8] sm:$0xff] 0.0
    %337 = vst [vmem:[#allocation2 + $0x9f0] sm:$0xff] 0.0
    %338 = vst [vmem:[#allocation2 + $0x9f8] sm:$0xff] 0.0
    %339 = vst [vmem:[#allocation2 + $0xa00] sm:$0xff] 0.0
    %340 = vst [vmem:[#allocation2 + $0xa08] sm:$0xff] 0.0
    %341 = vst [vmem:[#allocation2 + $0xa10] sm:$0xff] 0.0
    %342 = vst [vmem:[#allocation2 + $0xa18] sm:$0xff] 0.0
    %343 = vst [vmem:[#allocation2 + $0xa20] sm:$0xff] 0.0
    %344 = vst [vmem:[#allocation2 + $0xa28] sm:$0xff] 0.0
    %345 = vst [vmem:[#allocation2 + $0xa30] sm:$0xff] 0.0
    %346 = vst [vmem:[#allocation2 + $0xa38] sm:$0xff] 0.0
    %347 = vst [vmem:[#allocation2 + $0xa40] sm:$0xff] 0.0
    %348 = vst [vmem:[#allocation2 + $0xa48] sm:$0xff] 0.0
    %349 = vst [vmem:[#allocation2 + $0xa50] sm:$0xff] 0.0
    %350 = vst [vmem:[#allocation2 + $0xa58] sm:$0xff] 0.0
    %351 = vst [vmem:[#allocation2 + $0xa60] sm:$0xff] 0.0
    %352 = vst [vmem:[#allocation2 + $0xa68] sm:$0xff] 0.0
    %353 = vst [vmem:[#allocation2 + $0xa70] sm:$0xff] 0.0
    %354 = vst [vmem:[#allocation2 + $0xa78] sm:$0xff] 0.0
    %355 = vst [vmem:[#allocation2 + $0xa80] sm:$0xff] 0.0
    %356 = vst [vmem:[#allocation2 + $0xa88] sm:$0xff] 0.0
    %357 = vst [vmem:[#allocation2 + $0xa90] sm:$0xff] 0.0
    %358 = vst [vmem:[#allocation2 + $0xa98] sm:$0xff] 0.0
    %359 = vst [vmem:[#allocation2 + $0xaa0] sm:$0xff] 0.0
    %360 = vst [vmem:[#allocation2 + $0xaa8] sm:$0xff] 0.0
    %361 = vst [vmem:[#allocation2 + $0xab0] sm:$0xff] 0.0
    %362 = vst [vmem:[#allocation2 + $0xab8] sm:$0xff] 0.0
    %363 = vst [vmem:[#allocation2 + $0xac0] sm:$0xff] 0.0
    %364 = vst [vmem:[#allocation2 + $0xac8] sm:$0xff] 0.0
    %365 = vst [vmem:[#allocation2 + $0xad0] sm:$0xff] 0.0
    %366 = vst [vmem:[#allocation2 + $0xad8] sm:$0xff] 0.0
    %367 = vst [vmem:[#allocation2 + $0xae0] sm:$0xff] 0.0
    %368 = vst [vmem:[#allocation2 + $0xae8] sm:$0xff] 0.0
    %369 = vst [vmem:[#allocation2 + $0xaf0] sm:$0xff] 0.0
    %370 = vst [vmem:[#allocation2 + $0xaf8] sm:$0xff] 0.0
    %371 = vst [vmem:[#allocation2 + $0xb00] sm:$0xff] 0.0
    %372 = vst [vmem:[#allocation2 + $0xb08] sm:$0xff] 0.0
    %373 = vst [vmem:[#allocation2 + $0xb10] sm:$0xff] 0.0
    %374 = vst [vmem:[#allocation2 + $0xb18] sm:$0xff] 0.0
    %375 = vst [vmem:[#allocation2 + $0xb20] sm:$0xff] 0.0
    %376 = vst [vmem:[#allocation2 + $0xb28] sm:$0xff] 0.0
    %377 = vst [vmem:[#allocation2 + $0xb30] sm:$0xff] 0.0
    %378 = vst [vmem:[#allocation2 + $0xb38] sm:$0xff] 0.0
    %379 = vst [vmem:[#allocation2 + $0xb40] sm:$0xff] 0.0
    %380 = vst [vmem:[#allocation2 + $0xb48] sm:$0xff] 0.0
    %381 = vst [vmem:[#allocation2 + $0xb50] sm:$0xff] 0.0
    %382 = vst [vmem:[#allocation2 + $0xb58] sm:$0xff] 0.0
    %383 = vst [vmem:[#allocation2 + $0xb60] sm:$0xff] 0.0
    %384 = vst [vmem:[#allocation2 + $0xb68] sm:$0xff] 0.0
    %385 = vst [vmem:[#allocation2 + $0xb70] sm:$0xff] 0.0
    %386 = vst [vmem:[#allocation2 + $0xb78] sm:$0xff] 0.0
    %387 = vst [vmem:[#allocation2 + $0xb80] sm:$0xff] 0.0
    %388 = vst [vmem:[#allocation2 + $0xb88] sm:$0xff] 0.0
    %389 = vst [vmem:[#allocation2 + $0xb90] sm:$0xff] 0.0
    %390 = vst [vmem:[#allocation2 + $0xb98] sm:$0xff] 0.0
    %391 = vst [vmem:[#allocation2 + $0xba0] sm:$0xff] 0.0
    %392 = vst [vmem:[#allocation2 + $0xba8] sm:$0xff] 0.0
    %393 = vst [vmem:[#allocation2 + $0xbb0] sm:$0xff] 0.0
    %394 = vst [vmem:[#allocation2 + $0xbb8] sm:$0xff] 0.0
    %395 = vst [vmem:[#allocation2 + $0xbc0] sm:$0xff] 0.0
    %396 = vst [vmem:[#allocation2 + $0xbc8] sm:$0xff] 0.0
    %397 = vst [vmem:[#allocation2 + $0xbd0] sm:$0xff] 0.0
    %398 = vst [vmem:[#allocation2 + $0xbd8] sm:$0xff] 0.0
    %399 = vst [vmem:[#allocation2 + $0xbe0] sm:$0xff] 0.0
    %400 = vst [vmem:[#allocation2 + $0xbe8] sm:$0xff] 0.0
    %401 = vst [vmem:[#allocation2 + $0xbf0] sm:$0xff] 0.0
    %402 = vst [vmem:[#allocation2 + $0xbf8] sm:$0xff] 0.0
    %403 = vst [vmem:[#allocation2 + $0xc00] sm:$0xff] 0.0
    %404 = vst [vmem:[#allocation2 + $0xc08] sm:$0xff] 0.0
    %405 = vst [vmem:[#allocation2 + $0xc10] sm:$0xff] 0.0
    %406 = vst [vmem:[#allocation2 + $0xc18] sm:$0xff] 0.0
    %407 = vst [vmem:[#allocation2 + $0xc20] sm:$0xff] 0.0
    %408 = vst [vmem:[#allocation2 + $0xc28] sm:$0xff] 0.0
    %409 = vst [vmem:[#allocation2 + $0xc30] sm:$0xff] 0.0
    %410 = vst [vmem:[#allocation2 + $0xc38] sm:$0xff] 0.0
    %411 = vst [vmem:[#allocation2 + $0xc40] sm:$0xff] 0.0
    %412 = vst [vmem:[#allocation2 + $0xc48] sm:$0xff] 0.0
    %413 = vst [vmem:[#allocation2 + $0xc50] sm:$0xff] 0.0
    %414 = vst [vmem:[#allocation2 + $0xc58] sm:$0xff] 0.0
    %415 = vst [vmem:[#allocation2 + $0xc60] sm:$0xff] 0.0
    %416 = vst [vmem:[#allocation2 + $0xc68] sm:$0xff] 0.0
    %417 = vst [vmem:[#allocation2 + $0xc70] sm:$0xff] 0.0
    %418 = vst [vmem:[#allocation2 + $0xc78] sm:$0xff] 0.0
    %419 = vst [vmem:[#allocation2 + $0xc80] sm:$0xff] 0.0
    %420 = vst [vmem:[#allocation2 + $0xc88] sm:$0xff] 0.0
    %421 = vst [vmem:[#allocation2 + $0xc90] sm:$0xff] 0.0
    %422 = vst [vmem:[#allocation2 + $0xc98] sm:$0xff] 0.0
    %423 = vst [vmem:[#allocation2 + $0xca0] sm:$0xff] 0.0
    %424 = vst [vmem:[#allocation2 + $0xca8] sm:$0xff] 0.0
    %425 = vst [vmem:[#allocation2 + $0xcb0] sm:$0xff] 0.0
    %426 = vst [vmem:[#allocation2 + $0xcb8] sm:$0xff] 0.0
    %427 = vst [vmem:[#allocation2 + $0xcc0] sm:$0xff] 0.0
    %428 = vst [vmem:[#allocation2 + $0xcc8] sm:$0xff] 0.0
    %429 = vst [vmem:[#allocation2 + $0xcd0] sm:$0xff] 0.0
    %430 = vst [vmem:[#allocation2 + $0xcd8] sm:$0xff] 0.0
    %431 = vst [vmem:[#allocation2 + $0xce0] sm:$0xff] 0.0
    %432 = vst [vmem:[#allocation2 + $0xce8] sm:$0xff] 0.0
    %433 = vst [vmem:[#allocation2 + $0xcf0] sm:$0xff] 0.0
    %434 = vst [vmem:[#allocation2 + $0xcf8] sm:$0xff] 0.0
    %435 = vst [vmem:[#allocation2 + $0xd00] sm:$0xff] 0.0
    %436 = vst [vmem:[#allocation2 + $0xd08] sm:$0xff] 0.0
    %437 = vst [vmem:[#allocation2 + $0xd10] sm:$0xff] 0.0
    %438 = vst [vmem:[#allocation2 + $0xd18] sm:$0xff] 0.0
    %439 = vst [vmem:[#allocation2 + $0xd20] sm:$0xff] 0.0
    %440 = vst [vmem:[#allocation2 + $0xd28] sm:$0xff] 0.0
    %441 = vst [vmem:[#allocation2 + $0xd30] sm:$0xff] 0.0
    %442 = vst [vmem:[#allocation2 + $0xd38] sm:$0xff] 0.0
    %443 = vst [vmem:[#allocation2 + $0xd40] sm:$0xff] 0.0
    %444 = vst [vmem:[#allocation2 + $0xd48] sm:$0xff] 0.0
    %445 = vst [vmem:[#allocation2 + $0xd50] sm:$0xff] 0.0
    %446 = vst [vmem:[#allocation2 + $0xd58] sm:$0xff] 0.0
    %447 = vst [vmem:[#allocation2 + $0xd60] sm:$0xff] 0.0
    %448 = vst [vmem:[#allocation2 + $0xd68] sm:$0xff] 0.0
    %449 = vst [vmem:[#allocation2 + $0xd70] sm:$0xff] 0.0
    %450 = vst [vmem:[#allocation2 + $0xd78] sm:$0xff] 0.0
    %451 = vst [vmem:[#allocation2 + $0xd80] sm:$0xff] 0.0
    %452 = vst [vmem:[#allocation2 + $0xd88] sm:$0xff] 0.0
    %453 = vst [vmem:[#allocation2 + $0xd90] sm:$0xff] 0.0
    %454 = vst [vmem:[#allocation2 + $0xd98] sm:$0xff] 0.0
    %455 = vst [vmem:[#allocation2 + $0xda0] sm:$0xff] 0.0
    %456 = vst [vmem:[#allocation2 + $0xda8] sm:$0xff] 0.0
    %457 = vst [vmem:[#allocation2 + $0xdb0] sm:$0xff] 0.0
    %458 = vst [vmem:[#allocation2 + $0xdb8] sm:$0xff] 0.0
    %459 = vst [vmem:[#allocation2 + $0xdc0] sm:$0xff] 0.0
    %460 = vst [vmem:[#allocation2 + $0xdc8] sm:$0xff] 0.0
    %461 = vst [vmem:[#allocation2 + $0xdd0] sm:$0xff] 0.0
    %462 = vst [vmem:[#allocation2 + $0xdd8] sm:$0xff] 0.0
    %463 = vst [vmem:[#allocation2 + $0xde0] sm:$0xff] 0.0
    %464 = vst [vmem:[#allocation2 + $0xde8] sm:$0xff] 0.0
    %465 = vst [vmem:[#allocation2 + $0xdf0] sm:$0xff] 0.0
    %466 = vst [vmem:[#allocation2 + $0xdf8] sm:$0xff] 0.0
    %467 = vst [vmem:[#allocation2 + $0xe00] sm:$0xff] 0.0
    %468 = vst [vmem:[#allocation2 + $0xe08] sm:$0xff] 0.0
    %469 = vst [vmem:[#allocation2 + $0xe10] sm:$0xff] 0.0
    %470 = vst [vmem:[#allocation2 + $0xe18] sm:$0xff] 0.0
    %471 = vst [vmem:[#allocation2 + $0xe20] sm:$0xff] 0.0
    %472 = vst [vmem:[#allocation2 + $0xe28] sm:$0xff] 0.0
    %473 = vst [vmem:[#allocation2 + $0xe30] sm:$0xff] 0.0
    %474 = vst [vmem:[#allocation2 + $0xe38] sm:$0xff] 0.0
    %475 = vst [vmem:[#allocation2 + $0xe40] sm:$0xff] 0.0
    %476 = vst [vmem:[#allocation2 + $0xe48] sm:$0xff] 0.0
    %477 = vst [vmem:[#allocation2 + $0xe50] sm:$0xff] 0.0
    %478 = vst [vmem:[#allocation2 + $0xe58] sm:$0xff] 0.0
    %479 = vst [vmem:[#allocation2 + $0xe60] sm:$0xff] 0.0
    %480 = vst [vmem:[#allocation2 + $0xe68] sm:$0xff] 0.0
    %481 = vst [vmem:[#allocation2 + $0xe70] sm:$0xff] 0.0
    %482 = vst [vmem:[#allocation2 + $0xe78] sm:$0xff] 0.0
    %483 = vst [vmem:[#allocation2 + $0xe80] sm:$0xff] 0.0
    %484 = vst [vmem:[#allocation2 + $0xe88] sm:$0xff] 0.0
    %485 = vst [vmem:[#allocation2 + $0xe90] sm:$0xff] 0.0
    %486 = vst [vmem:[#allocation2 + $0xe98] sm:$0xff] 0.0
    %487 = vst [vmem:[#allocation2 + $0xea0] sm:$0xff] 0.0
    %488 = vst [vmem:[#allocation2 + $0xea8] sm:$0xff] 0.0
    %489 = vst [vmem:[#allocation2 + $0xeb0] sm:$0xff] 0.0
    %490 = vst [vmem:[#allocation2 + $0xeb8] sm:$0xff] 0.0
    %491 = vst [vmem:[#allocation2 + $0xec0] sm:$0xff] 0.0
    %492 = vst [vmem:[#allocation2 + $0xec8] sm:$0xff] 0.0
    %493 = vst [vmem:[#allocation2 + $0xed0] sm:$0xff] 0.0
    %494 = vst [vmem:[#allocation2 + $0xed8] sm:$0xff] 0.0
    %495 = vst [vmem:[#allocation2 + $0xee0] sm:$0xff] 0.0
    %496 = vst [vmem:[#allocation2 + $0xee8] sm:$0xff] 0.0
    %497 = vst [vmem:[#allocation2 + $0xef0] sm:$0xff] 0.0
    %498 = vst [vmem:[#allocation2 + $0xef8] sm:$0xff] 0.0
    %499 = vst [vmem:[#allocation2 + $0xf00] sm:$0xff] 0.0
    %500 = vst [vmem:[#allocation2 + $0xf08] sm:$0xff] 0.0
    %501 = vst [vmem:[#allocation2 + $0xf10] sm:$0xff] 0.0
    %502 = vst [vmem:[#allocation2 + $0xf18] sm:$0xff] 0.0
    %503 = vst [vmem:[#allocation2 + $0xf20] sm:$0xff] 0.0
    %504 = vst [vmem:[#allocation2 + $0xf28] sm:$0xff] 0.0
    %505 = vst [vmem:[#allocation2 + $0xf30] sm:$0xff] 0.0
    %506 = vst [vmem:[#allocation2 + $0xf38] sm:$0xff] 0.0
    %507 = vst [vmem:[#allocation2 + $0xf40] sm:$0xff] 0.0
    %508 = vst [vmem:[#allocation2 + $0xf48] sm:$0xff] 0.0
    %509 = vst [vmem:[#allocation2 + $0xf50] sm:$0xff] 0.0
    %510 = vst [vmem:[#allocation2 + $0xf58] sm:$0xff] 0.0
    %511 = vst [vmem:[#allocation2 + $0xf60] sm:$0xff] 0.0
    %512 = vst [vmem:[#allocation2 + $0xf68] sm:$0xff] 0.0
    %513 = vst [vmem:[#allocation2 + $0xf70] sm:$0xff] 0.0
    %514 = vst [vmem:[#allocation2 + $0xf78] sm:$0xff] 0.0
    %515 = vst [vmem:[#allocation2 + $0xf80] sm:$0xff] 0.0
    %516 = vst [vmem:[#allocation2 + $0xf88] sm:$0xff] 0.0
    %517 = vst [vmem:[#allocation2 + $0xf90] sm:$0xff] 0.0
    %518 = vst [vmem:[#allocation2 + $0xf98] sm:$0xff] 0.0
    %519 = vst [vmem:[#allocation2 + $0xfa0] sm:$0xff] 0.0
    %520 = vst [vmem:[#allocation2 + $0xfa8] sm:$0xff] 0.0
    %521 = vst [vmem:[#allocation2 + $0xfb0] sm:$0xff] 0.0
    %522 = vst [vmem:[#allocation2 + $0xfb8] sm:$0xff] 0.0
    %523 = vst [vmem:[#allocation2 + $0xfc0] sm:$0xff] 0.0
    %524 = vst [vmem:[#allocation2 + $0xfc8] sm:$0xff] 0.0
    %525 = vst [vmem:[#allocation2 + $0xfd0] sm:$0xff] 0.0
    %526 = vst [vmem:[#allocation2 + $0xfd8] sm:$0xff] 0.0
    %527 = vst [vmem:[#allocation2 + $0xfe0] sm:$0xff] 0.0
    %528 = vst [vmem:[#allocation2 + $0xfe8] sm:$0xff] 0.0
    %529 = vst [vmem:[#allocation2 + $0xff0] sm:$0xff] 0.0
    %530 = vst [vmem:[#allocation2 + $0xff8] sm:$0xff] 0.0
  $region17: #{_conv3d_nores.1} parent=0 // pred_fallthru
    _
  %v531 = vld [vmem:[#allocation2] sm:$0xff]
  %v532 = vld [vmem:[#allocation2 + $0x8] sm:$0xff]
  %v533 = vld [vmem:[#allocation2 + $0x10] sm:$0xff]
  %v534 = vld [vmem:[#allocation2 + $0x18] sm:$0xff]
  %v535 = vld [vmem:[#allocation2 + $0x20] sm:$0xff]
  %v536 = vld [vmem:[#allocation2 + $0x28] sm:$0xff]
  %v537 = vld [vmem:[#allocation2 + $0x30] sm:$0xff]
  %v538 = vld [vmem:[#allocation2 + $0x38] sm:$0xff]
  %v539 = vld [vmem:[#allocation2 + $0x40] sm:$0xff]
  %v540 = vld [vmem:[#allocation2 + $0x48] sm:$0xff]
  %v541 = vld [vmem:[#allocation2 + $0x50] sm:$0xff]
  %v542 = vld [vmem:[#allocation2 + $0x58] sm:$0xff]
  %v543 = vld [vmem:[#allocation2 + $0x60] sm:$0xff]
  %v544 = vld [vmem:[#allocation2 + $0x68] sm:$0xff]
  %v545 = vld [vmem:[#allocation2 + $0x70] sm:$0xff]
  %v546 = vld [vmem:[#allocation2 + $0x78] sm:$0xff]
  %v547 = vld [vmem:[#allocation2 + $0x80] sm:$0xff]
  %v548 = vld [vmem:[#allocation2 + $0x88] sm:$0xff]
  %v549 = vld [vmem:[#allocation2 + $0x90] sm:$0xff]
  %v550 = vld [vmem:[#allocation2 + $0x98] sm:$0xff]
  %v551 = vld [vmem:[#allocation2 + $0xa0] sm:$0xff]
  %v552 = vld [vmem:[#allocation2 + $0xa8] sm:$0xff]
  %v553 = vld [vmem:[#allocation2 + $0xb0] sm:$0xff]
  %v554 = vld [vmem:[#allocation2 + $0xb8] sm:$0xff]
  %v555 = vld [vmem:[#allocation2 + $0xc0] sm:$0xff]
  %v556 = vld [vmem:[#allocation2 + $0xc8] sm:$0xff]
  %v557 = vld [vmem:[#allocation2 + $0xd0] sm:$0xff]
  %v558 = vld [vmem:[#allocation2 + $0xd8] sm:$0xff]
  %v559 = vld [vmem:[#allocation2 + $0xe0] sm:$0xff]
  %v560 = vld [vmem:[#allocation2 + $0xe8] sm:$0xff]
  %v561 = vld [vmem:[#allocation2 + $0xf0] sm:$0xff]
  %v562 = vld [vmem:[#allocation2 + $0xf8] sm:$0xff]
  %v563 = vld [vmem:[#allocation2 + $0x100] sm:$0xff]
  %v564 = vld [vmem:[#allocation2 + $0x108] sm:$0xff]
  %v565 = vld [vmem:[#allocation2 + $0x110] sm:$0xff]
  %v566 = vld [vmem:[#allocation2 + $0x118] sm:$0xff]
  %v567 = vld [vmem:[#allocation2 + $0x120] sm:$0xff]
  %v568 = vld [vmem:[#allocation2 + $0x128] sm:$0xff]
  %v569 = vld [vmem:[#allocation2 + $0x130] sm:$0xff]
  %v570 = vld [vmem:[#allocation2 + $0x138] sm:$0xff]
  %v571 = vld [vmem:[#allocation2 + $0x140] sm:$0xff]
  %v572 = vld [vmem:[#allocation2 + $0x148] sm:$0xff]
  %v573 = vld [vmem:[#allocation2 + $0x150] sm:$0xff]
  %v574 = vld [vmem:[#allocation2 + $0x158] sm:$0xff]
  %v575 = vld [vmem:[#allocation2 + $0x160] sm:$0xff]
  %v576 = vld [vmem:[#allocation2 + $0x168] sm:$0xff]
  %v577 = vld [vmem:[#allocation2 + $0x170] sm:$0xff]
  %v578 = vld [vmem:[#allocation2 + $0x178] sm:$0xff]
  %v579 = vld [vmem:[#allocation2 + $0x180] sm:$0xff]
  %v580 = vld [vmem:[#allocation2 + $0x188] sm:$0xff]
  %v581 = vld [vmem:[#allocation2 + $0x190] sm:$0xff]
  %v582 = vld [vmem:[#allocation2 + $0x198] sm:$0xff]
  %v583 = vld [vmem:[#allocation2 + $0x1a0] sm:$0xff]
  %v584 = vld [vmem:[#allocation2 + $0x1a8] sm:$0xff]
  %v585 = vld [vmem:[#allocation2 + $0x1b0] sm:$0xff]
  %v586 = vld [vmem:[#allocation2 + $0x1b8] sm:$0xff]
  %v587 = vld [vmem:[#allocation2 + $0x1c0] sm:$0xff]
  %v588 = vld [vmem:[#allocation2 + $0x1c8] sm:$0xff]
  %v589 = vld [vmem:[#allocation2 + $0x1d0] sm:$0xff]
  %v590 = vld [vmem:[#allocation2 + $0x1d8] sm:$0xff]
  %v591 = vld [vmem:[#allocation2 + $0x1e0] sm:$0xff]
  %v592 = vld [vmem:[#allocation2 + $0x1e8] sm:$0xff]
  %v593 = vld [vmem:[#allocation2 + $0x1f0] sm:$0xff]
  %v594 = vld [vmem:[#allocation2 + $0x1f8] sm:$0xff]
  %v595 = vld [vmem:[#allocation2 + $0x200] sm:$0xff]
  %v596 = vld [vmem:[#allocation2 + $0x208] sm:$0xff]
  %v597 = vld [vmem:[#allocation2 + $0x210] sm:$0xff]
  %v598 = vld [vmem:[#allocation2 + $0x218] sm:$0xff]
  %v599 = vld [vmem:[#allocation2 + $0x220] sm:$0xff]
  %v600 = vld [vmem:[#allocation2 + $0x228] sm:$0xff]
  %v601 = vld [vmem:[#allocation2 + $0x230] sm:$0xff]
  %v602 = vld [vmem:[#allocation2 + $0x238] sm:$0xff]
  %v603 = vld [vmem:[#allocation2 + $0x240] sm:$0xff]
  %v604 = vld [vmem:[#allocation2 + $0x248] sm:$0xff]
  %v605 = vld [vmem:[#allocation2 + $0x250] sm:$0xff]
  %v606 = vld [vmem:[#allocation2 + $0x258] sm:$0xff]
  %v607 = vld [vmem:[#allocation2 + $0x260] sm:$0xff]
  %v608 = vld [vmem:[#allocation2 + $0x268] sm:$0xff]
  %v609 = vld [vmem:[#allocation2 + $0x270] sm:$0xff]
  %v610 = vld [vmem:[#allocation2 + $0x278] sm:$0xff]
  %v611 = vld [vmem:[#allocation2 + $0x280] sm:$0xff]
  %v612 = vld [vmem:[#allocation2 + $0x288] sm:$0xff]
  %v613 = vld [vmem:[#allocation2 + $0x290] sm:$0xff]
  %v614 = vld [vmem:[#allocation2 + $0x298] sm:$0xff]
  %v615 = vld [vmem:[#allocation2 + $0x2a0] sm:$0xff]
  %v616 = vld [vmem:[#allocation2 + $0x2a8] sm:$0xff]
  %v617 = vld [vmem:[#allocation2 + $0x2b0] sm:$0xff]
  %v618 = vld [vmem:[#allocation2 + $0x2b8] sm:$0xff]
  %v619 = vld [vmem:[#allocation2 + $0x2c0] sm:$0xff]
  %v620 = vld [vmem:[#allocation2 + $0x2c8] sm:$0xff]
  %v621 = vld [vmem:[#allocation2 + $0x2d0] sm:$0xff]
  %v622 = vld [vmem:[#allocation2 + $0x2d8] sm:$0xff]
  %v623 = vld [vmem:[#allocation2 + $0x2e0] sm:$0xff]
  %v624 = vld [vmem:[#allocation2 + $0x2e8] sm:$0xff]
  %v625 = vld [vmem:[#allocation2 + $0x2f0] sm:$0xff]
  %v626 = vld [vmem:[#allocation2 + $0x2f8] sm:$0xff]
  %v627 = vld [vmem:[#allocation2 + $0x300] sm:$0xff]
  %v628 = vld [vmem:[#allocation2 + $0x308] sm:$0xff]
  %v629 = vld [vmem:[#allocation2 + $0x310] sm:$0xff]
  %v630 = vld [vmem:[#allocation2 + $0x318] sm:$0xff]
  %v631 = vld [vmem:[#allocation2 + $0x320] sm:$0xff]
  %v632 = vld [vmem:[#allocation2 + $0x328] sm:$0xff]
  %v633 = vld [vmem:[#allocation2 + $0x330] sm:$0xff]
  %v634 = vld [vmem:[#allocation2 + $0x338] sm:$0xff]
  %v635 = vld [vmem:[#allocation2 + $0x340] sm:$0xff]
  %v636 = vld [vmem:[#allocation2 + $0x348] sm:$0xff]
  %v637 = vld [vmem:[#allocation2 + $0x350] sm:$0xff]
  %v638 = vld [vmem:[#allocation2 + $0x358] sm:$0xff]
  %v639 = vld [vmem:[#allocation2 + $0x360] sm:$0xff]
  %v640 = vld [vmem:[#allocation2 + $0x368] sm:$0xff]
  %v641 = vld [vmem:[#allocation2 + $0x370] sm:$0xff]
  %v642 = vld [vmem:[#allocation2 + $0x378] sm:$0xff]
  %v643 = vld [vmem:[#allocation2 + $0x380] sm:$0xff]
  %v644 = vld [vmem:[#allocation2 + $0x388] sm:$0xff]
  %v645 = vld [vmem:[#allocation2 + $0x390] sm:$0xff]
  %v646 = vld [vmem:[#allocation2 + $0x398] sm:$0xff]
  %v647 = vld [vmem:[#allocation2 + $0x3a0] sm:$0xff]
  %v648 = vld [vmem:[#allocation2 + $0x3a8] sm:$0xff]
  %v649 = vld [vmem:[#allocation2 + $0x3b0] sm:$0xff]
  %v650 = vld [vmem:[#allocation2 + $0x3b8] sm:$0xff]
  %v651 = vld [vmem:[#allocation2 + $0x3c0] sm:$0xff]
  %v652 = vld [vmem:[#allocation2 + $0x3c8] sm:$0xff]
  %v653 = vld [vmem:[#allocation2 + $0x3d0] sm:$0xff]
  %v654 = vld [vmem:[#allocation2 + $0x3d8] sm:$0xff]
  %v655 = vld [vmem:[#allocation2 + $0x3e0] sm:$0xff]
  %v656 = vld [vmem:[#allocation2 + $0x3e8] sm:$0xff]
  %v657 = vld [vmem:[#allocation2 + $0x3f0] sm:$0xff]
  %v658 = vld [vmem:[#allocation2 + $0x3f8] sm:$0xff]
  %v659 = vld [vmem:[#allocation2 + $0x400] sm:$0xff]
  %v660 = vld [vmem:[#allocation2 + $0x408] sm:$0xff]
  %v661 = vld [vmem:[#allocation2 + $0x410] sm:$0xff]
  %v662 = vld [vmem:[#allocation2 + $0x418] sm:$0xff]
  %v663 = vld [vmem:[#allocation2 + $0x420] sm:$0xff]
  %v664 = vld [vmem:[#allocation2 + $0x428] sm:$0xff]
  %v665 = vld [vmem:[#allocation2 + $0x430] sm:$0xff]
  %v666 = vld [vmem:[#allocation2 + $0x438] sm:$0xff]
  %v667 = vld [vmem:[#allocation2 + $0x440] sm:$0xff]
  %v668 = vld [vmem:[#allocation2 + $0x448] sm:$0xff]
  %v669 = vld [vmem:[#allocation2 + $0x450] sm:$0xff]
  %v670 = vld [vmem:[#allocation2 + $0x458] sm:$0xff]
  %v671 = vld [vmem:[#allocation2 + $0x460] sm:$0xff]
  %v672 = vld [vmem:[#allocation2 + $0x468] sm:$0xff]
  %v673 = vld [vmem:[#allocation2 + $0x470] sm:$0xff]
  %v674 = vld [vmem:[#allocation2 + $0x478] sm:$0xff]
  %v675 = vld [vmem:[#allocation2 + $0x480] sm:$0xff]
  %v676 = vld [vmem:[#allocation2 + $0x488] sm:$0xff]
  %v677 = vld [vmem:[#allocation2 + $0x490] sm:$0xff]
  %v678 = vld [vmem:[#allocation2 + $0x498] sm:$0xff]
  %v679 = vld [vmem:[#allocation2 + $0x4a0] sm:$0xff]
  %v680 = vld [vmem:[#allocation2 + $0x4a8] sm:$0xff]
  %v681 = vld [vmem:[#allocation2 + $0x4b0] sm:$0xff]
  %v682 = vld [vmem:[#allocation2 + $0x4b8] sm:$0xff]
  %v683 = vld [vmem:[#allocation2 + $0x4c0] sm:$0xff]
  %v684 = vld [vmem:[#allocation2 + $0x4c8] sm:$0xff]
  %v685 = vld [vmem:[#allocation2 + $0x4d0] sm:$0xff]
  %v686 = vld [vmem:[#allocation2 + $0x4d8] sm:$0xff]
  %v687 = vld [vmem:[#allocation2 + $0x4e0] sm:$0xff]
  %v688 = vld [vmem:[#allocation2 + $0x4e8] sm:$0xff]
  %v689 = vld [vmem:[#allocation2 + $0x4f0] sm:$0xff]
  %v690 = vld [vmem:[#allocation2 + $0x4f8] sm:$0xff]
  %v691 = vld [vmem:[#allocation2 + $0x500] sm:$0xff]
  %v692 = vld [vmem:[#allocation2 + $0x508] sm:$0xff]
  %v693 = vld [vmem:[#allocation2 + $0x510] sm:$0xff]
  %v694 = vld [vmem:[#allocation2 + $0x518] sm:$0xff]
  %v695 = vld [vmem:[#allocation2 + $0x520] sm:$0xff]
  %v696 = vld [vmem:[#allocation2 + $0x528] sm:$0xff]
  %v697 = vld [vmem:[#allocation2 + $0x530] sm:$0xff]
  %v698 = vld [vmem:[#allocation2 + $0x538] sm:$0xff]
  %v699 = vld [vmem:[#allocation2 + $0x540] sm:$0xff]
  %v700 = vld [vmem:[#allocation2 + $0x548] sm:$0xff]
  %v701 = vld [vmem:[#allocation2 + $0x550] sm:$0xff]
  %v702 = vld [vmem:[#allocation2 + $0x558] sm:$0xff]
  %v703 = vld [vmem:[#allocation2 + $0x560] sm:$0xff]
  %v704 = vld [vmem:[#allocation2 + $0x568] sm:$0xff]
  %v705 = vld [vmem:[#allocation2 + $0x570] sm:$0xff]
  %v706 = vld [vmem:[#allocation2 + $0x578] sm:$0xff]
  %v707 = vld [vmem:[#allocation2 + $0x580] sm:$0xff]
  %v708 = vld [vmem:[#allocation2 + $0x588] sm:$0xff]
  %v709 = vld [vmem:[#allocation2 + $0x590] sm:$0xff]
  %v710 = vld [vmem:[#allocation2 + $0x598] sm:$0xff]
  %v711 = vld [vmem:[#allocation2 + $0x5a0] sm:$0xff]
  %v712 = vld [vmem:[#allocation2 + $0x5a8] sm:$0xff]
  %v713 = vld [vmem:[#allocation2 + $0x5b0] sm:$0xff]
  %v714 = vld [vmem:[#allocation2 + $0x5b8] sm:$0xff]
  %v715 = vld [vmem:[#allocation2 + $0x5c0] sm:$0xff]
  %v716 = vld [vmem:[#allocation2 + $0x5c8] sm:$0xff]
  %v717 = vld [vmem:[#allocation2 + $0x5d0] sm:$0xff]
  %v718 = vld [vmem:[#allocation2 + $0x5d8] sm:$0xff]
  %v719 = vld [vmem:[#allocation2 + $0x5e0] sm:$0xff]
  %v720 = vld [vmem:[#allocation2 + $0x5e8] sm:$0xff]
  %v721 = vld [vmem:[#allocation2 + $0x5f0] sm:$0xff]
  %v722 = vld [vmem:[#allocation2 + $0x5f8] sm:$0xff]
  %v723 = vld [vmem:[#allocation2 + $0x600] sm:$0xff]
  %v724 = vld [vmem:[#allocation2 + $0x608] sm:$0xff]
  %v725 = vld [vmem:[#allocation2 + $0x610] sm:$0xff]
  %v726 = vld [vmem:[#allocation2 + $0x618] sm:$0xff]
  %v727 = vld [vmem:[#allocation2 + $0x620] sm:$0xff]
  %v728 = vld [vmem:[#allocation2 + $0x628] sm:$0xff]
  %v729 = vld [vmem:[#allocation2 + $0x630] sm:$0xff]
  %v730 = vld [vmem:[#allocation2 + $0x638] sm:$0xff]
  %v731 = vld [vmem:[#allocation2 + $0x640] sm:$0xff]
  %v732 = vld [vmem:[#allocation2 + $0x648] sm:$0xff]
  %v733 = vld [vmem:[#allocation2 + $0x650] sm:$0xff]
  %v734 = vld [vmem:[#allocation2 + $0x658] sm:$0xff]
  %v735 = vld [vmem:[#allocation2 + $0x660] sm:$0xff]
  %v736 = vld [vmem:[#allocation2 + $0x668] sm:$0xff]
  %v737 = vld [vmem:[#allocation2 + $0x670] sm:$0xff]
  %v738 = vld [vmem:[#allocation2 + $0x678] sm:$0xff]
  %v739 = vld [vmem:[#allocation2 + $0x680] sm:$0xff]
  %v740 = vld [vmem:[#allocation2 + $0x688] sm:$0xff]
  %v741 = vld [vmem:[#allocation2 + $0x690] sm:$0xff]
  %v742 = vld [vmem:[#allocation2 + $0x698] sm:$0xff]
  %v743 = vld [vmem:[#allocation2 + $0x6a0] sm:$0xff]
  %v744 = vld [vmem:[#allocation2 + $0x6a8] sm:$0xff]
  %v745 = vld [vmem:[#allocation2 + $0x6b0] sm:$0xff]
  %v746 = vld [vmem:[#allocation2 + $0x6b8] sm:$0xff]
  %v747 = vld [vmem:[#allocation2 + $0x6c0] sm:$0xff]
  %v748 = vld [vmem:[#allocation2 + $0x6c8] sm:$0xff]
  %v749 = vld [vmem:[#allocation2 + $0x6d0] sm:$0xff]
  %v750 = vld [vmem:[#allocation2 + $0x6d8] sm:$0xff]
  %v751 = vld [vmem:[#allocation2 + $0x6e0] sm:$0xff]
  %v752 = vld [vmem:[#allocation2 + $0x6e8] sm:$0xff]
  %v753 = vld [vmem:[#allocation2 + $0x6f0] sm:$0xff]
  %v754 = vld [vmem:[#allocation2 + $0x6f8] sm:$0xff]
  %v755 = vld [vmem:[#allocation2 + $0x700] sm:$0xff]
  %v756 = vld [vmem:[#allocation2 + $0x708] sm:$0xff]
  %v757 = vld [vmem:[#allocation2 + $0x710] sm:$0xff]
  %v758 = vld [vmem:[#allocation2 + $0x718] sm:$0xff]
  %v759 = vld [vmem:[#allocation2 + $0x720] sm:$0xff]
  %v760 = vld [vmem:[#allocation2 + $0x728] sm:$0xff]
  %v761 = vld [vmem:[#allocation2 + $0x730] sm:$0xff]
  %v762 = vld [vmem:[#allocation2 + $0x738] sm:$0xff]
  %v763 = vld [vmem:[#allocation2 + $0x740] sm:$0xff]
  %v764 = vld [vmem:[#allocation2 + $0x748] sm:$0xff]
  %v765 = vld [vmem:[#allocation2 + $0x750] sm:$0xff]
  %v766 = vld [vmem:[#allocation2 + $0x758] sm:$0xff]
  %v767 = vld [vmem:[#allocation2 + $0x760] sm:$0xff]
  %v768 = vld [vmem:[#allocation2 + $0x768] sm:$0xff]
  %v769 = vld [vmem:[#allocation2 + $0x770] sm:$0xff]
  %v770 = vld [vmem:[#allocation2 + $0x778] sm:$0xff]
  %v771 = vld [vmem:[#allocation2 + $0x780] sm:$0xff]
  %v772 = vld [vmem:[#allocation2 + $0x788] sm:$0xff]
  %v773 = vld [vmem:[#allocation2 + $0x790] sm:$0xff]
  %v774 = vld [vmem:[#allocation2 + $0x798] sm:$0xff]
  %v775 = vld [vmem:[#allocation2 + $0x7a0] sm:$0xff]
  %v776 = vld [vmem:[#allocation2 + $0x7a8] sm:$0xff]
  %v777 = vld [vmem:[#allocation2 + $0x7b0] sm:$0xff]
  %v778 = vld [vmem:[#allocation2 + $0x7b8] sm:$0xff]
  %v779 = vld [vmem:[#allocation2 + $0x7c0] sm:$0xff]
  %v780 = vld [vmem:[#allocation2 + $0x7c8] sm:$0xff]
  %v781 = vld [vmem:[#allocation2 + $0x7d0] sm:$0xff]
  %v782 = vld [vmem:[#allocation2 + $0x7d8] sm:$0xff]
  %v783 = vld [vmem:[#allocation2 + $0x7e0] sm:$0xff]
  %v784 = vld [vmem:[#allocation2 + $0x7e8] sm:$0xff]
  %v785 = vld [vmem:[#allocation2 + $0x7f0] sm:$0xff]
  %v786 = vld [vmem:[#allocation2 + $0x7f8] sm:$0xff]
  %v787 = vld [vmem:[#allocation2 + $0x800] sm:$0xff]
  %v788 = vld [vmem:[#allocation2 + $0x808] sm:$0xff]
  %v789 = vld [vmem:[#allocation2 + $0x810] sm:$0xff]
  %v790 = vld [vmem:[#allocation2 + $0x818] sm:$0xff]
  %v791 = vld [vmem:[#allocation2 + $0x820] sm:$0xff]
  %v792 = vld [vmem:[#allocation2 + $0x828] sm:$0xff]
  %v793 = vld [vmem:[#allocation2 + $0x830] sm:$0xff]
  %v794 = vld [vmem:[#allocation2 + $0x838] sm:$0xff]
  %v795 = vld [vmem:[#allocation2 + $0x840] sm:$0xff]
  %v796 = vld [vmem:[#allocation2 + $0x848] sm:$0xff]
  %v797 = vld [vmem:[#allocation2 + $0x850] sm:$0xff]
  %v798 = vld [vmem:[#allocation2 + $0x858] sm:$0xff]
  %v799 = vld [vmem:[#allocation2 + $0x860] sm:$0xff]
  %v800 = vld [vmem:[#allocation2 + $0x868] sm:$0xff]
  %v801 = vld [vmem:[#allocation2 + $0x870] sm:$0xff]
  %v802 = vld [vmem:[#allocation2 + $0x878] sm:$0xff]
  %v803 = vld [vmem:[#allocation2 + $0x880] sm:$0xff]
  %v804 = vld [vmem:[#allocation2 + $0x888] sm:$0xff]
  %v805 = vld [vmem:[#allocation2 + $0x890] sm:$0xff]
  %v806 = vld [vmem:[#allocation2 + $0x898] sm:$0xff]
  %v807 = vld [vmem:[#allocation2 + $0x8a0] sm:$0xff]
  %v808 = vld [vmem:[#allocation2 + $0x8a8] sm:$0xff]
  %v809 = vld [vmem:[#allocation2 + $0x8b0] sm:$0xff]
  %v810 = vld [vmem:[#allocation2 + $0x8b8] sm:$0xff]
  %v811 = vld [vmem:[#allocation2 + $0x8c0] sm:$0xff]
  %v812 = vld [vmem:[#allocation2 + $0x8c8] sm:$0xff]
  %v813 = vld [vmem:[#allocation2 + $0x8d0] sm:$0xff]
  %v814 = vld [vmem:[#allocation2 + $0x8d8] sm:$0xff]
  %v815 = vld [vmem:[#allocation2 + $0x8e0] sm:$0xff]
  %v816 = vld [vmem:[#allocation2 + $0x8e8] sm:$0xff]
  %v817 = vld [vmem:[#allocation2 + $0x8f0] sm:$0xff]
  %v818 = vld [vmem:[#allocation2 + $0x8f8] sm:$0xff]
  %v819 = vld [vmem:[#allocation2 + $0x900] sm:$0xff]
  %v820 = vld [vmem:[#allocation2 + $0x908] sm:$0xff]
  %v821 = vld [vmem:[#allocation2 + $0x910] sm:$0xff]
  %v822 = vld [vmem:[#allocation2 + $0x918] sm:$0xff]
  %v823 = vld [vmem:[#allocation2 + $0x920] sm:$0xff]
  %v824 = vld [vmem:[#allocation2 + $0x928] sm:$0xff]
  %v825 = vld [vmem:[#allocation2 + $0x930] sm:$0xff]
  %v826 = vld [vmem:[#allocation2 + $0x938] sm:$0xff]
  %v827 = vld [vmem:[#allocation2 + $0x940] sm:$0xff]
  %v828 = vld [vmem:[#allocation2 + $0x948] sm:$0xff]
  %v829 = vld [vmem:[#allocation2 + $0x950] sm:$0xff]
  %v830 = vld [vmem:[#allocation2 + $0x958] sm:$0xff]
  %v831 = vld [vmem:[#allocation2 + $0x960] sm:$0xff]
  %v832 = vld [vmem:[#allocation2 + $0x968] sm:$0xff]
  %v833 = vld [vmem:[#allocation2 + $0x970] sm:$0xff]
  %v834 = vld [vmem:[#allocation2 + $0x978] sm:$0xff]
  %v835 = vld [vmem:[#allocation2 + $0x980] sm:$0xff]
  %v836 = vld [vmem:[#allocation2 + $0x988] sm:$0xff]
  %v837 = vld [vmem:[#allocation2 + $0x990] sm:$0xff]
  %v838 = vld [vmem:[#allocation2 + $0x998] sm:$0xff]
  %v839 = vld [vmem:[#allocation2 + $0x9a0] sm:$0xff]
  %v840 = vld [vmem:[#allocation2 + $0x9a8] sm:$0xff]
  %v841 = vld [vmem:[#allocation2 + $0x9b0] sm:$0xff]
  %v842 = vld [vmem:[#allocation2 + $0x9b8] sm:$0xff]
  %v843 = vld [vmem:[#allocation2 + $0x9c0] sm:$0xff]
  %v844 = vld [vmem:[#allocation2 + $0x9c8] sm:$0xff]
  %v845 = vld [vmem:[#allocation2 + $0x9d0] sm:$0xff]
  %v846 = vld [vmem:[#allocation2 + $0x9d8] sm:$0xff]
  %v847 = vld [vmem:[#allocation2 + $0x9e0] sm:$0xff]
  %v848 = vld [vmem:[#allocation2 + $0x9e8] sm:$0xff]
  %v849 = vld [vmem:[#allocation2 + $0x9f0] sm:$0xff]
  %v850 = vld [vmem:[#allocation2 + $0x9f8] sm:$0xff]
  %v851 = vld [vmem:[#allocation2 + $0xa00] sm:$0xff]
  %v852 = vld [vmem:[#allocation2 + $0xa08] sm:$0xff]
  %v853 = vld [vmem:[#allocation2 + $0xa10] sm:$0xff]
  %v854 = vld [vmem:[#allocation2 + $0xa18] sm:$0xff]
  %v855 = vld [vmem:[#allocation2 + $0xa20] sm:$0xff]
  %v856 = vld [vmem:[#allocation2 + $0xa28] sm:$0xff]
  %v857 = vld [vmem:[#allocation2 + $0xa30] sm:$0xff]
  %v858 = vld [vmem:[#allocation2 + $0xa38] sm:$0xff]
  %v859 = vld [vmem:[#allocation2 + $0xa40] sm:$0xff]
  %v860 = vld [vmem:[#allocation2 + $0xa48] sm:$0xff]
  %v861 = vld [vmem:[#allocation2 + $0xa50] sm:$0xff]
  %v862 = vld [vmem:[#allocation2 + $0xa58] sm:$0xff]
  %v863 = vld [vmem:[#allocation2 + $0xa60] sm:$0xff]
  %v864 = vld [vmem:[#allocation2 + $0xa68] sm:$0xff]
  %v865 = vld [vmem:[#allocation2 + $0xa70] sm:$0xff]
  %v866 = vld [vmem:[#allocation2 + $0xa78] sm:$0xff]
  %v867 = vld [vmem:[#allocation2 + $0xa80] sm:$0xff]
  %v868 = vld [vmem:[#allocation2 + $0xa88] sm:$0xff]
  %v869 = vld [vmem:[#allocation2 + $0xa90] sm:$0xff]
  %v870 = vld [vmem:[#allocation2 + $0xa98] sm:$0xff]
  %v871 = vld [vmem:[#allocation2 + $0xaa0] sm:$0xff]
  %v872 = vld [vmem:[#allocation2 + $0xaa8] sm:$0xff]
  %v873 = vld [vmem:[#allocation2 + $0xab0] sm:$0xff]
  %v874 = vld [vmem:[#allocation2 + $0xab8] sm:$0xff]
  %v875 = vld [vmem:[#allocation2 + $0xac0] sm:$0xff]
  %v876 = vld [vmem:[#allocation2 + $0xac8] sm:$0xff]
  %v877 = vld [vmem:[#allocation2 + $0xad0] sm:$0xff]
  %v878 = vld [vmem:[#allocation2 + $0xad8] sm:$0xff]
  %v879 = vld [vmem:[#allocation2 + $0xae0] sm:$0xff]
  %v880 = vld [vmem:[#allocation2 + $0xae8] sm:$0xff]
  %v881 = vld [vmem:[#allocation2 + $0xaf0] sm:$0xff]
  %v882 = vld [vmem:[#allocation2 + $0xaf8] sm:$0xff]
  %v883 = vld [vmem:[#allocation2 + $0xb00] sm:$0xff]
  %v884 = vld [vmem:[#allocation2 + $0xb08] sm:$0xff]
  %v885 = vld [vmem:[#allocation2 + $0xb10] sm:$0xff]
  %v886 = vld [vmem:[#allocation2 + $0xb18] sm:$0xff]
  %v887 = vld [vmem:[#allocation2 + $0xb20] sm:$0xff]
  %v888 = vld [vmem:[#allocation2 + $0xb28] sm:$0xff]
  %v889 = vld [vmem:[#allocation2 + $0xb30] sm:$0xff]
  %v890 = vld [vmem:[#allocation2 + $0xb38] sm:$0xff]
  %v891 = vld [vmem:[#allocation2 + $0xb40] sm:$0xff]
  %v892 = vld [vmem:[#allocation2 + $0xb48] sm:$0xff]
  %v893 = vld [vmem:[#allocation2 + $0xb50] sm:$0xff]
  %v894 = vld [vmem:[#allocation2 + $0xb58] sm:$0xff]
  %v895 = vld [vmem:[#allocation2 + $0xb60] sm:$0xff]
  %v896 = vld [vmem:[#allocation2 + $0xb68] sm:$0xff]
  %v897 = vld [vmem:[#allocation2 + $0xb70] sm:$0xff]
  %v898 = vld [vmem:[#allocation2 + $0xb78] sm:$0xff]
  %v899 = vld [vmem:[#allocation2 + $0xb80] sm:$0xff]
  %v900 = vld [vmem:[#allocation2 + $0xb88] sm:$0xff]
  %v901 = vld [vmem:[#allocation2 + $0xb90] sm:$0xff]
  %v902 = vld [vmem:[#allocation2 + $0xb98] sm:$0xff]
  %v903 = vld [vmem:[#allocation2 + $0xba0] sm:$0xff]
  %v904 = vld [vmem:[#allocation2 + $0xba8] sm:$0xff]
  %v905 = vld [vmem:[#allocation2 + $0xbb0] sm:$0xff]
  %v906 = vld [vmem:[#allocation2 + $0xbb8] sm:$0xff]
  %v907 = vld [vmem:[#allocation2 + $0xbc0] sm:$0xff]
  %v908 = vld [vmem:[#allocation2 + $0xbc8] sm:$0xff]
  %v909 = vld [vmem:[#allocation2 + $0xbd0] sm:$0xff]
  %v910 = vld [vmem:[#allocation2 + $0xbd8] sm:$0xff]
  %v911 = vld [vmem:[#allocation2 + $0xbe0] sm:$0xff]
  %v912 = vld [vmem:[#allocation2 + $0xbe8] sm:$0xff]
  %v913 = vld [vmem:[#allocation2 + $0xbf0] sm:$0xff]
  %v914 = vld [vmem:[#allocation2 + $0xbf8] sm:$0xff]
  %v915 = vld [vmem:[#allocation2 + $0xc00] sm:$0xff]
  %v916 = vld [vmem:[#allocation2 + $0xc08] sm:$0xff]
  %v917 = vld [vmem:[#allocation2 + $0xc10] sm:$0xff]
  %v918 = vld [vmem:[#allocation2 + $0xc18] sm:$0xff]
  %v919 = vld [vmem:[#allocation2 + $0xc20] sm:$0xff]
  %v920 = vld [vmem:[#allocation2 + $0xc28] sm:$0xff]
  %v921 = vld [vmem:[#allocation2 + $0xc30] sm:$0xff]
  %v922 = vld [vmem:[#allocation2 + $0xc38] sm:$0xff]
  %v923 = vld [vmem:[#allocation2 + $0xc40] sm:$0xff]
  %v924 = vld [vmem:[#allocation2 + $0xc48] sm:$0xff]
  %v925 = vld [vmem:[#allocation2 + $0xc50] sm:$0xff]
  %v926 = vld [vmem:[#allocation2 + $0xc58] sm:$0xff]
  %v927 = vld [vmem:[#allocation2 + $0xc60] sm:$0xff]
  %v928 = vld [vmem:[#allocation2 + $0xc68] sm:$0xff]
  %v929 = vld [vmem:[#allocation2 + $0xc70] sm:$0xff]
  %v930 = vld [vmem:[#allocation2 + $0xc78] sm:$0xff]
  %v931 = vld [vmem:[#allocation2 + $0xc80] sm:$0xff]
  %v932 = vld [vmem:[#allocation2 + $0xc88] sm:$0xff]
  %v933 = vld [vmem:[#allocation2 + $0xc90] sm:$0xff]
  %v934 = vld [vmem:[#allocation2 + $0xc98] sm:$0xff]
  %v935 = vld [vmem:[#allocation2 + $0xca0] sm:$0xff]
  %v936 = vld [vmem:[#allocation2 + $0xca8] sm:$0xff]
  %v937 = vld [vmem:[#allocation2 + $0xcb0] sm:$0xff]
  %v938 = vld [vmem:[#allocation2 + $0xcb8] sm:$0xff]
  %v939 = vld [vmem:[#allocation2 + $0xcc0] sm:$0xff]
  %v940 = vld [vmem:[#allocation2 + $0xcc8] sm:$0xff]
  %v941 = vld [vmem:[#allocation2 + $0xcd0] sm:$0xff]
  %v942 = vld [vmem:[#allocation2 + $0xcd8] sm:$0xff]
  %v943 = vld [vmem:[#allocation2 + $0xce0] sm:$0xff]
  %v944 = vld [vmem:[#allocation2 + $0xce8] sm:$0xff]
  %v945 = vld [vmem:[#allocation2 + $0xcf0] sm:$0xff]
  %v946 = vld [vmem:[#allocation2 + $0xcf8] sm:$0xff]
  %v947 = vld [vmem:[#allocation2 + $0xd00] sm:$0xff]
  %v948 = vld [vmem:[#allocation2 + $0xd08] sm:$0xff]
  %v949 = vld [vmem:[#allocation2 + $0xd10] sm:$0xff]
  %v950 = vld [vmem:[#allocation2 + $0xd18] sm:$0xff]
  %v951 = vld [vmem:[#allocation2 + $0xd20] sm:$0xff]
  %v952 = vld [vmem:[#allocation2 + $0xd28] sm:$0xff]
  %v953 = vld [vmem:[#allocation2 + $0xd30] sm:$0xff]
  %v954 = vld [vmem:[#allocation2 + $0xd38] sm:$0xff]
  %v955 = vld [vmem:[#allocation2 + $0xd40] sm:$0xff]
  %v956 = vld [vmem:[#allocation2 + $0xd48] sm:$0xff]
  %v957 = vld [vmem:[#allocation2 + $0xd50] sm:$0xff]
  %v958 = vld [vmem:[#allocation2 + $0xd58] sm:$0xff]
  %v959 = vld [vmem:[#allocation2 + $0xd60] sm:$0xff]
  %v960 = vld [vmem:[#allocation2 + $0xd68] sm:$0xff]
  %v961 = vld [vmem:[#allocation2 + $0xd70] sm:$0xff]
  %v962 = vld [vmem:[#allocation2 + $0xd78] sm:$0xff]
  %v963 = vld [vmem:[#allocation2 + $0xd80] sm:$0xff]
  %v964 = vld [vmem:[#allocation2 + $0xd88] sm:$0xff]
  %v965 = vld [vmem:[#allocation2 + $0xd90] sm:$0xff]
  %v966 = vld [vmem:[#allocation2 + $0xd98] sm:$0xff]
  %v967 = vld [vmem:[#allocation2 + $0xda0] sm:$0xff]
  %v968 = vld [vmem:[#allocation2 + $0xda8] sm:$0xff]
  %v969 = vld [vmem:[#allocation2 + $0xdb0] sm:$0xff]
  %v970 = vld [vmem:[#allocation2 + $0xdb8] sm:$0xff]
  %v971 = vld [vmem:[#allocation2 + $0xdc0] sm:$0xff]
  %v972 = vld [vmem:[#allocation2 + $0xdc8] sm:$0xff]
  %v973 = vld [vmem:[#allocation2 + $0xdd0] sm:$0xff]
  %v974 = vld [vmem:[#allocation2 + $0xdd8] sm:$0xff]
  %v975 = vld [vmem:[#allocation2 + $0xde0] sm:$0xff]
  %v976 = vld [vmem:[#allocation2 + $0xde8] sm:$0xff]
  %v977 = vld [vmem:[#allocation2 + $0xdf0] sm:$0xff]
  %v978 = vld [vmem:[#allocation2 + $0xdf8] sm:$0xff]
  %v979 = vld [vmem:[#allocation2 + $0xe00] sm:$0xff]
  %v980 = vld [vmem:[#allocation2 + $0xe08] sm:$0xff]
  %v981 = vld [vmem:[#allocation2 + $0xe10] sm:$0xff]
  %v982 = vld [vmem:[#allocation2 + $0xe18] sm:$0xff]
  %v983 = vld [vmem:[#allocation2 + $0xe20] sm:$0xff]
  %v984 = vld [vmem:[#allocation2 + $0xe28] sm:$0xff]
  %v985 = vld [vmem:[#allocation2 + $0xe30] sm:$0xff]
  %v986 = vld [vmem:[#allocation2 + $0xe38] sm:$0xff]
  %v987 = vld [vmem:[#allocation2 + $0xe40] sm:$0xff]
  %v988 = vld [vmem:[#allocation2 + $0xe48] sm:$0xff]
  %v989 = vld [vmem:[#allocation2 + $0xe50] sm:$0xff]
  %v990 = vld [vmem:[#allocation2 + $0xe58] sm:$0xff]
  %v991 = vld [vmem:[#allocation2 + $0xe60] sm:$0xff]
  %v992 = vld [vmem:[#allocation2 + $0xe68] sm:$0xff]
  %v993 = vld [vmem:[#allocation2 + $0xe70] sm:$0xff]
  %v994 = vld [vmem:[#allocation2 + $0xe78] sm:$0xff]
  %v995 = vld [vmem:[#allocation2 + $0xe80] sm:$0xff]
  %v996 = vld [vmem:[#allocation2 + $0xe88] sm:$0xff]
  %v997 = vld [vmem:[#allocation2 + $0xe90] sm:$0xff]
  %v998 = vld [vmem:[#allocation2 + $0xe98] sm:$0xff]
  %v999 = vld [vmem:[#allocation2 + $0xea0] sm:$0xff]
  %v1000 = vld [vmem:[#allocation2 + $0xea8] sm:$0xff]
  %v1001 = vld [vmem:[#allocation2 + $0xeb0] sm:$0xff]
  %v1002 = vld [vmem:[#allocation2 + $0xeb8] sm:$0xff]
  %v1003 = vld [vmem:[#allocation2 + $0xec0] sm:$0xff]
  %v1004 = vld [vmem:[#allocation2 + $0xec8] sm:$0xff]
  %v1005 = vld [vmem:[#allocation2 + $0xed0] sm:$0xff]
  %v1006 = vld [vmem:[#allocation2 + $0xed8] sm:$0xff]
  %v1007 = vld [vmem:[#allocation2 + $0xee0] sm:$0xff]
  %v1008 = vld [vmem:[#allocation2 + $0xee8] sm:$0xff]
  %v1009 = vld [vmem:[#allocation2 + $0xef0] sm:$0xff]
  %v1010 = vld [vmem:[#allocation2 + $0xef8] sm:$0xff]
  %v1011 = vld [vmem:[#allocation2 + $0xf00] sm:$0xff]
  %v1012 = vld [vmem:[#allocation2 + $0xf08] sm:$0xff]
  %v1013 = vld [vmem:[#allocation2 + $0xf10] sm:$0xff]
  %v1014 = vld [vmem:[#allocation2 + $0xf18] sm:$0xff]
  %v1015 = vld [vmem:[#allocation2 + $0xf20] sm:$0xff]
  %v1016 = vld [vmem:[#allocation2 + $0xf28] sm:$0xff]
  %v1017 = vld [vmem:[#allocation2 + $0xf30] sm:$0xff]
  %v1018 = vld [vmem:[#allocation2 + $0xf38] sm:$0xff]
  %v1019 = vld [vmem:[#allocation2 + $0xf40] sm:$0xff]
  %v1020 = vld [vmem:[#allocation2 + $0xf48] sm:$0xff]
  %v1021 = vld [vmem:[#allocation2 + $0xf50] sm:$0xff]
  %v1022 = vld [vmem:[#allocation2 + $0xf58] sm:$0xff]
  %v1023 = vld [vmem:[#allocation2 + $0xf60] sm:$0xff]
  %v1024 = vld [vmem:[#allocation2 + $0xf68] sm:$0xff]
  %v1025 = vld [vmem:[#allocation2 + $0xf70] sm:$0xff]
  %v1026 = vld [vmem:[#allocation2 + $0xf78] sm:$0xff]
  %v1027 = vld [vmem:[#allocation2 + $0xf80] sm:$0xff]
  %v1028 = vld [vmem:[#allocation2 + $0xf88] sm:$0xff]
  %v1029 = vld [vmem:[#allocation2 + $0xf90] sm:$0xff]
  %v1030 = vld [vmem:[#allocation2 + $0xf98] sm:$0xff]
  %v1031 = vld [vmem:[#allocation2 + $0xfa0] sm:$0xff]
  %v1032 = vld [vmem:[#allocation2 + $0xfa8] sm:$0xff]
  %v1033 = vld [vmem:[#allocation2 + $0xfb0] sm:$0xff]
  %v1034 = vld [vmem:[#allocation2 + $0xfb8] sm:$0xff]
  %v1035 = vld [vmem:[#allocation2 + $0xfc0] sm:$0xff]
  %v1036 = vld [vmem:[#allocation2 + $0xfc8] sm:$0xff]
  %v1037 = vld [vmem:[#allocation2 + $0xfd0] sm:$0xff]
  %v1038 = vld [vmem:[#allocation2 + $0xfd8] sm:$0xff]
  %v1039 = vld [vmem:[#allocation2 + $0xfe0] sm:$0xff]
  %v1040 = vld [vmem:[#allocation2 + $0xfe8] sm:$0xff]
  %v1041 = vld [vmem:[#allocation2 + $0xff0] sm:$0xff]
  %v1042 = vld [vmem:[#allocation2 + $0xff8] sm:$0xff]
  %v1043 = vld [vmem:[%s0] sm:$0xf]
  %v1044 = vld [vmem:[%s0 + $0x4] sm:$0xf]
  %v1045 = vld [vmem:[%s0 + $0x8] sm:$0xf]
  %v1046 = vld [vmem:[%s0 + $0xc] sm:$0xf]
  %v1047 = vld [vmem:[%s0 + $0x10] sm:$0xf]
  %v1048 = vld [vmem:[%s0 + $0x14] sm:$0xf]
  %v1049 = vld [vmem:[%s0 + $0x18] sm:$0xf]
  %v1050 = vld [vmem:[%s0 + $0x1c] sm:$0xf]
  %v1051 = vld [vmem:[%s0 + $0x20] sm:$0xf]
  %v1052 = vld [vmem:[%s0 + $0x24] sm:$0xf]
  %v1053 = vld [vmem:[%s0 + $0x28] sm:$0xf]
  %v1054 = vld [vmem:[%s0 + $0x2c] sm:$0xf]
  %v1055 = vld [vmem:[%s0 + $0x30] sm:$0xf]
  %v1056 = vld [vmem:[%s0 + $0x34] sm:$0xf]
  %v1057 = vld [vmem:[%s0 + $0x38] sm:$0xf]
  %v1058 = vld [vmem:[%s0 + $0x3c] sm:$0xf]
  %v1059 = vld [vmem:[%s0 + $0x40] sm:$0xf]
  %v1060 = vld [vmem:[%s0 + $0x44] sm:$0xf]
  %v1061 = vld [vmem:[%s0 + $0x48] sm:$0xf]
  %v1062 = vld [vmem:[%s0 + $0x4c] sm:$0xf]
  %v1063 = vld [vmem:[%s0 + $0x50] sm:$0xf]
  %v1064 = vld [vmem:[%s0 + $0x54] sm:$0xf]
  %v1065 = vld [vmem:[%s0 + $0x58] sm:$0xf]
  %v1066 = vld [vmem:[%s0 + $0x5c] sm:$0xf]
  %v1067 = vld [vmem:[%s0 + $0x60] sm:$0xf]
  %v1068 = vld [vmem:[%s0 + $0x64] sm:$0xf]
  %v1069 = vld [vmem:[%s0 + $0x68] sm:$0xf]
  %v1070 = vld [vmem:[%s0 + $0x6c] sm:$0xf]
  %v1071 = vld [vmem:[%s0 + $0x70] sm:$0xf]
  %v1072 = vld [vmem:[%s0 + $0x74] sm:$0xf]
  %v1073 = vld [vmem:[%s0 + $0x78] sm:$0xf]
  %v1074 = vld [vmem:[%s0 + $0x7c] sm:$0xf]
  %v1075 = vld [vmem:[%s0 + $0x80] sm:$0xf]
  %v1076 = vld [vmem:[%s0 + $0x84] sm:$0xf]
  %v1077 = vld [vmem:[%s0 + $0x88] sm:$0xf]
  %v1078 = vld [vmem:[%s0 + $0x8c] sm:$0xf]
  %v1079 = vld [vmem:[%s0 + $0x90] sm:$0xf]
  %v1080 = vld [vmem:[%s0 + $0x94] sm:$0xf]
  %v1081 = vld [vmem:[%s0 + $0x98] sm:$0xf]
  %v1082 = vld [vmem:[%s0 + $0x9c] sm:$0xf]
  %v1083 = vld [vmem:[%s0 + $0xa0] sm:$0xf]
  %v1084 = vld [vmem:[%s0 + $0xa4] sm:$0xf]
  %v1085 = vld [vmem:[%s0 + $0xa8] sm:$0xf]
  %v1086 = vld [vmem:[%s0 + $0xac] sm:$0xf]
  %v1087 = vld [vmem:[%s0 + $0xb0] sm:$0xf]
  %v1088 = vld [vmem:[%s0 + $0xb4] sm:$0xf]
  %v1089 = vld [vmem:[%s0 + $0xb8] sm:$0xf]
  %v1090 = vld [vmem:[%s0 + $0xbc] sm:$0xf]
  %v1091 = vld [vmem:[%s0 + $0xc0] sm:$0xf]
  %v1092 = vld [vmem:[%s0 + $0xc4] sm:$0xf]
  %v1093 = vld [vmem:[%s0 + $0xc8] sm:$0xf]
  %v1094 = vld [vmem:[%s0 + $0xcc] sm:$0xf]
  %v1095 = vld [vmem:[%s0 + $0xd0] sm:$0xf]
  %v1096 = vld [vmem:[%s0 + $0xd4] sm:$0xf]
  %v1097 = vld [vmem:[%s0 + $0xd8] sm:$0xf]
  %v1098 = vld [vmem:[%s0 + $0xdc] sm:$0xf]
  %v1099 = vld [vmem:[%s0 + $0xe0] sm:$0xf]
  %v1100 = vld [vmem:[%s0 + $0xe4] sm:$0xf]
  %v1101 = vld [vmem:[%s0 + $0xe8] sm:$0xf]
  %v1102 = vld [vmem:[%s0 + $0xec] sm:$0xf]
  %v1103 = vld [vmem:[%s0 + $0xf0] sm:$0xf]
  %v1104 = vld [vmem:[%s0 + $0xf4] sm:$0xf]
  %v1105 = vld [vmem:[%s0 + $0xf8] sm:$0xf]
  %v1106 = vld [vmem:[%s0 + $0xfc] sm:$0xf]
  %v1107 = vld [vmem:[%s0 + $0x100] sm:$0xf]
  %v1108 = vld [vmem:[%s0 + $0x104] sm:$0xf]
  %v1109 = vld [vmem:[%s0 + $0x108] sm:$0xf]
  %v1110 = vld [vmem:[%s0 + $0x10c] sm:$0xf]
  %v1111 = vld [vmem:[%s0 + $0x110] sm:$0xf]
  %v1112 = vld [vmem:[%s0 + $0x114] sm:$0xf]
  %v1113 = vld [vmem:[%s0 + $0x118] sm:$0xf]
  %v1114 = vld [vmem:[%s0 + $0x11c] sm:$0xf]
  %v1115 = vld [vmem:[%s0 + $0x120] sm:$0xf]
  %v1116 = vld [vmem:[%s0 + $0x124] sm:$0xf]
  %v1117 = vld [vmem:[%s0 + $0x128] sm:$0xf]
  %v1118 = vld [vmem:[%s0 + $0x12c] sm:$0xf]
  %v1119 = vld [vmem:[%s0 + $0x130] sm:$0xf]
  %v1120 = vld [vmem:[%s0 + $0x134] sm:$0xf]
  %v1121 = vld [vmem:[%s0 + $0x138] sm:$0xf]
  %v1122 = vld [vmem:[%s0 + $0x13c] sm:$0xf]
  %v1123 = vld [vmem:[%s0 + $0x140] sm:$0xf]
  %v1124 = vld [vmem:[%s0 + $0x144] sm:$0xf]
  %v1125 = vld [vmem:[%s0 + $0x148] sm:$0xf]
  %v1126 = vld [vmem:[%s0 + $0x14c] sm:$0xf]
  %v1127 = vld [vmem:[%s0 + $0x150] sm:$0xf]
  %v1128 = vld [vmem:[%s0 + $0x154] sm:$0xf]
  %v1129 = vld [vmem:[%s0 + $0x158] sm:$0xf]
  %v1130 = vld [vmem:[%s0 + $0x15c] sm:$0xf]
  %v1131 = vld [vmem:[%s0 + $0x160] sm:$0xf]
  %v1132 = vld [vmem:[%s0 + $0x164] sm:$0xf]
  %v1133 = vld [vmem:[%s0 + $0x168] sm:$0xf]
  %v1134 = vld [vmem:[%s0 + $0x16c] sm:$0xf]
  %v1135 = vld [vmem:[%s0 + $0x170] sm:$0xf]
  %v1136 = vld [vmem:[%s0 + $0x174] sm:$0xf]
  %v1137 = vld [vmem:[%s0 + $0x178] sm:$0xf]
  %v1138 = vld [vmem:[%s0 + $0x17c] sm:$0xf]
  %v1139 = vld [vmem:[%s0 + $0x180] sm:$0xf]
  %v1140 = vld [vmem:[%s0 + $0x184] sm:$0xf]
  %v1141 = vld [vmem:[%s0 + $0x188] sm:$0xf]
  %v1142 = vld [vmem:[%s0 + $0x18c] sm:$0xf]
  %v1143 = vld [vmem:[%s0 + $0x190] sm:$0xf]
  %v1144 = vld [vmem:[%s0 + $0x194] sm:$0xf]
  %v1145 = vld [vmem:[%s0 + $0x198] sm:$0xf]
  %v1146 = vld [vmem:[%s0 + $0x19c] sm:$0xf]
  %v1147 = vld [vmem:[%s0 + $0x1a0] sm:$0xf]
  %v1148 = vld [vmem:[%s0 + $0x1a4] sm:$0xf]
  %v1149 = vld [vmem:[%s0 + $0x1a8] sm:$0xf]
  %v1150 = vld [vmem:[%s0 + $0x1ac] sm:$0xf]
  %v1151 = vld [vmem:[%s0 + $0x1b0] sm:$0xf]
  %v1152 = vld [vmem:[%s0 + $0x1b4] sm:$0xf]
  %v1153 = vld [vmem:[%s0 + $0x1b8] sm:$0xf]
  %v1154 = vld [vmem:[%s0 + $0x1bc] sm:$0xf]
  %v1155 = vld [vmem:[%s0 + $0x1c0] sm:$0xf]
  %v1156 = vld [vmem:[%s0 + $0x1c4] sm:$0xf]
  %v1157 = vld [vmem:[%s0 + $0x1c8] sm:$0xf]
  %v1158 = vld [vmem:[%s0 + $0x1cc] sm:$0xf]
  %v1159 = vld [vmem:[%s0 + $0x1d0] sm:$0xf]
  %v1160 = vld [vmem:[%s0 + $0x1d4] sm:$0xf]
  %v1161 = vld [vmem:[%s0 + $0x1d8] sm:$0xf]
  %v1162 = vld [vmem:[%s0 + $0x1dc] sm:$0xf]
  %v1163 = vld [vmem:[%s0 + $0x1e0] sm:$0xf]
  %v1164 = vld [vmem:[%s0 + $0x1e4] sm:$0xf]
  %v1165 = vld [vmem:[%s0 + $0x1e8] sm:$0xf]
  %v1166 = vld [vmem:[%s0 + $0x1ec] sm:$0xf]
  %v1167 = vld [vmem:[%s0 + $0x1f0] sm:$0xf]
  %v1168 = vld [vmem:[%s0 + $0x1f4] sm:$0xf]
  %v1169 = vld [vmem:[%s0 + $0x1f8] sm:$0xf]
  %v1170 = vld [vmem:[%s0 + $0x1fc] sm:$0xf]
  %v1171 = vld [vmem:[%s0 + $0x200] sm:$0xf]
  %v1172 = vld [vmem:[%s0 + $0x204] sm:$0xf]
  %v1173 = vld [vmem:[%s0 + $0x208] sm:$0xf]
  %v1174 = vld [vmem:[%s0 + $0x20c] sm:$0xf]
  %v1175 = vld [vmem:[%s0 + $0x210] sm:$0xf]
  %v1176 = vld [vmem:[%s0 + $0x214] sm:$0xf]
  %v1177 = vld [vmem:[%s0 + $0x218] sm:$0xf]
  %v1178 = vld [vmem:[%s0 + $0x21c] sm:$0xf]
  %v1179 = vld [vmem:[%s0 + $0x220] sm:$0xf]
  %v1180 = vld [vmem:[%s0 + $0x224] sm:$0xf]
  %v1181 = vld [vmem:[%s0 + $0x228] sm:$0xf]
  %v1182 = vld [vmem:[%s0 + $0x22c] sm:$0xf]
  %v1183 = vld [vmem:[%s0 + $0x230] sm:$0xf]
  %v1184 = vld [vmem:[%s0 + $0x234] sm:$0xf]
  %v1185 = vld [vmem:[%s0 + $0x238] sm:$0xf]
  %v1186 = vld [vmem:[%s0 + $0x23c] sm:$0xf]
  %v1187 = vld [vmem:[%s0 + $0x240] sm:$0xf]
  %v1188 = vld [vmem:[%s0 + $0x244] sm:$0xf]
  %v1189 = vld [vmem:[%s0 + $0x248] sm:$0xf]
  %v1190 = vld [vmem:[%s0 + $0x24c] sm:$0xf]
  %v1191 = vld [vmem:[%s0 + $0x250] sm:$0xf]
  %v1192 = vld [vmem:[%s0 + $0x254] sm:$0xf]
  %v1193 = vld [vmem:[%s0 + $0x258] sm:$0xf]
  %v1194 = vld [vmem:[%s0 + $0x25c] sm:$0xf]
  %v1195 = vld [vmem:[%s0 + $0x260] sm:$0xf]
  %v1196 = vld [vmem:[%s0 + $0x264] sm:$0xf]
  %v1197 = vld [vmem:[%s0 + $0x268] sm:$0xf]
  %v1198 = vld [vmem:[%s0 + $0x26c] sm:$0xf]
  %v1199 = vld [vmem:[%s0 + $0x270] sm:$0xf]
  %v1200 = vld [vmem:[%s0 + $0x274] sm:$0xf]
  %v1201 = vld [vmem:[%s0 + $0x278] sm:$0xf]
  %v1202 = vld [vmem:[%s0 + $0x27c] sm:$0xf]
  %v1203 = vld [vmem:[%s0 + $0x280] sm:$0xf]
  %v1204 = vld [vmem:[%s0 + $0x284] sm:$0xf]
  %v1205 = vld [vmem:[%s0 + $0x288] sm:$0xf]
  %v1206 = vld [vmem:[%s0 + $0x28c] sm:$0xf]
  %v1207 = vld [vmem:[%s0 + $0x290] sm:$0xf]
  %v1208 = vld [vmem:[%s0 + $0x294] sm:$0xf]
  %v1209 = vld [vmem:[%s0 + $0x298] sm:$0xf]
  %v1210 = vld [vmem:[%s0 + $0x29c] sm:$0xf]
  %v1211 = vld [vmem:[%s0 + $0x2a0] sm:$0xf]
  %v1212 = vld [vmem:[%s0 + $0x2a4] sm:$0xf]
  %v1213 = vld [vmem:[%s0 + $0x2a8] sm:$0xf]
  %v1214 = vld [vmem:[%s0 + $0x2ac] sm:$0xf]
  %v1215 = vld [vmem:[%s0 + $0x2b0] sm:$0xf]
  %v1216 = vld [vmem:[%s0 + $0x2b4] sm:$0xf]
  %v1217 = vld [vmem:[%s0 + $0x2b8] sm:$0xf]
  %v1218 = vld [vmem:[%s0 + $0x2bc] sm:$0xf]
  %v1219 = vld [vmem:[%s0 + $0x2c0] sm:$0xf]
  %v1220 = vld [vmem:[%s0 + $0x2c4] sm:$0xf]
  %v1221 = vld [vmem:[%s0 + $0x2c8] sm:$0xf]
  %v1222 = vld [vmem:[%s0 + $0x2cc] sm:$0xf]
  %v1223 = vld [vmem:[%s0 + $0x2d0] sm:$0xf]
  %v1224 = vld [vmem:[%s0 + $0x2d4] sm:$0xf]
  %v1225 = vld [vmem:[%s0 + $0x2d8] sm:$0xf]
  %v1226 = vld [vmem:[%s0 + $0x2dc] sm:$0xf]
  %v1227 = vld [vmem:[%s0 + $0x2e0] sm:$0xf]
  %v1228 = vld [vmem:[%s0 + $0x2e4] sm:$0xf]
  %v1229 = vld [vmem:[%s0 + $0x2e8] sm:$0xf]
  %v1230 = vld [vmem:[%s0 + $0x2ec] sm:$0xf]
  %v1231 = vld [vmem:[%s0 + $0x2f0] sm:$0xf]
  %v1232 = vld [vmem:[%s0 + $0x2f4] sm:$0xf]
  %v1233 = vld [vmem:[%s0 + $0x2f8] sm:$0xf]
  %v1234 = vld [vmem:[%s0 + $0x2fc] sm:$0xf]
  %v1235 = vld [vmem:[%s0 + $0x300] sm:$0xf]
  %v1236 = vld [vmem:[%s0 + $0x304] sm:$0xf]
  %v1237 = vld [vmem:[%s0 + $0x308] sm:$0xf]
  %v1238 = vld [vmem:[%s0 + $0x30c] sm:$0xf]
  %v1239 = vld [vmem:[%s0 + $0x310] sm:$0xf]
  %v1240 = vld [vmem:[%s0 + $0x314] sm:$0xf]
  %v1241 = vld [vmem:[%s0 + $0x318] sm:$0xf]
  %v1242 = vld [vmem:[%s0 + $0x31c] sm:$0xf]
  %v1243 = vld [vmem:[%s0 + $0x320] sm:$0xf]
  %v1244 = vld [vmem:[%s0 + $0x324] sm:$0xf]
  %v1245 = vld [vmem:[%s0 + $0x328] sm:$0xf]
  %v1246 = vld [vmem:[%s0 + $0x32c] sm:$0xf]
  %v1247 = vld [vmem:[%s0 + $0x330] sm:$0xf]
  %v1248 = vld [vmem:[%s0 + $0x334] sm:$0xf]
  %v1249 = vld [vmem:[%s0 + $0x338] sm:$0xf]
  %v1250 = vld [vmem:[%s0 + $0x33c] sm:$0xf]
  %v1251 = vld [vmem:[%s0 + $0x340] sm:$0xf]
  %v1252 = vld [vmem:[%s0 + $0x344] sm:$0xf]
  %v1253 = vld [vmem:[%s0 + $0x348] sm:$0xf]
  %v1254 = vld [vmem:[%s0 + $0x34c] sm:$0xf]
  %v1255 = vld [vmem:[%s0 + $0x350] sm:$0xf]
  %v1256 = vld [vmem:[%s0 + $0x354] sm:$0xf]
  %v1257 = vld [vmem:[%s0 + $0x358] sm:$0xf]
  %v1258 = vld [vmem:[%s0 + $0x35c] sm:$0xf]
  %v1259 = vld [vmem:[%s0 + $0x360] sm:$0xf]
  %v1260 = vld [vmem:[%s0 + $0x364] sm:$0xf]
  %v1261 = vld [vmem:[%s0 + $0x368] sm:$0xf]
  %v1262 = vld [vmem:[%s0 + $0x36c] sm:$0xf]
  %v1263 = vld [vmem:[%s0 + $0x370] sm:$0xf]
  %v1264 = vld [vmem:[%s0 + $0x374] sm:$0xf]
  %v1265 = vld [vmem:[%s0 + $0x378] sm:$0xf]
  %v1266 = vld [vmem:[%s0 + $0x37c] sm:$0xf]
  %v1267 = vld [vmem:[%s0 + $0x380] sm:$0xf]
  %v1268 = vld [vmem:[%s0 + $0x384] sm:$0xf]
  %v1269 = vld [vmem:[%s0 + $0x388] sm:$0xf]
  %v1270 = vld [vmem:[%s0 + $0x38c] sm:$0xf]
  %v1271 = vld [vmem:[%s0 + $0x390] sm:$0xf]
  %v1272 = vld [vmem:[%s0 + $0x394] sm:$0xf]
  %v1273 = vld [vmem:[%s0 + $0x398] sm:$0xf]
  %v1274 = vld [vmem:[%s0 + $0x39c] sm:$0xf]
  %v1275 = vld [vmem:[%s0 + $0x3a0] sm:$0xf]
  %v1276 = vld [vmem:[%s0 + $0x3a4] sm:$0xf]
  %v1277 = vld [vmem:[%s0 + $0x3a8] sm:$0xf]
  %v1278 = vld [vmem:[%s0 + $0x3ac] sm:$0xf]
  %v1279 = vld [vmem:[%s0 + $0x3b0] sm:$0xf]
  %v1280 = vld [vmem:[%s0 + $0x3b4] sm:$0xf]
  %v1281 = vld [vmem:[%s0 + $0x3b8] sm:$0xf]
  %v1282 = vld [vmem:[%s0 + $0x3bc] sm:$0xf]
  %v1283 = vld [vmem:[%s0 + $0x3c0] sm:$0xf]
  %v1284 = vld [vmem:[%s0 + $0x3c4] sm:$0xf]
  %v1285 = vld [vmem:[%s0 + $0x3c8] sm:$0xf]
  %v1286 = vld [vmem:[%s0 + $0x3cc] sm:$0xf]
  %v1287 = vld [vmem:[%s0 + $0x3d0] sm:$0xf]
  %v1288 = vld [vmem:[%s0 + $0x3d4] sm:$0xf]
  %v1289 = vld [vmem:[%s0 + $0x3d8] sm:$0xf]
  %v1290 = vld [vmem:[%s0 + $0x3dc] sm:$0xf]
  %v1291 = vld [vmem:[%s0 + $0x3e0] sm:$0xf]
  %v1292 = vld [vmem:[%s0 + $0x3e4] sm:$0xf]
  %v1293 = vld [vmem:[%s0 + $0x3e8] sm:$0xf]
  %v1294 = vld [vmem:[%s0 + $0x3ec] sm:$0xf]
  %v1295 = vld [vmem:[%s0 + $0x3f0] sm:$0xf]
  %v1296 = vld [vmem:[%s0 + $0x3f4] sm:$0xf]
  %v1297 = vld [vmem:[%s0 + $0x3f8] sm:$0xf]
  %v1298 = vld [vmem:[%s0 + $0x3fc] sm:$0xf]
  %v1299 = vld [vmem:[%s0 + $0x400] sm:$0xf]
  %v1300 = vld [vmem:[%s0 + $0x404] sm:$0xf]
  %v1301 = vld [vmem:[%s0 + $0x408] sm:$0xf]
  %v1302 = vld [vmem:[%s0 + $0x40c] sm:$0xf]
  %v1303 = vld [vmem:[%s0 + $0x410] sm:$0xf]
  %v1304 = vld [vmem:[%s0 + $0x414] sm:$0xf]
  %v1305 = vld [vmem:[%s0 + $0x418] sm:$0xf]
  %v1306 = vld [vmem:[%s0 + $0x41c] sm:$0xf]
  %v1307 = vld [vmem:[%s0 + $0x420] sm:$0xf]
  %v1308 = vld [vmem:[%s0 + $0x424] sm:$0xf]
  %v1309 = vld [vmem:[%s0 + $0x428] sm:$0xf]
  %v1310 = vld [vmem:[%s0 + $0x42c] sm:$0xf]
  %v1311 = vld [vmem:[%s0 + $0x430] sm:$0xf]
  %v1312 = vld [vmem:[%s0 + $0x434] sm:$0xf]
  %v1313 = vld [vmem:[%s0 + $0x438] sm:$0xf]
  %v1314 = vld [vmem:[%s0 + $0x43c] sm:$0xf]
  %v1315 = vld [vmem:[%s0 + $0x440] sm:$0xf]
  %v1316 = vld [vmem:[%s0 + $0x444] sm:$0xf]
  %v1317 = vld [vmem:[%s0 + $0x448] sm:$0xf]
  %v1318 = vld [vmem:[%s0 + $0x44c] sm:$0xf]
  %v1319 = vld [vmem:[%s0 + $0x450] sm:$0xf]
  %v1320 = vld [vmem:[%s0 + $0x454] sm:$0xf]
  %v1321 = vld [vmem:[%s0 + $0x458] sm:$0xf]
  %v1322 = vld [vmem:[%s0 + $0x45c] sm:$0xf]
  %v1323 = vld [vmem:[%s0 + $0x460] sm:$0xf]
  %v1324 = vld [vmem:[%s0 + $0x464] sm:$0xf]
  %v1325 = vld [vmem:[%s0 + $0x468] sm:$0xf]
  %v1326 = vld [vmem:[%s0 + $0x46c] sm:$0xf]
  %v1327 = vld [vmem:[%s0 + $0x470] sm:$0xf]
  %v1328 = vld [vmem:[%s0 + $0x474] sm:$0xf]
  %v1329 = vld [vmem:[%s0 + $0x478] sm:$0xf]
  %v1330 = vld [vmem:[%s0 + $0x47c] sm:$0xf]
  %v1331 = vld [vmem:[%s0 + $0x480] sm:$0xf]
  %v1332 = vld [vmem:[%s0 + $0x484] sm:$0xf]
  %v1333 = vld [vmem:[%s0 + $0x488] sm:$0xf]
  %v1334 = vld [vmem:[%s0 + $0x48c] sm:$0xf]
  %v1335 = vld [vmem:[%s0 + $0x490] sm:$0xf]
  %v1336 = vld [vmem:[%s0 + $0x494] sm:$0xf]
  %v1337 = vld [vmem:[%s0 + $0x498] sm:$0xf]
  %v1338 = vld [vmem:[%s0 + $0x49c] sm:$0xf]
  %v1339 = vld [vmem:[%s0 + $0x4a0] sm:$0xf]
  %v1340 = vld [vmem:[%s0 + $0x4a4] sm:$0xf]
  %v1341 = vld [vmem:[%s0 + $0x4a8] sm:$0xf]
  %v1342 = vld [vmem:[%s0 + $0x4ac] sm:$0xf]
  %v1343 = vld [vmem:[%s0 + $0x4b0] sm:$0xf]
  %v1344 = vld [vmem:[%s0 + $0x4b4] sm:$0xf]
  %v1345 = vld [vmem:[%s0 + $0x4b8] sm:$0xf]
  %v1346 = vld [vmem:[%s0 + $0x4bc] sm:$0xf]
  %v1347 = vld [vmem:[%s0 + $0x4c0] sm:$0xf]
  %v1348 = vld [vmem:[%s0 + $0x4c4] sm:$0xf]
  %v1349 = vld [vmem:[%s0 + $0x4c8] sm:$0xf]
  %v1350 = vld [vmem:[%s0 + $0x4cc] sm:$0xf]
  %v1351 = vld [vmem:[%s0 + $0x4d0] sm:$0xf]
  %v1352 = vld [vmem:[%s0 + $0x4d4] sm:$0xf]
  %v1353 = vld [vmem:[%s0 + $0x4d8] sm:$0xf]
  %v1354 = vld [vmem:[%s0 + $0x4dc] sm:$0xf]
  %v1355 = vld [vmem:[%s0 + $0x4e0] sm:$0xf]
  %v1356 = vld [vmem:[%s0 + $0x4e4] sm:$0xf]
  %v1357 = vld [vmem:[%s0 + $0x4e8] sm:$0xf]
  %v1358 = vld [vmem:[%s0 + $0x4ec] sm:$0xf]
  %v1359 = vld [vmem:[%s0 + $0x4f0] sm:$0xf]
  %v1360 = vld [vmem:[%s0 + $0x4f4] sm:$0xf]
  %v1361 = vld [vmem:[%s0 + $0x4f8] sm:$0xf]
  %v1362 = vld [vmem:[%s0 + $0x4fc] sm:$0xf]
  %v1363 = vld [vmem:[%s0 + $0x500] sm:$0xf]
  %v1364 = vld [vmem:[%s0 + $0x504] sm:$0xf]
  %v1365 = vld [vmem:[%s0 + $0x508] sm:$0xf]
  %v1366 = vld [vmem:[%s0 + $0x50c] sm:$0xf]
  %v1367 = vld [vmem:[%s0 + $0x510] sm:$0xf]
  %v1368 = vld [vmem:[%s0 + $0x514] sm:$0xf]
  %v1369 = vld [vmem:[%s0 + $0x518] sm:$0xf]
  %v1370 = vld [vmem:[%s0 + $0x51c] sm:$0xf]
  %v1371 = vld [vmem:[%s0 + $0x520] sm:$0xf]
  %v1372 = vld [vmem:[%s0 + $0x524] sm:$0xf]
  %v1373 = vld [vmem:[%s0 + $0x528] sm:$0xf]
  %v1374 = vld [vmem:[%s0 + $0x52c] sm:$0xf]
  %v1375 = vld [vmem:[%s0 + $0x530] sm:$0xf]
  %v1376 = vld [vmem:[%s0 + $0x534] sm:$0xf]
  %v1377 = vld [vmem:[%s0 + $0x538] sm:$0xf]
  %v1378 = vld [vmem:[%s0 + $0x53c] sm:$0xf]
  %v1379 = vld [vmem:[%s0 + $0x540] sm:$0xf]
  %v1380 = vld [vmem:[%s0 + $0x544] sm:$0xf]
  %v1381 = vld [vmem:[%s0 + $0x548] sm:$0xf]
  %v1382 = vld [vmem:[%s0 + $0x54c] sm:$0xf]
  %v1383 = vld [vmem:[%s0 + $0x550] sm:$0xf]
  %v1384 = vld [vmem:[%s0 + $0x554] sm:$0xf]
  %v1385 = vld [vmem:[%s0 + $0x558] sm:$0xf]
  %v1386 = vld [vmem:[%s0 + $0x55c] sm:$0xf]
  %v1387 = vld [vmem:[%s0 + $0x560] sm:$0xf]
  %v1388 = vld [vmem:[%s0 + $0x564] sm:$0xf]
  %v1389 = vld [vmem:[%s0 + $0x568] sm:$0xf]
  %v1390 = vld [vmem:[%s0 + $0x56c] sm:$0xf]
  %v1391 = vld [vmem:[%s0 + $0x570] sm:$0xf]
  %v1392 = vld [vmem:[%s0 + $0x574] sm:$0xf]
  %v1393 = vld [vmem:[%s0 + $0x578] sm:$0xf]
  %v1394 = vld [vmem:[%s0 + $0x57c] sm:$0xf]
  %v1395 = vld [vmem:[%s0 + $0x580] sm:$0xf]
  %v1396 = vld [vmem:[%s0 + $0x584] sm:$0xf]
  %v1397 = vld [vmem:[%s0 + $0x588] sm:$0xf]
  %v1398 = vld [vmem:[%s0 + $0x58c] sm:$0xf]
  %v1399 = vld [vmem:[%s0 + $0x590] sm:$0xf]
  %v1400 = vld [vmem:[%s0 + $0x594] sm:$0xf]
  %v1401 = vld [vmem:[%s0 + $0x598] sm:$0xf]
  %v1402 = vld [vmem:[%s0 + $0x59c] sm:$0xf]
  %v1403 = vld [vmem:[%s0 + $0x5a0] sm:$0xf]
  %v1404 = vld [vmem:[%s0 + $0x5a4] sm:$0xf]
  %v1405 = vld [vmem:[%s0 + $0x5a8] sm:$0xf]
  %v1406 = vld [vmem:[%s0 + $0x5ac] sm:$0xf]
  %v1407 = vld [vmem:[%s0 + $0x5b0] sm:$0xf]
  %v1408 = vld [vmem:[%s0 + $0x5b4] sm:$0xf]
  %v1409 = vld [vmem:[%s0 + $0x5b8] sm:$0xf]
  %v1410 = vld [vmem:[%s0 + $0x5bc] sm:$0xf]
  %v1411 = vld [vmem:[%s0 + $0x5c0] sm:$0xf]
  %v1412 = vld [vmem:[%s0 + $0x5c4] sm:$0xf]
  %v1413 = vld [vmem:[%s0 + $0x5c8] sm:$0xf]
  %v1414 = vld [vmem:[%s0 + $0x5cc] sm:$0xf]
  %v1415 = vld [vmem:[%s0 + $0x5d0] sm:$0xf]
  %v1416 = vld [vmem:[%s0 + $0x5d4] sm:$0xf]
  %v1417 = vld [vmem:[%s0 + $0x5d8] sm:$0xf]
  %v1418 = vld [vmem:[%s0 + $0x5dc] sm:$0xf]
  %v1419 = vld [vmem:[%s0 + $0x5e0] sm:$0xf]
  %v1420 = vld [vmem:[%s0 + $0x5e4] sm:$0xf]
  %v1421 = vld [vmem:[%s0 + $0x5e8] sm:$0xf]
  %v1422 = vld [vmem:[%s0 + $0x5ec] sm:$0xf]
  %v1423 = vld [vmem:[%s0 + $0x5f0] sm:$0xf]
  %v1424 = vld [vmem:[%s0 + $0x5f4] sm:$0xf]
  %v1425 = vld [vmem:[%s0 + $0x5f8] sm:$0xf]
  %v1426 = vld [vmem:[%s0 + $0x5fc] sm:$0xf]
  %v1427 = vld [vmem:[%s0 + $0x600] sm:$0xf]
  %v1428 = vld [vmem:[%s0 + $0x604] sm:$0xf]
  %v1429 = vld [vmem:[%s0 + $0x608] sm:$0xf]
  %v1430 = vld [vmem:[%s0 + $0x60c] sm:$0xf]
  %v1431 = vld [vmem:[%s0 + $0x610] sm:$0xf]
  %v1432 = vld [vmem:[%s0 + $0x614] sm:$0xf]
  %v1433 = vld [vmem:[%s0 + $0x618] sm:$0xf]
  %v1434 = vld [vmem:[%s0 + $0x61c] sm:$0xf]
  %v1435 = vld [vmem:[%s0 + $0x620] sm:$0xf]
  %v1436 = vld [vmem:[%s0 + $0x624] sm:$0xf]
  %v1437 = vld [vmem:[%s0 + $0x628] sm:$0xf]
  %v1438 = vld [vmem:[%s0 + $0x62c] sm:$0xf]
  %v1439 = vld [vmem:[%s0 + $0x630] sm:$0xf]
  %v1440 = vld [vmem:[%s0 + $0x634] sm:$0xf]
  %v1441 = vld [vmem:[%s0 + $0x638] sm:$0xf]
  %v1442 = vld [vmem:[%s0 + $0x63c] sm:$0xf]
  %v1443 = vld [vmem:[%s0 + $0x640] sm:$0xf]
  %v1444 = vld [vmem:[%s0 + $0x644] sm:$0xf]
  %v1445 = vld [vmem:[%s0 + $0x648] sm:$0xf]
  %v1446 = vld [vmem:[%s0 + $0x64c] sm:$0xf]
  %v1447 = vld [vmem:[%s0 + $0x650] sm:$0xf]
  %v1448 = vld [vmem:[%s0 + $0x654] sm:$0xf]
  %v1449 = vld [vmem:[%s0 + $0x658] sm:$0xf]
  %v1450 = vld [vmem:[%s0 + $0x65c] sm:$0xf]
  %v1451 = vld [vmem:[%s0 + $0x660] sm:$0xf]
  %v1452 = vld [vmem:[%s0 + $0x664] sm:$0xf]
  %v1453 = vld [vmem:[%s0 + $0x668] sm:$0xf]
  %v1454 = vld [vmem:[%s0 + $0x66c] sm:$0xf]
  %v1455 = vld [vmem:[%s0 + $0x670] sm:$0xf]
  %v1456 = vld [vmem:[%s0 + $0x674] sm:$0xf]
  %v1457 = vld [vmem:[%s0 + $0x678] sm:$0xf]
  %v1458 = vld [vmem:[%s0 + $0x67c] sm:$0xf]
  %v1459 = vld [vmem:[%s0 + $0x680] sm:$0xf]
  %v1460 = vld [vmem:[%s0 + $0x684] sm:$0xf]
  %v1461 = vld [vmem:[%s0 + $0x688] sm:$0xf]
  %v1462 = vld [vmem:[%s0 + $0x68c] sm:$0xf]
  %v1463 = vld [vmem:[%s0 + $0x690] sm:$0xf]
  %v1464 = vld [vmem:[%s0 + $0x694] sm:$0xf]
  %v1465 = vld [vmem:[%s0 + $0x698] sm:$0xf]
  %v1466 = vld [vmem:[%s0 + $0x69c] sm:$0xf]
  %v1467 = vld [vmem:[%s0 + $0x6a0] sm:$0xf]
  %v1468 = vld [vmem:[%s0 + $0x6a4] sm:$0xf]
  %v1469 = vld [vmem:[%s0 + $0x6a8] sm:$0xf]
  %v1470 = vld [vmem:[%s0 + $0x6ac] sm:$0xf]
  %v1471 = vld [vmem:[%s0 + $0x6b0] sm:$0xf]
  %v1472 = vld [vmem:[%s0 + $0x6b4] sm:$0xf]
  %v1473 = vld [vmem:[%s0 + $0x6b8] sm:$0xf]
  %v1474 = vld [vmem:[%s0 + $0x6bc] sm:$0xf]
  %v1475 = vld [vmem:[%s0 + $0x6c0] sm:$0xf]
  %v1476 = vld [vmem:[%s0 + $0x6c4] sm:$0xf]
  %v1477 = vld [vmem:[%s0 + $0x6c8] sm:$0xf]
  %v1478 = vld [vmem:[%s0 + $0x6cc] sm:$0xf]
  %v1479 = vld [vmem:[%s0 + $0x6d0] sm:$0xf]
  %v1480 = vld [vmem:[%s0 + $0x6d4] sm:$0xf]
  %v1481 = vld [vmem:[%s0 + $0x6d8] sm:$0xf]
  %v1482 = vld [vmem:[%s0 + $0x6dc] sm:$0xf]
  %v1483 = vld [vmem:[%s0 + $0x6e0] sm:$0xf]
  %v1484 = vld [vmem:[%s0 + $0x6e4] sm:$0xf]
  %v1485 = vld [vmem:[%s0 + $0x6e8] sm:$0xf]
  %v1486 = vld [vmem:[%s0 + $0x6ec] sm:$0xf]
  %v1487 = vld [vmem:[%s0 + $0x6f0] sm:$0xf]
  %v1488 = vld [vmem:[%s0 + $0x6f4] sm:$0xf]
  %v1489 = vld [vmem:[%s0 + $0x6f8] sm:$0xf]
  %v1490 = vld [vmem:[%s0 + $0x6fc] sm:$0xf]
  %v1491 = vld [vmem:[%s0 + $0x700] sm:$0xf]
  %v1492 = vld [vmem:[%s0 + $0x704] sm:$0xf]
  %v1493 = vld [vmem:[%s0 + $0x708] sm:$0xf]
  %v1494 = vld [vmem:[%s0 + $0x70c] sm:$0xf]
  %v1495 = vld [vmem:[%s0 + $0x710] sm:$0xf]
  %v1496 = vld [vmem:[%s0 + $0x714] sm:$0xf]
  %v1497 = vld [vmem:[%s0 + $0x718] sm:$0xf]
  %v1498 = vld [vmem:[%s0 + $0x71c] sm:$0xf]
  %v1499 = vld [vmem:[%s0 + $0x720] sm:$0xf]
  %v1500 = vld [vmem:[%s0 + $0x724] sm:$0xf]
  %v1501 = vld [vmem:[%s0 + $0x728] sm:$0xf]
  %v1502 = vld [vmem:[%s0 + $0x72c] sm:$0xf]
  %v1503 = vld [vmem:[%s0 + $0x730] sm:$0xf]
  %v1504 = vld [vmem:[%s0 + $0x734] sm:$0xf]
  %v1505 = vld [vmem:[%s0 + $0x738] sm:$0xf]
  %v1506 = vld [vmem:[%s0 + $0x73c] sm:$0xf]
  %v1507 = vld [vmem:[%s0 + $0x740] sm:$0xf]
  %v1508 = vld [vmem:[%s0 + $0x744] sm:$0xf]
  %v1509 = vld [vmem:[%s0 + $0x748] sm:$0xf]
  %v1510 = vld [vmem:[%s0 + $0x74c] sm:$0xf]
  %v1511 = vld [vmem:[%s0 + $0x750] sm:$0xf]
  %v1512 = vld [vmem:[%s0 + $0x754] sm:$0xf]
  %v1513 = vld [vmem:[%s0 + $0x758] sm:$0xf]
  %v1514 = vld [vmem:[%s0 + $0x75c] sm:$0xf]
  %v1515 = vld [vmem:[%s0 + $0x760] sm:$0xf]
  %v1516 = vld [vmem:[%s0 + $0x764] sm:$0xf]
  %v1517 = vld [vmem:[%s0 + $0x768] sm:$0xf]
  %v1518 = vld [vmem:[%s0 + $0x76c] sm:$0xf]
  %v1519 = vld [vmem:[%s0 + $0x770] sm:$0xf]
  %v1520 = vld [vmem:[%s0 + $0x774] sm:$0xf]
  %v1521 = vld [vmem:[%s0 + $0x778] sm:$0xf]
  %v1522 = vld [vmem:[%s0 + $0x77c] sm:$0xf]
  %v1523 = vld [vmem:[%s0 + $0x780] sm:$0xf]
  %v1524 = vld [vmem:[%s0 + $0x784] sm:$0xf]
  %v1525 = vld [vmem:[%s0 + $0x788] sm:$0xf]
  %v1526 = vld [vmem:[%s0 + $0x78c] sm:$0xf]
  %v1527 = vld [vmem:[%s0 + $0x790] sm:$0xf]
  %v1528 = vld [vmem:[%s0 + $0x794] sm:$0xf]
  %v1529 = vld [vmem:[%s0 + $0x798] sm:$0xf]
  %v1530 = vld [vmem:[%s0 + $0x79c] sm:$0xf]
  %v1531 = vld [vmem:[%s0 + $0x7a0] sm:$0xf]
  %v1532 = vld [vmem:[%s0 + $0x7a4] sm:$0xf]
  %v1533 = vld [vmem:[%s0 + $0x7a8] sm:$0xf]
  %v1534 = vld [vmem:[%s0 + $0x7ac] sm:$0xf]
  %v1535 = vld [vmem:[%s0 + $0x7b0] sm:$0xf]
  %v1536 = vld [vmem:[%s0 + $0x7b4] sm:$0xf]
  %v1537 = vld [vmem:[%s0 + $0x7b8] sm:$0xf]
  %v1538 = vld [vmem:[%s0 + $0x7bc] sm:$0xf]
  %v1539 = vld [vmem:[%s0 + $0x7c0] sm:$0xf]
  %v1540 = vld [vmem:[%s0 + $0x7c4] sm:$0xf]
  %v1541 = vld [vmem:[%s0 + $0x7c8] sm:$0xf]
  %v1542 = vld [vmem:[%s0 + $0x7cc] sm:$0xf]
  %v1543 = vld [vmem:[%s0 + $0x7d0] sm:$0xf]
  %v1544 = vld [vmem:[%s0 + $0x7d4] sm:$0xf]
  %v1545 = vld [vmem:[%s0 + $0x7d8] sm:$0xf]
  %v1546 = vld [vmem:[%s0 + $0x7dc] sm:$0xf]
  %v1547 = vld [vmem:[%s0 + $0x7e0] sm:$0xf]
  %v1548 = vld [vmem:[%s0 + $0x7e4] sm:$0xf]
  %v1549 = vld [vmem:[%s0 + $0x7e8] sm:$0xf]
  %v1550 = vld [vmem:[%s0 + $0x7ec] sm:$0xf]
  %v1551 = vld [vmem:[%s0 + $0x7f0] sm:$0xf]
  %v1552 = vld [vmem:[%s0 + $0x7f4] sm:$0xf]
  %v1553 = vld [vmem:[%s0 + $0x7f8] sm:$0xf]
  %v1554 = vld [vmem:[%s0 + $0x7fc] sm:$0xf]
  %v1555 = vld [vmem:[%s1] sm:$0xf]
  %v1556 = vld [vmem:[%s1 + $0x4] sm:$0xf]
  %v1557 = vld [vmem:[%s1 + $0x8] sm:$0xf]
  %v1558 = vld [vmem:[%s1 + $0xc] sm:$0xf]
  %v2071 = vunpack.c.l.b16 %v1043
  %v2072 = vunpack.c.l.b16 %v1044
  %v2073 = vunpack.c.l.b16 %v1045
  %v2074 = vunpack.c.l.b16 %v1046
  %v2075 = vunpack.c.l.b16 %v1047
  %v2076 = vunpack.c.l.b16 %v1048
  %v2077 = vunpack.c.l.b16 %v1049
  %v2078 = vunpack.c.l.b16 %v1050
  %v2079 = vunpack.c.l.b16 %v1051
  %v2080 = vunpack.c.l.b16 %v1052
  %v2081 = vunpack.c.l.b16 %v1053
  %v2082 = vunpack.c.l.b16 %v1054
  %v2083 = vunpack.c.l.b16 %v1055
  %v2084 = vunpack.c.l.b16 %v1056
  %v2085 = vunpack.c.l.b16 %v1057
  %v2086 = vunpack.c.l.b16 %v1058
  %v2087 = vunpack.c.l.b16 %v1059
  %v2088 = vunpack.c.l.b16 %v1060
  %v2089 = vunpack.c.l.b16 %v1061
  %v2090 = vunpack.c.l.b16 %v1062
  %v2091 = vunpack.c.l.b16 %v1063
  %v2092 = vunpack.c.l.b16 %v1064
  %v2093 = vunpack.c.l.b16 %v1065
  %v2094 = vunpack.c.l.b16 %v1066
  %v2095 = vunpack.c.l.b16 %v1067
  %v2096 = vunpack.c.l.b16 %v1068
  %v2097 = vunpack.c.l.b16 %v1069
  %v2098 = vunpack.c.l.b16 %v1070
  %v2099 = vunpack.c.l.b16 %v1071
  %v2100 = vunpack.c.l.b16 %v1072
  %v2101 = vunpack.c.l.b16 %v1073
  %v2102 = vunpack.c.l.b16 %v1074
  %v2103 = vunpack.c.l.b16 %v1075
  %v2104 = vunpack.c.l.b16 %v1076
  %v2105 = vunpack.c.l.b16 %v1077
  %v2106 = vunpack.c.l.b16 %v1078
  %v2107 = vunpack.c.l.b16 %v1079
  %v2108 = vunpack.c.l.b16 %v1080
  %v2109 = vunpack.c.l.b16 %v1081
  %v2110 = vunpack.c.l.b16 %v1082
  %v2111 = vunpack.c.l.b16 %v1083
  %v2112 = vunpack.c.l.b16 %v1084
  %v2113 = vunpack.c.l.b16 %v1085
  %v2114 = vunpack.c.l.b16 %v1086
  %v2115 = vunpack.c.l.b16 %v1087
  %v2116 = vunpack.c.l.b16 %v1088
  %v2117 = vunpack.c.l.b16 %v1089
  %v2118 = vunpack.c.l.b16 %v1090
  %v2119 = vunpack.c.l.b16 %v1091
  %v2120 = vunpack.c.l.b16 %v1092
  %v2121 = vunpack.c.l.b16 %v1093
  %v2122 = vunpack.c.l.b16 %v1094
  %v2123 = vunpack.c.l.b16 %v1095
  %v2124 = vunpack.c.l.b16 %v1096
  %v2125 = vunpack.c.l.b16 %v1097
  %v2126 = vunpack.c.l.b16 %v1098
  %v2127 = vunpack.c.l.b16 %v1099
  %v2128 = vunpack.c.l.b16 %v1100
  %v2129 = vunpack.c.l.b16 %v1101
  %v2130 = vunpack.c.l.b16 %v1102
  %v2131 = vunpack.c.l.b16 %v1103
  %v2132 = vunpack.c.l.b16 %v1104
  %v2133 = vunpack.c.l.b16 %v1105
  %v2134 = vunpack.c.l.b16 %v1106
  %v2135 = vunpack.c.l.b16 %v1107
  %v2136 = vunpack.c.l.b16 %v1108
  %v2137 = vunpack.c.l.b16 %v1109
  %v2138 = vunpack.c.l.b16 %v1110
  %v2139 = vunpack.c.l.b16 %v1111
  %v2140 = vunpack.c.l.b16 %v1112
  %v2141 = vunpack.c.l.b16 %v1113
  %v2142 = vunpack.c.l.b16 %v1114
  %v2143 = vunpack.c.l.b16 %v1115
  %v2144 = vunpack.c.l.b16 %v1116
  %v2145 = vunpack.c.l.b16 %v1117
  %v2146 = vunpack.c.l.b16 %v1118
  %v2147 = vunpack.c.l.b16 %v1119
  %v2148 = vunpack.c.l.b16 %v1120
  %v2149 = vunpack.c.l.b16 %v1121
  %v2150 = vunpack.c.l.b16 %v1122
  %v2151 = vunpack.c.l.b16 %v1123
  %v2152 = vunpack.c.l.b16 %v1124
  %v2153 = vunpack.c.l.b16 %v1125
  %v2154 = vunpack.c.l.b16 %v1126
  %v2155 = vunpack.c.l.b16 %v1127
  %v2156 = vunpack.c.l.b16 %v1128
  %v2157 = vunpack.c.l.b16 %v1129
  %v2158 = vunpack.c.l.b16 %v1130
  %v2159 = vunpack.c.l.b16 %v1131
  %v2160 = vunpack.c.l.b16 %v1132
  %v2161 = vunpack.c.l.b16 %v1133
  %v2162 = vunpack.c.l.b16 %v1134
  %v2163 = vunpack.c.l.b16 %v1135
  %v2164 = vunpack.c.l.b16 %v1136
  %v2165 = vunpack.c.l.b16 %v1137
  %v2166 = vunpack.c.l.b16 %v1138
  %v2167 = vunpack.c.l.b16 %v1139
  %v2168 = vunpack.c.l.b16 %v1140
  %v2169 = vunpack.c.l.b16 %v1141
  %v2170 = vunpack.c.l.b16 %v1142
  %v2171 = vunpack.c.l.b16 %v1143
  %v2172 = vunpack.c.l.b16 %v1144
  %v2173 = vunpack.c.l.b16 %v1145
  %v2174 = vunpack.c.l.b16 %v1146
  %v2175 = vunpack.c.l.b16 %v1147
  %v2176 = vunpack.c.l.b16 %v1148
  %v2177 = vunpack.c.l.b16 %v1149
  %v2178 = vunpack.c.l.b16 %v1150
  %v2179 = vunpack.c.l.b16 %v1151
  %v2180 = vunpack.c.l.b16 %v1152
  %v2181 = vunpack.c.l.b16 %v1153
  %v2182 = vunpack.c.l.b16 %v1154
  %v2183 = vunpack.c.l.b16 %v1155
  %v2184 = vunpack.c.l.b16 %v1156
  %v2185 = vunpack.c.l.b16 %v1157
  %v2186 = vunpack.c.l.b16 %v1158
  %v2187 = vunpack.c.l.b16 %v1159
  %v2188 = vunpack.c.l.b16 %v1160
  %v2189 = vunpack.c.l.b16 %v1161
  %v2190 = vunpack.c.l.b16 %v1162
  %v2191 = vunpack.c.l.b16 %v1163
  %v2192 = vunpack.c.l.b16 %v1164
  %v2193 = vunpack.c.l.b16 %v1165
  %v2194 = vunpack.c.l.b16 %v1166
  %v2195 = vunpack.c.l.b16 %v1167
  %v2196 = vunpack.c.l.b16 %v1168
  %v2197 = vunpack.c.l.b16 %v1169
  %v2198 = vunpack.c.l.b16 %v1170
  %v2199 = vunpack.c.l.b16 %v1171
  %v2200 = vunpack.c.l.b16 %v1172
  %v2201 = vunpack.c.l.b16 %v1173
  %v2202 = vunpack.c.l.b16 %v1174
  %v2203 = vunpack.c.l.b16 %v1175
  %v2204 = vunpack.c.l.b16 %v1176
  %v2205 = vunpack.c.l.b16 %v1177
  %v2206 = vunpack.c.l.b16 %v1178
  %v2207 = vunpack.c.l.b16 %v1179
  %v2208 = vunpack.c.l.b16 %v1180
  %v2209 = vunpack.c.l.b16 %v1181
  %v2210 = vunpack.c.l.b16 %v1182
  %v2211 = vunpack.c.l.b16 %v1183
  %v2212 = vunpack.c.l.b16 %v1184
  %v2213 = vunpack.c.l.b16 %v1185
  %v2214 = vunpack.c.l.b16 %v1186
  %v2215 = vunpack.c.l.b16 %v1187
  %v2216 = vunpack.c.l.b16 %v1188
  %v2217 = vunpack.c.l.b16 %v1189
  %v2218 = vunpack.c.l.b16 %v1190
  %v2219 = vunpack.c.l.b16 %v1191
  %v2220 = vunpack.c.l.b16 %v1192
  %v2221 = vunpack.c.l.b16 %v1193
  %v2222 = vunpack.c.l.b16 %v1194
  %v2223 = vunpack.c.l.b16 %v1195
  %v2224 = vunpack.c.l.b16 %v1196
  %v2225 = vunpack.c.l.b16 %v1197
  %v2226 = vunpack.c.l.b16 %v1198
  %v2227 = vunpack.c.l.b16 %v1199
  %v2228 = vunpack.c.l.b16 %v1200
  %v2229 = vunpack.c.l.b16 %v1201
  %v2230 = vunpack.c.l.b16 %v1202
  %v2231 = vunpack.c.l.b16 %v1203
  %v2232 = vunpack.c.l.b16 %v1204
  %v2233 = vunpack.c.l.b16 %v1205
  %v2234 = vunpack.c.l.b16 %v1206
  %v2235 = vunpack.c.l.b16 %v1207
  %v2236 = vunpack.c.l.b16 %v1208
  %v2237 = vunpack.c.l.b16 %v1209
  %v2238 = vunpack.c.l.b16 %v1210
  %v2239 = vunpack.c.l.b16 %v1211
  %v2240 = vunpack.c.l.b16 %v1212
  %v2241 = vunpack.c.l.b16 %v1213
  %v2242 = vunpack.c.l.b16 %v1214
  %v2243 = vunpack.c.l.b16 %v1215
  %v2244 = vunpack.c.l.b16 %v1216
  %v2245 = vunpack.c.l.b16 %v1217
  %v2246 = vunpack.c.l.b16 %v1218
  %v2247 = vunpack.c.l.b16 %v1219
  %v2248 = vunpack.c.l.b16 %v1220
  %v2249 = vunpack.c.l.b16 %v1221
  %v2250 = vunpack.c.l.b16 %v1222
  %v2251 = vunpack.c.l.b16 %v1223
  %v2252 = vunpack.c.l.b16 %v1224
  %v2253 = vunpack.c.l.b16 %v1225
  %v2254 = vunpack.c.l.b16 %v1226
  %v2255 = vunpack.c.l.b16 %v1227
  %v2256 = vunpack.c.l.b16 %v1228
  %v2257 = vunpack.c.l.b16 %v1229
  %v2258 = vunpack.c.l.b16 %v1230
  %v2259 = vunpack.c.l.b16 %v1231
  %v2260 = vunpack.c.l.b16 %v1232
  %v2261 = vunpack.c.l.b16 %v1233
  %v2262 = vunpack.c.l.b16 %v1234
  %v2263 = vunpack.c.l.b16 %v1235
  %v2264 = vunpack.c.l.b16 %v1236
  %v2265 = vunpack.c.l.b16 %v1237
  %v2266 = vunpack.c.l.b16 %v1238
  %v2267 = vunpack.c.l.b16 %v1239
  %v2268 = vunpack.c.l.b16 %v1240
  %v2269 = vunpack.c.l.b16 %v1241
  %v2270 = vunpack.c.l.b16 %v1242
  %v2271 = vunpack.c.l.b16 %v1243
  %v2272 = vunpack.c.l.b16 %v1244
  %v2273 = vunpack.c.l.b16 %v1245
  %v2274 = vunpack.c.l.b16 %v1246
  %v2275 = vunpack.c.l.b16 %v1247
  %v2276 = vunpack.c.l.b16 %v1248
  %v2277 = vunpack.c.l.b16 %v1249
  %v2278 = vunpack.c.l.b16 %v1250
  %v2279 = vunpack.c.l.b16 %v1251
  %v2280 = vunpack.c.l.b16 %v1252
  %v2281 = vunpack.c.l.b16 %v1253
  %v2282 = vunpack.c.l.b16 %v1254
  %v2283 = vunpack.c.l.b16 %v1255
  %v2284 = vunpack.c.l.b16 %v1256
  %v2285 = vunpack.c.l.b16 %v1257
  %v2286 = vunpack.c.l.b16 %v1258
  %v2287 = vunpack.c.l.b16 %v1259
  %v2288 = vunpack.c.l.b16 %v1260
  %v2289 = vunpack.c.l.b16 %v1261
  %v2290 = vunpack.c.l.b16 %v1262
  %v2291 = vunpack.c.l.b16 %v1263
  %v2292 = vunpack.c.l.b16 %v1264
  %v2293 = vunpack.c.l.b16 %v1265
  %v2294 = vunpack.c.l.b16 %v1266
  %v2295 = vunpack.c.l.b16 %v1267
  %v2296 = vunpack.c.l.b16 %v1268
  %v2297 = vunpack.c.l.b16 %v1269
  %v2298 = vunpack.c.l.b16 %v1270
  %v2299 = vunpack.c.l.b16 %v1271
  %v2300 = vunpack.c.l.b16 %v1272
  %v2301 = vunpack.c.l.b16 %v1273
  %v2302 = vunpack.c.l.b16 %v1274
  %v2303 = vunpack.c.l.b16 %v1275
  %v2304 = vunpack.c.l.b16 %v1276
  %v2305 = vunpack.c.l.b16 %v1277
  %v2306 = vunpack.c.l.b16 %v1278
  %v2307 = vunpack.c.l.b16 %v1279
  %v2308 = vunpack.c.l.b16 %v1280
  %v2309 = vunpack.c.l.b16 %v1281
  %v2310 = vunpack.c.l.b16 %v1282
  %v2311 = vunpack.c.l.b16 %v1283
  %v2312 = vunpack.c.l.b16 %v1284
  %v2313 = vunpack.c.l.b16 %v1285
  %v2314 = vunpack.c.l.b16 %v1286
  %v2315 = vunpack.c.l.b16 %v1287
  %v2316 = vunpack.c.l.b16 %v1288
  %v2317 = vunpack.c.l.b16 %v1289
  %v2318 = vunpack.c.l.b16 %v1290
  %v2319 = vunpack.c.l.b16 %v1291
  %v2320 = vunpack.c.l.b16 %v1292
  %v2321 = vunpack.c.l.b16 %v1293
  %v2322 = vunpack.c.l.b16 %v1294
  %v2323 = vunpack.c.l.b16 %v1295
  %v2324 = vunpack.c.l.b16 %v1296
  %v2325 = vunpack.c.l.b16 %v1297
  %v2326 = vunpack.c.l.b16 %v1298
  %v2327 = vunpack.c.l.b16 %v1299
  %v2328 = vunpack.c.l.b16 %v1300
  %v2329 = vunpack.c.l.b16 %v1301
  %v2330 = vunpack.c.l.b16 %v1302
  %v2331 = vunpack.c.l.b16 %v1303
  %v2332 = vunpack.c.l.b16 %v1304
  %v2333 = vunpack.c.l.b16 %v1305
  %v2334 = vunpack.c.l.b16 %v1306
  %v2335 = vunpack.c.l.b16 %v1307
  %v2336 = vunpack.c.l.b16 %v1308
  %v2337 = vunpack.c.l.b16 %v1309
  %v2338 = vunpack.c.l.b16 %v1310
  %v2339 = vunpack.c.l.b16 %v1311
  %v2340 = vunpack.c.l.b16 %v1312
  %v2341 = vunpack.c.l.b16 %v1313
  %v2342 = vunpack.c.l.b16 %v1314
  %v2343 = vunpack.c.l.b16 %v1315
  %v2344 = vunpack.c.l.b16 %v1316
  %v2345 = vunpack.c.l.b16 %v1317
  %v2346 = vunpack.c.l.b16 %v1318
  %v2347 = vunpack.c.l.b16 %v1319
  %v2348 = vunpack.c.l.b16 %v1320
  %v2349 = vunpack.c.l.b16 %v1321
  %v2350 = vunpack.c.l.b16 %v1322
  %v2351 = vunpack.c.l.b16 %v1323
  %v2352 = vunpack.c.l.b16 %v1324
  %v2353 = vunpack.c.l.b16 %v1325
  %v2354 = vunpack.c.l.b16 %v1326
  %v2355 = vunpack.c.l.b16 %v1327
  %v2356 = vunpack.c.l.b16 %v1328
  %v2357 = vunpack.c.l.b16 %v1329
  %v2358 = vunpack.c.l.b16 %v1330
  %v2359 = vunpack.c.l.b16 %v1331
  %v2360 = vunpack.c.l.b16 %v1332
  %v2361 = vunpack.c.l.b16 %v1333
  %v2362 = vunpack.c.l.b16 %v1334
  %v2363 = vunpack.c.l.b16 %v1335
  %v2364 = vunpack.c.l.b16 %v1336
  %v2365 = vunpack.c.l.b16 %v1337
  %v2366 = vunpack.c.l.b16 %v1338
  %v2367 = vunpack.c.l.b16 %v1339
  %v2368 = vunpack.c.l.b16 %v1340
  %v2369 = vunpack.c.l.b16 %v1341
  %v2370 = vunpack.c.l.b16 %v1342
  %v2371 = vunpack.c.l.b16 %v1343
  %v2372 = vunpack.c.l.b16 %v1344
  %v2373 = vunpack.c.l.b16 %v1345
  %v2374 = vunpack.c.l.b16 %v1346
  %v2375 = vunpack.c.l.b16 %v1347
  %v2376 = vunpack.c.l.b16 %v1348
  %v2377 = vunpack.c.l.b16 %v1349
  %v2378 = vunpack.c.l.b16 %v1350
  %v2379 = vunpack.c.l.b16 %v1351
  %v2380 = vunpack.c.l.b16 %v1352
  %v2381 = vunpack.c.l.b16 %v1353
  %v2382 = vunpack.c.l.b16 %v1354
  %v2383 = vunpack.c.l.b16 %v1355
  %v2384 = vunpack.c.l.b16 %v1356
  %v2385 = vunpack.c.l.b16 %v1357
  %v2386 = vunpack.c.l.b16 %v1358
  %v2387 = vunpack.c.l.b16 %v1359
  %v2388 = vunpack.c.l.b16 %v1360
  %v2389 = vunpack.c.l.b16 %v1361
  %v2390 = vunpack.c.l.b16 %v1362
  %v2391 = vunpack.c.l.b16 %v1363
  %v2392 = vunpack.c.l.b16 %v1364
  %v2393 = vunpack.c.l.b16 %v1365
  %v2394 = vunpack.c.l.b16 %v1366
  %v2395 = vunpack.c.l.b16 %v1367
  %v2396 = vunpack.c.l.b16 %v1368
  %v2397 = vunpack.c.l.b16 %v1369
  %v2398 = vunpack.c.l.b16 %v1370
  %v2399 = vunpack.c.l.b16 %v1371
  %v2400 = vunpack.c.l.b16 %v1372
  %v2401 = vunpack.c.l.b16 %v1373
  %v2402 = vunpack.c.l.b16 %v1374
  %v2403 = vunpack.c.l.b16 %v1375
  %v2404 = vunpack.c.l.b16 %v1376
  %v2405 = vunpack.c.l.b16 %v1377
  %v2406 = vunpack.c.l.b16 %v1378
  %v2407 = vunpack.c.l.b16 %v1379
  %v2408 = vunpack.c.l.b16 %v1380
  %v2409 = vunpack.c.l.b16 %v1381
  %v2410 = vunpack.c.l.b16 %v1382
  %v2411 = vunpack.c.l.b16 %v1383
  %v2412 = vunpack.c.l.b16 %v1384
  %v2413 = vunpack.c.l.b16 %v1385
  %v2414 = vunpack.c.l.b16 %v1386
  %v2415 = vunpack.c.l.b16 %v1387
  %v2416 = vunpack.c.l.b16 %v1388
  %v2417 = vunpack.c.l.b16 %v1389
  %v2418 = vunpack.c.l.b16 %v1390
  %v2419 = vunpack.c.l.b16 %v1391
  %v2420 = vunpack.c.l.b16 %v1392
  %v2421 = vunpack.c.l.b16 %v1393
  %v2422 = vunpack.c.l.b16 %v1394
  %v2423 = vunpack.c.l.b16 %v1395
  %v2424 = vunpack.c.l.b16 %v1396
  %v2425 = vunpack.c.l.b16 %v1397
  %v2426 = vunpack.c.l.b16 %v1398
  %v2427 = vunpack.c.l.b16 %v1399
  %v2428 = vunpack.c.l.b16 %v1400
  %v2429 = vunpack.c.l.b16 %v1401
  %v2430 = vunpack.c.l.b16 %v1402
  %v2431 = vunpack.c.l.b16 %v1403
  %v2432 = vunpack.c.l.b16 %v1404
  %v2433 = vunpack.c.l.b16 %v1405
  %v2434 = vunpack.c.l.b16 %v1406
  %v2435 = vunpack.c.l.b16 %v1407
  %v2436 = vunpack.c.l.b16 %v1408
  %v2437 = vunpack.c.l.b16 %v1409
  %v2438 = vunpack.c.l.b16 %v1410
  %v2439 = vunpack.c.l.b16 %v1411
  %v2440 = vunpack.c.l.b16 %v1412
  %v2441 = vunpack.c.l.b16 %v1413
  %v2442 = vunpack.c.l.b16 %v1414
  %v2443 = vunpack.c.l.b16 %v1415
  %v2444 = vunpack.c.l.b16 %v1416
  %v2445 = vunpack.c.l.b16 %v1417
  %v2446 = vunpack.c.l.b16 %v1418
  %v2447 = vunpack.c.l.b16 %v1419
  %v2448 = vunpack.c.l.b16 %v1420
  %v2449 = vunpack.c.l.b16 %v1421
  %v2450 = vunpack.c.l.b16 %v1422
  %v2451 = vunpack.c.l.b16 %v1423
  %v2452 = vunpack.c.l.b16 %v1424
  %v2453 = vunpack.c.l.b16 %v1425
  %v2454 = vunpack.c.l.b16 %v1426
  %v2455 = vunpack.c.l.b16 %v1427
  %v2456 = vunpack.c.l.b16 %v1428
  %v2457 = vunpack.c.l.b16 %v1429
  %v2458 = vunpack.c.l.b16 %v1430
  %v2459 = vunpack.c.l.b16 %v1431
  %v2460 = vunpack.c.l.b16 %v1432
  %v2461 = vunpack.c.l.b16 %v1433
  %v2462 = vunpack.c.l.b16 %v1434
  %v2463 = vunpack.c.l.b16 %v1435
  %v2464 = vunpack.c.l.b16 %v1436
  %v2465 = vunpack.c.l.b16 %v1437
  %v2466 = vunpack.c.l.b16 %v1438
  %v2467 = vunpack.c.l.b16 %v1439
  %v2468 = vunpack.c.l.b16 %v1440
  %v2469 = vunpack.c.l.b16 %v1441
  %v2470 = vunpack.c.l.b16 %v1442
  %v2471 = vunpack.c.l.b16 %v1443
  %v2472 = vunpack.c.l.b16 %v1444
  %v2473 = vunpack.c.l.b16 %v1445
  %v2474 = vunpack.c.l.b16 %v1446
  %v2475 = vunpack.c.l.b16 %v1447
  %v2476 = vunpack.c.l.b16 %v1448
  %v2477 = vunpack.c.l.b16 %v1449
  %v2478 = vunpack.c.l.b16 %v1450
  %v2479 = vunpack.c.l.b16 %v1451
  %v2480 = vunpack.c.l.b16 %v1452
  %v2481 = vunpack.c.l.b16 %v1453
  %v2482 = vunpack.c.l.b16 %v1454
  %v2483 = vunpack.c.l.b16 %v1455
  %v2484 = vunpack.c.l.b16 %v1456
  %v2485 = vunpack.c.l.b16 %v1457
  %v2486 = vunpack.c.l.b16 %v1458
  %v2487 = vunpack.c.l.b16 %v1459
  %v2488 = vunpack.c.l.b16 %v1460
  %v2489 = vunpack.c.l.b16 %v1461
  %v2490 = vunpack.c.l.b16 %v1462
  %v2491 = vunpack.c.l.b16 %v1463
  %v2492 = vunpack.c.l.b16 %v1464
  %v2493 = vunpack.c.l.b16 %v1465
  %v2494 = vunpack.c.l.b16 %v1466
  %v2495 = vunpack.c.l.b16 %v1467
  %v2496 = vunpack.c.l.b16 %v1468
  %v2497 = vunpack.c.l.b16 %v1469
  %v2498 = vunpack.c.l.b16 %v1470
  %v2499 = vunpack.c.l.b16 %v1471
  %v2500 = vunpack.c.l.b16 %v1472
  %v2501 = vunpack.c.l.b16 %v1473
  %v2502 = vunpack.c.l.b16 %v1474
  %v2503 = vunpack.c.l.b16 %v1475
  %v2504 = vunpack.c.l.b16 %v1476
  %v2505 = vunpack.c.l.b16 %v1477
  %v2506 = vunpack.c.l.b16 %v1478
  %v2507 = vunpack.c.l.b16 %v1479
  %v2508 = vunpack.c.l.b16 %v1480
  %v2509 = vunpack.c.l.b16 %v1481
  %v2510 = vunpack.c.l.b16 %v1482
  %v2511 = vunpack.c.l.b16 %v1483
  %v2512 = vunpack.c.l.b16 %v1484
  %v2513 = vunpack.c.l.b16 %v1485
  %v2514 = vunpack.c.l.b16 %v1486
  %v2515 = vunpack.c.l.b16 %v1487
  %v2516 = vunpack.c.l.b16 %v1488
  %v2517 = vunpack.c.l.b16 %v1489
  %v2518 = vunpack.c.l.b16 %v1490
  %v2519 = vunpack.c.l.b16 %v1491
  %v2520 = vunpack.c.l.b16 %v1492
  %v2521 = vunpack.c.l.b16 %v1493
  %v2522 = vunpack.c.l.b16 %v1494
  %v2523 = vunpack.c.l.b16 %v1495
  %v2524 = vunpack.c.l.b16 %v1496
  %v2525 = vunpack.c.l.b16 %v1497
  %v2526 = vunpack.c.l.b16 %v1498
  %v2527 = vunpack.c.l.b16 %v1499
  %v2528 = vunpack.c.l.b16 %v1500
  %v2529 = vunpack.c.l.b16 %v1501
  %v2530 = vunpack.c.l.b16 %v1502
  %v2531 = vunpack.c.l.b16 %v1503
  %v2532 = vunpack.c.l.b16 %v1504
  %v2533 = vunpack.c.l.b16 %v1505
  %v2534 = vunpack.c.l.b16 %v1506
  %v2535 = vunpack.c.l.b16 %v1507
  %v2536 = vunpack.c.l.b16 %v1508
  %v2537 = vunpack.c.l.b16 %v1509
  %v2538 = vunpack.c.l.b16 %v1510
  %v2539 = vunpack.c.l.b16 %v1511
  %v2540 = vunpack.c.l.b16 %v1512
  %v2541 = vunpack.c.l.b16 %v1513
  %v2542 = vunpack.c.l.b16 %v1514
  %v2543 = vunpack.c.l.b16 %v1515
  %v2544 = vunpack.c.l.b16 %v1516
  %v2545 = vunpack.c.l.b16 %v1517
  %v2546 = vunpack.c.l.b16 %v1518
  %v2547 = vunpack.c.l.b16 %v1519
  %v2548 = vunpack.c.l.b16 %v1520
  %v2549 = vunpack.c.l.b16 %v1521
  %v2550 = vunpack.c.l.b16 %v1522
  %v2551 = vunpack.c.l.b16 %v1523
  %v2552 = vunpack.c.l.b16 %v1524
  %v2553 = vunpack.c.l.b16 %v1525
  %v2554 = vunpack.c.l.b16 %v1526
  %v2555 = vunpack.c.l.b16 %v1527
  %v2556 = vunpack.c.l.b16 %v1528
  %v2557 = vunpack.c.l.b16 %v1529
  %v2558 = vunpack.c.l.b16 %v1530
  %v2559 = vunpack.c.l.b16 %v1531
  %v2560 = vunpack.c.l.b16 %v1532
  %v2561 = vunpack.c.l.b16 %v1533
  %v2562 = vunpack.c.l.b16 %v1534
  %v2563 = vunpack.c.l.b16 %v1535
  %v2564 = vunpack.c.l.b16 %v1536
  %v2565 = vunpack.c.l.b16 %v1537
  %v2566 = vunpack.c.l.b16 %v1538
  %v2567 = vunpack.c.l.b16 %v1539
  %v2568 = vunpack.c.l.b16 %v1540
  %v2569 = vunpack.c.l.b16 %v1541
  %v2570 = vunpack.c.l.b16 %v1542
  %v2571 = vunpack.c.l.b16 %v1543
  %v2572 = vunpack.c.l.b16 %v1544
  %v2573 = vunpack.c.l.b16 %v1545
  %v2574 = vunpack.c.l.b16 %v1546
  %v2575 = vunpack.c.l.b16 %v1547
  %v2576 = vunpack.c.l.b16 %v1548
  %v2577 = vunpack.c.l.b16 %v1549
  %v2578 = vunpack.c.l.b16 %v1550
  %v2579 = vunpack.c.l.b16 %v1551
  %v2580 = vunpack.c.l.b16 %v1552
  %v2581 = vunpack.c.l.b16 %v1553
  %v2582 = vunpack.c.l.b16 %v1554
  %v2583 = vpack.c.b16 %v2072, %v2071
  %v2584 = vpack.c.b16 %v2074, %v2073
  %v2585 = vpack.c.b16 %v2076, %v2075
  %v2586 = vpack.c.b16 %v2078, %v2077
  %v2587 = vpack.c.b16 %v2080, %v2079
  %v2588 = vpack.c.b16 %v2082, %v2081
  %v2589 = vpack.c.b16 %v2084, %v2083
  %v2590 = vpack.c.b16 %v2086, %v2085
  %v2591 = vpack.c.b16 %v2088, %v2087
  %v2592 = vpack.c.b16 %v2090, %v2089
  %v2593 = vpack.c.b16 %v2092, %v2091
  %v2594 = vpack.c.b16 %v2094, %v2093
  %v2595 = vpack.c.b16 %v2096, %v2095
  %v2596 = vpack.c.b16 %v2098, %v2097
  %v2597 = vpack.c.b16 %v2100, %v2099
  %v2598 = vpack.c.b16 %v2102, %v2101
  %v2599 = vpack.c.b16 %v2104, %v2103
  %v2600 = vpack.c.b16 %v2106, %v2105
  %v2601 = vpack.c.b16 %v2108, %v2107
  %v2602 = vpack.c.b16 %v2110, %v2109
  %v2603 = vpack.c.b16 %v2112, %v2111
  %v2604 = vpack.c.b16 %v2114, %v2113
  %v2605 = vpack.c.b16 %v2116, %v2115
  %v2606 = vpack.c.b16 %v2118, %v2117
  %v2607 = vpack.c.b16 %v2120, %v2119
  %v2608 = vpack.c.b16 %v2122, %v2121
  %v2609 = vpack.c.b16 %v2124, %v2123
  %v2610 = vpack.c.b16 %v2126, %v2125
  %v2611 = vpack.c.b16 %v2128, %v2127
  %v2612 = vpack.c.b16 %v2130, %v2129
  %v2613 = vpack.c.b16 %v2132, %v2131
  %v2614 = vpack.c.b16 %v2134, %v2133
  %v2615 = vpack.c.b16 %v2136, %v2135
  %v2616 = vpack.c.b16 %v2138, %v2137
  %v2617 = vpack.c.b16 %v2140, %v2139
  %v2618 = vpack.c.b16 %v2142, %v2141
  %v2619 = vpack.c.b16 %v2144, %v2143
  %v2620 = vpack.c.b16 %v2146, %v2145
  %v2621 = vpack.c.b16 %v2148, %v2147
  %v2622 = vpack.c.b16 %v2150, %v2149
  %v2623 = vpack.c.b16 %v2152, %v2151
  %v2624 = vpack.c.b16 %v2154, %v2153
  %v2625 = vpack.c.b16 %v2156, %v2155
  %v2626 = vpack.c.b16 %v2158, %v2157
  %v2627 = vpack.c.b16 %v2160, %v2159
  %v2628 = vpack.c.b16 %v2162, %v2161
  %v2629 = vpack.c.b16 %v2164, %v2163
  %v2630 = vpack.c.b16 %v2166, %v2165
  %v2631 = vpack.c.b16 %v2168, %v2167
  %v2632 = vpack.c.b16 %v2170, %v2169
  %v2633 = vpack.c.b16 %v2172, %v2171
  %v2634 = vpack.c.b16 %v2174, %v2173
  %v2635 = vpack.c.b16 %v2176, %v2175
  %v2636 = vpack.c.b16 %v2178, %v2177
  %v2637 = vpack.c.b16 %v2180, %v2179
  %v2638 = vpack.c.b16 %v2182, %v2181
  %v2639 = vpack.c.b16 %v2184, %v2183
  %v2640 = vpack.c.b16 %v2186, %v2185
  %v2641 = vpack.c.b16 %v2188, %v2187
  %v2642 = vpack.c.b16 %v2190, %v2189
  %v2643 = vpack.c.b16 %v2192, %v2191
  %v2644 = vpack.c.b16 %v2194, %v2193
  %v2645 = vpack.c.b16 %v2196, %v2195
  %v2646 = vpack.c.b16 %v2198, %v2197
  %v2647 = vpack.c.b16 %v2200, %v2199
  %v2648 = vpack.c.b16 %v2202, %v2201
  %v2649 = vpack.c.b16 %v2204, %v2203
  %v2650 = vpack.c.b16 %v2206, %v2205
  %v2651 = vpack.c.b16 %v2208, %v2207
  %v2652 = vpack.c.b16 %v2210, %v2209
  %v2653 = vpack.c.b16 %v2212, %v2211
  %v2654 = vpack.c.b16 %v2214, %v2213
  %v2655 = vpack.c.b16 %v2216, %v2215
  %v2656 = vpack.c.b16 %v2218, %v2217
  %v2657 = vpack.c.b16 %v2220, %v2219
  %v2658 = vpack.c.b16 %v2222, %v2221
  %v2659 = vpack.c.b16 %v2224, %v2223
  %v2660 = vpack.c.b16 %v2226, %v2225
  %v2661 = vpack.c.b16 %v2228, %v2227
  %v2662 = vpack.c.b16 %v2230, %v2229
  %v2663 = vpack.c.b16 %v2232, %v2231
  %v2664 = vpack.c.b16 %v2234, %v2233
  %v2665 = vpack.c.b16 %v2236, %v2235
  %v2666 = vpack.c.b16 %v2238, %v2237
  %v2667 = vpack.c.b16 %v2240, %v2239
  %v2668 = vpack.c.b16 %v2242, %v2241
  %v2669 = vpack.c.b16 %v2244, %v2243
  %v2670 = vpack.c.b16 %v2246, %v2245
  %v2671 = vpack.c.b16 %v2248, %v2247
  %v2672 = vpack.c.b16 %v2250, %v2249
  %v2673 = vpack.c.b16 %v2252, %v2251
  %v2674 = vpack.c.b16 %v2254, %v2253
  %v2675 = vpack.c.b16 %v2256, %v2255
  %v2676 = vpack.c.b16 %v2258, %v2257
  %v2677 = vpack.c.b16 %v2260, %v2259
  %v2678 = vpack.c.b16 %v2262, %v2261
  %v2679 = vpack.c.b16 %v2264, %v2263
  %v2680 = vpack.c.b16 %v2266, %v2265
  %v2681 = vpack.c.b16 %v2268, %v2267
  %v2682 = vpack.c.b16 %v2270, %v2269
  %v2683 = vpack.c.b16 %v2272, %v2271
  %v2684 = vpack.c.b16 %v2274, %v2273
  %v2685 = vpack.c.b16 %v2276, %v2275
  %v2686 = vpack.c.b16 %v2278, %v2277
  %v2687 = vpack.c.b16 %v2280, %v2279
  %v2688 = vpack.c.b16 %v2282, %v2281
  %v2689 = vpack.c.b16 %v2284, %v2283
  %v2690 = vpack.c.b16 %v2286, %v2285
  %v2691 = vpack.c.b16 %v2288, %v2287
  %v2692 = vpack.c.b16 %v2290, %v2289
  %v2693 = vpack.c.b16 %v2292, %v2291
  %v2694 = vpack.c.b16 %v2294, %v2293
  %v2695 = vpack.c.b16 %v2296, %v2295
  %v2696 = vpack.c.b16 %v2298, %v2297
  %v2697 = vpack.c.b16 %v2300, %v2299
  %v2698 = vpack.c.b16 %v2302, %v2301
  %v2699 = vpack.c.b16 %v2304, %v2303
  %v2700 = vpack.c.b16 %v2306, %v2305
  %v2701 = vpack.c.b16 %v2308, %v2307
  %v2702 = vpack.c.b16 %v2310, %v2309
  %v2703 = vpack.c.b16 %v2312, %v2311
  %v2704 = vpack.c.b16 %v2314, %v2313
  %v2705 = vpack.c.b16 %v2316, %v2315
  %v2706 = vpack.c.b16 %v2318, %v2317
  %v2707 = vpack.c.b16 %v2320, %v2319
  %v2708 = vpack.c.b16 %v2322, %v2321
  %v2709 = vpack.c.b16 %v2324, %v2323
  %v2710 = vpack.c.b16 %v2326, %v2325
  %v2711 = vpack.c.b16 %v2328, %v2327
  %v2712 = vpack.c.b16 %v2330, %v2329
  %v2713 = vpack.c.b16 %v2332, %v2331
  %v2714 = vpack.c.b16 %v2334, %v2333
  %v2715 = vpack.c.b16 %v2336, %v2335
  %v2716 = vpack.c.b16 %v2338, %v2337
  %v2717 = vpack.c.b16 %v2340, %v2339
  %v2718 = vpack.c.b16 %v2342, %v2341
  %v2719 = vpack.c.b16 %v2344, %v2343
  %v2720 = vpack.c.b16 %v2346, %v2345
  %v2721 = vpack.c.b16 %v2348, %v2347
  %v2722 = vpack.c.b16 %v2350, %v2349
  %v2723 = vpack.c.b16 %v2352, %v2351
  %v2724 = vpack.c.b16 %v2354, %v2353
  %v2725 = vpack.c.b16 %v2356, %v2355
  %v2726 = vpack.c.b16 %v2358, %v2357
  %v2727 = vpack.c.b16 %v2360, %v2359
  %v2728 = vpack.c.b16 %v2362, %v2361
  %v2729 = vpack.c.b16 %v2364, %v2363
  %v2730 = vpack.c.b16 %v2366, %v2365
  %v2731 = vpack.c.b16 %v2368, %v2367
  %v2732 = vpack.c.b16 %v2370, %v2369
  %v2733 = vpack.c.b16 %v2372, %v2371
  %v2734 = vpack.c.b16 %v2374, %v2373
  %v2735 = vpack.c.b16 %v2376, %v2375
  %v2736 = vpack.c.b16 %v2378, %v2377
  %v2737 = vpack.c.b16 %v2380, %v2379
  %v2738 = vpack.c.b16 %v2382, %v2381
  %v2739 = vpack.c.b16 %v2384, %v2383
  %v2740 = vpack.c.b16 %v2386, %v2385
  %v2741 = vpack.c.b16 %v2388, %v2387
  %v2742 = vpack.c.b16 %v2390, %v2389
  %v2743 = vpack.c.b16 %v2392, %v2391
  %v2744 = vpack.c.b16 %v2394, %v2393
  %v2745 = vpack.c.b16 %v2396, %v2395
  %v2746 = vpack.c.b16 %v2398, %v2397
  %v2747 = vpack.c.b16 %v2400, %v2399
  %v2748 = vpack.c.b16 %v2402, %v2401
  %v2749 = vpack.c.b16 %v2404, %v2403
  %v2750 = vpack.c.b16 %v2406, %v2405
  %v2751 = vpack.c.b16 %v2408, %v2407
  %v2752 = vpack.c.b16 %v2410, %v2409
  %v2753 = vpack.c.b16 %v2412, %v2411
  %v2754 = vpack.c.b16 %v2414, %v2413
  %v2755 = vpack.c.b16 %v2416, %v2415
  %v2756 = vpack.c.b16 %v2418, %v2417
  %v2757 = vpack.c.b16 %v2420, %v2419
  %v2758 = vpack.c.b16 %v2422, %v2421
  %v2759 = vpack.c.b16 %v2424, %v2423
  %v2760 = vpack.c.b16 %v2426, %v2425
  %v2761 = vpack.c.b16 %v2428, %v2427
  %v2762 = vpack.c.b16 %v2430, %v2429
  %v2763 = vpack.c.b16 %v2432, %v2431
  %v2764 = vpack.c.b16 %v2434, %v2433
  %v2765 = vpack.c.b16 %v2436, %v2435
  %v2766 = vpack.c.b16 %v2438, %v2437
  %v2767 = vpack.c.b16 %v2440, %v2439
  %v2768 = vpack.c.b16 %v2442, %v2441
  %v2769 = vpack.c.b16 %v2444, %v2443
  %v2770 = vpack.c.b16 %v2446, %v2445
  %v2771 = vpack.c.b16 %v2448, %v2447
  %v2772 = vpack.c.b16 %v2450, %v2449
  %v2773 = vpack.c.b16 %v2452, %v2451
  %v2774 = vpack.c.b16 %v2454, %v2453
  %v2775 = vpack.c.b16 %v2456, %v2455
  %v2776 = vpack.c.b16 %v2458, %v2457
  %v2777 = vpack.c.b16 %v2460, %v2459
  %v2778 = vpack.c.b16 %v2462, %v2461
  %v2779 = vpack.c.b16 %v2464, %v2463
  %v2780 = vpack.c.b16 %v2466, %v2465
  %v2781 = vpack.c.b16 %v2468, %v2467
  %v2782 = vpack.c.b16 %v2470, %v2469
  %v2783 = vpack.c.b16 %v2472, %v2471
  %v2784 = vpack.c.b16 %v2474, %v2473
  %v2785 = vpack.c.b16 %v2476, %v2475
  %v2786 = vpack.c.b16 %v2478, %v2477
  %v2787 = vpack.c.b16 %v2480, %v2479
  %v2788 = vpack.c.b16 %v2482, %v2481
  %v2789 = vpack.c.b16 %v2484, %v2483
  %v2790 = vpack.c.b16 %v2486, %v2485
  %v2791 = vpack.c.b16 %v2488, %v2487
  %v2792 = vpack.c.b16 %v2490, %v2489
  %v2793 = vpack.c.b16 %v2492, %v2491
  %v2794 = vpack.c.b16 %v2494, %v2493
  %v2795 = vpack.c.b16 %v2496, %v2495
  %v2796 = vpack.c.b16 %v2498, %v2497
  %v2797 = vpack.c.b16 %v2500, %v2499
  %v2798 = vpack.c.b16 %v2502, %v2501
  %v2799 = vpack.c.b16 %v2504, %v2503
  %v2800 = vpack.c.b16 %v2506, %v2505
  %v2801 = vpack.c.b16 %v2508, %v2507
  %v2802 = vpack.c.b16 %v2510, %v2509
  %v2803 = vpack.c.b16 %v2512, %v2511
  %v2804 = vpack.c.b16 %v2514, %v2513
  %v2805 = vpack.c.b16 %v2516, %v2515
  %v2806 = vpack.c.b16 %v2518, %v2517
  %v2807 = vpack.c.b16 %v2520, %v2519
  %v2808 = vpack.c.b16 %v2522, %v2521
  %v2809 = vpack.c.b16 %v2524, %v2523
  %v2810 = vpack.c.b16 %v2526, %v2525
  %v2811 = vpack.c.b16 %v2528, %v2527
  %v2812 = vpack.c.b16 %v2530, %v2529
  %v2813 = vpack.c.b16 %v2532, %v2531
  %v2814 = vpack.c.b16 %v2534, %v2533
  %v2815 = vpack.c.b16 %v2536, %v2535
  %v2816 = vpack.c.b16 %v2538, %v2537
  %v2817 = vpack.c.b16 %v2540, %v2539
  %v2818 = vpack.c.b16 %v2542, %v2541
  %v2819 = vpack.c.b16 %v2544, %v2543
  %v2820 = vpack.c.b16 %v2546, %v2545
  %v2821 = vpack.c.b16 %v2548, %v2547
  %v2822 = vpack.c.b16 %v2550, %v2549
  %v2823 = vpack.c.b16 %v2552, %v2551
  %v2824 = vpack.c.b16 %v2554, %v2553
  %v2825 = vpack.c.b16 %v2556, %v2555
  %v2826 = vpack.c.b16 %v2558, %v2557
  %v2827 = vpack.c.b16 %v2560, %v2559
  %v2828 = vpack.c.b16 %v2562, %v2561
  %v2829 = vpack.c.b16 %v2564, %v2563
  %v2830 = vpack.c.b16 %v2566, %v2565
  %v2831 = vpack.c.b16 %v2568, %v2567
  %v2832 = vpack.c.b16 %v2570, %v2569
  %v2833 = vpack.c.b16 %v2572, %v2571
  %v2834 = vpack.c.b16 %v2574, %v2573
  %v2835 = vpack.c.b16 %v2576, %v2575
  %v2836 = vpack.c.b16 %v2578, %v2577
  %v2837 = vpack.c.b16 %v2580, %v2579
  %v2838 = vpack.c.b16 %v2582, %v2581
  %v2843 = vunpack.c.l.b16 %v1555
  %v2844 = vunpack.c.l.b16 %v1556
  %v2845 = vunpack.c.l.b16 %v1557
  %v2846 = vunpack.c.l.b16 %v1558
  %v2847 = vpack.c.b16 %v2844, %v2843
  %v2848 = vpack.c.b16 %v2846, %v2845
  %vm2851 = vcmask 261120
  %v2853 = vsel %vm2851, %v2583, 0
  %v2856 = vsel %vm2851, %v2584, 0
  %v2859 = vsel %vm2851, %v2585, 0
  %v2862 = vsel %vm2851, %v2586, 0
  %v2865 = vsel %vm2851, %v2587, 0
  %v2868 = vsel %vm2851, %v2588, 0
  %v2871 = vsel %vm2851, %v2589, 0
  %v2874 = vsel %vm2851, %v2590, 0
  %v2877 = vsel %vm2851, %v2591, 0
  %v2880 = vsel %vm2851, %v2592, 0
  %v2883 = vsel %vm2851, %v2593, 0
  %v2886 = vsel %vm2851, %v2594, 0
  %v2889 = vsel %vm2851, %v2595, 0
  %v2892 = vsel %vm2851, %v2596, 0
  %v2895 = vsel %vm2851, %v2597, 0
  %v2898 = vsel %vm2851, %v2598, 0
  %v2901 = vsel %vm2851, %v2599, 0
  %v2904 = vsel %vm2851, %v2600, 0
  %v2907 = vsel %vm2851, %v2601, 0
  %v2910 = vsel %vm2851, %v2602, 0
  %v2913 = vsel %vm2851, %v2603, 0
  %v2916 = vsel %vm2851, %v2604, 0
  %v2919 = vsel %vm2851, %v2605, 0
  %v2922 = vsel %vm2851, %v2606, 0
  %v2925 = vsel %vm2851, %v2607, 0
  %v2928 = vsel %vm2851, %v2608, 0
  %v2931 = vsel %vm2851, %v2609, 0
  %v2934 = vsel %vm2851, %v2610, 0
  %v2937 = vsel %vm2851, %v2611, 0
  %v2940 = vsel %vm2851, %v2612, 0
  %v2943 = vsel %vm2851, %v2613, 0
  %v2946 = vsel %vm2851, %v2614, 0
  %v2949 = vsel %vm2851, %v2615, 0
  %v2952 = vsel %vm2851, %v2616, 0
  %v2955 = vsel %vm2851, %v2617, 0
  %v2958 = vsel %vm2851, %v2618, 0
  %v2961 = vsel %vm2851, %v2619, 0
  %v2964 = vsel %vm2851, %v2620, 0
  %v2967 = vsel %vm2851, %v2621, 0
  %v2970 = vsel %vm2851, %v2622, 0
  %v2973 = vsel %vm2851, %v2623, 0
  %v2976 = vsel %vm2851, %v2624, 0
  %v2979 = vsel %vm2851, %v2625, 0
  %v2982 = vsel %vm2851, %v2626, 0
  %v2985 = vsel %vm2851, %v2627, 0
  %v2988 = vsel %vm2851, %v2628, 0
  %v2991 = vsel %vm2851, %v2629, 0
  %v2994 = vsel %vm2851, %v2630, 0
  %v2997 = vsel %vm2851, %v2631, 0
  %v3000 = vsel %vm2851, %v2632, 0
  %v3003 = vsel %vm2851, %v2633, 0
  %v3006 = vsel %vm2851, %v2634, 0
  %v3009 = vsel %vm2851, %v2635, 0
  %v3012 = vsel %vm2851, %v2636, 0
  %v3015 = vsel %vm2851, %v2637, 0
  %v3018 = vsel %vm2851, %v2638, 0
  %v3021 = vsel %vm2851, %v2639, 0
  %v3024 = vsel %vm2851, %v2640, 0
  %v3027 = vsel %vm2851, %v2641, 0
  %v3030 = vsel %vm2851, %v2642, 0
  %v3033 = vsel %vm2851, %v2643, 0
  %v3036 = vsel %vm2851, %v2644, 0
  %v3039 = vsel %vm2851, %v2645, 0
  %v3042 = vsel %vm2851, %v2646, 0
  %v3045 = vsel %vm2851, %v2647, 0
  %v3048 = vsel %vm2851, %v2648, 0
  %v3051 = vsel %vm2851, %v2649, 0
  %v3054 = vsel %vm2851, %v2650, 0
  %v3057 = vsel %vm2851, %v2651, 0
  %v3060 = vsel %vm2851, %v2652, 0
  %v3063 = vsel %vm2851, %v2653, 0
  %v3066 = vsel %vm2851, %v2654, 0
  %v3069 = vsel %vm2851, %v2655, 0
  %v3072 = vsel %vm2851, %v2656, 0
  %v3075 = vsel %vm2851, %v2657, 0
  %v3078 = vsel %vm2851, %v2658, 0
  %v3081 = vsel %vm2851, %v2659, 0
  %v3084 = vsel %vm2851, %v2660, 0
  %v3087 = vsel %vm2851, %v2661, 0
  %v3090 = vsel %vm2851, %v2662, 0
  %v3093 = vsel %vm2851, %v2663, 0
  %v3096 = vsel %vm2851, %v2664, 0
  %v3099 = vsel %vm2851, %v2665, 0
  %v3102 = vsel %vm2851, %v2666, 0
  %v3105 = vsel %vm2851, %v2667, 0
  %v3108 = vsel %vm2851, %v2668, 0
  %v3111 = vsel %vm2851, %v2669, 0
  %v3114 = vsel %vm2851, %v2670, 0
  %v3117 = vsel %vm2851, %v2671, 0
  %v3120 = vsel %vm2851, %v2672, 0
  %v3123 = vsel %vm2851, %v2673, 0
  %v3126 = vsel %vm2851, %v2674, 0
  %v3129 = vsel %vm2851, %v2675, 0
  %v3132 = vsel %vm2851, %v2676, 0
  %v3135 = vsel %vm2851, %v2677, 0
  %v3138 = vsel %vm2851, %v2678, 0
  %v3141 = vsel %vm2851, %v2679, 0
  %v3144 = vsel %vm2851, %v2680, 0
  %v3147 = vsel %vm2851, %v2681, 0
  %v3150 = vsel %vm2851, %v2682, 0
  %v3153 = vsel %vm2851, %v2683, 0
  %v3156 = vsel %vm2851, %v2684, 0
  %v3159 = vsel %vm2851, %v2685, 0
  %v3162 = vsel %vm2851, %v2686, 0
  %v3165 = vsel %vm2851, %v2687, 0
  %v3168 = vsel %vm2851, %v2688, 0
  %v3171 = vsel %vm2851, %v2689, 0
  %v3174 = vsel %vm2851, %v2690, 0
  %v3177 = vsel %vm2851, %v2691, 0
  %v3180 = vsel %vm2851, %v2692, 0
  %v3183 = vsel %vm2851, %v2693, 0
  %v3186 = vsel %vm2851, %v2694, 0
  %v3189 = vsel %vm2851, %v2695, 0
  %v3192 = vsel %vm2851, %v2696, 0
  %v3195 = vsel %vm2851, %v2697, 0
  %v3198 = vsel %vm2851, %v2698, 0
  %v3201 = vsel %vm2851, %v2699, 0
  %v3204 = vsel %vm2851, %v2700, 0
  %v3207 = vsel %vm2851, %v2701, 0
  %v3210 = vsel %vm2851, %v2702, 0
  %v3213 = vsel %vm2851, %v2703, 0
  %v3216 = vsel %vm2851, %v2704, 0
  %v3219 = vsel %vm2851, %v2705, 0
  %v3222 = vsel %vm2851, %v2706, 0
  %v3225 = vsel %vm2851, %v2707, 0
  %v3228 = vsel %vm2851, %v2708, 0
  %v3231 = vsel %vm2851, %v2709, 0
  %v3234 = vsel %vm2851, %v2710, 0
  %v3237 = vsel %vm2851, %v2711, 0
  %v3240 = vsel %vm2851, %v2712, 0
  %v3243 = vsel %vm2851, %v2713, 0
  %v3246 = vsel %vm2851, %v2714, 0
  %v3249 = vsel %vm2851, %v2715, 0
  %v3252 = vsel %vm2851, %v2716, 0
  %v3255 = vsel %vm2851, %v2717, 0
  %v3258 = vsel %vm2851, %v2718, 0
  %v3261 = vsel %vm2851, %v2719, 0
  %v3264 = vsel %vm2851, %v2720, 0
  %v3267 = vsel %vm2851, %v2721, 0
  %v3270 = vsel %vm2851, %v2722, 0
  %v3273 = vsel %vm2851, %v2723, 0
  %v3276 = vsel %vm2851, %v2724, 0
  %v3279 = vsel %vm2851, %v2725, 0
  %v3282 = vsel %vm2851, %v2726, 0
  %v3285 = vsel %vm2851, %v2727, 0
  %v3288 = vsel %vm2851, %v2728, 0
  %v3291 = vsel %vm2851, %v2729, 0
  %v3294 = vsel %vm2851, %v2730, 0
  %v3297 = vsel %vm2851, %v2731, 0
  %v3300 = vsel %vm2851, %v2732, 0
  %v3303 = vsel %vm2851, %v2733, 0
  %v3306 = vsel %vm2851, %v2734, 0
  %v3309 = vsel %vm2851, %v2735, 0
  %v3312 = vsel %vm2851, %v2736, 0
  %v3315 = vsel %vm2851, %v2737, 0
  %v3318 = vsel %vm2851, %v2738, 0
  %v3321 = vsel %vm2851, %v2739, 0
  %v3324 = vsel %vm2851, %v2740, 0
  %v3327 = vsel %vm2851, %v2741, 0
  %v3330 = vsel %vm2851, %v2742, 0
  %v3333 = vsel %vm2851, %v2743, 0
  %v3336 = vsel %vm2851, %v2744, 0
  %v3339 = vsel %vm2851, %v2745, 0
  %v3342 = vsel %vm2851, %v2746, 0
  %v3345 = vsel %vm2851, %v2747, 0
  %v3348 = vsel %vm2851, %v2748, 0
  %v3351 = vsel %vm2851, %v2749, 0
  %v3354 = vsel %vm2851, %v2750, 0
  %v3357 = vsel %vm2851, %v2751, 0
  %v3360 = vsel %vm2851, %v2752, 0
  %v3363 = vsel %vm2851, %v2753, 0
  %v3366 = vsel %vm2851, %v2754, 0
  %v3369 = vsel %vm2851, %v2755, 0
  %v3372 = vsel %vm2851, %v2756, 0
  %v3375 = vsel %vm2851, %v2757, 0
  %v3378 = vsel %vm2851, %v2758, 0
  %v3381 = vsel %vm2851, %v2759, 0
  %v3384 = vsel %vm2851, %v2760, 0
  %v3387 = vsel %vm2851, %v2761, 0
  %v3390 = vsel %vm2851, %v2762, 0
  %v3393 = vsel %vm2851, %v2763, 0
  %v3396 = vsel %vm2851, %v2764, 0
  %v3399 = vsel %vm2851, %v2765, 0
  %v3402 = vsel %vm2851, %v2766, 0
  %v3405 = vsel %vm2851, %v2767, 0
  %v3408 = vsel %vm2851, %v2768, 0
  %v3411 = vsel %vm2851, %v2769, 0
  %v3414 = vsel %vm2851, %v2770, 0
  %v3417 = vsel %vm2851, %v2771, 0
  %v3420 = vsel %vm2851, %v2772, 0
  %v3423 = vsel %vm2851, %v2773, 0
  %v3426 = vsel %vm2851, %v2774, 0
  %v3429 = vsel %vm2851, %v2775, 0
  %v3432 = vsel %vm2851, %v2776, 0
  %v3435 = vsel %vm2851, %v2777, 0
  %v3438 = vsel %vm2851, %v2778, 0
  %v3441 = vsel %vm2851, %v2779, 0
  %v3444 = vsel %vm2851, %v2780, 0
  %v3447 = vsel %vm2851, %v2781, 0
  %v3450 = vsel %vm2851, %v2782, 0
  %v3453 = vsel %vm2851, %v2783, 0
  %v3456 = vsel %vm2851, %v2784, 0
  %v3459 = vsel %vm2851, %v2785, 0
  %v3462 = vsel %vm2851, %v2786, 0
  %v3465 = vsel %vm2851, %v2787, 0
  %v3468 = vsel %vm2851, %v2788, 0
  %v3471 = vsel %vm2851, %v2789, 0
  %v3474 = vsel %vm2851, %v2790, 0
  %v3477 = vsel %vm2851, %v2791, 0
  %v3480 = vsel %vm2851, %v2792, 0
  %v3483 = vsel %vm2851, %v2793, 0
  %v3486 = vsel %vm2851, %v2794, 0
  %v3489 = vsel %vm2851, %v2795, 0
  %v3492 = vsel %vm2851, %v2796, 0
  %v3495 = vsel %vm2851, %v2797, 0
  %v3498 = vsel %vm2851, %v2798, 0
  %v3501 = vsel %vm2851, %v2799, 0
  %v3504 = vsel %vm2851, %v2800, 0
  %v3507 = vsel %vm2851, %v2801, 0
  %v3510 = vsel %vm2851, %v2802, 0
  %v3513 = vsel %vm2851, %v2803, 0
  %v3516 = vsel %vm2851, %v2804, 0
  %v3519 = vsel %vm2851, %v2805, 0
  %v3522 = vsel %vm2851, %v2806, 0
  %v3525 = vsel %vm2851, %v2807, 0
  %v3528 = vsel %vm2851, %v2808, 0
  %v3531 = vsel %vm2851, %v2809, 0
  %v3534 = vsel %vm2851, %v2810, 0
  %v3537 = vsel %vm2851, %v2811, 0
  %v3540 = vsel %vm2851, %v2812, 0
  %v3543 = vsel %vm2851, %v2813, 0
  %v3546 = vsel %vm2851, %v2814, 0
  %v3549 = vsel %vm2851, %v2815, 0
  %v3552 = vsel %vm2851, %v2816, 0
  %v3555 = vsel %vm2851, %v2817, 0
  %v3558 = vsel %vm2851, %v2818, 0
  %v3561 = vsel %vm2851, %v2819, 0
  %v3564 = vsel %vm2851, %v2820, 0
  %v3567 = vsel %vm2851, %v2821, 0
  %v3570 = vsel %vm2851, %v2822, 0
  %v3573 = vsel %vm2851, %v2823, 0
  %v3576 = vsel %vm2851, %v2824, 0
  %v3579 = vsel %vm2851, %v2825, 0
  %v3582 = vsel %vm2851, %v2826, 0
  %v3585 = vsel %vm2851, %v2827, 0
  %v3588 = vsel %vm2851, %v2828, 0
  %v3591 = vsel %vm2851, %v2829, 0
  %v3594 = vsel %vm2851, %v2830, 0
  %v3597 = vsel %vm2851, %v2831, 0
  %v3600 = vsel %vm2851, %v2832, 0
  %v3603 = vsel %vm2851, %v2833, 0
  %v3606 = vsel %vm2851, %v2834, 0
  %v3609 = vsel %vm2851, %v2835, 0
  %v3612 = vsel %vm2851, %v2836, 0
  %v3615 = vsel %vm2851, %v2837, 0
  %v3618 = vsel %vm2851, %v2838, 0
  %3620 = vmatpush.bf16.msra.mxu0 0
  %3621 = vmatpush.bf16.msra.mxu0 0
  %3622 = vmatpush.bf16.msra.mxu0 0
  %3623 = vmatpush.bf16.msra.mxu0 0
  %3624 = vmatpush.bf16.msra.mxu0 0
  %3625 = vmatpush.bf16.msra.mxu0 0
  %3626 = vmatpush.bf16.msra.mxu0 %v2848
  %3627 = vmatpush.bf16.msra.mxu0 %v2847
  %3628 = vmatmul.bf16.gmra.mxu0 %v2853
  %v3629 = vpop.f32.mrf.mxu0
  %v3630 = vadd.f32 0.0, %v3629
  %v3631 = vpop.f32.mrf.mxu0
  %v3632 = vadd.f32 0.0, %v3631
  %3633 = vmatmul.bf16.gmra.mxu0 %v2856
  %v3634 = vpop.f32.mrf.mxu0
  %v3635 = vadd.f32 0.0, %v3634
  %v3636 = vpop.f32.mrf.mxu0
  %v3637 = vadd.f32 0.0, %v3636
  %3638 = vmatmul.bf16.gmra.mxu0 %v2859
  %v3639 = vpop.f32.mrf.mxu0
  %v3640 = vadd.f32 0.0, %v3639
  %v3641 = vpop.f32.mrf.mxu0
  %v3642 = vadd.f32 0.0, %v3641
  %3643 = vmatmul.bf16.gmra.mxu0 %v2862
  %v3644 = vpop.f32.mrf.mxu0
  %v3645 = vadd.f32 0.0, %v3644
  %v3646 = vpop.f32.mrf.mxu0
  %v3647 = vadd.f32 0.0, %v3646
  %3648 = vmatmul.bf16.gmra.mxu0 %v2865
  %v3649 = vpop.f32.mrf.mxu0
  %v3650 = vadd.f32 0.0, %v3649
  %v3651 = vpop.f32.mrf.mxu0
  %v3652 = vadd.f32 0.0, %v3651
  %3653 = vmatmul.bf16.gmra.mxu0 %v2868
  %v3654 = vpop.f32.mrf.mxu0
  %v3655 = vadd.f32 0.0, %v3654
  %v3656 = vpop.f32.mrf.mxu0
  %v3657 = vadd.f32 0.0, %v3656
  %3658 = vmatmul.bf16.gmra.mxu0 %v2871
  %v3659 = vpop.f32.mrf.mxu0
  %v3660 = vadd.f32 0.0, %v3659
  %v3661 = vpop.f32.mrf.mxu0
  %v3662 = vadd.f32 0.0, %v3661
  %3663 = vmatmul.bf16.gmra.mxu0 %v2874
  %v3664 = vpop.f32.mrf.mxu0
  %v3665 = vadd.f32 0.0, %v3664
  %v3666 = vpop.f32.mrf.mxu0
  %v3667 = vadd.f32 0.0, %v3666
  %3668 = vmatmul.bf16.gmra.mxu0 %v2877
  %v3669 = vpop.f32.mrf.mxu0
  %v3670 = vadd.f32 0.0, %v3669
  %v3671 = vpop.f32.mrf.mxu0
  %v3672 = vadd.f32 0.0, %v3671
  %3673 = vmatmul.bf16.gmra.mxu0 %v2880
  %v3674 = vpop.f32.mrf.mxu0
  %v3675 = vadd.f32 0.0, %v3674
  %v3676 = vpop.f32.mrf.mxu0
  %v3677 = vadd.f32 0.0, %v3676
  %3678 = vmatmul.bf16.gmra.mxu0 %v2883
  %v3679 = vpop.f32.mrf.mxu0
  %v3680 = vadd.f32 0.0, %v3679
  %v3681 = vpop.f32.mrf.mxu0
  %v3682 = vadd.f32 0.0, %v3681
  %3683 = vmatmul.bf16.gmra.mxu0 %v2886
  %v3684 = vpop.f32.mrf.mxu0
  %v3685 = vadd.f32 0.0, %v3684
  %v3686 = vpop.f32.mrf.mxu0
  %v3687 = vadd.f32 0.0, %v3686
  %3688 = vmatmul.bf16.gmra.mxu0 %v2889
  %v3689 = vpop.f32.mrf.mxu0
  %v3690 = vadd.f32 0.0, %v3689
  %v3691 = vpop.f32.mrf.mxu0
  %v3692 = vadd.f32 0.0, %v3691
  %3693 = vmatmul.bf16.gmra.mxu0 %v2892
  %v3694 = vpop.f32.mrf.mxu0
  %v3695 = vadd.f32 0.0, %v3694
  %v3696 = vpop.f32.mrf.mxu0
  %v3697 = vadd.f32 0.0, %v3696
  %3698 = vmatmul.bf16.gmra.mxu0 %v2895
  %v3699 = vpop.f32.mrf.mxu0
  %v3700 = vadd.f32 0.0, %v3699
  %v3701 = vpop.f32.mrf.mxu0
  %v3702 = vadd.f32 0.0, %v3701
  %3703 = vmatmul.bf16.gmra.mxu0 %v2898
  %v3704 = vpop.f32.mrf.mxu0
  %v3705 = vadd.f32 0.0, %v3704
  %v3706 = vpop.f32.mrf.mxu0
  %v3707 = vadd.f32 0.0, %v3706
  %3708 = vmatmul.bf16.gmra.mxu0 %v2901
  %v3709 = vpop.f32.mrf.mxu0
  %v3710 = vadd.f32 0.0, %v3709
  %v3711 = vpop.f32.mrf.mxu0
  %v3712 = vadd.f32 0.0, %v3711
  %3713 = vmatmul.bf16.gmra.mxu0 %v2904
  %v3714 = vpop.f32.mrf.mxu0
  %v3715 = vadd.f32 0.0, %v3714
  %v3716 = vpop.f32.mrf.mxu0
  %v3717 = vadd.f32 0.0, %v3716
  %3718 = vmatmul.bf16.gmra.mxu0 %v2907
  %v3719 = vpop.f32.mrf.mxu0
  %v3720 = vadd.f32 0.0, %v3719
  %v3721 = vpop.f32.mrf.mxu0
  %v3722 = vadd.f32 0.0, %v3721
  %3723 = vmatmul.bf16.gmra.mxu0 %v2910
  %v3724 = vpop.f32.mrf.mxu0
  %v3725 = vadd.f32 0.0, %v3724
  %v3726 = vpop.f32.mrf.mxu0
  %v3727 = vadd.f32 0.0, %v3726
  %3728 = vmatmul.bf16.gmra.mxu0 %v2913
  %v3729 = vpop.f32.mrf.mxu0
  %v3730 = vadd.f32 0.0, %v3729
  %v3731 = vpop.f32.mrf.mxu0
  %v3732 = vadd.f32 0.0, %v3731
  %3733 = vmatmul.bf16.gmra.mxu0 %v2916
  %v3734 = vpop.f32.mrf.mxu0
  %v3735 = vadd.f32 0.0, %v3734
  %v3736 = vpop.f32.mrf.mxu0
  %v3737 = vadd.f32 0.0, %v3736
  %3738 = vmatmul.bf16.gmra.mxu0 %v2919
  %v3739 = vpop.f32.mrf.mxu0
  %v3740 = vadd.f32 0.0, %v3739
  %v3741 = vpop.f32.mrf.mxu0
  %v3742 = vadd.f32 0.0, %v3741
  %3743 = vmatmul.bf16.gmra.mxu0 %v2922
  %v3744 = vpop.f32.mrf.mxu0
  %v3745 = vadd.f32 0.0, %v3744
  %v3746 = vpop.f32.mrf.mxu0
  %v3747 = vadd.f32 0.0, %v3746
  %3748 = vmatmul.bf16.gmra.mxu0 %v2925
  %v3749 = vpop.f32.mrf.mxu0
  %v3750 = vadd.f32 0.0, %v3749
  %v3751 = vpop.f32.mrf.mxu0
  %v3752 = vadd.f32 0.0, %v3751
  %3753 = vmatmul.bf16.gmra.mxu0 %v2928
  %v3754 = vpop.f32.mrf.mxu0
  %v3755 = vadd.f32 0.0, %v3754
  %v3756 = vpop.f32.mrf.mxu0
  %v3757 = vadd.f32 0.0, %v3756
  %3758 = vmatmul.bf16.gmra.mxu0 %v2931
  %v3759 = vpop.f32.mrf.mxu0
  %v3760 = vadd.f32 0.0, %v3759
  %v3761 = vpop.f32.mrf.mxu0
  %v3762 = vadd.f32 0.0, %v3761
  %3763 = vmatmul.bf16.gmra.mxu0 %v2934
  %v3764 = vpop.f32.mrf.mxu0
  %v3765 = vadd.f32 0.0, %v3764
  %v3766 = vpop.f32.mrf.mxu0
  %v3767 = vadd.f32 0.0, %v3766
  %3768 = vmatmul.bf16.gmra.mxu0 %v2937
  %v3769 = vpop.f32.mrf.mxu0
  %v3770 = vadd.f32 0.0, %v3769
  %v3771 = vpop.f32.mrf.mxu0
  %v3772 = vadd.f32 0.0, %v3771
  %3773 = vmatmul.bf16.gmra.mxu0 %v2940
  %v3774 = vpop.f32.mrf.mxu0
  %v3775 = vadd.f32 0.0, %v3774
  %v3776 = vpop.f32.mrf.mxu0
  %v3777 = vadd.f32 0.0, %v3776
  %3778 = vmatmul.bf16.gmra.mxu0 %v2943
  %v3779 = vpop.f32.mrf.mxu0
  %v3780 = vadd.f32 0.0, %v3779
  %v3781 = vpop.f32.mrf.mxu0
  %v3782 = vadd.f32 0.0, %v3781
  %3783 = vmatmul.bf16.gmra.mxu0 %v2946
  %v3784 = vpop.f32.mrf.mxu0
  %v3785 = vadd.f32 0.0, %v3784
  %v3786 = vpop.f32.mrf.mxu0
  %v3787 = vadd.f32 0.0, %v3786
  %3788 = vmatmul.bf16.gmra.mxu0 %v2949
  %v3789 = vpop.f32.mrf.mxu0
  %v3790 = vadd.f32 0.0, %v3789
  %v3791 = vpop.f32.mrf.mxu0
  %v3792 = vadd.f32 0.0, %v3791
  %3793 = vmatmul.bf16.gmra.mxu0 %v2952
  %v3794 = vpop.f32.mrf.mxu0
  %v3795 = vadd.f32 0.0, %v3794
  %v3796 = vpop.f32.mrf.mxu0
  %v3797 = vadd.f32 0.0, %v3796
  %3798 = vmatmul.bf16.gmra.mxu0 %v2955
  %v3799 = vpop.f32.mrf.mxu0
  %v3800 = vadd.f32 0.0, %v3799
  %v3801 = vpop.f32.mrf.mxu0
  %v3802 = vadd.f32 0.0, %v3801
  %3803 = vmatmul.bf16.gmra.mxu0 %v2958
  %v3804 = vpop.f32.mrf.mxu0
  %v3805 = vadd.f32 0.0, %v3804
  %v3806 = vpop.f32.mrf.mxu0
  %v3807 = vadd.f32 0.0, %v3806
  %3808 = vmatmul.bf16.gmra.mxu0 %v2961
  %v3809 = vpop.f32.mrf.mxu0
  %v3810 = vadd.f32 0.0, %v3809
  %v3811 = vpop.f32.mrf.mxu0
  %v3812 = vadd.f32 0.0, %v3811
  %3813 = vmatmul.bf16.gmra.mxu0 %v2964
  %v3814 = vpop.f32.mrf.mxu0
  %v3815 = vadd.f32 0.0, %v3814
  %v3816 = vpop.f32.mrf.mxu0
  %v3817 = vadd.f32 0.0, %v3816
  %3818 = vmatmul.bf16.gmra.mxu0 %v2967
  %v3819 = vpop.f32.mrf.mxu0
  %v3820 = vadd.f32 0.0, %v3819
  %v3821 = vpop.f32.mrf.mxu0
  %v3822 = vadd.f32 0.0, %v3821
  %3823 = vmatmul.bf16.gmra.mxu0 %v2970
  %v3824 = vpop.f32.mrf.mxu0
  %v3825 = vadd.f32 0.0, %v3824
  %v3826 = vpop.f32.mrf.mxu0
  %v3827 = vadd.f32 0.0, %v3826
  %3828 = vmatmul.bf16.gmra.mxu0 %v2973
  %v3829 = vpop.f32.mrf.mxu0
  %v3830 = vadd.f32 0.0, %v3829
  %v3831 = vpop.f32.mrf.mxu0
  %v3832 = vadd.f32 0.0, %v3831
  %3833 = vmatmul.bf16.gmra.mxu0 %v2976
  %v3834 = vpop.f32.mrf.mxu0
  %v3835 = vadd.f32 0.0, %v3834
  %v3836 = vpop.f32.mrf.mxu0
  %v3837 = vadd.f32 0.0, %v3836
  %3838 = vmatmul.bf16.gmra.mxu0 %v2979
  %v3839 = vpop.f32.mrf.mxu0
  %v3840 = vadd.f32 0.0, %v3839
  %v3841 = vpop.f32.mrf.mxu0
  %v3842 = vadd.f32 0.0, %v3841
  %3843 = vmatmul.bf16.gmra.mxu0 %v2982
  %v3844 = vpop.f32.mrf.mxu0
  %v3845 = vadd.f32 0.0, %v3844
  %v3846 = vpop.f32.mrf.mxu0
  %v3847 = vadd.f32 0.0, %v3846
  %3848 = vmatmul.bf16.gmra.mxu0 %v2985
  %v3849 = vpop.f32.mrf.mxu0
  %v3850 = vadd.f32 0.0, %v3849
  %v3851 = vpop.f32.mrf.mxu0
  %v3852 = vadd.f32 0.0, %v3851
  %3853 = vmatmul.bf16.gmra.mxu0 %v2988
  %v3854 = vpop.f32.mrf.mxu0
  %v3855 = vadd.f32 0.0, %v3854
  %v3856 = vpop.f32.mrf.mxu0
  %v3857 = vadd.f32 0.0, %v3856
  %3858 = vmatmul.bf16.gmra.mxu0 %v2991
  %v3859 = vpop.f32.mrf.mxu0
  %v3860 = vadd.f32 0.0, %v3859
  %v3861 = vpop.f32.mrf.mxu0
  %v3862 = vadd.f32 0.0, %v3861
  %3863 = vmatmul.bf16.gmra.mxu0 %v2994
  %v3864 = vpop.f32.mrf.mxu0
  %v3865 = vadd.f32 0.0, %v3864
  %v3866 = vpop.f32.mrf.mxu0
  %v3867 = vadd.f32 0.0, %v3866
  %3868 = vmatmul.bf16.gmra.mxu0 %v2997
  %v3869 = vpop.f32.mrf.mxu0
  %v3870 = vadd.f32 0.0, %v3869
  %v3871 = vpop.f32.mrf.mxu0
  %v3872 = vadd.f32 0.0, %v3871
  %3873 = vmatmul.bf16.gmra.mxu0 %v3000
  %v3874 = vpop.f32.mrf.mxu0
  %v3875 = vadd.f32 0.0, %v3874
  %v3876 = vpop.f32.mrf.mxu0
  %v3877 = vadd.f32 0.0, %v3876
  %3878 = vmatmul.bf16.gmra.mxu0 %v3003
  %v3879 = vpop.f32.mrf.mxu0
  %v3880 = vadd.f32 0.0, %v3879
  %v3881 = vpop.f32.mrf.mxu0
  %v3882 = vadd.f32 0.0, %v3881
  %3883 = vmatmul.bf16.gmra.mxu0 %v3006
  %v3884 = vpop.f32.mrf.mxu0
  %v3885 = vadd.f32 0.0, %v3884
  %v3886 = vpop.f32.mrf.mxu0
  %v3887 = vadd.f32 0.0, %v3886
  %3888 = vmatmul.bf16.gmra.mxu0 %v3009
  %v3889 = vpop.f32.mrf.mxu0
  %v3890 = vadd.f32 0.0, %v3889
  %v3891 = vpop.f32.mrf.mxu0
  %v3892 = vadd.f32 0.0, %v3891
  %3893 = vmatmul.bf16.gmra.mxu0 %v3012
  %v3894 = vpop.f32.mrf.mxu0
  %v3895 = vadd.f32 0.0, %v3894
  %v3896 = vpop.f32.mrf.mxu0
  %v3897 = vadd.f32 0.0, %v3896
  %3898 = vmatmul.bf16.gmra.mxu0 %v3015
  %v3899 = vpop.f32.mrf.mxu0
  %v3900 = vadd.f32 0.0, %v3899
  %v3901 = vpop.f32.mrf.mxu0
  %v3902 = vadd.f32 0.0, %v3901
  %3903 = vmatmul.bf16.gmra.mxu0 %v3018
  %v3904 = vpop.f32.mrf.mxu0
  %v3905 = vadd.f32 0.0, %v3904
  %v3906 = vpop.f32.mrf.mxu0
  %v3907 = vadd.f32 0.0, %v3906
  %3908 = vmatmul.bf16.gmra.mxu0 %v3021
  %v3909 = vpop.f32.mrf.mxu0
  %v3910 = vadd.f32 0.0, %v3909
  %v3911 = vpop.f32.mrf.mxu0
  %v3912 = vadd.f32 0.0, %v3911
  %3913 = vmatmul.bf16.gmra.mxu0 %v3024
  %v3914 = vpop.f32.mrf.mxu0
  %v3915 = vadd.f32 0.0, %v3914
  %v3916 = vpop.f32.mrf.mxu0
  %v3917 = vadd.f32 0.0, %v3916
  %3918 = vmatmul.bf16.gmra.mxu0 %v3027
  %v3919 = vpop.f32.mrf.mxu0
  %v3920 = vadd.f32 0.0, %v3919
  %v3921 = vpop.f32.mrf.mxu0
  %v3922 = vadd.f32 0.0, %v3921
  %3923 = vmatmul.bf16.gmra.mxu0 %v3030
  %v3924 = vpop.f32.mrf.mxu0
  %v3925 = vadd.f32 0.0, %v3924
  %v3926 = vpop.f32.mrf.mxu0
  %v3927 = vadd.f32 0.0, %v3926
  %3928 = vmatmul.bf16.gmra.mxu0 %v3033
  %v3929 = vpop.f32.mrf.mxu0
  %v3930 = vadd.f32 0.0, %v3929
  %v3931 = vpop.f32.mrf.mxu0
  %v3932 = vadd.f32 0.0, %v3931
  %3933 = vmatmul.bf16.gmra.mxu0 %v3036
  %v3934 = vpop.f32.mrf.mxu0
  %v3935 = vadd.f32 0.0, %v3934
  %v3936 = vpop.f32.mrf.mxu0
  %v3937 = vadd.f32 0.0, %v3936
  %3938 = vmatmul.bf16.gmra.mxu0 %v3039
  %v3939 = vpop.f32.mrf.mxu0
  %v3940 = vadd.f32 0.0, %v3939
  %v3941 = vpop.f32.mrf.mxu0
  %v3942 = vadd.f32 0.0, %v3941
  %3943 = vmatmul.bf16.gmra.mxu0 %v3042
  %v3944 = vpop.f32.mrf.mxu0
  %v3945 = vadd.f32 0.0, %v3944
  %v3946 = vpop.f32.mrf.mxu0
  %v3947 = vadd.f32 0.0, %v3946
  %3948 = vmatmul.bf16.gmra.mxu0 %v3045
  %v3949 = vpop.f32.mrf.mxu0
  %v3950 = vadd.f32 0.0, %v3949
  %v3951 = vpop.f32.mrf.mxu0
  %v3952 = vadd.f32 0.0, %v3951
  %3953 = vmatmul.bf16.gmra.mxu0 %v3048
  %v3954 = vpop.f32.mrf.mxu0
  %v3955 = vadd.f32 0.0, %v3954
  %v3956 = vpop.f32.mrf.mxu0
  %v3957 = vadd.f32 0.0, %v3956
  %3958 = vmatmul.bf16.gmra.mxu0 %v3051
  %v3959 = vpop.f32.mrf.mxu0
  %v3960 = vadd.f32 0.0, %v3959
  %v3961 = vpop.f32.mrf.mxu0
  %v3962 = vadd.f32 0.0, %v3961
  %3963 = vmatmul.bf16.gmra.mxu0 %v3054
  %v3964 = vpop.f32.mrf.mxu0
  %v3965 = vadd.f32 0.0, %v3964
  %v3966 = vpop.f32.mrf.mxu0
  %v3967 = vadd.f32 0.0, %v3966
  %3968 = vmatmul.bf16.gmra.mxu0 %v3057
  %v3969 = vpop.f32.mrf.mxu0
  %v3970 = vadd.f32 0.0, %v3969
  %v3971 = vpop.f32.mrf.mxu0
  %v3972 = vadd.f32 0.0, %v3971
  %3973 = vmatmul.bf16.gmra.mxu0 %v3060
  %v3974 = vpop.f32.mrf.mxu0
  %v3975 = vadd.f32 0.0, %v3974
  %v3976 = vpop.f32.mrf.mxu0
  %v3977 = vadd.f32 0.0, %v3976
  %3978 = vmatmul.bf16.gmra.mxu0 %v3063
  %v3979 = vpop.f32.mrf.mxu0
  %v3980 = vadd.f32 0.0, %v3979
  %v3981 = vpop.f32.mrf.mxu0
  %v3982 = vadd.f32 0.0, %v3981
  %3983 = vmatmul.bf16.gmra.mxu0 %v3066
  %v3984 = vpop.f32.mrf.mxu0
  %v3985 = vadd.f32 0.0, %v3984
  %v3986 = vpop.f32.mrf.mxu0
  %v3987 = vadd.f32 0.0, %v3986
  %3988 = vmatmul.bf16.gmra.mxu0 %v3069
  %v3989 = vpop.f32.mrf.mxu0
  %v3990 = vadd.f32 0.0, %v3989
  %v3991 = vpop.f32.mrf.mxu0
  %v3992 = vadd.f32 0.0, %v3991
  %3993 = vmatmul.bf16.gmra.mxu0 %v3072
  %v3994 = vpop.f32.mrf.mxu0
  %v3995 = vadd.f32 0.0, %v3994
  %v3996 = vpop.f32.mrf.mxu0
  %v3997 = vadd.f32 0.0, %v3996
  %3998 = vmatmul.bf16.gmra.mxu0 %v3075
  %v3999 = vpop.f32.mrf.mxu0
  %v4000 = vadd.f32 0.0, %v3999
  %v4001 = vpop.f32.mrf.mxu0
  %v4002 = vadd.f32 0.0, %v4001
  %4003 = vmatmul.bf16.gmra.mxu0 %v3078
  %v4004 = vpop.f32.mrf.mxu0
  %v4005 = vadd.f32 0.0, %v4004
  %v4006 = vpop.f32.mrf.mxu0
  %v4007 = vadd.f32 0.0, %v4006
  %4008 = vmatmul.bf16.gmra.mxu0 %v3081
  %v4009 = vpop.f32.mrf.mxu0
  %v4010 = vadd.f32 0.0, %v4009
  %v4011 = vpop.f32.mrf.mxu0
  %v4012 = vadd.f32 0.0, %v4011
  %4013 = vmatmul.bf16.gmra.mxu0 %v3084
  %v4014 = vpop.f32.mrf.mxu0
  %v4015 = vadd.f32 0.0, %v4014
  %v4016 = vpop.f32.mrf.mxu0
  %v4017 = vadd.f32 0.0, %v4016
  %4018 = vmatmul.bf16.gmra.mxu0 %v3087
  %v4019 = vpop.f32.mrf.mxu0
  %v4020 = vadd.f32 0.0, %v4019
  %v4021 = vpop.f32.mrf.mxu0
  %v4022 = vadd.f32 0.0, %v4021
  %4023 = vmatmul.bf16.gmra.mxu0 %v3090
  %v4024 = vpop.f32.mrf.mxu0
  %v4025 = vadd.f32 0.0, %v4024
  %v4026 = vpop.f32.mrf.mxu0
  %v4027 = vadd.f32 0.0, %v4026
  %4028 = vmatmul.bf16.gmra.mxu0 %v3093
  %v4029 = vpop.f32.mrf.mxu0
  %v4030 = vadd.f32 0.0, %v4029
  %v4031 = vpop.f32.mrf.mxu0
  %v4032 = vadd.f32 0.0, %v4031
  %4033 = vmatmul.bf16.gmra.mxu0 %v3096
  %v4034 = vpop.f32.mrf.mxu0
  %v4035 = vadd.f32 0.0, %v4034
  %v4036 = vpop.f32.mrf.mxu0
  %v4037 = vadd.f32 0.0, %v4036
  %4038 = vmatmul.bf16.gmra.mxu0 %v3099
  %v4039 = vpop.f32.mrf.mxu0
  %v4040 = vadd.f32 0.0, %v4039
  %v4041 = vpop.f32.mrf.mxu0
  %v4042 = vadd.f32 0.0, %v4041
  %4043 = vmatmul.bf16.gmra.mxu0 %v3102
  %v4044 = vpop.f32.mrf.mxu0
  %v4045 = vadd.f32 0.0, %v4044
  %v4046 = vpop.f32.mrf.mxu0
  %v4047 = vadd.f32 0.0, %v4046
  %4048 = vmatmul.bf16.gmra.mxu0 %v3105
  %v4049 = vpop.f32.mrf.mxu0
  %v4050 = vadd.f32 0.0, %v4049
  %v4051 = vpop.f32.mrf.mxu0
  %v4052 = vadd.f32 0.0, %v4051
  %4053 = vmatmul.bf16.gmra.mxu0 %v3108
  %v4054 = vpop.f32.mrf.mxu0
  %v4055 = vadd.f32 0.0, %v4054
  %v4056 = vpop.f32.mrf.mxu0
  %v4057 = vadd.f32 0.0, %v4056
  %4058 = vmatmul.bf16.gmra.mxu0 %v3111
  %v4059 = vpop.f32.mrf.mxu0
  %v4060 = vadd.f32 0.0, %v4059
  %v4061 = vpop.f32.mrf.mxu0
  %v4062 = vadd.f32 0.0, %v4061
  %4063 = vmatmul.bf16.gmra.mxu0 %v3114
  %v4064 = vpop.f32.mrf.mxu0
  %v4065 = vadd.f32 0.0, %v4064
  %v4066 = vpop.f32.mrf.mxu0
  %v4067 = vadd.f32 0.0, %v4066
  %4068 = vmatmul.bf16.gmra.mxu0 %v3117
  %v4069 = vpop.f32.mrf.mxu0
  %v4070 = vadd.f32 0.0, %v4069
  %v4071 = vpop.f32.mrf.mxu0
  %v4072 = vadd.f32 0.0, %v4071
  %4073 = vmatmul.bf16.gmra.mxu0 %v3120
  %v4074 = vpop.f32.mrf.mxu0
  %v4075 = vadd.f32 0.0, %v4074
  %v4076 = vpop.f32.mrf.mxu0
  %v4077 = vadd.f32 0.0, %v4076
  %4078 = vmatmul.bf16.gmra.mxu0 %v3123
  %v4079 = vpop.f32.mrf.mxu0
  %v4080 = vadd.f32 0.0, %v4079
  %v4081 = vpop.f32.mrf.mxu0
  %v4082 = vadd.f32 0.0, %v4081
  %4083 = vmatmul.bf16.gmra.mxu0 %v3126
  %v4084 = vpop.f32.mrf.mxu0
  %v4085 = vadd.f32 0.0, %v4084
  %v4086 = vpop.f32.mrf.mxu0
  %v4087 = vadd.f32 0.0, %v4086
  %4088 = vmatmul.bf16.gmra.mxu0 %v3129
  %v4089 = vpop.f32.mrf.mxu0
  %v4090 = vadd.f32 0.0, %v4089
  %v4091 = vpop.f32.mrf.mxu0
  %v4092 = vadd.f32 0.0, %v4091
  %4093 = vmatmul.bf16.gmra.mxu0 %v3132
  %v4094 = vpop.f32.mrf.mxu0
  %v4095 = vadd.f32 0.0, %v4094
  %v4096 = vpop.f32.mrf.mxu0
  %v4097 = vadd.f32 0.0, %v4096
  %4098 = vmatmul.bf16.gmra.mxu0 %v3135
  %v4099 = vpop.f32.mrf.mxu0
  %v4100 = vadd.f32 0.0, %v4099
  %v4101 = vpop.f32.mrf.mxu0
  %v4102 = vadd.f32 0.0, %v4101
  %4103 = vmatmul.bf16.gmra.mxu0 %v3138
  %v4104 = vpop.f32.mrf.mxu0
  %v4105 = vadd.f32 0.0, %v4104
  %v4106 = vpop.f32.mrf.mxu0
  %v4107 = vadd.f32 0.0, %v4106
  %4108 = vmatmul.bf16.gmra.mxu0 %v3141
  %v4109 = vpop.f32.mrf.mxu0
  %v4110 = vadd.f32 0.0, %v4109
  %v4111 = vpop.f32.mrf.mxu0
  %v4112 = vadd.f32 0.0, %v4111
  %4113 = vmatmul.bf16.gmra.mxu0 %v3144
  %v4114 = vpop.f32.mrf.mxu0
  %v4115 = vadd.f32 0.0, %v4114
  %v4116 = vpop.f32.mrf.mxu0
  %v4117 = vadd.f32 0.0, %v4116
  %4118 = vmatmul.bf16.gmra.mxu0 %v3147
  %v4119 = vpop.f32.mrf.mxu0
  %v4120 = vadd.f32 0.0, %v4119
  %v4121 = vpop.f32.mrf.mxu0
  %v4122 = vadd.f32 0.0, %v4121
  %4123 = vmatmul.bf16.gmra.mxu0 %v3150
  %v4124 = vpop.f32.mrf.mxu0
  %v4125 = vadd.f32 0.0, %v4124
  %v4126 = vpop.f32.mrf.mxu0
  %v4127 = vadd.f32 0.0, %v4126
  %4128 = vmatmul.bf16.gmra.mxu0 %v3153
  %v4129 = vpop.f32.mrf.mxu0
  %v4130 = vadd.f32 0.0, %v4129
  %v4131 = vpop.f32.mrf.mxu0
  %v4132 = vadd.f32 0.0, %v4131
  %4133 = vmatmul.bf16.gmra.mxu0 %v3156
  %v4134 = vpop.f32.mrf.mxu0
  %v4135 = vadd.f32 0.0, %v4134
  %v4136 = vpop.f32.mrf.mxu0
  %v4137 = vadd.f32 0.0, %v4136
  %4138 = vmatmul.bf16.gmra.mxu0 %v3159
  %v4139 = vpop.f32.mrf.mxu0
  %v4140 = vadd.f32 0.0, %v4139
  %v4141 = vpop.f32.mrf.mxu0
  %v4142 = vadd.f32 0.0, %v4141
  %4143 = vmatmul.bf16.gmra.mxu0 %v3162
  %v4144 = vpop.f32.mrf.mxu0
  %v4145 = vadd.f32 0.0, %v4144
  %v4146 = vpop.f32.mrf.mxu0
  %v4147 = vadd.f32 0.0, %v4146
  %4148 = vmatmul.bf16.gmra.mxu0 %v3165
  %v4149 = vpop.f32.mrf.mxu0
  %v4150 = vadd.f32 0.0, %v4149
  %v4151 = vpop.f32.mrf.mxu0
  %v4152 = vadd.f32 0.0, %v4151
  %4153 = vmatmul.bf16.gmra.mxu0 %v3168
  %v4154 = vpop.f32.mrf.mxu0
  %v4155 = vadd.f32 0.0, %v4154
  %v4156 = vpop.f32.mrf.mxu0
  %v4157 = vadd.f32 0.0, %v4156
  %4158 = vmatmul.bf16.gmra.mxu0 %v3171
  %v4159 = vpop.f32.mrf.mxu0
  %v4160 = vadd.f32 0.0, %v4159
  %v4161 = vpop.f32.mrf.mxu0
  %v4162 = vadd.f32 0.0, %v4161
  %4163 = vmatmul.bf16.gmra.mxu0 %v3174
  %v4164 = vpop.f32.mrf.mxu0
  %v4165 = vadd.f32 0.0, %v4164
  %v4166 = vpop.f32.mrf.mxu0
  %v4167 = vadd.f32 0.0, %v4166
  %4168 = vmatmul.bf16.gmra.mxu0 %v3177
  %v4169 = vpop.f32.mrf.mxu0
  %v4170 = vadd.f32 0.0, %v4169
  %v4171 = vpop.f32.mrf.mxu0
  %v4172 = vadd.f32 0.0, %v4171
  %4173 = vmatmul.bf16.gmra.mxu0 %v3180
  %v4174 = vpop.f32.mrf.mxu0
  %v4175 = vadd.f32 0.0, %v4174
  %v4176 = vpop.f32.mrf.mxu0
  %v4177 = vadd.f32 0.0, %v4176
  %4178 = vmatmul.bf16.gmra.mxu0 %v3183
  %v4179 = vpop.f32.mrf.mxu0
  %v4180 = vadd.f32 0.0, %v4179
  %v4181 = vpop.f32.mrf.mxu0
  %v4182 = vadd.f32 0.0, %v4181
  %4183 = vmatmul.bf16.gmra.mxu0 %v3186
  %v4184 = vpop.f32.mrf.mxu0
  %v4185 = vadd.f32 0.0, %v4184
  %v4186 = vpop.f32.mrf.mxu0
  %v4187 = vadd.f32 0.0, %v4186
  %4188 = vmatmul.bf16.gmra.mxu0 %v3189
  %v4189 = vpop.f32.mrf.mxu0
  %v4190 = vadd.f32 0.0, %v4189
  %v4191 = vpop.f32.mrf.mxu0
  %v4192 = vadd.f32 0.0, %v4191
  %4193 = vmatmul.bf16.gmra.mxu0 %v3192
  %v4194 = vpop.f32.mrf.mxu0
  %v4195 = vadd.f32 0.0, %v4194
  %v4196 = vpop.f32.mrf.mxu0
  %v4197 = vadd.f32 0.0, %v4196
  %4198 = vmatmul.bf16.gmra.mxu0 %v3195
  %v4199 = vpop.f32.mrf.mxu0
  %v4200 = vadd.f32 0.0, %v4199
  %v4201 = vpop.f32.mrf.mxu0
  %v4202 = vadd.f32 0.0, %v4201
  %4203 = vmatmul.bf16.gmra.mxu0 %v3198
  %v4204 = vpop.f32.mrf.mxu0
  %v4205 = vadd.f32 0.0, %v4204
  %v4206 = vpop.f32.mrf.mxu0
  %v4207 = vadd.f32 0.0, %v4206
  %4208 = vmatmul.bf16.gmra.mxu0 %v3201
  %v4209 = vpop.f32.mrf.mxu0
  %v4210 = vadd.f32 0.0, %v4209
  %v4211 = vpop.f32.mrf.mxu0
  %v4212 = vadd.f32 0.0, %v4211
  %4213 = vmatmul.bf16.gmra.mxu0 %v3204
  %v4214 = vpop.f32.mrf.mxu0
  %v4215 = vadd.f32 0.0, %v4214
  %v4216 = vpop.f32.mrf.mxu0
  %v4217 = vadd.f32 0.0, %v4216
  %4218 = vmatmul.bf16.gmra.mxu0 %v3207
  %v4219 = vpop.f32.mrf.mxu0
  %v4220 = vadd.f32 0.0, %v4219
  %v4221 = vpop.f32.mrf.mxu0
  %v4222 = vadd.f32 0.0, %v4221
  %4223 = vmatmul.bf16.gmra.mxu0 %v3210
  %v4224 = vpop.f32.mrf.mxu0
  %v4225 = vadd.f32 0.0, %v4224
  %v4226 = vpop.f32.mrf.mxu0
  %v4227 = vadd.f32 0.0, %v4226
  %4228 = vmatmul.bf16.gmra.mxu0 %v3213
  %v4229 = vpop.f32.mrf.mxu0
  %v4230 = vadd.f32 0.0, %v4229
  %v4231 = vpop.f32.mrf.mxu0
  %v4232 = vadd.f32 0.0, %v4231
  %4233 = vmatmul.bf16.gmra.mxu0 %v3216
  %v4234 = vpop.f32.mrf.mxu0
  %v4235 = vadd.f32 0.0, %v4234
  %v4236 = vpop.f32.mrf.mxu0
  %v4237 = vadd.f32 0.0, %v4236
  %4238 = vmatmul.bf16.gmra.mxu0 %v3219
  %v4239 = vpop.f32.mrf.mxu0
  %v4240 = vadd.f32 0.0, %v4239
  %v4241 = vpop.f32.mrf.mxu0
  %v4242 = vadd.f32 0.0, %v4241
  %4243 = vmatmul.bf16.gmra.mxu0 %v3222
  %v4244 = vpop.f32.mrf.mxu0
  %v4245 = vadd.f32 0.0, %v4244
  %v4246 = vpop.f32.mrf.mxu0
  %v4247 = vadd.f32 0.0, %v4246
  %4248 = vmatmul.bf16.gmra.mxu0 %v3225
  %v4249 = vpop.f32.mrf.mxu0
  %v4250 = vadd.f32 0.0, %v4249
  %v4251 = vpop.f32.mrf.mxu0
  %v4252 = vadd.f32 0.0, %v4251
  %4253 = vmatmul.bf16.gmra.mxu0 %v3228
  %v4254 = vpop.f32.mrf.mxu0
  %v4255 = vadd.f32 0.0, %v4254
  %v4256 = vpop.f32.mrf.mxu0
  %v4257 = vadd.f32 0.0, %v4256
  %4258 = vmatmul.bf16.gmra.mxu0 %v3231
  %v4259 = vpop.f32.mrf.mxu0
  %v4260 = vadd.f32 0.0, %v4259
  %v4261 = vpop.f32.mrf.mxu0
  %v4262 = vadd.f32 0.0, %v4261
  %4263 = vmatmul.bf16.gmra.mxu0 %v3234
  %v4264 = vpop.f32.mrf.mxu0
  %v4265 = vadd.f32 0.0, %v4264
  %v4266 = vpop.f32.mrf.mxu0
  %v4267 = vadd.f32 0.0, %v4266
  %4268 = vmatmul.bf16.gmra.mxu0 %v3237
  %v4269 = vpop.f32.mrf.mxu0
  %v4270 = vadd.f32 0.0, %v4269
  %v4271 = vpop.f32.mrf.mxu0
  %v4272 = vadd.f32 0.0, %v4271
  %4273 = vmatmul.bf16.gmra.mxu0 %v3240
  %v4274 = vpop.f32.mrf.mxu0
  %v4275 = vadd.f32 0.0, %v4274
  %v4276 = vpop.f32.mrf.mxu0
  %v4277 = vadd.f32 0.0, %v4276
  %4278 = vmatmul.bf16.gmra.mxu0 %v3243
  %v4279 = vpop.f32.mrf.mxu0
  %v4280 = vadd.f32 0.0, %v4279
  %v4281 = vpop.f32.mrf.mxu0
  %v4282 = vadd.f32 0.0, %v4281
  %4283 = vmatmul.bf16.gmra.mxu0 %v3246
  %v4284 = vpop.f32.mrf.mxu0
  %v4285 = vadd.f32 0.0, %v4284
  %v4286 = vpop.f32.mrf.mxu0
  %v4287 = vadd.f32 0.0, %v4286
  %4288 = vmatmul.bf16.gmra.mxu0 %v3249
  %v4289 = vpop.f32.mrf.mxu0
  %v4290 = vadd.f32 0.0, %v4289
  %v4291 = vpop.f32.mrf.mxu0
  %v4292 = vadd.f32 0.0, %v4291
  %4293 = vmatmul.bf16.gmra.mxu0 %v3252
  %v4294 = vpop.f32.mrf.mxu0
  %v4295 = vadd.f32 0.0, %v4294
  %v4296 = vpop.f32.mrf.mxu0
  %v4297 = vadd.f32 0.0, %v4296
  %4298 = vmatmul.bf16.gmra.mxu0 %v3255
  %v4299 = vpop.f32.mrf.mxu0
  %v4300 = vadd.f32 0.0, %v4299
  %v4301 = vpop.f32.mrf.mxu0
  %v4302 = vadd.f32 0.0, %v4301
  %4303 = vmatmul.bf16.gmra.mxu0 %v3258
  %v4304 = vpop.f32.mrf.mxu0
  %v4305 = vadd.f32 0.0, %v4304
  %v4306 = vpop.f32.mrf.mxu0
  %v4307 = vadd.f32 0.0, %v4306
  %4308 = vmatmul.bf16.gmra.mxu0 %v3261
  %v4309 = vpop.f32.mrf.mxu0
  %v4310 = vadd.f32 0.0, %v4309
  %v4311 = vpop.f32.mrf.mxu0
  %v4312 = vadd.f32 0.0, %v4311
  %4313 = vmatmul.bf16.gmra.mxu0 %v3264
  %v4314 = vpop.f32.mrf.mxu0
  %v4315 = vadd.f32 0.0, %v4314
  %v4316 = vpop.f32.mrf.mxu0
  %v4317 = vadd.f32 0.0, %v4316
  %4318 = vmatmul.bf16.gmra.mxu0 %v3267
  %v4319 = vpop.f32.mrf.mxu0
  %v4320 = vadd.f32 0.0, %v4319
  %v4321 = vpop.f32.mrf.mxu0
  %v4322 = vadd.f32 0.0, %v4321
  %4323 = vmatmul.bf16.gmra.mxu0 %v3270
  %v4324 = vpop.f32.mrf.mxu0
  %v4325 = vadd.f32 0.0, %v4324
  %v4326 = vpop.f32.mrf.mxu0
  %v4327 = vadd.f32 0.0, %v4326
  %4328 = vmatmul.bf16.gmra.mxu0 %v3273
  %v4329 = vpop.f32.mrf.mxu0
  %v4330 = vadd.f32 0.0, %v4329
  %v4331 = vpop.f32.mrf.mxu0
  %v4332 = vadd.f32 0.0, %v4331
  %4333 = vmatmul.bf16.gmra.mxu0 %v3276
  %v4334 = vpop.f32.mrf.mxu0
  %v4335 = vadd.f32 0.0, %v4334
  %v4336 = vpop.f32.mrf.mxu0
  %v4337 = vadd.f32 0.0, %v4336
  %4338 = vmatmul.bf16.gmra.mxu0 %v3279
  %v4339 = vpop.f32.mrf.mxu0
  %v4340 = vadd.f32 0.0, %v4339
  %v4341 = vpop.f32.mrf.mxu0
  %v4342 = vadd.f32 0.0, %v4341
  %4343 = vmatmul.bf16.gmra.mxu0 %v3282
  %v4344 = vpop.f32.mrf.mxu0
  %v4345 = vadd.f32 0.0, %v4344
  %v4346 = vpop.f32.mrf.mxu0
  %v4347 = vadd.f32 0.0, %v4346
  %4348 = vmatmul.bf16.gmra.mxu0 %v3285
  %v4349 = vpop.f32.mrf.mxu0
  %v4350 = vadd.f32 0.0, %v4349
  %v4351 = vpop.f32.mrf.mxu0
  %v4352 = vadd.f32 0.0, %v4351
  %4353 = vmatmul.bf16.gmra.mxu0 %v3288
  %v4354 = vpop.f32.mrf.mxu0
  %v4355 = vadd.f32 0.0, %v4354
  %v4356 = vpop.f32.mrf.mxu0
  %v4357 = vadd.f32 0.0, %v4356
  %4358 = vmatmul.bf16.gmra.mxu0 %v3291
  %v4359 = vpop.f32.mrf.mxu0
  %v4360 = vadd.f32 0.0, %v4359
  %v4361 = vpop.f32.mrf.mxu0
  %v4362 = vadd.f32 0.0, %v4361
  %4363 = vmatmul.bf16.gmra.mxu0 %v3294
  %v4364 = vpop.f32.mrf.mxu0
  %v4365 = vadd.f32 0.0, %v4364
  %v4366 = vpop.f32.mrf.mxu0
  %v4367 = vadd.f32 0.0, %v4366
  %4368 = vmatmul.bf16.gmra.mxu0 %v3297
  %v4369 = vpop.f32.mrf.mxu0
  %v4370 = vadd.f32 0.0, %v4369
  %v4371 = vpop.f32.mrf.mxu0
  %v4372 = vadd.f32 0.0, %v4371
  %4373 = vmatmul.bf16.gmra.mxu0 %v3300
  %v4374 = vpop.f32.mrf.mxu0
  %v4375 = vadd.f32 0.0, %v4374
  %v4376 = vpop.f32.mrf.mxu0
  %v4377 = vadd.f32 0.0, %v4376
  %4378 = vmatmul.bf16.gmra.mxu0 %v3303
  %v4379 = vpop.f32.mrf.mxu0
  %v4380 = vadd.f32 0.0, %v4379
  %v4381 = vpop.f32.mrf.mxu0
  %v4382 = vadd.f32 0.0, %v4381
  %4383 = vmatmul.bf16.gmra.mxu0 %v3306
  %v4384 = vpop.f32.mrf.mxu0
  %v4385 = vadd.f32 0.0, %v4384
  %v4386 = vpop.f32.mrf.mxu0
  %v4387 = vadd.f32 0.0, %v4386
  %4388 = vmatmul.bf16.gmra.mxu0 %v3309
  %v4389 = vpop.f32.mrf.mxu0
  %v4390 = vadd.f32 0.0, %v4389
  %v4391 = vpop.f32.mrf.mxu0
  %v4392 = vadd.f32 0.0, %v4391
  %4393 = vmatmul.bf16.gmra.mxu0 %v3312
  %v4394 = vpop.f32.mrf.mxu0
  %v4395 = vadd.f32 0.0, %v4394
  %v4396 = vpop.f32.mrf.mxu0
  %v4397 = vadd.f32 0.0, %v4396
  %4398 = vmatmul.bf16.gmra.mxu0 %v3315
  %v4399 = vpop.f32.mrf.mxu0
  %v4400 = vadd.f32 0.0, %v4399
  %v4401 = vpop.f32.mrf.mxu0
  %v4402 = vadd.f32 0.0, %v4401
  %4403 = vmatmul.bf16.gmra.mxu0 %v3318
  %v4404 = vpop.f32.mrf.mxu0
  %v4405 = vadd.f32 0.0, %v4404
  %v4406 = vpop.f32.mrf.mxu0
  %v4407 = vadd.f32 0.0, %v4406
  %4408 = vmatmul.bf16.gmra.mxu0 %v3321
  %v4409 = vpop.f32.mrf.mxu0
  %v4410 = vadd.f32 0.0, %v4409
  %v4411 = vpop.f32.mrf.mxu0
  %v4412 = vadd.f32 0.0, %v4411
  %4413 = vmatmul.bf16.gmra.mxu0 %v3324
  %v4414 = vpop.f32.mrf.mxu0
  %v4415 = vadd.f32 0.0, %v4414
  %v4416 = vpop.f32.mrf.mxu0
  %v4417 = vadd.f32 0.0, %v4416
  %4418 = vmatmul.bf16.gmra.mxu0 %v3327
  %v4419 = vpop.f32.mrf.mxu0
  %v4420 = vadd.f32 0.0, %v4419
  %v4421 = vpop.f32.mrf.mxu0
  %v4422 = vadd.f32 0.0, %v4421
  %4423 = vmatmul.bf16.gmra.mxu0 %v3330
  %v4424 = vpop.f32.mrf.mxu0
  %v4425 = vadd.f32 0.0, %v4424
  %v4426 = vpop.f32.mrf.mxu0
  %v4427 = vadd.f32 0.0, %v4426
  %4428 = vmatmul.bf16.gmra.mxu0 %v3333
  %v4429 = vpop.f32.mrf.mxu0
  %v4430 = vadd.f32 0.0, %v4429
  %v4431 = vpop.f32.mrf.mxu0
  %v4432 = vadd.f32 0.0, %v4431
  %4433 = vmatmul.bf16.gmra.mxu0 %v3336
  %v4434 = vpop.f32.mrf.mxu0
  %v4435 = vadd.f32 0.0, %v4434
  %v4436 = vpop.f32.mrf.mxu0
  %v4437 = vadd.f32 0.0, %v4436
  %4438 = vmatmul.bf16.gmra.mxu0 %v3339
  %v4439 = vpop.f32.mrf.mxu0
  %v4440 = vadd.f32 0.0, %v4439
  %v4441 = vpop.f32.mrf.mxu0
  %v4442 = vadd.f32 0.0, %v4441
  %4443 = vmatmul.bf16.gmra.mxu0 %v3342
  %v4444 = vpop.f32.mrf.mxu0
  %v4445 = vadd.f32 0.0, %v4444
  %v4446 = vpop.f32.mrf.mxu0
  %v4447 = vadd.f32 0.0, %v4446
  %4448 = vmatmul.bf16.gmra.mxu0 %v3345
  %v4449 = vpop.f32.mrf.mxu0
  %v4450 = vadd.f32 0.0, %v4449
  %v4451 = vpop.f32.mrf.mxu0
  %v4452 = vadd.f32 0.0, %v4451
  %4453 = vmatmul.bf16.gmra.mxu0 %v3348
  %v4454 = vpop.f32.mrf.mxu0
  %v4455 = vadd.f32 0.0, %v4454
  %v4456 = vpop.f32.mrf.mxu0
  %v4457 = vadd.f32 0.0, %v4456
  %4458 = vmatmul.bf16.gmra.mxu0 %v3351
  %v4459 = vpop.f32.mrf.mxu0
  %v4460 = vadd.f32 0.0, %v4459
  %v4461 = vpop.f32.mrf.mxu0
  %v4462 = vadd.f32 0.0, %v4461
  %4463 = vmatmul.bf16.gmra.mxu0 %v3354
  %v4464 = vpop.f32.mrf.mxu0
  %v4465 = vadd.f32 0.0, %v4464
  %v4466 = vpop.f32.mrf.mxu0
  %v4467 = vadd.f32 0.0, %v4466
  %4468 = vmatmul.bf16.gmra.mxu0 %v3357
  %v4469 = vpop.f32.mrf.mxu0
  %v4470 = vadd.f32 0.0, %v4469
  %v4471 = vpop.f32.mrf.mxu0
  %v4472 = vadd.f32 0.0, %v4471
  %4473 = vmatmul.bf16.gmra.mxu0 %v3360
  %v4474 = vpop.f32.mrf.mxu0
  %v4475 = vadd.f32 0.0, %v4474
  %v4476 = vpop.f32.mrf.mxu0
  %v4477 = vadd.f32 0.0, %v4476
  %4478 = vmatmul.bf16.gmra.mxu0 %v3363
  %v4479 = vpop.f32.mrf.mxu0
  %v4480 = vadd.f32 0.0, %v4479
  %v4481 = vpop.f32.mrf.mxu0
  %v4482 = vadd.f32 0.0, %v4481
  %4483 = vmatmul.bf16.gmra.mxu0 %v3366
  %v4484 = vpop.f32.mrf.mxu0
  %v4485 = vadd.f32 0.0, %v4484
  %v4486 = vpop.f32.mrf.mxu0
  %v4487 = vadd.f32 0.0, %v4486
  %4488 = vmatmul.bf16.gmra.mxu0 %v3369
  %v4489 = vpop.f32.mrf.mxu0
  %v4490 = vadd.f32 0.0, %v4489
  %v4491 = vpop.f32.mrf.mxu0
  %v4492 = vadd.f32 0.0, %v4491
  %4493 = vmatmul.bf16.gmra.mxu0 %v3372
  %v4494 = vpop.f32.mrf.mxu0
  %v4495 = vadd.f32 0.0, %v4494
  %v4496 = vpop.f32.mrf.mxu0
  %v4497 = vadd.f32 0.0, %v4496
  %4498 = vmatmul.bf16.gmra.mxu0 %v3375
  %v4499 = vpop.f32.mrf.mxu0
  %v4500 = vadd.f32 0.0, %v4499
  %v4501 = vpop.f32.mrf.mxu0
  %v4502 = vadd.f32 0.0, %v4501
  %4503 = vmatmul.bf16.gmra.mxu0 %v3378
  %v4504 = vpop.f32.mrf.mxu0
  %v4505 = vadd.f32 0.0, %v4504
  %v4506 = vpop.f32.mrf.mxu0
  %v4507 = vadd.f32 0.0, %v4506
  %4508 = vmatmul.bf16.gmra.mxu0 %v3381
  %v4509 = vpop.f32.mrf.mxu0
  %v4510 = vadd.f32 0.0, %v4509
  %v4511 = vpop.f32.mrf.mxu0
  %v4512 = vadd.f32 0.0, %v4511
  %4513 = vmatmul.bf16.gmra.mxu0 %v3384
  %v4514 = vpop.f32.mrf.mxu0
  %v4515 = vadd.f32 0.0, %v4514
  %v4516 = vpop.f32.mrf.mxu0
  %v4517 = vadd.f32 0.0, %v4516
  %4518 = vmatmul.bf16.gmra.mxu0 %v3387
  %v4519 = vpop.f32.mrf.mxu0
  %v4520 = vadd.f32 0.0, %v4519
  %v4521 = vpop.f32.mrf.mxu0
  %v4522 = vadd.f32 0.0, %v4521
  %4523 = vmatmul.bf16.gmra.mxu0 %v3390
  %v4524 = vpop.f32.mrf.mxu0
  %v4525 = vadd.f32 0.0, %v4524
  %v4526 = vpop.f32.mrf.mxu0
  %v4527 = vadd.f32 0.0, %v4526
  %4528 = vmatmul.bf16.gmra.mxu0 %v3393
  %v4529 = vpop.f32.mrf.mxu0
  %v4530 = vadd.f32 0.0, %v4529
  %v4531 = vpop.f32.mrf.mxu0
  %v4532 = vadd.f32 0.0, %v4531
  %4533 = vmatmul.bf16.gmra.mxu0 %v3396
  %v4534 = vpop.f32.mrf.mxu0
  %v4535 = vadd.f32 0.0, %v4534
  %v4536 = vpop.f32.mrf.mxu0
  %v4537 = vadd.f32 0.0, %v4536
  %4538 = vmatmul.bf16.gmra.mxu0 %v3399
  %v4539 = vpop.f32.mrf.mxu0
  %v4540 = vadd.f32 0.0, %v4539
  %v4541 = vpop.f32.mrf.mxu0
  %v4542 = vadd.f32 0.0, %v4541
  %4543 = vmatmul.bf16.gmra.mxu0 %v3402
  %v4544 = vpop.f32.mrf.mxu0
  %v4545 = vadd.f32 0.0, %v4544
  %v4546 = vpop.f32.mrf.mxu0
  %v4547 = vadd.f32 0.0, %v4546
  %4548 = vmatmul.bf16.gmra.mxu0 %v3405
  %v4549 = vpop.f32.mrf.mxu0
  %v4550 = vadd.f32 0.0, %v4549
  %v4551 = vpop.f32.mrf.mxu0
  %v4552 = vadd.f32 0.0, %v4551
  %4553 = vmatmul.bf16.gmra.mxu0 %v3408
  %v4554 = vpop.f32.mrf.mxu0
  %v4555 = vadd.f32 0.0, %v4554
  %v4556 = vpop.f32.mrf.mxu0
  %v4557 = vadd.f32 0.0, %v4556
  %4558 = vmatmul.bf16.gmra.mxu0 %v3411
  %v4559 = vpop.f32.mrf.mxu0
  %v4560 = vadd.f32 0.0, %v4559
  %v4561 = vpop.f32.mrf.mxu0
  %v4562 = vadd.f32 0.0, %v4561
  %4563 = vmatmul.bf16.gmra.mxu0 %v3414
  %v4564 = vpop.f32.mrf.mxu0
  %v4565 = vadd.f32 0.0, %v4564
  %v4566 = vpop.f32.mrf.mxu0
  %v4567 = vadd.f32 0.0, %v4566
  %4568 = vmatmul.bf16.gmra.mxu0 %v3417
  %v4569 = vpop.f32.mrf.mxu0
  %v4570 = vadd.f32 0.0, %v4569
  %v4571 = vpop.f32.mrf.mxu0
  %v4572 = vadd.f32 0.0, %v4571
  %4573 = vmatmul.bf16.gmra.mxu0 %v3420
  %v4574 = vpop.f32.mrf.mxu0
  %v4575 = vadd.f32 0.0, %v4574
  %v4576 = vpop.f32.mrf.mxu0
  %v4577 = vadd.f32 0.0, %v4576
  %4578 = vmatmul.bf16.gmra.mxu0 %v3423
  %v4579 = vpop.f32.mrf.mxu0
  %v4580 = vadd.f32 0.0, %v4579
  %v4581 = vpop.f32.mrf.mxu0
  %v4582 = vadd.f32 0.0, %v4581
  %4583 = vmatmul.bf16.gmra.mxu0 %v3426
  %v4584 = vpop.f32.mrf.mxu0
  %v4585 = vadd.f32 0.0, %v4584
  %v4586 = vpop.f32.mrf.mxu0
  %v4587 = vadd.f32 0.0, %v4586
  %4588 = vmatmul.bf16.gmra.mxu0 %v3429
  %v4589 = vpop.f32.mrf.mxu0
  %v4590 = vadd.f32 0.0, %v4589
  %v4591 = vpop.f32.mrf.mxu0
  %v4592 = vadd.f32 0.0, %v4591
  %4593 = vmatmul.bf16.gmra.mxu0 %v3432
  %v4594 = vpop.f32.mrf.mxu0
  %v4595 = vadd.f32 0.0, %v4594
  %v4596 = vpop.f32.mrf.mxu0
  %v4597 = vadd.f32 0.0, %v4596
  %4598 = vmatmul.bf16.gmra.mxu0 %v3435
  %v4599 = vpop.f32.mrf.mxu0
  %v4600 = vadd.f32 0.0, %v4599
  %v4601 = vpop.f32.mrf.mxu0
  %v4602 = vadd.f32 0.0, %v4601
  %4603 = vmatmul.bf16.gmra.mxu0 %v3438
  %v4604 = vpop.f32.mrf.mxu0
  %v4605 = vadd.f32 0.0, %v4604
  %v4606 = vpop.f32.mrf.mxu0
  %v4607 = vadd.f32 0.0, %v4606
  %4608 = vmatmul.bf16.gmra.mxu0 %v3441
  %v4609 = vpop.f32.mrf.mxu0
  %v4610 = vadd.f32 0.0, %v4609
  %v4611 = vpop.f32.mrf.mxu0
  %v4612 = vadd.f32 0.0, %v4611
  %4613 = vmatmul.bf16.gmra.mxu0 %v3444
  %v4614 = vpop.f32.mrf.mxu0
  %v4615 = vadd.f32 0.0, %v4614
  %v4616 = vpop.f32.mrf.mxu0
  %v4617 = vadd.f32 0.0, %v4616
  %4618 = vmatmul.bf16.gmra.mxu0 %v3447
  %v4619 = vpop.f32.mrf.mxu0
  %v4620 = vadd.f32 0.0, %v4619
  %v4621 = vpop.f32.mrf.mxu0
  %v4622 = vadd.f32 0.0, %v4621
  %4623 = vmatmul.bf16.gmra.mxu0 %v3450
  %v4624 = vpop.f32.mrf.mxu0
  %v4625 = vadd.f32 0.0, %v4624
  %v4626 = vpop.f32.mrf.mxu0
  %v4627 = vadd.f32 0.0, %v4626
  %4628 = vmatmul.bf16.gmra.mxu0 %v3453
  %v4629 = vpop.f32.mrf.mxu0
  %v4630 = vadd.f32 0.0, %v4629
  %v4631 = vpop.f32.mrf.mxu0
  %v4632 = vadd.f32 0.0, %v4631
  %4633 = vmatmul.bf16.gmra.mxu0 %v3456
  %v4634 = vpop.f32.mrf.mxu0
  %v4635 = vadd.f32 0.0, %v4634
  %v4636 = vpop.f32.mrf.mxu0
  %v4637 = vadd.f32 0.0, %v4636
  %4638 = vmatmul.bf16.gmra.mxu0 %v3459
  %v4639 = vpop.f32.mrf.mxu0
  %v4640 = vadd.f32 0.0, %v4639
  %v4641 = vpop.f32.mrf.mxu0
  %v4642 = vadd.f32 0.0, %v4641
  %4643 = vmatmul.bf16.gmra.mxu0 %v3462
  %v4644 = vpop.f32.mrf.mxu0
  %v4645 = vadd.f32 0.0, %v4644
  %v4646 = vpop.f32.mrf.mxu0
  %v4647 = vadd.f32 0.0, %v4646
  %4648 = vmatmul.bf16.gmra.mxu0 %v3465
  %v4649 = vpop.f32.mrf.mxu0
  %v4650 = vadd.f32 0.0, %v4649
  %v4651 = vpop.f32.mrf.mxu0
  %v4652 = vadd.f32 0.0, %v4651
  %4653 = vmatmul.bf16.gmra.mxu0 %v3468
  %v4654 = vpop.f32.mrf.mxu0
  %v4655 = vadd.f32 0.0, %v4654
  %v4656 = vpop.f32.mrf.mxu0
  %v4657 = vadd.f32 0.0, %v4656
  %4658 = vmatmul.bf16.gmra.mxu0 %v3471
  %v4659 = vpop.f32.mrf.mxu0
  %v4660 = vadd.f32 0.0, %v4659
  %v4661 = vpop.f32.mrf.mxu0
  %v4662 = vadd.f32 0.0, %v4661
  %4663 = vmatmul.bf16.gmra.mxu0 %v3474
  %v4664 = vpop.f32.mrf.mxu0
  %v4665 = vadd.f32 0.0, %v4664
  %v4666 = vpop.f32.mrf.mxu0
  %v4667 = vadd.f32 0.0, %v4666
  %4668 = vmatmul.bf16.gmra.mxu0 %v3477
  %v4669 = vpop.f32.mrf.mxu0
  %v4670 = vadd.f32 0.0, %v4669
  %v4671 = vpop.f32.mrf.mxu0
  %v4672 = vadd.f32 0.0, %v4671
  %4673 = vmatmul.bf16.gmra.mxu0 %v3480
  %v4674 = vpop.f32.mrf.mxu0
  %v4675 = vadd.f32 0.0, %v4674
  %v4676 = vpop.f32.mrf.mxu0
  %v4677 = vadd.f32 0.0, %v4676
  %4678 = vmatmul.bf16.gmra.mxu0 %v3483
  %v4679 = vpop.f32.mrf.mxu0
  %v4680 = vadd.f32 0.0, %v4679
  %v4681 = vpop.f32.mrf.mxu0
  %v4682 = vadd.f32 0.0, %v4681
  %4683 = vmatmul.bf16.gmra.mxu0 %v3486
  %v4684 = vpop.f32.mrf.mxu0
  %v4685 = vadd.f32 0.0, %v4684
  %v4686 = vpop.f32.mrf.mxu0
  %v4687 = vadd.f32 0.0, %v4686
  %4688 = vmatmul.bf16.gmra.mxu0 %v3489
  %v4689 = vpop.f32.mrf.mxu0
  %v4690 = vadd.f32 0.0, %v4689
  %v4691 = vpop.f32.mrf.mxu0
  %v4692 = vadd.f32 0.0, %v4691
  %4693 = vmatmul.bf16.gmra.mxu0 %v3492
  %v4694 = vpop.f32.mrf.mxu0
  %v4695 = vadd.f32 0.0, %v4694
  %v4696 = vpop.f32.mrf.mxu0
  %v4697 = vadd.f32 0.0, %v4696
  %4698 = vmatmul.bf16.gmra.mxu0 %v3495
  %v4699 = vpop.f32.mrf.mxu0
  %v4700 = vadd.f32 0.0, %v4699
  %v4701 = vpop.f32.mrf.mxu0
  %v4702 = vadd.f32 0.0, %v4701
  %4703 = vmatmul.bf16.gmra.mxu0 %v3498
  %v4704 = vpop.f32.mrf.mxu0
  %v4705 = vadd.f32 0.0, %v4704
  %v4706 = vpop.f32.mrf.mxu0
  %v4707 = vadd.f32 0.0, %v4706
  %4708 = vmatmul.bf16.gmra.mxu0 %v3501
  %v4709 = vpop.f32.mrf.mxu0
  %v4710 = vadd.f32 0.0, %v4709
  %v4711 = vpop.f32.mrf.mxu0
  %v4712 = vadd.f32 0.0, %v4711
  %4713 = vmatmul.bf16.gmra.mxu0 %v3504
  %v4714 = vpop.f32.mrf.mxu0
  %v4715 = vadd.f32 0.0, %v4714
  %v4716 = vpop.f32.mrf.mxu0
  %v4717 = vadd.f32 0.0, %v4716
  %4718 = vmatmul.bf16.gmra.mxu0 %v3507
  %v4719 = vpop.f32.mrf.mxu0
  %v4720 = vadd.f32 0.0, %v4719
  %v4721 = vpop.f32.mrf.mxu0
  %v4722 = vadd.f32 0.0, %v4721
  %4723 = vmatmul.bf16.gmra.mxu0 %v3510
  %v4724 = vpop.f32.mrf.mxu0
  %v4725 = vadd.f32 0.0, %v4724
  %v4726 = vpop.f32.mrf.mxu0
  %v4727 = vadd.f32 0.0, %v4726
  %4728 = vmatmul.bf16.gmra.mxu0 %v3513
  %v4729 = vpop.f32.mrf.mxu0
  %v4730 = vadd.f32 0.0, %v4729
  %v4731 = vpop.f32.mrf.mxu0
  %v4732 = vadd.f32 0.0, %v4731
  %4733 = vmatmul.bf16.gmra.mxu0 %v3516
  %v4734 = vpop.f32.mrf.mxu0
  %v4735 = vadd.f32 0.0, %v4734
  %v4736 = vpop.f32.mrf.mxu0
  %v4737 = vadd.f32 0.0, %v4736
  %4738 = vmatmul.bf16.gmra.mxu0 %v3519
  %v4739 = vpop.f32.mrf.mxu0
  %v4740 = vadd.f32 0.0, %v4739
  %v4741 = vpop.f32.mrf.mxu0
  %v4742 = vadd.f32 0.0, %v4741
  %4743 = vmatmul.bf16.gmra.mxu0 %v3522
  %v4744 = vpop.f32.mrf.mxu0
  %v4745 = vadd.f32 0.0, %v4744
  %v4746 = vpop.f32.mrf.mxu0
  %v4747 = vadd.f32 0.0, %v4746
  %4748 = vmatmul.bf16.gmra.mxu0 %v3525
  %v4749 = vpop.f32.mrf.mxu0
  %v4750 = vadd.f32 0.0, %v4749
  %v4751 = vpop.f32.mrf.mxu0
  %v4752 = vadd.f32 0.0, %v4751
  %4753 = vmatmul.bf16.gmra.mxu0 %v3528
  %v4754 = vpop.f32.mrf.mxu0
  %v4755 = vadd.f32 0.0, %v4754
  %v4756 = vpop.f32.mrf.mxu0
  %v4757 = vadd.f32 0.0, %v4756
  %4758 = vmatmul.bf16.gmra.mxu0 %v3531
  %v4759 = vpop.f32.mrf.mxu0
  %v4760 = vadd.f32 0.0, %v4759
  %v4761 = vpop.f32.mrf.mxu0
  %v4762 = vadd.f32 0.0, %v4761
  %4763 = vmatmul.bf16.gmra.mxu0 %v3534
  %v4764 = vpop.f32.mrf.mxu0
  %v4765 = vadd.f32 0.0, %v4764
  %v4766 = vpop.f32.mrf.mxu0
  %v4767 = vadd.f32 0.0, %v4766
  %4768 = vmatmul.bf16.gmra.mxu0 %v3537
  %v4769 = vpop.f32.mrf.mxu0
  %v4770 = vadd.f32 0.0, %v4769
  %v4771 = vpop.f32.mrf.mxu0
  %v4772 = vadd.f32 0.0, %v4771
  %4773 = vmatmul.bf16.gmra.mxu0 %v3540
  %v4774 = vpop.f32.mrf.mxu0
  %v4775 = vadd.f32 0.0, %v4774
  %v4776 = vpop.f32.mrf.mxu0
  %v4777 = vadd.f32 0.0, %v4776
  %4778 = vmatmul.bf16.gmra.mxu0 %v3543
  %v4779 = vpop.f32.mrf.mxu0
  %v4780 = vadd.f32 0.0, %v4779
  %v4781 = vpop.f32.mrf.mxu0
  %v4782 = vadd.f32 0.0, %v4781
  %4783 = vmatmul.bf16.gmra.mxu0 %v3546
  %v4784 = vpop.f32.mrf.mxu0
  %v4785 = vadd.f32 0.0, %v4784
  %v4786 = vpop.f32.mrf.mxu0
  %v4787 = vadd.f32 0.0, %v4786
  %4788 = vmatmul.bf16.gmra.mxu0 %v3549
  %v4789 = vpop.f32.mrf.mxu0
  %v4790 = vadd.f32 0.0, %v4789
  %v4791 = vpop.f32.mrf.mxu0
  %v4792 = vadd.f32 0.0, %v4791
  %4793 = vmatmul.bf16.gmra.mxu0 %v3552
  %v4794 = vpop.f32.mrf.mxu0
  %v4795 = vadd.f32 0.0, %v4794
  %v4796 = vpop.f32.mrf.mxu0
  %v4797 = vadd.f32 0.0, %v4796
  %4798 = vmatmul.bf16.gmra.mxu0 %v3555
  %v4799 = vpop.f32.mrf.mxu0
  %v4800 = vadd.f32 0.0, %v4799
  %v4801 = vpop.f32.mrf.mxu0
  %v4802 = vadd.f32 0.0, %v4801
  %4803 = vmatmul.bf16.gmra.mxu0 %v3558
  %v4804 = vpop.f32.mrf.mxu0
  %v4805 = vadd.f32 0.0, %v4804
  %v4806 = vpop.f32.mrf.mxu0
  %v4807 = vadd.f32 0.0, %v4806
  %4808 = vmatmul.bf16.gmra.mxu0 %v3561
  %v4809 = vpop.f32.mrf.mxu0
  %v4810 = vadd.f32 0.0, %v4809
  %v4811 = vpop.f32.mrf.mxu0
  %v4812 = vadd.f32 0.0, %v4811
  %4813 = vmatmul.bf16.gmra.mxu0 %v3564
  %v4814 = vpop.f32.mrf.mxu0
  %v4815 = vadd.f32 0.0, %v4814
  %v4816 = vpop.f32.mrf.mxu0
  %v4817 = vadd.f32 0.0, %v4816
  %4818 = vmatmul.bf16.gmra.mxu0 %v3567
  %v4819 = vpop.f32.mrf.mxu0
  %v4820 = vadd.f32 0.0, %v4819
  %v4821 = vpop.f32.mrf.mxu0
  %v4822 = vadd.f32 0.0, %v4821
  %4823 = vmatmul.bf16.gmra.mxu0 %v3570
  %v4824 = vpop.f32.mrf.mxu0
  %v4825 = vadd.f32 0.0, %v4824
  %v4826 = vpop.f32.mrf.mxu0
  %v4827 = vadd.f32 0.0, %v4826
  %4828 = vmatmul.bf16.gmra.mxu0 %v3573
  %v4829 = vpop.f32.mrf.mxu0
  %v4830 = vadd.f32 0.0, %v4829
  %v4831 = vpop.f32.mrf.mxu0
  %v4832 = vadd.f32 0.0, %v4831
  %4833 = vmatmul.bf16.gmra.mxu0 %v3576
  %v4834 = vpop.f32.mrf.mxu0
  %v4835 = vadd.f32 0.0, %v4834
  %v4836 = vpop.f32.mrf.mxu0
  %v4837 = vadd.f32 0.0, %v4836
  %4838 = vmatmul.bf16.gmra.mxu0 %v3579
  %v4839 = vpop.f32.mrf.mxu0
  %v4840 = vadd.f32 0.0, %v4839
  %v4841 = vpop.f32.mrf.mxu0
  %v4842 = vadd.f32 0.0, %v4841
  %4843 = vmatmul.bf16.gmra.mxu0 %v3582
  %v4844 = vpop.f32.mrf.mxu0
  %v4845 = vadd.f32 0.0, %v4844
  %v4846 = vpop.f32.mrf.mxu0
  %v4847 = vadd.f32 0.0, %v4846
  %4848 = vmatmul.bf16.gmra.mxu0 %v3585
  %v4849 = vpop.f32.mrf.mxu0
  %v4850 = vadd.f32 0.0, %v4849
  %v4851 = vpop.f32.mrf.mxu0
  %v4852 = vadd.f32 0.0, %v4851
  %4853 = vmatmul.bf16.gmra.mxu0 %v3588
  %v4854 = vpop.f32.mrf.mxu0
  %v4855 = vadd.f32 0.0, %v4854
  %v4856 = vpop.f32.mrf.mxu0
  %v4857 = vadd.f32 0.0, %v4856
  %4858 = vmatmul.bf16.gmra.mxu0 %v3591
  %v4859 = vpop.f32.mrf.mxu0
  %v4860 = vadd.f32 0.0, %v4859
  %v4861 = vpop.f32.mrf.mxu0
  %v4862 = vadd.f32 0.0, %v4861
  %4863 = vmatmul.bf16.gmra.mxu0 %v3594
  %v4864 = vpop.f32.mrf.mxu0
  %v4865 = vadd.f32 0.0, %v4864
  %v4866 = vpop.f32.mrf.mxu0
  %v4867 = vadd.f32 0.0, %v4866
  %4868 = vmatmul.bf16.gmra.mxu0 %v3597
  %v4869 = vpop.f32.mrf.mxu0
  %v4870 = vadd.f32 0.0, %v4869
  %v4871 = vpop.f32.mrf.mxu0
  %v4872 = vadd.f32 0.0, %v4871
  %4873 = vmatmul.bf16.gmra.mxu0 %v3600
  %v4874 = vpop.f32.mrf.mxu0
  %v4875 = vadd.f32 0.0, %v4874
  %v4876 = vpop.f32.mrf.mxu0
  %v4877 = vadd.f32 0.0, %v4876
  %4878 = vmatmul.bf16.gmra.mxu0 %v3603
  %v4879 = vpop.f32.mrf.mxu0
  %v4880 = vadd.f32 0.0, %v4879
  %v4881 = vpop.f32.mrf.mxu0
  %v4882 = vadd.f32 0.0, %v4881
  %4883 = vmatmul.bf16.gmra.mxu0 %v3606
  %v4884 = vpop.f32.mrf.mxu0
  %v4885 = vadd.f32 0.0, %v4884
  %v4886 = vpop.f32.mrf.mxu0
  %v4887 = vadd.f32 0.0, %v4886
  %4888 = vmatmul.bf16.gmra.mxu0 %v3609
  %v4889 = vpop.f32.mrf.mxu0
  %v4890 = vadd.f32 0.0, %v4889
  %v4891 = vpop.f32.mrf.mxu0
  %v4892 = vadd.f32 0.0, %v4891
  %4893 = vmatmul.bf16.gmra.mxu0 %v3612
  %v4894 = vpop.f32.mrf.mxu0
  %v4895 = vadd.f32 0.0, %v4894
  %v4896 = vpop.f32.mrf.mxu0
  %v4897 = vadd.f32 0.0, %v4896
  %4898 = vmatmul.bf16.gmra.mxu0 %v3615
  %v4899 = vpop.f32.mrf.mxu0
  %v4900 = vadd.f32 0.0, %v4899
  %v4901 = vpop.f32.mrf.mxu0
  %v4902 = vadd.f32 0.0, %v4901
  %4903 = vmatmul.bf16.gmra.mxu0 %v3618
  %v4904 = vpop.f32.mrf.mxu0
  %v4905 = vadd.f32 0.0, %v4904
  %v4906 = vpop.f32.mrf.mxu0
  %v4907 = vadd.f32 0.0, %v4906
  %4908 = vdwg.mxu0
  %v4909 = vadd.f32 %v531, %v3630
  %v4910 = vadd.f32 %v532, %v3632
  %v4911 = vadd.f32 %v533, %v3635
  %v4912 = vadd.f32 %v534, %v3637
  %v4913 = vadd.f32 %v535, %v3640
  %v4914 = vadd.f32 %v536, %v3642
  %v4915 = vadd.f32 %v537, %v3645
  %v4916 = vadd.f32 %v538, %v3647
  %v4917 = vadd.f32 %v539, %v3650
  %v4918 = vadd.f32 %v540, %v3652
  %v4919 = vadd.f32 %v541, %v3655
  %v4920 = vadd.f32 %v542, %v3657
  %v4921 = vadd.f32 %v543, %v3660
  %v4922 = vadd.f32 %v544, %v3662
  %v4923 = vadd.f32 %v545, %v3665
  %v4924 = vadd.f32 %v546, %v3667
  %v4925 = vadd.f32 %v547, %v3670
  %v4926 = vadd.f32 %v548, %v3672
  %v4927 = vadd.f32 %v549, %v3675
  %v4928 = vadd.f32 %v550, %v3677
  %v4929 = vadd.f32 %v551, %v3680
  %v4930 = vadd.f32 %v552, %v3682
  %v4931 = vadd.f32 %v553, %v3685
  %v4932 = vadd.f32 %v554, %v3687
  %v4933 = vadd.f32 %v555, %v3690
  %v4934 = vadd.f32 %v556, %v3692
  %v4935 = vadd.f32 %v557, %v3695
  %v4936 = vadd.f32 %v558, %v3697
  %v4937 = vadd.f32 %v559, %v3700
  %v4938 = vadd.f32 %v560, %v3702
  %v4939 = vadd.f32 %v561, %v3705
  %v4940 = vadd.f32 %v562, %v3707
  %v4941 = vadd.f32 %v563, %v3710
  %v4942 = vadd.f32 %v564, %v3712
  %v4943 = vadd.f32 %v565, %v3715
  %v4944 = vadd.f32 %v566, %v3717
  %v4945 = vadd.f32 %v567, %v3720
  %v4946 = vadd.f32 %v568, %v3722
  %v4947 = vadd.f32 %v569, %v3725
  %v4948 = vadd.f32 %v570, %v3727
  %v4949 = vadd.f32 %v571, %v3730
  %v4950 = vadd.f32 %v572, %v3732
  %v4951 = vadd.f32 %v573, %v3735
  %v4952 = vadd.f32 %v574, %v3737
  %v4953 = vadd.f32 %v575, %v3740
  %v4954 = vadd.f32 %v576, %v3742
  %v4955 = vadd.f32 %v577, %v3745
  %v4956 = vadd.f32 %v578, %v3747
  %v4957 = vadd.f32 %v579, %v3750
  %v4958 = vadd.f32 %v580, %v3752
  %v4959 = vadd.f32 %v581, %v3755
  %v4960 = vadd.f32 %v582, %v3757
  %v4961 = vadd.f32 %v583, %v3760
  %v4962 = vadd.f32 %v584, %v3762
  %v4963 = vadd.f32 %v585, %v3765
  %v4964 = vadd.f32 %v586, %v3767
  %v4965 = vadd.f32 %v587, %v3770
  %v4966 = vadd.f32 %v588, %v3772
  %v4967 = vadd.f32 %v589, %v3775
  %v4968 = vadd.f32 %v590, %v3777
  %v4969 = vadd.f32 %v591, %v3780
  %v4970 = vadd.f32 %v592, %v3782
  %v4971 = vadd.f32 %v593, %v3785
  %v4972 = vadd.f32 %v594, %v3787
  %v4973 = vadd.f32 %v595, %v3790
  %v4974 = vadd.f32 %v596, %v3792
  %v4975 = vadd.f32 %v597, %v3795
  %v4976 = vadd.f32 %v598, %v3797
  %v4977 = vadd.f32 %v599, %v3800
  %v4978 = vadd.f32 %v600, %v3802
  %v4979 = vadd.f32 %v601, %v3805
  %v4980 = vadd.f32 %v602, %v3807
  %v4981 = vadd.f32 %v603, %v3810
  %v4982 = vadd.f32 %v604, %v3812
  %v4983 = vadd.f32 %v605, %v3815
  %v4984 = vadd.f32 %v606, %v3817
  %v4985 = vadd.f32 %v607, %v3820
  %v4986 = vadd.f32 %v608, %v3822
  %v4987 = vadd.f32 %v609, %v3825
  %v4988 = vadd.f32 %v610, %v3827
  %v4989 = vadd.f32 %v611, %v3830
  %v4990 = vadd.f32 %v612, %v3832
  %v4991 = vadd.f32 %v613, %v3835
  %v4992 = vadd.f32 %v614, %v3837
  %v4993 = vadd.f32 %v615, %v3840
  %v4994 = vadd.f32 %v616, %v3842
  %v4995 = vadd.f32 %v617, %v3845
  %v4996 = vadd.f32 %v618, %v3847
  %v4997 = vadd.f32 %v619, %v3850
  %v4998 = vadd.f32 %v620, %v3852
  %v4999 = vadd.f32 %v621, %v3855
  %v5000 = vadd.f32 %v622, %v3857
  %v5001 = vadd.f32 %v623, %v3860
  %v5002 = vadd.f32 %v624, %v3862
  %v5003 = vadd.f32 %v625, %v3865
  %v5004 = vadd.f32 %v626, %v3867
  %v5005 = vadd.f32 %v627, %v3870
  %v5006 = vadd.f32 %v628, %v3872
  %v5007 = vadd.f32 %v629, %v3875
  %v5008 = vadd.f32 %v630, %v3877
  %v5009 = vadd.f32 %v631, %v3880
  %v5010 = vadd.f32 %v632, %v3882
  %v5011 = vadd.f32 %v633, %v3885
  %v5012 = vadd.f32 %v634, %v3887
  %v5013 = vadd.f32 %v635, %v3890
  %v5014 = vadd.f32 %v636, %v3892
  %v5015 = vadd.f32 %v637, %v3895
  %v5016 = vadd.f32 %v638, %v3897
  %v5017 = vadd.f32 %v639, %v3900
  %v5018 = vadd.f32 %v640, %v3902
  %v5019 = vadd.f32 %v641, %v3905
  %v5020 = vadd.f32 %v642, %v3907
  %v5021 = vadd.f32 %v643, %v3910
  %v5022 = vadd.f32 %v644, %v3912
  %v5023 = vadd.f32 %v645, %v3915
  %v5024 = vadd.f32 %v646, %v3917
  %v5025 = vadd.f32 %v647, %v3920
  %v5026 = vadd.f32 %v648, %v3922
  %v5027 = vadd.f32 %v649, %v3925
  %v5028 = vadd.f32 %v650, %v3927
  %v5029 = vadd.f32 %v651, %v3930
  %v5030 = vadd.f32 %v652, %v3932
  %v5031 = vadd.f32 %v653, %v3935
  %v5032 = vadd.f32 %v654, %v3937
  %v5033 = vadd.f32 %v655, %v3940
  %v5034 = vadd.f32 %v656, %v3942
  %v5035 = vadd.f32 %v657, %v3945
  %v5036 = vadd.f32 %v658, %v3947
  %v5037 = vadd.f32 %v659, %v3950
  %v5038 = vadd.f32 %v660, %v3952
  %v5039 = vadd.f32 %v661, %v3955
  %v5040 = vadd.f32 %v662, %v3957
  %v5041 = vadd.f32 %v663, %v3960
  %v5042 = vadd.f32 %v664, %v3962
  %v5043 = vadd.f32 %v665, %v3965
  %v5044 = vadd.f32 %v666, %v3967
  %v5045 = vadd.f32 %v667, %v3970
  %v5046 = vadd.f32 %v668, %v3972
  %v5047 = vadd.f32 %v669, %v3975
  %v5048 = vadd.f32 %v670, %v3977
  %v5049 = vadd.f32 %v671, %v3980
  %v5050 = vadd.f32 %v672, %v3982
  %v5051 = vadd.f32 %v673, %v3985
  %v5052 = vadd.f32 %v674, %v3987
  %v5053 = vadd.f32 %v675, %v3990
  %v5054 = vadd.f32 %v676, %v3992
  %v5055 = vadd.f32 %v677, %v3995
  %v5056 = vadd.f32 %v678, %v3997
  %v5057 = vadd.f32 %v679, %v4000
  %v5058 = vadd.f32 %v680, %v4002
  %v5059 = vadd.f32 %v681, %v4005
  %v5060 = vadd.f32 %v682, %v4007
  %v5061 = vadd.f32 %v683, %v4010
  %v5062 = vadd.f32 %v684, %v4012
  %v5063 = vadd.f32 %v685, %v4015
  %v5064 = vadd.f32 %v686, %v4017
  %v5065 = vadd.f32 %v687, %v4020
  %v5066 = vadd.f32 %v688, %v4022
  %v5067 = vadd.f32 %v689, %v4025
  %v5068 = vadd.f32 %v690, %v4027
  %v5069 = vadd.f32 %v691, %v4030
  %v5070 = vadd.f32 %v692, %v4032
  %v5071 = vadd.f32 %v693, %v4035
  %v5072 = vadd.f32 %v694, %v4037
  %v5073 = vadd.f32 %v695, %v4040
  %v5074 = vadd.f32 %v696, %v4042
  %v5075 = vadd.f32 %v697, %v4045
  %v5076 = vadd.f32 %v698, %v4047
  %v5077 = vadd.f32 %v699, %v4050
  %v5078 = vadd.f32 %v700, %v4052
  %v5079 = vadd.f32 %v701, %v4055
  %v5080 = vadd.f32 %v702, %v4057
  %v5081 = vadd.f32 %v703, %v4060
  %v5082 = vadd.f32 %v704, %v4062
  %v5083 = vadd.f32 %v705, %v4065
  %v5084 = vadd.f32 %v706, %v4067
  %v5085 = vadd.f32 %v707, %v4070
  %v5086 = vadd.f32 %v708, %v4072
  %v5087 = vadd.f32 %v709, %v4075
  %v5088 = vadd.f32 %v710, %v4077
  %v5089 = vadd.f32 %v711, %v4080
  %v5090 = vadd.f32 %v712, %v4082
  %v5091 = vadd.f32 %v713, %v4085
  %v5092 = vadd.f32 %v714, %v4087
  %v5093 = vadd.f32 %v715, %v4090
  %v5094 = vadd.f32 %v716, %v4092
  %v5095 = vadd.f32 %v717, %v4095
  %v5096 = vadd.f32 %v718, %v4097
  %v5097 = vadd.f32 %v719, %v4100
  %v5098 = vadd.f32 %v720, %v4102
  %v5099 = vadd.f32 %v721, %v4105
  %v5100 = vadd.f32 %v722, %v4107
  %v5101 = vadd.f32 %v723, %v4110
  %v5102 = vadd.f32 %v724, %v4112
  %v5103 = vadd.f32 %v725, %v4115
  %v5104 = vadd.f32 %v726, %v4117
  %v5105 = vadd.f32 %v727, %v4120
  %v5106 = vadd.f32 %v728, %v4122
  %v5107 = vadd.f32 %v729, %v4125
  %v5108 = vadd.f32 %v730, %v4127
  %v5109 = vadd.f32 %v731, %v4130
  %v5110 = vadd.f32 %v732, %v4132
  %v5111 = vadd.f32 %v733, %v4135
  %v5112 = vadd.f32 %v734, %v4137
  %v5113 = vadd.f32 %v735, %v4140
  %v5114 = vadd.f32 %v736, %v4142
  %v5115 = vadd.f32 %v737, %v4145
  %v5116 = vadd.f32 %v738, %v4147
  %v5117 = vadd.f32 %v739, %v4150
  %v5118 = vadd.f32 %v740, %v4152
  %v5119 = vadd.f32 %v741, %v4155
  %v5120 = vadd.f32 %v742, %v4157
  %v5121 = vadd.f32 %v743, %v4160
  %v5122 = vadd.f32 %v744, %v4162
  %v5123 = vadd.f32 %v745, %v4165
  %v5124 = vadd.f32 %v746, %v4167
  %v5125 = vadd.f32 %v747, %v4170
  %v5126 = vadd.f32 %v748, %v4172
  %v5127 = vadd.f32 %v749, %v4175
  %v5128 = vadd.f32 %v750, %v4177
  %v5129 = vadd.f32 %v751, %v4180
  %v5130 = vadd.f32 %v752, %v4182
  %v5131 = vadd.f32 %v753, %v4185
  %v5132 = vadd.f32 %v754, %v4187
  %v5133 = vadd.f32 %v755, %v4190
  %v5134 = vadd.f32 %v756, %v4192
  %v5135 = vadd.f32 %v757, %v4195
  %v5136 = vadd.f32 %v758, %v4197
  %v5137 = vadd.f32 %v759, %v4200
  %v5138 = vadd.f32 %v760, %v4202
  %v5139 = vadd.f32 %v761, %v4205
  %v5140 = vadd.f32 %v762, %v4207
  %v5141 = vadd.f32 %v763, %v4210
  %v5142 = vadd.f32 %v764, %v4212
  %v5143 = vadd.f32 %v765, %v4215
  %v5144 = vadd.f32 %v766, %v4217
  %v5145 = vadd.f32 %v767, %v4220
  %v5146 = vadd.f32 %v768, %v4222
  %v5147 = vadd.f32 %v769, %v4225
  %v5148 = vadd.f32 %v770, %v4227
  %v5149 = vadd.f32 %v771, %v4230
  %v5150 = vadd.f32 %v772, %v4232
  %v5151 = vadd.f32 %v773, %v4235
  %v5152 = vadd.f32 %v774, %v4237
  %v5153 = vadd.f32 %v775, %v4240
  %v5154 = vadd.f32 %v776, %v4242
  %v5155 = vadd.f32 %v777, %v4245
  %v5156 = vadd.f32 %v778, %v4247
  %v5157 = vadd.f32 %v779, %v4250
  %v5158 = vadd.f32 %v780, %v4252
  %v5159 = vadd.f32 %v781, %v4255
  %v5160 = vadd.f32 %v782, %v4257
  %v5161 = vadd.f32 %v783, %v4260
  %v5162 = vadd.f32 %v784, %v4262
  %v5163 = vadd.f32 %v785, %v4265
  %v5164 = vadd.f32 %v786, %v4267
  %v5165 = vadd.f32 %v787, %v4270
  %v5166 = vadd.f32 %v788, %v4272
  %v5167 = vadd.f32 %v789, %v4275
  %v5168 = vadd.f32 %v790, %v4277
  %v5169 = vadd.f32 %v791, %v4280
  %v5170 = vadd.f32 %v792, %v4282
  %v5171 = vadd.f32 %v793, %v4285
  %v5172 = vadd.f32 %v794, %v4287
  %v5173 = vadd.f32 %v795, %v4290
  %v5174 = vadd.f32 %v796, %v4292
  %v5175 = vadd.f32 %v797, %v4295
  %v5176 = vadd.f32 %v798, %v4297
  %v5177 = vadd.f32 %v799, %v4300
  %v5178 = vadd.f32 %v800, %v4302
  %v5179 = vadd.f32 %v801, %v4305
  %v5180 = vadd.f32 %v802, %v4307
  %v5181 = vadd.f32 %v803, %v4310
  %v5182 = vadd.f32 %v804, %v4312
  %v5183 = vadd.f32 %v805, %v4315
  %v5184 = vadd.f32 %v806, %v4317
  %v5185 = vadd.f32 %v807, %v4320
  %v5186 = vadd.f32 %v808, %v4322
  %v5187 = vadd.f32 %v809, %v4325
  %v5188 = vadd.f32 %v810, %v4327
  %v5189 = vadd.f32 %v811, %v4330
  %v5190 = vadd.f32 %v812, %v4332
  %v5191 = vadd.f32 %v813, %v4335
  %v5192 = vadd.f32 %v814, %v4337
  %v5193 = vadd.f32 %v815, %v4340
  %v5194 = vadd.f32 %v816, %v4342
  %v5195 = vadd.f32 %v817, %v4345
  %v5196 = vadd.f32 %v818, %v4347
  %v5197 = vadd.f32 %v819, %v4350
  %v5198 = vadd.f32 %v820, %v4352
  %v5199 = vadd.f32 %v821, %v4355
  %v5200 = vadd.f32 %v822, %v4357
  %v5201 = vadd.f32 %v823, %v4360
  %v5202 = vadd.f32 %v824, %v4362
  %v5203 = vadd.f32 %v825, %v4365
  %v5204 = vadd.f32 %v826, %v4367
  %v5205 = vadd.f32 %v827, %v4370
  %v5206 = vadd.f32 %v828, %v4372
  %v5207 = vadd.f32 %v829, %v4375
  %v5208 = vadd.f32 %v830, %v4377
  %v5209 = vadd.f32 %v831, %v4380
  %v5210 = vadd.f32 %v832, %v4382
  %v5211 = vadd.f32 %v833, %v4385
  %v5212 = vadd.f32 %v834, %v4387
  %v5213 = vadd.f32 %v835, %v4390
  %v5214 = vadd.f32 %v836, %v4392
  %v5215 = vadd.f32 %v837, %v4395
  %v5216 = vadd.f32 %v838, %v4397
  %v5217 = vadd.f32 %v839, %v4400
  %v5218 = vadd.f32 %v840, %v4402
  %v5219 = vadd.f32 %v841, %v4405
  %v5220 = vadd.f32 %v842, %v4407
  %v5221 = vadd.f32 %v843, %v4410
  %v5222 = vadd.f32 %v844, %v4412
  %v5223 = vadd.f32 %v845, %v4415
  %v5224 = vadd.f32 %v846, %v4417
  %v5225 = vadd.f32 %v847, %v4420
  %v5226 = vadd.f32 %v848, %v4422
  %v5227 = vadd.f32 %v849, %v4425
  %v5228 = vadd.f32 %v850, %v4427
  %v5229 = vadd.f32 %v851, %v4430
  %v5230 = vadd.f32 %v852, %v4432
  %v5231 = vadd.f32 %v853, %v4435
  %v5232 = vadd.f32 %v854, %v4437
  %v5233 = vadd.f32 %v855, %v4440
  %v5234 = vadd.f32 %v856, %v4442
  %v5235 = vadd.f32 %v857, %v4445
  %v5236 = vadd.f32 %v858, %v4447
  %v5237 = vadd.f32 %v859, %v4450
  %v5238 = vadd.f32 %v860, %v4452
  %v5239 = vadd.f32 %v861, %v4455
  %v5240 = vadd.f32 %v862, %v4457
  %v5241 = vadd.f32 %v863, %v4460
  %v5242 = vadd.f32 %v864, %v4462
  %v5243 = vadd.f32 %v865, %v4465
  %v5244 = vadd.f32 %v866, %v4467
  %v5245 = vadd.f32 %v867, %v4470
  %v5246 = vadd.f32 %v868, %v4472
  %v5247 = vadd.f32 %v869, %v4475
  %v5248 = vadd.f32 %v870, %v4477
  %v5249 = vadd.f32 %v871, %v4480
  %v5250 = vadd.f32 %v872, %v4482
  %v5251 = vadd.f32 %v873, %v4485
  %v5252 = vadd.f32 %v874, %v4487
  %v5253 = vadd.f32 %v875, %v4490
  %v5254 = vadd.f32 %v876, %v4492
  %v5255 = vadd.f32 %v877, %v4495
  %v5256 = vadd.f32 %v878, %v4497
  %v5257 = vadd.f32 %v879, %v4500
  %v5258 = vadd.f32 %v880, %v4502
  %v5259 = vadd.f32 %v881, %v4505
  %v5260 = vadd.f32 %v882, %v4507
  %v5261 = vadd.f32 %v883, %v4510
  %v5262 = vadd.f32 %v884, %v4512
  %v5263 = vadd.f32 %v885, %v4515
  %v5264 = vadd.f32 %v886, %v4517
  %v5265 = vadd.f32 %v887, %v4520
  %v5266 = vadd.f32 %v888, %v4522
  %v5267 = vadd.f32 %v889, %v4525
  %v5268 = vadd.f32 %v890, %v4527
  %v5269 = vadd.f32 %v891, %v4530
  %v5270 = vadd.f32 %v892, %v4532
  %v5271 = vadd.f32 %v893, %v4535
  %v5272 = vadd.f32 %v894, %v4537
  %v5273 = vadd.f32 %v895, %v4540
  %v5274 = vadd.f32 %v896, %v4542
  %v5275 = vadd.f32 %v897, %v4545
  %v5276 = vadd.f32 %v898, %v4547
  %v5277 = vadd.f32 %v899, %v4550
  %v5278 = vadd.f32 %v900, %v4552
  %v5279 = vadd.f32 %v901, %v4555
  %v5280 = vadd.f32 %v902, %v4557
  %v5281 = vadd.f32 %v903, %v4560
  %v5282 = vadd.f32 %v904, %v4562
  %v5283 = vadd.f32 %v905, %v4565
  %v5284 = vadd.f32 %v906, %v4567
  %v5285 = vadd.f32 %v907, %v4570
  %v5286 = vadd.f32 %v908, %v4572
  %v5287 = vadd.f32 %v909, %v4575
  %v5288 = vadd.f32 %v910, %v4577
  %v5289 = vadd.f32 %v911, %v4580
  %v5290 = vadd.f32 %v912, %v4582
  %v5291 = vadd.f32 %v913, %v4585
  %v5292 = vadd.f32 %v914, %v4587
  %v5293 = vadd.f32 %v915, %v4590
  %v5294 = vadd.f32 %v916, %v4592
  %v5295 = vadd.f32 %v917, %v4595
  %v5296 = vadd.f32 %v918, %v4597
  %v5297 = vadd.f32 %v919, %v4600
  %v5298 = vadd.f32 %v920, %v4602
  %v5299 = vadd.f32 %v921, %v4605
  %v5300 = vadd.f32 %v922, %v4607
  %v5301 = vadd.f32 %v923, %v4610
  %v5302 = vadd.f32 %v924, %v4612
  %v5303 = vadd.f32 %v925, %v4615
  %v5304 = vadd.f32 %v926, %v4617
  %v5305 = vadd.f32 %v927, %v4620
  %v5306 = vadd.f32 %v928, %v4622
  %v5307 = vadd.f32 %v929, %v4625
  %v5308 = vadd.f32 %v930, %v4627
  %v5309 = vadd.f32 %v931, %v4630
  %v5310 = vadd.f32 %v932, %v4632
  %v5311 = vadd.f32 %v933, %v4635
  %v5312 = vadd.f32 %v934, %v4637
  %v5313 = vadd.f32 %v935, %v4640
  %v5314 = vadd.f32 %v936, %v4642
  %v5315 = vadd.f32 %v937, %v4645
  %v5316 = vadd.f32 %v938, %v4647
  %v5317 = vadd.f32 %v939, %v4650
  %v5318 = vadd.f32 %v940, %v4652
  %v5319 = vadd.f32 %v941, %v4655
  %v5320 = vadd.f32 %v942, %v4657
  %v5321 = vadd.f32 %v943, %v4660
  %v5322 = vadd.f32 %v944, %v4662
  %v5323 = vadd.f32 %v945, %v4665
  %v5324 = vadd.f32 %v946, %v4667
  %v5325 = vadd.f32 %v947, %v4670
  %v5326 = vadd.f32 %v948, %v4672
  %v5327 = vadd.f32 %v949, %v4675
  %v5328 = vadd.f32 %v950, %v4677
  %v5329 = vadd.f32 %v951, %v4680
  %v5330 = vadd.f32 %v952, %v4682
  %v5331 = vadd.f32 %v953, %v4685
  %v5332 = vadd.f32 %v954, %v4687
  %v5333 = vadd.f32 %v955, %v4690
  %v5334 = vadd.f32 %v956, %v4692
  %v5335 = vadd.f32 %v957, %v4695
  %v5336 = vadd.f32 %v958, %v4697
  %v5337 = vadd.f32 %v959, %v4700
  %v5338 = vadd.f32 %v960, %v4702
  %v5339 = vadd.f32 %v961, %v4705
  %v5340 = vadd.f32 %v962, %v4707
  %v5341 = vadd.f32 %v963, %v4710
  %v5342 = vadd.f32 %v964, %v4712
  %v5343 = vadd.f32 %v965, %v4715
  %v5344 = vadd.f32 %v966, %v4717
  %v5345 = vadd.f32 %v967, %v4720
  %v5346 = vadd.f32 %v968, %v4722
  %v5347 = vadd.f32 %v969, %v4725
  %v5348 = vadd.f32 %v970, %v4727
  %v5349 = vadd.f32 %v971, %v4730
  %v5350 = vadd.f32 %v972, %v4732
  %v5351 = vadd.f32 %v973, %v4735
  %v5352 = vadd.f32 %v974, %v4737
  %v5353 = vadd.f32 %v975, %v4740
  %v5354 = vadd.f32 %v976, %v4742
  %v5355 = vadd.f32 %v977, %v4745
  %v5356 = vadd.f32 %v978, %v4747
  %v5357 = vadd.f32 %v979, %v4750
  %v5358 = vadd.f32 %v980, %v4752
  %v5359 = vadd.f32 %v981, %v4755
  %v5360 = vadd.f32 %v982, %v4757
  %v5361 = vadd.f32 %v983, %v4760
  %v5362 = vadd.f32 %v984, %v4762
  %v5363 = vadd.f32 %v985, %v4765
  %v5364 = vadd.f32 %v986, %v4767
  %v5365 = vadd.f32 %v987, %v4770
  %v5366 = vadd.f32 %v988, %v4772
  %v5367 = vadd.f32 %v989, %v4775
  %v5368 = vadd.f32 %v990, %v4777
  %v5369 = vadd.f32 %v991, %v4780
  %v5370 = vadd.f32 %v992, %v4782
  %v5371 = vadd.f32 %v993, %v4785
  %v5372 = vadd.f32 %v994, %v4787
  %v5373 = vadd.f32 %v995, %v4790
  %v5374 = vadd.f32 %v996, %v4792
  %v5375 = vadd.f32 %v997, %v4795
  %v5376 = vadd.f32 %v998, %v4797
  %v5377 = vadd.f32 %v999, %v4800
  %v5378 = vadd.f32 %v1000, %v4802
  %v5379 = vadd.f32 %v1001, %v4805
  %v5380 = vadd.f32 %v1002, %v4807
  %v5381 = vadd.f32 %v1003, %v4810
  %v5382 = vadd.f32 %v1004, %v4812
  %v5383 = vadd.f32 %v1005, %v4815
  %v5384 = vadd.f32 %v1006, %v4817
  %v5385 = vadd.f32 %v1007, %v4820
  %v5386 = vadd.f32 %v1008, %v4822
  %v5387 = vadd.f32 %v1009, %v4825
  %v5388 = vadd.f32 %v1010, %v4827
  %v5389 = vadd.f32 %v1011, %v4830
  %v5390 = vadd.f32 %v1012, %v4832
  %v5391 = vadd.f32 %v1013, %v4835
  %v5392 = vadd.f32 %v1014, %v4837
  %v5393 = vadd.f32 %v1015, %v4840
  %v5394 = vadd.f32 %v1016, %v4842
  %v5395 = vadd.f32 %v1017, %v4845
  %v5396 = vadd.f32 %v1018, %v4847
  %v5397 = vadd.f32 %v1019, %v4850
  %v5398 = vadd.f32 %v1020, %v4852
  %v5399 = vadd.f32 %v1021, %v4855
  %v5400 = vadd.f32 %v1022, %v4857
  %v5401 = vadd.f32 %v1023, %v4860
  %v5402 = vadd.f32 %v1024, %v4862
  %v5403 = vadd.f32 %v1025, %v4865
  %v5404 = vadd.f32 %v1026, %v4867
  %v5405 = vadd.f32 %v1027, %v4870
  %v5406 = vadd.f32 %v1028, %v4872
  %v5407 = vadd.f32 %v1029, %v4875
  %v5408 = vadd.f32 %v1030, %v4877
  %v5409 = vadd.f32 %v1031, %v4880
  %v5410 = vadd.f32 %v1032, %v4882
  %v5411 = vadd.f32 %v1033, %v4885
  %v5412 = vadd.f32 %v1034, %v4887
  %v5413 = vadd.f32 %v1035, %v4890
  %v5414 = vadd.f32 %v1036, %v4892
  %v5415 = vadd.f32 %v1037, %v4895
  %v5416 = vadd.f32 %v1038, %v4897
  %v5417 = vadd.f32 %v1039, %v4900
  %v5418 = vadd.f32 %v1040, %v4902
  %v5419 = vadd.f32 %v1041, %v4905
  %v5420 = vadd.f32 %v1042, %v4907
  %5421 = vst [vmem:[#allocation2] sm:$0xff] %v4909
  %5422 = vst [vmem:[#allocation2 + $0x8] sm:$0xff] %v4910
  %5423 = vst [vmem:[#allocation2 + $0x10] sm:$0xff] %v4911
  %5424 = vst [vmem:[#allocation2 + $0x18] sm:$0xff] %v4912
  %5425 = vst [vmem:[#allocation2 + $0x20] sm:$0xff] %v4913
  %5426 = vst [vmem:[#allocation2 + $0x28] sm:$0xff] %v4914
  %5427 = vst [vmem:[#allocation2 + $0x30] sm:$0xff] %v4915
  %5428 = vst [vmem:[#allocation2 + $0x38] sm:$0xff] %v4916
  %5429 = vst [vmem:[#allocation2 + $0x40] sm:$0xff] %v4917
  %5430 = vst [vmem:[#allocation2 + $0x48] sm:$0xff] %v4918
  %5431 = vst [vmem:[#allocation2 + $0x50] sm:$0xff] %v4919
  %5432 = vst [vmem:[#allocation2 + $0x58] sm:$0xff] %v4920
  %5433 = vst [vmem:[#allocation2 + $0x60] sm:$0xff] %v4921
  %5434 = vst [vmem:[#allocation2 + $0x68] sm:$0xff] %v4922
  %5435 = vst [vmem:[#allocation2 + $0x70] sm:$0xff] %v4923
  %5436 = vst [vmem:[#allocation2 + $0x78] sm:$0xff] %v4924
  %5437 = vst [vmem:[#allocation2 + $0x80] sm:$0xff] %v4925
  %5438 = vst [vmem:[#allocation2 + $0x88] sm:$0xff] %v4926
  %5439 = vst [vmem:[#allocation2 + $0x90] sm:$0xff] %v4927
  %5440 = vst [vmem:[#allocation2 + $0x98] sm:$0xff] %v4928
  %5441 = vst [vmem:[#allocation2 + $0xa0] sm:$0xff] %v4929
  %5442 = vst [vmem:[#allocation2 + $0xa8] sm:$0xff] %v4930
  %5443 = vst [vmem:[#allocation2 + $0xb0] sm:$0xff] %v4931
  %5444 = vst [vmem:[#allocation2 + $0xb8] sm:$0xff] %v4932
  %5445 = vst [vmem:[#allocation2 + $0xc0] sm:$0xff] %v4933
  %5446 = vst [vmem:[#allocation2 + $0xc8] sm:$0xff] %v4934
  %5447 = vst [vmem:[#allocation2 + $0xd0] sm:$0xff] %v4935
  %5448 = vst [vmem:[#allocation2 + $0xd8] sm:$0xff] %v4936
  %5449 = vst [vmem:[#allocation2 + $0xe0] sm:$0xff] %v4937
  %5450 = vst [vmem:[#allocation2 + $0xe8] sm:$0xff] %v4938
  %5451 = vst [vmem:[#allocation2 + $0xf0] sm:$0xff] %v4939
  %5452 = vst [vmem:[#allocation2 + $0xf8] sm:$0xff] %v4940
  %5453 = vst [vmem:[#allocation2 + $0x100] sm:$0xff] %v4941
  %5454 = vst [vmem:[#allocation2 + $0x108] sm:$0xff] %v4942
  %5455 = vst [vmem:[#allocation2 + $0x110] sm:$0xff] %v4943
  %5456 = vst [vmem:[#allocation2 + $0x118] sm:$0xff] %v4944
  %5457 = vst [vmem:[#allocation2 + $0x120] sm:$0xff] %v4945
  %5458 = vst [vmem:[#allocation2 + $0x128] sm:$0xff] %v4946
  %5459 = vst [vmem:[#allocation2 + $0x130] sm:$0xff] %v4947
  %5460 = vst [vmem:[#allocation2 + $0x138] sm:$0xff] %v4948
  %5461 = vst [vmem:[#allocation2 + $0x140] sm:$0xff] %v4949
  %5462 = vst [vmem:[#allocation2 + $0x148] sm:$0xff] %v4950
  %5463 = vst [vmem:[#allocation2 + $0x150] sm:$0xff] %v4951
  %5464 = vst [vmem:[#allocation2 + $0x158] sm:$0xff] %v4952
  %5465 = vst [vmem:[#allocation2 + $0x160] sm:$0xff] %v4953
  %5466 = vst [vmem:[#allocation2 + $0x168] sm:$0xff] %v4954
  %5467 = vst [vmem:[#allocation2 + $0x170] sm:$0xff] %v4955
  %5468 = vst [vmem:[#allocation2 + $0x178] sm:$0xff] %v4956
  %5469 = vst [vmem:[#allocation2 + $0x180] sm:$0xff] %v4957
  %5470 = vst [vmem:[#allocation2 + $0x188] sm:$0xff] %v4958
  %5471 = vst [vmem:[#allocation2 + $0x190] sm:$0xff] %v4959
  %5472 = vst [vmem:[#allocation2 + $0x198] sm:$0xff] %v4960
  %5473 = vst [vmem:[#allocation2 + $0x1a0] sm:$0xff] %v4961
  %5474 = vst [vmem:[#allocation2 + $0x1a8] sm:$0xff] %v4962
  %5475 = vst [vmem:[#allocation2 + $0x1b0] sm:$0xff] %v4963
  %5476 = vst [vmem:[#allocation2 + $0x1b8] sm:$0xff] %v4964
  %5477 = vst [vmem:[#allocation2 + $0x1c0] sm:$0xff] %v4965
  %5478 = vst [vmem:[#allocation2 + $0x1c8] sm:$0xff] %v4966
  %5479 = vst [vmem:[#allocation2 + $0x1d0] sm:$0xff] %v4967
  %5480 = vst [vmem:[#allocation2 + $0x1d8] sm:$0xff] %v4968
  %5481 = vst [vmem:[#allocation2 + $0x1e0] sm:$0xff] %v4969
  %5482 = vst [vmem:[#allocation2 + $0x1e8] sm:$0xff] %v4970
  %5483 = vst [vmem:[#allocation2 + $0x1f0] sm:$0xff] %v4971
  %5484 = vst [vmem:[#allocation2 + $0x1f8] sm:$0xff] %v4972
  %5485 = vst [vmem:[#allocation2 + $0x200] sm:$0xff] %v4973
  %5486 = vst [vmem:[#allocation2 + $0x208] sm:$0xff] %v4974
  %5487 = vst [vmem:[#allocation2 + $0x210] sm:$0xff] %v4975
  %5488 = vst [vmem:[#allocation2 + $0x218] sm:$0xff] %v4976
  %5489 = vst [vmem:[#allocation2 + $0x220] sm:$0xff] %v4977
  %5490 = vst [vmem:[#allocation2 + $0x228] sm:$0xff] %v4978
  %5491 = vst [vmem:[#allocation2 + $0x230] sm:$0xff] %v4979
  %5492 = vst [vmem:[#allocation2 + $0x238] sm:$0xff] %v4980
  %5493 = vst [vmem:[#allocation2 + $0x240] sm:$0xff] %v4981
  %5494 = vst [vmem:[#allocation2 + $0x248] sm:$0xff] %v4982
  %5495 = vst [vmem:[#allocation2 + $0x250] sm:$0xff] %v4983
  %5496 = vst [vmem:[#allocation2 + $0x258] sm:$0xff] %v4984
  %5497 = vst [vmem:[#allocation2 + $0x260] sm:$0xff] %v4985
  %5498 = vst [vmem:[#allocation2 + $0x268] sm:$0xff] %v4986
  %5499 = vst [vmem:[#allocation2 + $0x270] sm:$0xff] %v4987
  %5500 = vst [vmem:[#allocation2 + $0x278] sm:$0xff] %v4988
  %5501 = vst [vmem:[#allocation2 + $0x280] sm:$0xff] %v4989
  %5502 = vst [vmem:[#allocation2 + $0x288] sm:$0xff] %v4990
  %5503 = vst [vmem:[#allocation2 + $0x290] sm:$0xff] %v4991
  %5504 = vst [vmem:[#allocation2 + $0x298] sm:$0xff] %v4992
  %5505 = vst [vmem:[#allocation2 + $0x2a0] sm:$0xff] %v4993
  %5506 = vst [vmem:[#allocation2 + $0x2a8] sm:$0xff] %v4994
  %5507 = vst [vmem:[#allocation2 + $0x2b0] sm:$0xff] %v4995
  %5508 = vst [vmem:[#allocation2 + $0x2b8] sm:$0xff] %v4996
  %5509 = vst [vmem:[#allocation2 + $0x2c0] sm:$0xff] %v4997
  %5510 = vst [vmem:[#allocation2 + $0x2c8] sm:$0xff] %v4998
  %5511 = vst [vmem:[#allocation2 + $0x2d0] sm:$0xff] %v4999
  %5512 = vst [vmem:[#allocation2 + $0x2d8] sm:$0xff] %v5000
  %5513 = vst [vmem:[#allocation2 + $0x2e0] sm:$0xff] %v5001
  %5514 = vst [vmem:[#allocation2 + $0x2e8] sm:$0xff] %v5002
  %5515 = vst [vmem:[#allocation2 + $0x2f0] sm:$0xff] %v5003
  %5516 = vst [vmem:[#allocation2 + $0x2f8] sm:$0xff] %v5004
  %5517 = vst [vmem:[#allocation2 + $0x300] sm:$0xff] %v5005
  %5518 = vst [vmem:[#allocation2 + $0x308] sm:$0xff] %v5006
  %5519 = vst [vmem:[#allocation2 + $0x310] sm:$0xff] %v5007
  %5520 = vst [vmem:[#allocation2 + $0x318] sm:$0xff] %v5008
  %5521 = vst [vmem:[#allocation2 + $0x320] sm:$0xff] %v5009
  %5522 = vst [vmem:[#allocation2 + $0x328] sm:$0xff] %v5010
  %5523 = vst [vmem:[#allocation2 + $0x330] sm:$0xff] %v5011
  %5524 = vst [vmem:[#allocation2 + $0x338] sm:$0xff] %v5012
  %5525 = vst [vmem:[#allocation2 + $0x340] sm:$0xff] %v5013
  %5526 = vst [vmem:[#allocation2 + $0x348] sm:$0xff] %v5014
  %5527 = vst [vmem:[#allocation2 + $0x350] sm:$0xff] %v5015
  %5528 = vst [vmem:[#allocation2 + $0x358] sm:$0xff] %v5016
  %5529 = vst [vmem:[#allocation2 + $0x360] sm:$0xff] %v5017
  %5530 = vst [vmem:[#allocation2 + $0x368] sm:$0xff] %v5018
  %5531 = vst [vmem:[#allocation2 + $0x370] sm:$0xff] %v5019
  %5532 = vst [vmem:[#allocation2 + $0x378] sm:$0xff] %v5020
  %5533 = vst [vmem:[#allocation2 + $0x380] sm:$0xff] %v5021
  %5534 = vst [vmem:[#allocation2 + $0x388] sm:$0xff] %v5022
  %5535 = vst [vmem:[#allocation2 + $0x390] sm:$0xff] %v5023
  %5536 = vst [vmem:[#allocation2 + $0x398] sm:$0xff] %v5024
  %5537 = vst [vmem:[#allocation2 + $0x3a0] sm:$0xff] %v5025
  %5538 = vst [vmem:[#allocation2 + $0x3a8] sm:$0xff] %v5026
  %5539 = vst [vmem:[#allocation2 + $0x3b0] sm:$0xff] %v5027
  %5540 = vst [vmem:[#allocation2 + $0x3b8] sm:$0xff] %v5028
  %5541 = vst [vmem:[#allocation2 + $0x3c0] sm:$0xff] %v5029
  %5542 = vst [vmem:[#allocation2 + $0x3c8] sm:$0xff] %v5030
  %5543 = vst [vmem:[#allocation2 + $0x3d0] sm:$0xff] %v5031
  %5544 = vst [vmem:[#allocation2 + $0x3d8] sm:$0xff] %v5032
  %5545 = vst [vmem:[#allocation2 + $0x3e0] sm:$0xff] %v5033
  %5546 = vst [vmem:[#allocation2 + $0x3e8] sm:$0xff] %v5034
  %5547 = vst [vmem:[#allocation2 + $0x3f0] sm:$0xff] %v5035
  %5548 = vst [vmem:[#allocation2 + $0x3f8] sm:$0xff] %v5036
  %5549 = vst [vmem:[#allocation2 + $0x400] sm:$0xff] %v5037
  %5550 = vst [vmem:[#allocation2 + $0x408] sm:$0xff] %v5038
  %5551 = vst [vmem:[#allocation2 + $0x410] sm:$0xff] %v5039
  %5552 = vst [vmem:[#allocation2 + $0x418] sm:$0xff] %v5040
  %5553 = vst [vmem:[#allocation2 + $0x420] sm:$0xff] %v5041
  %5554 = vst [vmem:[#allocation2 + $0x428] sm:$0xff] %v5042
  %5555 = vst [vmem:[#allocation2 + $0x430] sm:$0xff] %v5043
  %5556 = vst [vmem:[#allocation2 + $0x438] sm:$0xff] %v5044
  %5557 = vst [vmem:[#allocation2 + $0x440] sm:$0xff] %v5045
  %5558 = vst [vmem:[#allocation2 + $0x448] sm:$0xff] %v5046
  %5559 = vst [vmem:[#allocation2 + $0x450] sm:$0xff] %v5047
  %5560 = vst [vmem:[#allocation2 + $0x458] sm:$0xff] %v5048
  %5561 = vst [vmem:[#allocation2 + $0x460] sm:$0xff] %v5049
  %5562 = vst [vmem:[#allocation2 + $0x468] sm:$0xff] %v5050
  %5563 = vst [vmem:[#allocation2 + $0x470] sm:$0xff] %v5051
  %5564 = vst [vmem:[#allocation2 + $0x478] sm:$0xff] %v5052
  %5565 = vst [vmem:[#allocation2 + $0x480] sm:$0xff] %v5053
  %5566 = vst [vmem:[#allocation2 + $0x488] sm:$0xff] %v5054
  %5567 = vst [vmem:[#allocation2 + $0x490] sm:$0xff] %v5055
  %5568 = vst [vmem:[#allocation2 + $0x498] sm:$0xff] %v5056
  %5569 = vst [vmem:[#allocation2 + $0x4a0] sm:$0xff] %v5057
  %5570 = vst [vmem:[#allocation2 + $0x4a8] sm:$0xff] %v5058
  %5571 = vst [vmem:[#allocation2 + $0x4b0] sm:$0xff] %v5059
  %5572 = vst [vmem:[#allocation2 + $0x4b8] sm:$0xff] %v5060
  %5573 = vst [vmem:[#allocation2 + $0x4c0] sm:$0xff] %v5061
  %5574 = vst [vmem:[#allocation2 + $0x4c8] sm:$0xff] %v5062
  %5575 = vst [vmem:[#allocation2 + $0x4d0] sm:$0xff] %v5063
  %5576 = vst [vmem:[#allocation2 + $0x4d8] sm:$0xff] %v5064
  %5577 = vst [vmem:[#allocation2 + $0x4e0] sm:$0xff] %v5065
  %5578 = vst [vmem:[#allocation2 + $0x4e8] sm:$0xff] %v5066
  %5579 = vst [vmem:[#allocation2 + $0x4f0] sm:$0xff] %v5067
  %5580 = vst [vmem:[#allocation2 + $0x4f8] sm:$0xff] %v5068
  %5581 = vst [vmem:[#allocation2 + $0x500] sm:$0xff] %v5069
  %5582 = vst [vmem:[#allocation2 + $0x508] sm:$0xff] %v5070
  %5583 = vst [vmem:[#allocation2 + $0x510] sm:$0xff] %v5071
  %5584 = vst [vmem:[#allocation2 + $0x518] sm:$0xff] %v5072
  %5585 = vst [vmem:[#allocation2 + $0x520] sm:$0xff] %v5073
  %5586 = vst [vmem:[#allocation2 + $0x528] sm:$0xff] %v5074
  %5587 = vst [vmem:[#allocation2 + $0x530] sm:$0xff] %v5075
  %5588 = vst [vmem:[#allocation2 + $0x538] sm:$0xff] %v5076
  %5589 = vst [vmem:[#allocation2 + $0x540] sm:$0xff] %v5077
  %5590 = vst [vmem:[#allocation2 + $0x548] sm:$0xff] %v5078
  %5591 = vst [vmem:[#allocation2 + $0x550] sm:$0xff] %v5079
  %5592 = vst [vmem:[#allocation2 + $0x558] sm:$0xff] %v5080
  %5593 = vst [vmem:[#allocation2 + $0x560] sm:$0xff] %v5081
  %5594 = vst [vmem:[#allocation2 + $0x568] sm:$0xff] %v5082
  %5595 = vst [vmem:[#allocation2 + $0x570] sm:$0xff] %v5083
  %5596 = vst [vmem:[#allocation2 + $0x578] sm:$0xff] %v5084
  %5597 = vst [vmem:[#allocation2 + $0x580] sm:$0xff] %v5085
  %5598 = vst [vmem:[#allocation2 + $0x588] sm:$0xff] %v5086
  %5599 = vst [vmem:[#allocation2 + $0x590] sm:$0xff] %v5087
  %5600 = vst [vmem:[#allocation2 + $0x598] sm:$0xff] %v5088
  %5601 = vst [vmem:[#allocation2 + $0x5a0] sm:$0xff] %v5089
  %5602 = vst [vmem:[#allocation2 + $0x5a8] sm:$0xff] %v5090
  %5603 = vst [vmem:[#allocation2 + $0x5b0] sm:$0xff] %v5091
  %5604 = vst [vmem:[#allocation2 + $0x5b8] sm:$0xff] %v5092
  %5605 = vst [vmem:[#allocation2 + $0x5c0] sm:$0xff] %v5093
  %5606 = vst [vmem:[#allocation2 + $0x5c8] sm:$0xff] %v5094
  %5607 = vst [vmem:[#allocation2 + $0x5d0] sm:$0xff] %v5095
  %5608 = vst [vmem:[#allocation2 + $0x5d8] sm:$0xff] %v5096
  %5609 = vst [vmem:[#allocation2 + $0x5e0] sm:$0xff] %v5097
  %5610 = vst [vmem:[#allocation2 + $0x5e8] sm:$0xff] %v5098
  %5611 = vst [vmem:[#allocation2 + $0x5f0] sm:$0xff] %v5099
  %5612 = vst [vmem:[#allocation2 + $0x5f8] sm:$0xff] %v5100
  %5613 = vst [vmem:[#allocation2 + $0x600] sm:$0xff] %v5101
  %5614 = vst [vmem:[#allocation2 + $0x608] sm:$0xff] %v5102
  %5615 = vst [vmem:[#allocation2 + $0x610] sm:$0xff] %v5103
  %5616 = vst [vmem:[#allocation2 + $0x618] sm:$0xff] %v5104
  %5617 = vst [vmem:[#allocation2 + $0x620] sm:$0xff] %v5105
  %5618 = vst [vmem:[#allocation2 + $0x628] sm:$0xff] %v5106
  %5619 = vst [vmem:[#allocation2 + $0x630] sm:$0xff] %v5107
  %5620 = vst [vmem:[#allocation2 + $0x638] sm:$0xff] %v5108
  %5621 = vst [vmem:[#allocation2 + $0x640] sm:$0xff] %v5109
  %5622 = vst [vmem:[#allocation2 + $0x648] sm:$0xff] %v5110
  %5623 = vst [vmem:[#allocation2 + $0x650] sm:$0xff] %v5111
  %5624 = vst [vmem:[#allocation2 + $0x658] sm:$0xff] %v5112
  %5625 = vst [vmem:[#allocation2 + $0x660] sm:$0xff] %v5113
  %5626 = vst [vmem:[#allocation2 + $0x668] sm:$0xff] %v5114
  %5627 = vst [vmem:[#allocation2 + $0x670] sm:$0xff] %v5115
  %5628 = vst [vmem:[#allocation2 + $0x678] sm:$0xff] %v5116
  %5629 = vst [vmem:[#allocation2 + $0x680] sm:$0xff] %v5117
  %5630 = vst [vmem:[#allocation2 + $0x688] sm:$0xff] %v5118
  %5631 = vst [vmem:[#allocation2 + $0x690] sm:$0xff] %v5119
  %5632 = vst [vmem:[#allocation2 + $0x698] sm:$0xff] %v5120
  %5633 = vst [vmem:[#allocation2 + $0x6a0] sm:$0xff] %v5121
  %5634 = vst [vmem:[#allocation2 + $0x6a8] sm:$0xff] %v5122
  %5635 = vst [vmem:[#allocation2 + $0x6b0] sm:$0xff] %v5123
  %5636 = vst [vmem:[#allocation2 + $0x6b8] sm:$0xff] %v5124
  %5637 = vst [vmem:[#allocation2 + $0x6c0] sm:$0xff] %v5125
  %5638 = vst [vmem:[#allocation2 + $0x6c8] sm:$0xff] %v5126
  %5639 = vst [vmem:[#allocation2 + $0x6d0] sm:$0xff] %v5127
  %5640 = vst [vmem:[#allocation2 + $0x6d8] sm:$0xff] %v5128
  %5641 = vst [vmem:[#allocation2 + $0x6e0] sm:$0xff] %v5129
  %5642 = vst [vmem:[#allocation2 + $0x6e8] sm:$0xff] %v5130
  %5643 = vst [vmem:[#allocation2 + $0x6f0] sm:$0xff] %v5131
  %5644 = vst [vmem:[#allocation2 + $0x6f8] sm:$0xff] %v5132
  %5645 = vst [vmem:[#allocation2 + $0x700] sm:$0xff] %v5133
  %5646 = vst [vmem:[#allocation2 + $0x708] sm:$0xff] %v5134
  %5647 = vst [vmem:[#allocation2 + $0x710] sm:$0xff] %v5135
  %5648 = vst [vmem:[#allocation2 + $0x718] sm:$0xff] %v5136
  %5649 = vst [vmem:[#allocation2 + $0x720] sm:$0xff] %v5137
  %5650 = vst [vmem:[#allocation2 + $0x728] sm:$0xff] %v5138
  %5651 = vst [vmem:[#allocation2 + $0x730] sm:$0xff] %v5139
  %5652 = vst [vmem:[#allocation2 + $0x738] sm:$0xff] %v5140
  %5653 = vst [vmem:[#allocation2 + $0x740] sm:$0xff] %v5141
  %5654 = vst [vmem:[#allocation2 + $0x748] sm:$0xff] %v5142
  %5655 = vst [vmem:[#allocation2 + $0x750] sm:$0xff] %v5143
  %5656 = vst [vmem:[#allocation2 + $0x758] sm:$0xff] %v5144
  %5657 = vst [vmem:[#allocation2 + $0x760] sm:$0xff] %v5145
  %5658 = vst [vmem:[#allocation2 + $0x768] sm:$0xff] %v5146
  %5659 = vst [vmem:[#allocation2 + $0x770] sm:$0xff] %v5147
  %5660 = vst [vmem:[#allocation2 + $0x778] sm:$0xff] %v5148
  %5661 = vst [vmem:[#allocation2 + $0x780] sm:$0xff] %v5149
  %5662 = vst [vmem:[#allocation2 + $0x788] sm:$0xff] %v5150
  %5663 = vst [vmem:[#allocation2 + $0x790] sm:$0xff] %v5151
  %5664 = vst [vmem:[#allocation2 + $0x798] sm:$0xff] %v5152
  %5665 = vst [vmem:[#allocation2 + $0x7a0] sm:$0xff] %v5153
  %5666 = vst [vmem:[#allocation2 + $0x7a8] sm:$0xff] %v5154
  %5667 = vst [vmem:[#allocation2 + $0x7b0] sm:$0xff] %v5155
  %5668 = vst [vmem:[#allocation2 + $0x7b8] sm:$0xff] %v5156
  %5669 = vst [vmem:[#allocation2 + $0x7c0] sm:$0xff] %v5157
  %5670 = vst [vmem:[#allocation2 + $0x7c8] sm:$0xff] %v5158
  %5671 = vst [vmem:[#allocation2 + $0x7d0] sm:$0xff] %v5159
  %5672 = vst [vmem:[#allocation2 + $0x7d8] sm:$0xff] %v5160
  %5673 = vst [vmem:[#allocation2 + $0x7e0] sm:$0xff] %v5161
  %5674 = vst [vmem:[#allocation2 + $0x7e8] sm:$0xff] %v5162
  %5675 = vst [vmem:[#allocation2 + $0x7f0] sm:$0xff] %v5163
  %5676 = vst [vmem:[#allocation2 + $0x7f8] sm:$0xff] %v5164
  %5677 = vst [vmem:[#allocation2 + $0x800] sm:$0xff] %v5165
  %5678 = vst [vmem:[#allocation2 + $0x808] sm:$0xff] %v5166
  %5679 = vst [vmem:[#allocation2 + $0x810] sm:$0xff] %v5167
  %5680 = vst [vmem:[#allocation2 + $0x818] sm:$0xff] %v5168
  %5681 = vst [vmem:[#allocation2 + $0x820] sm:$0xff] %v5169
  %5682 = vst [vmem:[#allocation2 + $0x828] sm:$0xff] %v5170
  %5683 = vst [vmem:[#allocation2 + $0x830] sm:$0xff] %v5171
  %5684 = vst [vmem:[#allocation2 + $0x838] sm:$0xff] %v5172
  %5685 = vst [vmem:[#allocation2 + $0x840] sm:$0xff] %v5173
  %5686 = vst [vmem:[#allocation2 + $0x848] sm:$0xff] %v5174
  %5687 = vst [vmem:[#allocation2 + $0x850] sm:$0xff] %v5175
  %5688 = vst [vmem:[#allocation2 + $0x858] sm:$0xff] %v5176
  %5689 = vst [vmem:[#allocation2 + $0x860] sm:$0xff] %v5177
  %5690 = vst [vmem:[#allocation2 + $0x868] sm:$0xff] %v5178
  %5691 = vst [vmem:[#allocation2 + $0x870] sm:$0xff] %v5179
  %5692 = vst [vmem:[#allocation2 + $0x878] sm:$0xff] %v5180
  %5693 = vst [vmem:[#allocation2 + $0x880] sm:$0xff] %v5181
  %5694 = vst [vmem:[#allocation2 + $0x888] sm:$0xff] %v5182
  %5695 = vst [vmem:[#allocation2 + $0x890] sm:$0xff] %v5183
  %5696 = vst [vmem:[#allocation2 + $0x898] sm:$0xff] %v5184
  %5697 = vst [vmem:[#allocation2 + $0x8a0] sm:$0xff] %v5185
  %5698 = vst [vmem:[#allocation2 + $0x8a8] sm:$0xff] %v5186
  %5699 = vst [vmem:[#allocation2 + $0x8b0] sm:$0xff] %v5187
  %5700 = vst [vmem:[#allocation2 + $0x8b8] sm:$0xff] %v5188
  %5701 = vst [vmem:[#allocation2 + $0x8c0] sm:$0xff] %v5189
  %5702 = vst [vmem:[#allocation2 + $0x8c8] sm:$0xff] %v5190
  %5703 = vst [vmem:[#allocation2 + $0x8d0] sm:$0xff] %v5191
  %5704 = vst [vmem:[#allocation2 + $0x8d8] sm:$0xff] %v5192
  %5705 = vst [vmem:[#allocation2 + $0x8e0] sm:$0xff] %v5193
  %5706 = vst [vmem:[#allocation2 + $0x8e8] sm:$0xff] %v5194
  %5707 = vst [vmem:[#allocation2 + $0x8f0] sm:$0xff] %v5195
  %5708 = vst [vmem:[#allocation2 + $0x8f8] sm:$0xff] %v5196
  %5709 = vst [vmem:[#allocation2 + $0x900] sm:$0xff] %v5197
  %5710 = vst [vmem:[#allocation2 + $0x908] sm:$0xff] %v5198
  %5711 = vst [vmem:[#allocation2 + $0x910] sm:$0xff] %v5199
  %5712 = vst [vmem:[#allocation2 + $0x918] sm:$0xff] %v5200
  %5713 = vst [vmem:[#allocation2 + $0x920] sm:$0xff] %v5201
  %5714 = vst [vmem:[#allocation2 + $0x928] sm:$0xff] %v5202
  %5715 = vst [vmem:[#allocation2 + $0x930] sm:$0xff] %v5203
  %5716 = vst [vmem:[#allocation2 + $0x938] sm:$0xff] %v5204
  %5717 = vst [vmem:[#allocation2 + $0x940] sm:$0xff] %v5205
  %5718 = vst [vmem:[#allocation2 + $0x948] sm:$0xff] %v5206
  %5719 = vst [vmem:[#allocation2 + $0x950] sm:$0xff] %v5207
  %5720 = vst [vmem:[#allocation2 + $0x958] sm:$0xff] %v5208
  %5721 = vst [vmem:[#allocation2 + $0x960] sm:$0xff] %v5209
  %5722 = vst [vmem:[#allocation2 + $0x968] sm:$0xff] %v5210
  %5723 = vst [vmem:[#allocation2 + $0x970] sm:$0xff] %v5211
  %5724 = vst [vmem:[#allocation2 + $0x978] sm:$0xff] %v5212
  %5725 = vst [vmem:[#allocation2 + $0x980] sm:$0xff] %v5213
  %5726 = vst [vmem:[#allocation2 + $0x988] sm:$0xff] %v5214
  %5727 = vst [vmem:[#allocation2 + $0x990] sm:$0xff] %v5215
  %5728 = vst [vmem:[#allocation2 + $0x998] sm:$0xff] %v5216
  %5729 = vst [vmem:[#allocation2 + $0x9a0] sm:$0xff] %v5217
  %5730 = vst [vmem:[#allocation2 + $0x9a8] sm:$0xff] %v5218
  %5731 = vst [vmem:[#allocation2 + $0x9b0] sm:$0xff] %v5219
  %5732 = vst [vmem:[#allocation2 + $0x9b8] sm:$0xff] %v5220
  %5733 = vst [vmem:[#allocation2 + $0x9c0] sm:$0xff] %v5221
  %5734 = vst [vmem:[#allocation2 + $0x9c8] sm:$0xff] %v5222
  %5735 = vst [vmem:[#allocation2 + $0x9d0] sm:$0xff] %v5223
  %5736 = vst [vmem:[#allocation2 + $0x9d8] sm:$0xff] %v5224
  %5737 = vst [vmem:[#allocation2 + $0x9e0] sm:$0xff] %v5225
  %5738 = vst [vmem:[#allocation2 + $0x9e8] sm:$0xff] %v5226
  %5739 = vst [vmem:[#allocation2 + $0x9f0] sm:$0xff] %v5227
  %5740 = vst [vmem:[#allocation2 + $0x9f8] sm:$0xff] %v5228
  %5741 = vst [vmem:[#allocation2 + $0xa00] sm:$0xff] %v5229
  %5742 = vst [vmem:[#allocation2 + $0xa08] sm:$0xff] %v5230
  %5743 = vst [vmem:[#allocation2 + $0xa10] sm:$0xff] %v5231
  %5744 = vst [vmem:[#allocation2 + $0xa18] sm:$0xff] %v5232
  %5745 = vst [vmem:[#allocation2 + $0xa20] sm:$0xff] %v5233
  %5746 = vst [vmem:[#allocation2 + $0xa28] sm:$0xff] %v5234
  %5747 = vst [vmem:[#allocation2 + $0xa30] sm:$0xff] %v5235
  %5748 = vst [vmem:[#allocation2 + $0xa38] sm:$0xff] %v5236
  %5749 = vst [vmem:[#allocation2 + $0xa40] sm:$0xff] %v5237
  %5750 = vst [vmem:[#allocation2 + $0xa48] sm:$0xff] %v5238
  %5751 = vst [vmem:[#allocation2 + $0xa50] sm:$0xff] %v5239
  %5752 = vst [vmem:[#allocation2 + $0xa58] sm:$0xff] %v5240
  %5753 = vst [vmem:[#allocation2 + $0xa60] sm:$0xff] %v5241
  %5754 = vst [vmem:[#allocation2 + $0xa68] sm:$0xff] %v5242
  %5755 = vst [vmem:[#allocation2 + $0xa70] sm:$0xff] %v5243
  %5756 = vst [vmem:[#allocation2 + $0xa78] sm:$0xff] %v5244
  %5757 = vst [vmem:[#allocation2 + $0xa80] sm:$0xff] %v5245
  %5758 = vst [vmem:[#allocation2 + $0xa88] sm:$0xff] %v5246
  %5759 = vst [vmem:[#allocation2 + $0xa90] sm:$0xff] %v5247
  %5760 = vst [vmem:[#allocation2 + $0xa98] sm:$0xff] %v5248
  %5761 = vst [vmem:[#allocation2 + $0xaa0] sm:$0xff] %v5249
  %5762 = vst [vmem:[#allocation2 + $0xaa8] sm:$0xff] %v5250
  %5763 = vst [vmem:[#allocation2 + $0xab0] sm:$0xff] %v5251
  %5764 = vst [vmem:[#allocation2 + $0xab8] sm:$0xff] %v5252
  %5765 = vst [vmem:[#allocation2 + $0xac0] sm:$0xff] %v5253
  %5766 = vst [vmem:[#allocation2 + $0xac8] sm:$0xff] %v5254
  %5767 = vst [vmem:[#allocation2 + $0xad0] sm:$0xff] %v5255
  %5768 = vst [vmem:[#allocation2 + $0xad8] sm:$0xff] %v5256
  %5769 = vst [vmem:[#allocation2 + $0xae0] sm:$0xff] %v5257
  %5770 = vst [vmem:[#allocation2 + $0xae8] sm:$0xff] %v5258
  %5771 = vst [vmem:[#allocation2 + $0xaf0] sm:$0xff] %v5259
  %5772 = vst [vmem:[#allocation2 + $0xaf8] sm:$0xff] %v5260
  %5773 = vst [vmem:[#allocation2 + $0xb00] sm:$0xff] %v5261
  %5774 = vst [vmem:[#allocation2 + $0xb08] sm:$0xff] %v5262
  %5775 = vst [vmem:[#allocation2 + $0xb10] sm:$0xff] %v5263
  %5776 = vst [vmem:[#allocation2 + $0xb18] sm:$0xff] %v5264
  %5777 = vst [vmem:[#allocation2 + $0xb20] sm:$0xff] %v5265
  %5778 = vst [vmem:[#allocation2 + $0xb28] sm:$0xff] %v5266
  %5779 = vst [vmem:[#allocation2 + $0xb30] sm:$0xff] %v5267
  %5780 = vst [vmem:[#allocation2 + $0xb38] sm:$0xff] %v5268
  %5781 = vst [vmem:[#allocation2 + $0xb40] sm:$0xff] %v5269
  %5782 = vst [vmem:[#allocation2 + $0xb48] sm:$0xff] %v5270
  %5783 = vst [vmem:[#allocation2 + $0xb50] sm:$0xff] %v5271
  %5784 = vst [vmem:[#allocation2 + $0xb58] sm:$0xff] %v5272
  %5785 = vst [vmem:[#allocation2 + $0xb60] sm:$0xff] %v5273
  %5786 = vst [vmem:[#allocation2 + $0xb68] sm:$0xff] %v5274
  %5787 = vst [vmem:[#allocation2 + $0xb70] sm:$0xff] %v5275
  %5788 = vst [vmem:[#allocation2 + $0xb78] sm:$0xff] %v5276
  %5789 = vst [vmem:[#allocation2 + $0xb80] sm:$0xff] %v5277
  %5790 = vst [vmem:[#allocation2 + $0xb88] sm:$0xff] %v5278
  %5791 = vst [vmem:[#allocation2 + $0xb90] sm:$0xff] %v5279
  %5792 = vst [vmem:[#allocation2 + $0xb98] sm:$0xff] %v5280
  %5793 = vst [vmem:[#allocation2 + $0xba0] sm:$0xff] %v5281
  %5794 = vst [vmem:[#allocation2 + $0xba8] sm:$0xff] %v5282
  %5795 = vst [vmem:[#allocation2 + $0xbb0] sm:$0xff] %v5283
  %5796 = vst [vmem:[#allocation2 + $0xbb8] sm:$0xff] %v5284
  %5797 = vst [vmem:[#allocation2 + $0xbc0] sm:$0xff] %v5285
  %5798 = vst [vmem:[#allocation2 + $0xbc8] sm:$0xff] %v5286
  %5799 = vst [vmem:[#allocation2 + $0xbd0] sm:$0xff] %v5287
  %5800 = vst [vmem:[#allocation2 + $0xbd8] sm:$0xff] %v5288
  %5801 = vst [vmem:[#allocation2 + $0xbe0] sm:$0xff] %v5289
  %5802 = vst [vmem:[#allocation2 + $0xbe8] sm:$0xff] %v5290
  %5803 = vst [vmem:[#allocation2 + $0xbf0] sm:$0xff] %v5291
  %5804 = vst [vmem:[#allocation2 + $0xbf8] sm:$0xff] %v5292
  %5805 = vst [vmem:[#allocation2 + $0xc00] sm:$0xff] %v5293
  %5806 = vst [vmem:[#allocation2 + $0xc08] sm:$0xff] %v5294
  %5807 = vst [vmem:[#allocation2 + $0xc10] sm:$0xff] %v5295
  %5808 = vst [vmem:[#allocation2 + $0xc18] sm:$0xff] %v5296
  %5809 = vst [vmem:[#allocation2 + $0xc20] sm:$0xff] %v5297
  %5810 = vst [vmem:[#allocation2 + $0xc28] sm:$0xff] %v5298
  %5811 = vst [vmem:[#allocation2 + $0xc30] sm:$0xff] %v5299
  %5812 = vst [vmem:[#allocation2 + $0xc38] sm:$0xff] %v5300
  %5813 = vst [vmem:[#allocation2 + $0xc40] sm:$0xff] %v5301
  %5814 = vst [vmem:[#allocation2 + $0xc48] sm:$0xff] %v5302
  %5815 = vst [vmem:[#allocation2 + $0xc50] sm:$0xff] %v5303
  %5816 = vst [vmem:[#allocation2 + $0xc58] sm:$0xff] %v5304
  %5817 = vst [vmem:[#allocation2 + $0xc60] sm:$0xff] %v5305
  %5818 = vst [vmem:[#allocation2 + $0xc68] sm:$0xff] %v5306
  %5819 = vst [vmem:[#allocation2 + $0xc70] sm:$0xff] %v5307
  %5820 = vst [vmem:[#allocation2 + $0xc78] sm:$0xff] %v5308
  %5821 = vst [vmem:[#allocation2 + $0xc80] sm:$0xff] %v5309
  %5822 = vst [vmem:[#allocation2 + $0xc88] sm:$0xff] %v5310
  %5823 = vst [vmem:[#allocation2 + $0xc90] sm:$0xff] %v5311
  %5824 = vst [vmem:[#allocation2 + $0xc98] sm:$0xff] %v5312
  %5825 = vst [vmem:[#allocation2 + $0xca0] sm:$0xff] %v5313
  %5826 = vst [vmem:[#allocation2 + $0xca8] sm:$0xff] %v5314
  %5827 = vst [vmem:[#allocation2 + $0xcb0] sm:$0xff] %v5315
  %5828 = vst [vmem:[#allocation2 + $0xcb8] sm:$0xff] %v5316
  %5829 = vst [vmem:[#allocation2 + $0xcc0] sm:$0xff] %v5317
  %5830 = vst [vmem:[#allocation2 + $0xcc8] sm:$0xff] %v5318
  %5831 = vst [vmem:[#allocation2 + $0xcd0] sm:$0xff] %v5319
  %5832 = vst [vmem:[#allocation2 + $0xcd8] sm:$0xff] %v5320
  %5833 = vst [vmem:[#allocation2 + $0xce0] sm:$0xff] %v5321
  %5834 = vst [vmem:[#allocation2 + $0xce8] sm:$0xff] %v5322
  %5835 = vst [vmem:[#allocation2 + $0xcf0] sm:$0xff] %v5323
  %5836 = vst [vmem:[#allocation2 + $0xcf8] sm:$0xff] %v5324
  %5837 = vst [vmem:[#allocation2 + $0xd00] sm:$0xff] %v5325
  %5838 = vst [vmem:[#allocation2 + $0xd08] sm:$0xff] %v5326
  %5839 = vst [vmem:[#allocation2 + $0xd10] sm:$0xff] %v5327
  %5840 = vst [vmem:[#allocation2 + $0xd18] sm:$0xff] %v5328
  %5841 = vst [vmem:[#allocation2 + $0xd20] sm:$0xff] %v5329
  %5842 = vst [vmem:[#allocation2 + $0xd28] sm:$0xff] %v5330
  %5843 = vst [vmem:[#allocation2 + $0xd30] sm:$0xff] %v5331
  %5844 = vst [vmem:[#allocation2 + $0xd38] sm:$0xff] %v5332
  %5845 = vst [vmem:[#allocation2 + $0xd40] sm:$0xff] %v5333
  %5846 = vst [vmem:[#allocation2 + $0xd48] sm:$0xff] %v5334
  %5847 = vst [vmem:[#allocation2 + $0xd50] sm:$0xff] %v5335
  %5848 = vst [vmem:[#allocation2 + $0xd58] sm:$0xff] %v5336
  %5849 = vst [vmem:[#allocation2 + $0xd60] sm:$0xff] %v5337
  %5850 = vst [vmem:[#allocation2 + $0xd68] sm:$0xff] %v5338
  %5851 = vst [vmem:[#allocation2 + $0xd70] sm:$0xff] %v5339
  %5852 = vst [vmem:[#allocation2 + $0xd78] sm:$0xff] %v5340
  %5853 = vst [vmem:[#allocation2 + $0xd80] sm:$0xff] %v5341
  %5854 = vst [vmem:[#allocation2 + $0xd88] sm:$0xff] %v5342
  %5855 = vst [vmem:[#allocation2 + $0xd90] sm:$0xff] %v5343
  %5856 = vst [vmem:[#allocation2 + $0xd98] sm:$0xff] %v5344
  %5857 = vst [vmem:[#allocation2 + $0xda0] sm:$0xff] %v5345
  %5858 = vst [vmem:[#allocation2 + $0xda8] sm:$0xff] %v5346
  %5859 = vst [vmem:[#allocation2 + $0xdb0] sm:$0xff] %v5347
  %5860 = vst [vmem:[#allocation2 + $0xdb8] sm:$0xff] %v5348
  %5861 = vst [vmem:[#allocation2 + $0xdc0] sm:$0xff] %v5349
  %5862 = vst [vmem:[#allocation2 + $0xdc8] sm:$0xff] %v5350
  %5863 = vst [vmem:[#allocation2 + $0xdd0] sm:$0xff] %v5351
  %5864 = vst [vmem:[#allocation2 + $0xdd8] sm:$0xff] %v5352
  %5865 = vst [vmem:[#allocation2 + $0xde0] sm:$0xff] %v5353
  %5866 = vst [vmem:[#allocation2 + $0xde8] sm:$0xff] %v5354
  %5867 = vst [vmem:[#allocation2 + $0xdf0] sm:$0xff] %v5355
  %5868 = vst [vmem:[#allocation2 + $0xdf8] sm:$0xff] %v5356
  %5869 = vst [vmem:[#allocation2 + $0xe00] sm:$0xff] %v5357
  %5870 = vst [vmem:[#allocation2 + $0xe08] sm:$0xff] %v5358
  %5871 = vst [vmem:[#allocation2 + $0xe10] sm:$0xff] %v5359
  %5872 = vst [vmem:[#allocation2 + $0xe18] sm:$0xff] %v5360
  %5873 = vst [vmem:[#allocation2 + $0xe20] sm:$0xff] %v5361
  %5874 = vst [vmem:[#allocation2 + $0xe28] sm:$0xff] %v5362
  %5875 = vst [vmem:[#allocation2 + $0xe30] sm:$0xff] %v5363
  %5876 = vst [vmem:[#allocation2 + $0xe38] sm:$0xff] %v5364
  %5877 = vst [vmem:[#allocation2 + $0xe40] sm:$0xff] %v5365
  %5878 = vst [vmem:[#allocation2 + $0xe48] sm:$0xff] %v5366
  %5879 = vst [vmem:[#allocation2 + $0xe50] sm:$0xff] %v5367
  %5880 = vst [vmem:[#allocation2 + $0xe58] sm:$0xff] %v5368
  %5881 = vst [vmem:[#allocation2 + $0xe60] sm:$0xff] %v5369
  %5882 = vst [vmem:[#allocation2 + $0xe68] sm:$0xff] %v5370
  %5883 = vst [vmem:[#allocation2 + $0xe70] sm:$0xff] %v5371
  %5884 = vst [vmem:[#allocation2 + $0xe78] sm:$0xff] %v5372
  %5885 = vst [vmem:[#allocation2 + $0xe80] sm:$0xff] %v5373
  %5886 = vst [vmem:[#allocation2 + $0xe88] sm:$0xff] %v5374
  %5887 = vst [vmem:[#allocation2 + $0xe90] sm:$0xff] %v5375
  %5888 = vst [vmem:[#allocation2 + $0xe98] sm:$0xff] %v5376
  %5889 = vst [vmem:[#allocation2 + $0xea0] sm:$0xff] %v5377
  %5890 = vst [vmem:[#allocation2 + $0xea8] sm:$0xff] %v5378
  %5891 = vst [vmem:[#allocation2 + $0xeb0] sm:$0xff] %v5379
  %5892 = vst [vmem:[#allocation2 + $0xeb8] sm:$0xff] %v5380
  %5893 = vst [vmem:[#allocation2 + $0xec0] sm:$0xff] %v5381
  %5894 = vst [vmem:[#allocation2 + $0xec8] sm:$0xff] %v5382
  %5895 = vst [vmem:[#allocation2 + $0xed0] sm:$0xff] %v5383
  %5896 = vst [vmem:[#allocation2 + $0xed8] sm:$0xff] %v5384
  %5897 = vst [vmem:[#allocation2 + $0xee0] sm:$0xff] %v5385
  %5898 = vst [vmem:[#allocation2 + $0xee8] sm:$0xff] %v5386
  %5899 = vst [vmem:[#allocation2 + $0xef0] sm:$0xff] %v5387
  %5900 = vst [vmem:[#allocation2 + $0xef8] sm:$0xff] %v5388
  %5901 = vst [vmem:[#allocation2 + $0xf00] sm:$0xff] %v5389
  %5902 = vst [vmem:[#allocation2 + $0xf08] sm:$0xff] %v5390
  %5903 = vst [vmem:[#allocation2 + $0xf10] sm:$0xff] %v5391
  %5904 = vst [vmem:[#allocation2 + $0xf18] sm:$0xff] %v5392
  %5905 = vst [vmem:[#allocation2 + $0xf20] sm:$0xff] %v5393
  %5906 = vst [vmem:[#allocation2 + $0xf28] sm:$0xff] %v5394
  %5907 = vst [vmem:[#allocation2 + $0xf30] sm:$0xff] %v5395
  %5908 = vst [vmem:[#allocation2 + $0xf38] sm:$0xff] %v5396
  %5909 = vst [vmem:[#allocation2 + $0xf40] sm:$0xff] %v5397
  %5910 = vst [vmem:[#allocation2 + $0xf48] sm:$0xff] %v5398
  %5911 = vst [vmem:[#allocation2 + $0xf50] sm:$0xff] %v5399
  %5912 = vst [vmem:[#allocation2 + $0xf58] sm:$0xff] %v5400
  %5913 = vst [vmem:[#allocation2 + $0xf60] sm:$0xff] %v5401
  %5914 = vst [vmem:[#allocation2 + $0xf68] sm:$0xff] %v5402
  %5915 = vst [vmem:[#allocation2 + $0xf70] sm:$0xff] %v5403
  %5916 = vst [vmem:[#allocation2 + $0xf78] sm:$0xff] %v5404
  %5917 = vst [vmem:[#allocation2 + $0xf80] sm:$0xff] %v5405
  %5918 = vst [vmem:[#allocation2 + $0xf88] sm:$0xff] %v5406
  %5919 = vst [vmem:[#allocation2 + $0xf90] sm:$0xff] %v5407
  %5920 = vst [vmem:[#allocation2 + $0xf98] sm:$0xff] %v5408
  %5921 = vst [vmem:[#allocation2 + $0xfa0] sm:$0xff] %v5409
  %5922 = vst [vmem:[#allocation2 + $0xfa8] sm:$0xff] %v5410
  %5923 = vst [vmem:[#allocation2 + $0xfb0] sm:$0xff] %v5411
  %5924 = vst [vmem:[#allocation2 + $0xfb8] sm:$0xff] %v5412
  %5925 = vst [vmem:[#allocation2 + $0xfc0] sm:$0xff] %v5413
  %5926 = vst [vmem:[#allocation2 + $0xfc8] sm:$0xff] %v5414
  %5927 = vst [vmem:[#allocation2 + $0xfd0] sm:$0xff] %v5415
  %5928 = vst [vmem:[#allocation2 + $0xfd8] sm:$0xff] %v5416
  %5929 = vst [vmem:[#allocation2 + $0xfe0] sm:$0xff] %v5417
  %5930 = vst [vmem:[#allocation2 + $0xfe8] sm:$0xff] %v5418
  %5931 = vst [vmem:[#allocation2 + $0xff0] sm:$0xff] %v5419
  %5932 = vst [vmem:[#allocation2 + $0xff8] sm:$0xff] %v5420
  // Predicated region
  $region18: #{_conv3d_nores.1} parent=0 // pred_check
    %p5933 = pneg %p15
  $region19: #{_conv3d_nores.1} parent=0 // pred_check_branch
    %5935 = sbr.rel (%p5933) target = $region21
  $region20: #{_conv3d_nores.1} parent=0 // pred_region
    %v5936 = vld [vmem:[#allocation2] sm:$0xff]
    %v5937 = vld [vmem:[#allocation2 + $0x8] sm:$0xff]
    %v5938 = vld [vmem:[#allocation2 + $0x10] sm:$0xff]
    %v5939 = vld [vmem:[#allocation2 + $0x18] sm:$0xff]
    %v5940 = vld [vmem:[#allocation2 + $0x20] sm:$0xff]
    %v5941 = vld [vmem:[#allocation2 + $0x28] sm:$0xff]
    %v5942 = vld [vmem:[#allocation2 + $0x30] sm:$0xff]
    %v5943 = vld [vmem:[#allocation2 + $0x38] sm:$0xff]
    %v5944 = vld [vmem:[#allocation2 + $0x40] sm:$0xff]
    %v5945 = vld [vmem:[#allocation2 + $0x48] sm:$0xff]
    %v5946 = vld [vmem:[#allocation2 + $0x50] sm:$0xff]
    %v5947 = vld [vmem:[#allocation2 + $0x58] sm:$0xff]
    %v5948 = vld [vmem:[#allocation2 + $0x60] sm:$0xff]
    %v5949 = vld [vmem:[#allocation2 + $0x68] sm:$0xff]
    %v5950 = vld [vmem:[#allocation2 + $0x70] sm:$0xff]
    %v5951 = vld [vmem:[#allocation2 + $0x78] sm:$0xff]
    %v5952 = vld [vmem:[#allocation2 + $0x80] sm:$0xff]
    %v5953 = vld [vmem:[#allocation2 + $0x88] sm:$0xff]
    %v5954 = vld [vmem:[#allocation2 + $0x90] sm:$0xff]
    %v5955 = vld [vmem:[#allocation2 + $0x98] sm:$0xff]
    %v5956 = vld [vmem:[#allocation2 + $0xa0] sm:$0xff]
    %v5957 = vld [vmem:[#allocation2 + $0xa8] sm:$0xff]
    %v5958 = vld [vmem:[#allocation2 + $0xb0] sm:$0xff]
    %v5959 = vld [vmem:[#allocation2 + $0xb8] sm:$0xff]
    %v5960 = vld [vmem:[#allocation2 + $0xc0] sm:$0xff]
    %v5961 = vld [vmem:[#allocation2 + $0xc8] sm:$0xff]
    %v5962 = vld [vmem:[#allocation2 + $0xd0] sm:$0xff]
    %v5963 = vld [vmem:[#allocation2 + $0xd8] sm:$0xff]
    %v5964 = vld [vmem:[#allocation2 + $0xe0] sm:$0xff]
    %v5965 = vld [vmem:[#allocation2 + $0xe8] sm:$0xff]
    %v5966 = vld [vmem:[#allocation2 + $0xf0] sm:$0xff]
    %v5967 = vld [vmem:[#allocation2 + $0xf8] sm:$0xff]
    %v5968 = vld [vmem:[#allocation2 + $0x100] sm:$0xff]
    %v5969 = vld [vmem:[#allocation2 + $0x108] sm:$0xff]
    %v5970 = vld [vmem:[#allocation2 + $0x110] sm:$0xff]
    %v5971 = vld [vmem:[#allocation2 + $0x118] sm:$0xff]
    %v5972 = vld [vmem:[#allocation2 + $0x120] sm:$0xff]
    %v5973 = vld [vmem:[#allocation2 + $0x128] sm:$0xff]
    %v5974 = vld [vmem:[#allocation2 + $0x130] sm:$0xff]
    %v5975 = vld [vmem:[#allocation2 + $0x138] sm:$0xff]
    %v5976 = vld [vmem:[#allocation2 + $0x140] sm:$0xff]
    %v5977 = vld [vmem:[#allocation2 + $0x148] sm:$0xff]
    %v5978 = vld [vmem:[#allocation2 + $0x150] sm:$0xff]
    %v5979 = vld [vmem:[#allocation2 + $0x158] sm:$0xff]
    %v5980 = vld [vmem:[#allocation2 + $0x160] sm:$0xff]
    %v5981 = vld [vmem:[#allocation2 + $0x168] sm:$0xff]
    %v5982 = vld [vmem:[#allocation2 + $0x170] sm:$0xff]
    %v5983 = vld [vmem:[#allocation2 + $0x178] sm:$0xff]
    %v5984 = vld [vmem:[#allocation2 + $0x180] sm:$0xff]
    %v5985 = vld [vmem:[#allocation2 + $0x188] sm:$0xff]
    %v5986 = vld [vmem:[#allocation2 + $0x190] sm:$0xff]
    %v5987 = vld [vmem:[#allocation2 + $0x198] sm:$0xff]
    %v5988 = vld [vmem:[#allocation2 + $0x1a0] sm:$0xff]
    %v5989 = vld [vmem:[#allocation2 + $0x1a8] sm:$0xff]
    %v5990 = vld [vmem:[#allocation2 + $0x1b0] sm:$0xff]
    %v5991 = vld [vmem:[#allocation2 + $0x1b8] sm:$0xff]
    %v5992 = vld [vmem:[#allocation2 + $0x1c0] sm:$0xff]
    %v5993 = vld [vmem:[#allocation2 + $0x1c8] sm:$0xff]
    %v5994 = vld [vmem:[#allocation2 + $0x1d0] sm:$0xff]
    %v5995 = vld [vmem:[#allocation2 + $0x1d8] sm:$0xff]
    %v5996 = vld [vmem:[#allocation2 + $0x1e0] sm:$0xff]
    %v5997 = vld [vmem:[#allocation2 + $0x1e8] sm:$0xff]
    %v5998 = vld [vmem:[#allocation2 + $0x1f0] sm:$0xff]
    %v5999 = vld [vmem:[#allocation2 + $0x1f8] sm:$0xff]
    %v6000 = vld [vmem:[#allocation2 + $0x200] sm:$0xff]
    %v6001 = vld [vmem:[#allocation2 + $0x208] sm:$0xff]
    %v6002 = vld [vmem:[#allocation2 + $0x210] sm:$0xff]
    %v6003 = vld [vmem:[#allocation2 + $0x218] sm:$0xff]
    %v6004 = vld [vmem:[#allocation2 + $0x220] sm:$0xff]
    %v6005 = vld [vmem:[#allocation2 + $0x228] sm:$0xff]
    %v6006 = vld [vmem:[#allocation2 + $0x230] sm:$0xff]
    %v6007 = vld [vmem:[#allocation2 + $0x238] sm:$0xff]
    %v6008 = vld [vmem:[#allocation2 + $0x240] sm:$0xff]
    %v6009 = vld [vmem:[#allocation2 + $0x248] sm:$0xff]
    %v6010 = vld [vmem:[#allocation2 + $0x250] sm:$0xff]
    %v6011 = vld [vmem:[#allocation2 + $0x258] sm:$0xff]
    %v6012 = vld [vmem:[#allocation2 + $0x260] sm:$0xff]
    %v6013 = vld [vmem:[#allocation2 + $0x268] sm:$0xff]
    %v6014 = vld [vmem:[#allocation2 + $0x270] sm:$0xff]
    %v6015 = vld [vmem:[#allocation2 + $0x278] sm:$0xff]
    %v6016 = vld [vmem:[#allocation2 + $0x280] sm:$0xff]
    %v6017 = vld [vmem:[#allocation2 + $0x288] sm:$0xff]
    %v6018 = vld [vmem:[#allocation2 + $0x290] sm:$0xff]
    %v6019 = vld [vmem:[#allocation2 + $0x298] sm:$0xff]
    %v6020 = vld [vmem:[#allocation2 + $0x2a0] sm:$0xff]
    %v6021 = vld [vmem:[#allocation2 + $0x2a8] sm:$0xff]
    %v6022 = vld [vmem:[#allocation2 + $0x2b0] sm:$0xff]
    %v6023 = vld [vmem:[#allocation2 + $0x2b8] sm:$0xff]
    %v6024 = vld [vmem:[#allocation2 + $0x2c0] sm:$0xff]
    %v6025 = vld [vmem:[#allocation2 + $0x2c8] sm:$0xff]
    %v6026 = vld [vmem:[#allocation2 + $0x2d0] sm:$0xff]
    %v6027 = vld [vmem:[#allocation2 + $0x2d8] sm:$0xff]
    %v6028 = vld [vmem:[#allocation2 + $0x2e0] sm:$0xff]
    %v6029 = vld [vmem:[#allocation2 + $0x2e8] sm:$0xff]
    %v6030 = vld [vmem:[#allocation2 + $0x2f0] sm:$0xff]
    %v6031 = vld [vmem:[#allocation2 + $0x2f8] sm:$0xff]
    %v6032 = vld [vmem:[#allocation2 + $0x300] sm:$0xff]
    %v6033 = vld [vmem:[#allocation2 + $0x308] sm:$0xff]
    %v6034 = vld [vmem:[#allocation2 + $0x310] sm:$0xff]
    %v6035 = vld [vmem:[#allocation2 + $0x318] sm:$0xff]
    %v6036 = vld [vmem:[#allocation2 + $0x320] sm:$0xff]
    %v6037 = vld [vmem:[#allocation2 + $0x328] sm:$0xff]
    %v6038 = vld [vmem:[#allocation2 + $0x330] sm:$0xff]
    %v6039 = vld [vmem:[#allocation2 + $0x338] sm:$0xff]
    %v6040 = vld [vmem:[#allocation2 + $0x340] sm:$0xff]
    %v6041 = vld [vmem:[#allocation2 + $0x348] sm:$0xff]
    %v6042 = vld [vmem:[#allocation2 + $0x350] sm:$0xff]
    %v6043 = vld [vmem:[#allocation2 + $0x358] sm:$0xff]
    %v6044 = vld [vmem:[#allocation2 + $0x360] sm:$0xff]
    %v6045 = vld [vmem:[#allocation2 + $0x368] sm:$0xff]
    %v6046 = vld [vmem:[#allocation2 + $0x370] sm:$0xff]
    %v6047 = vld [vmem:[#allocation2 + $0x378] sm:$0xff]
    %v6048 = vld [vmem:[#allocation2 + $0x380] sm:$0xff]
    %v6049 = vld [vmem:[#allocation2 + $0x388] sm:$0xff]
    %v6050 = vld [vmem:[#allocation2 + $0x390] sm:$0xff]
    %v6051 = vld [vmem:[#allocation2 + $0x398] sm:$0xff]
    %v6052 = vld [vmem:[#allocation2 + $0x3a0] sm:$0xff]
    %v6053 = vld [vmem:[#allocation2 + $0x3a8] sm:$0xff]
    %v6054 = vld [vmem:[#allocation2 + $0x3b0] sm:$0xff]
    %v6055 = vld [vmem:[#allocation2 + $0x3b8] sm:$0xff]
    %v6056 = vld [vmem:[#allocation2 + $0x3c0] sm:$0xff]
    %v6057 = vld [vmem:[#allocation2 + $0x3c8] sm:$0xff]
    %v6058 = vld [vmem:[#allocation2 + $0x3d0] sm:$0xff]
    %v6059 = vld [vmem:[#allocation2 + $0x3d8] sm:$0xff]
    %v6060 = vld [vmem:[#allocation2 + $0x3e0] sm:$0xff]
    %v6061 = vld [vmem:[#allocation2 + $0x3e8] sm:$0xff]
    %v6062 = vld [vmem:[#allocation2 + $0x3f0] sm:$0xff]
    %v6063 = vld [vmem:[#allocation2 + $0x3f8] sm:$0xff]
    %v6064 = vld [vmem:[#allocation2 + $0x400] sm:$0xff]
    %v6065 = vld [vmem:[#allocation2 + $0x408] sm:$0xff]
    %v6066 = vld [vmem:[#allocation2 + $0x410] sm:$0xff]
    %v6067 = vld [vmem:[#allocation2 + $0x418] sm:$0xff]
    %v6068 = vld [vmem:[#allocation2 + $0x420] sm:$0xff]
    %v6069 = vld [vmem:[#allocation2 + $0x428] sm:$0xff]
    %v6070 = vld [vmem:[#allocation2 + $0x430] sm:$0xff]
    %v6071 = vld [vmem:[#allocation2 + $0x438] sm:$0xff]
    %v6072 = vld [vmem:[#allocation2 + $0x440] sm:$0xff]
    %v6073 = vld [vmem:[#allocation2 + $0x448] sm:$0xff]
    %v6074 = vld [vmem:[#allocation2 + $0x450] sm:$0xff]
    %v6075 = vld [vmem:[#allocation2 + $0x458] sm:$0xff]
    %v6076 = vld [vmem:[#allocation2 + $0x460] sm:$0xff]
    %v6077 = vld [vmem:[#allocation2 + $0x468] sm:$0xff]
    %v6078 = vld [vmem:[#allocation2 + $0x470] sm:$0xff]
    %v6079 = vld [vmem:[#allocation2 + $0x478] sm:$0xff]
    %v6080 = vld [vmem:[#allocation2 + $0x480] sm:$0xff]
    %v6081 = vld [vmem:[#allocation2 + $0x488] sm:$0xff]
    %v6082 = vld [vmem:[#allocation2 + $0x490] sm:$0xff]
    %v6083 = vld [vmem:[#allocation2 + $0x498] sm:$0xff]
    %v6084 = vld [vmem:[#allocation2 + $0x4a0] sm:$0xff]
    %v6085 = vld [vmem:[#allocation2 + $0x4a8] sm:$0xff]
    %v6086 = vld [vmem:[#allocation2 + $0x4b0] sm:$0xff]
    %v6087 = vld [vmem:[#allocation2 + $0x4b8] sm:$0xff]
    %v6088 = vld [vmem:[#allocation2 + $0x4c0] sm:$0xff]
    %v6089 = vld [vmem:[#allocation2 + $0x4c8] sm:$0xff]
    %v6090 = vld [vmem:[#allocation2 + $0x4d0] sm:$0xff]
    %v6091 = vld [vmem:[#allocation2 + $0x4d8] sm:$0xff]
    %v6092 = vld [vmem:[#allocation2 + $0x4e0] sm:$0xff]
    %v6093 = vld [vmem:[#allocation2 + $0x4e8] sm:$0xff]
    %v6094 = vld [vmem:[#allocation2 + $0x4f0] sm:$0xff]
    %v6095 = vld [vmem:[#allocation2 + $0x4f8] sm:$0xff]
    %v6096 = vld [vmem:[#allocation2 + $0x500] sm:$0xff]
    %v6097 = vld [vmem:[#allocation2 + $0x508] sm:$0xff]
    %v6098 = vld [vmem:[#allocation2 + $0x510] sm:$0xff]
    %v6099 = vld [vmem:[#allocation2 + $0x518] sm:$0xff]
    %v6100 = vld [vmem:[#allocation2 + $0x520] sm:$0xff]
    %v6101 = vld [vmem:[#allocation2 + $0x528] sm:$0xff]
    %v6102 = vld [vmem:[#allocation2 + $0x530] sm:$0xff]
    %v6103 = vld [vmem:[#allocation2 + $0x538] sm:$0xff]
    %v6104 = vld [vmem:[#allocation2 + $0x540] sm:$0xff]
    %v6105 = vld [vmem:[#allocation2 + $0x548] sm:$0xff]
    %v6106 = vld [vmem:[#allocation2 + $0x550] sm:$0xff]
    %v6107 = vld [vmem:[#allocation2 + $0x558] sm:$0xff]
    %v6108 = vld [vmem:[#allocation2 + $0x560] sm:$0xff]
    %v6109 = vld [vmem:[#allocation2 + $0x568] sm:$0xff]
    %v6110 = vld [vmem:[#allocation2 + $0x570] sm:$0xff]
    %v6111 = vld [vmem:[#allocation2 + $0x578] sm:$0xff]
    %v6112 = vld [vmem:[#allocation2 + $0x580] sm:$0xff]
    %v6113 = vld [vmem:[#allocation2 + $0x588] sm:$0xff]
    %v6114 = vld [vmem:[#allocation2 + $0x590] sm:$0xff]
    %v6115 = vld [vmem:[#allocation2 + $0x598] sm:$0xff]
    %v6116 = vld [vmem:[#allocation2 + $0x5a0] sm:$0xff]
    %v6117 = vld [vmem:[#allocation2 + $0x5a8] sm:$0xff]
    %v6118 = vld [vmem:[#allocation2 + $0x5b0] sm:$0xff]
    %v6119 = vld [vmem:[#allocation2 + $0x5b8] sm:$0xff]
    %v6120 = vld [vmem:[#allocation2 + $0x5c0] sm:$0xff]
    %v6121 = vld [vmem:[#allocation2 + $0x5c8] sm:$0xff]
    %v6122 = vld [vmem:[#allocation2 + $0x5d0] sm:$0xff]
    %v6123 = vld [vmem:[#allocation2 + $0x5d8] sm:$0xff]
    %v6124 = vld [vmem:[#allocation2 + $0x5e0] sm:$0xff]
    %v6125 = vld [vmem:[#allocation2 + $0x5e8] sm:$0xff]
    %v6126 = vld [vmem:[#allocation2 + $0x5f0] sm:$0xff]
    %v6127 = vld [vmem:[#allocation2 + $0x5f8] sm:$0xff]
    %v6128 = vld [vmem:[#allocation2 + $0x600] sm:$0xff]
    %v6129 = vld [vmem:[#allocation2 + $0x608] sm:$0xff]
    %v6130 = vld [vmem:[#allocation2 + $0x610] sm:$0xff]
    %v6131 = vld [vmem:[#allocation2 + $0x618] sm:$0xff]
    %v6132 = vld [vmem:[#allocation2 + $0x620] sm:$0xff]
    %v6133 = vld [vmem:[#allocation2 + $0x628] sm:$0xff]
    %v6134 = vld [vmem:[#allocation2 + $0x630] sm:$0xff]
    %v6135 = vld [vmem:[#allocation2 + $0x638] sm:$0xff]
    %v6136 = vld [vmem:[#allocation2 + $0x640] sm:$0xff]
    %v6137 = vld [vmem:[#allocation2 + $0x648] sm:$0xff]
    %v6138 = vld [vmem:[#allocation2 + $0x650] sm:$0xff]
    %v6139 = vld [vmem:[#allocation2 + $0x658] sm:$0xff]
    %v6140 = vld [vmem:[#allocation2 + $0x660] sm:$0xff]
    %v6141 = vld [vmem:[#allocation2 + $0x668] sm:$0xff]
    %v6142 = vld [vmem:[#allocation2 + $0x670] sm:$0xff]
    %v6143 = vld [vmem:[#allocation2 + $0x678] sm:$0xff]
    %v6144 = vld [vmem:[#allocation2 + $0x680] sm:$0xff]
    %v6145 = vld [vmem:[#allocation2 + $0x688] sm:$0xff]
    %v6146 = vld [vmem:[#allocation2 + $0x690] sm:$0xff]
    %v6147 = vld [vmem:[#allocation2 + $0x698] sm:$0xff]
    %v6148 = vld [vmem:[#allocation2 + $0x6a0] sm:$0xff]
    %v6149 = vld [vmem:[#allocation2 + $0x6a8] sm:$0xff]
    %v6150 = vld [vmem:[#allocation2 + $0x6b0] sm:$0xff]
    %v6151 = vld [vmem:[#allocation2 + $0x6b8] sm:$0xff]
    %v6152 = vld [vmem:[#allocation2 + $0x6c0] sm:$0xff]
    %v6153 = vld [vmem:[#allocation2 + $0x6c8] sm:$0xff]
    %v6154 = vld [vmem:[#allocation2 + $0x6d0] sm:$0xff]
    %v6155 = vld [vmem:[#allocation2 + $0x6d8] sm:$0xff]
    %v6156 = vld [vmem:[#allocation2 + $0x6e0] sm:$0xff]
    %v6157 = vld [vmem:[#allocation2 + $0x6e8] sm:$0xff]
    %v6158 = vld [vmem:[#allocation2 + $0x6f0] sm:$0xff]
    %v6159 = vld [vmem:[#allocation2 + $0x6f8] sm:$0xff]
    %v6160 = vld [vmem:[#allocation2 + $0x700] sm:$0xff]
    %v6161 = vld [vmem:[#allocation2 + $0x708] sm:$0xff]
    %v6162 = vld [vmem:[#allocation2 + $0x710] sm:$0xff]
    %v6163 = vld [vmem:[#allocation2 + $0x718] sm:$0xff]
    %v6164 = vld [vmem:[#allocation2 + $0x720] sm:$0xff]
    %v6165 = vld [vmem:[#allocation2 + $0x728] sm:$0xff]
    %v6166 = vld [vmem:[#allocation2 + $0x730] sm:$0xff]
    %v6167 = vld [vmem:[#allocation2 + $0x738] sm:$0xff]
    %v6168 = vld [vmem:[#allocation2 + $0x740] sm:$0xff]
    %v6169 = vld [vmem:[#allocation2 + $0x748] sm:$0xff]
    %v6170 = vld [vmem:[#allocation2 + $0x750] sm:$0xff]
    %v6171 = vld [vmem:[#allocation2 + $0x758] sm:$0xff]
    %v6172 = vld [vmem:[#allocation2 + $0x760] sm:$0xff]
    %v6173 = vld [vmem:[#allocation2 + $0x768] sm:$0xff]
    %v6174 = vld [vmem:[#allocation2 + $0x770] sm:$0xff]
    %v6175 = vld [vmem:[#allocation2 + $0x778] sm:$0xff]
    %v6176 = vld [vmem:[#allocation2 + $0x780] sm:$0xff]
    %v6177 = vld [vmem:[#allocation2 + $0x788] sm:$0xff]
    %v6178 = vld [vmem:[#allocation2 + $0x790] sm:$0xff]
    %v6179 = vld [vmem:[#allocation2 + $0x798] sm:$0xff]
    %v6180 = vld [vmem:[#allocation2 + $0x7a0] sm:$0xff]
    %v6181 = vld [vmem:[#allocation2 + $0x7a8] sm:$0xff]
    %v6182 = vld [vmem:[#allocation2 + $0x7b0] sm:$0xff]
    %v6183 = vld [vmem:[#allocation2 + $0x7b8] sm:$0xff]
    %v6184 = vld [vmem:[#allocation2 + $0x7c0] sm:$0xff]
    %v6185 = vld [vmem:[#allocation2 + $0x7c8] sm:$0xff]
    %v6186 = vld [vmem:[#allocation2 + $0x7d0] sm:$0xff]
    %v6187 = vld [vmem:[#allocation2 + $0x7d8] sm:$0xff]
    %v6188 = vld [vmem:[#allocation2 + $0x7e0] sm:$0xff]
    %v6189 = vld [vmem:[#allocation2 + $0x7e8] sm:$0xff]
    %v6190 = vld [vmem:[#allocation2 + $0x7f0] sm:$0xff]
    %v6191 = vld [vmem:[#allocation2 + $0x7f8] sm:$0xff]
    %v6192 = vld [vmem:[#allocation2 + $0x800] sm:$0xff]
    %v6193 = vld [vmem:[#allocation2 + $0x808] sm:$0xff]
    %v6194 = vld [vmem:[#allocation2 + $0x810] sm:$0xff]
    %v6195 = vld [vmem:[#allocation2 + $0x818] sm:$0xff]
    %v6196 = vld [vmem:[#allocation2 + $0x820] sm:$0xff]
    %v6197 = vld [vmem:[#allocation2 + $0x828] sm:$0xff]
    %v6198 = vld [vmem:[#allocation2 + $0x830] sm:$0xff]
    %v6199 = vld [vmem:[#allocation2 + $0x838] sm:$0xff]
    %v6200 = vld [vmem:[#allocation2 + $0x840] sm:$0xff]
    %v6201 = vld [vmem:[#allocation2 + $0x848] sm:$0xff]
    %v6202 = vld [vmem:[#allocation2 + $0x850] sm:$0xff]
    %v6203 = vld [vmem:[#allocation2 + $0x858] sm:$0xff]
    %v6204 = vld [vmem:[#allocation2 + $0x860] sm:$0xff]
    %v6205 = vld [vmem:[#allocation2 + $0x868] sm:$0xff]
    %v6206 = vld [vmem:[#allocation2 + $0x870] sm:$0xff]
    %v6207 = vld [vmem:[#allocation2 + $0x878] sm:$0xff]
    %v6208 = vld [vmem:[#allocation2 + $0x880] sm:$0xff]
    %v6209 = vld [vmem:[#allocation2 + $0x888] sm:$0xff]
    %v6210 = vld [vmem:[#allocation2 + $0x890] sm:$0xff]
    %v6211 = vld [vmem:[#allocation2 + $0x898] sm:$0xff]
    %v6212 = vld [vmem:[#allocation2 + $0x8a0] sm:$0xff]
    %v6213 = vld [vmem:[#allocation2 + $0x8a8] sm:$0xff]
    %v6214 = vld [vmem:[#allocation2 + $0x8b0] sm:$0xff]
    %v6215 = vld [vmem:[#allocation2 + $0x8b8] sm:$0xff]
    %v6216 = vld [vmem:[#allocation2 + $0x8c0] sm:$0xff]
    %v6217 = vld [vmem:[#allocation2 + $0x8c8] sm:$0xff]
    %v6218 = vld [vmem:[#allocation2 + $0x8d0] sm:$0xff]
    %v6219 = vld [vmem:[#allocation2 + $0x8d8] sm:$0xff]
    %v6220 = vld [vmem:[#allocation2 + $0x8e0] sm:$0xff]
    %v6221 = vld [vmem:[#allocation2 + $0x8e8] sm:$0xff]
    %v6222 = vld [vmem:[#allocation2 + $0x8f0] sm:$0xff]
    %v6223 = vld [vmem:[#allocation2 + $0x8f8] sm:$0xff]
    %v6224 = vld [vmem:[#allocation2 + $0x900] sm:$0xff]
    %v6225 = vld [vmem:[#allocation2 + $0x908] sm:$0xff]
    %v6226 = vld [vmem:[#allocation2 + $0x910] sm:$0xff]
    %v6227 = vld [vmem:[#allocation2 + $0x918] sm:$0xff]
    %v6228 = vld [vmem:[#allocation2 + $0x920] sm:$0xff]
    %v6229 = vld [vmem:[#allocation2 + $0x928] sm:$0xff]
    %v6230 = vld [vmem:[#allocation2 + $0x930] sm:$0xff]
    %v6231 = vld [vmem:[#allocation2 + $0x938] sm:$0xff]
    %v6232 = vld [vmem:[#allocation2 + $0x940] sm:$0xff]
    %v6233 = vld [vmem:[#allocation2 + $0x948] sm:$0xff]
    %v6234 = vld [vmem:[#allocation2 + $0x950] sm:$0xff]
    %v6235 = vld [vmem:[#allocation2 + $0x958] sm:$0xff]
    %v6236 = vld [vmem:[#allocation2 + $0x960] sm:$0xff]
    %v6237 = vld [vmem:[#allocation2 + $0x968] sm:$0xff]
    %v6238 = vld [vmem:[#allocation2 + $0x970] sm:$0xff]
    %v6239 = vld [vmem:[#allocation2 + $0x978] sm:$0xff]
    %v6240 = vld [vmem:[#allocation2 + $0x980] sm:$0xff]
    %v6241 = vld [vmem:[#allocation2 + $0x988] sm:$0xff]
    %v6242 = vld [vmem:[#allocation2 + $0x990] sm:$0xff]
    %v6243 = vld [vmem:[#allocation2 + $0x998] sm:$0xff]
    %v6244 = vld [vmem:[#allocation2 + $0x9a0] sm:$0xff]
    %v6245 = vld [vmem:[#allocation2 + $0x9a8] sm:$0xff]
    %v6246 = vld [vmem:[#allocation2 + $0x9b0] sm:$0xff]
    %v6247 = vld [vmem:[#allocation2 + $0x9b8] sm:$0xff]
    %v6248 = vld [vmem:[#allocation2 + $0x9c0] sm:$0xff]
    %v6249 = vld [vmem:[#allocation2 + $0x9c8] sm:$0xff]
    %v6250 = vld [vmem:[#allocation2 + $0x9d0] sm:$0xff]
    %v6251 = vld [vmem:[#allocation2 + $0x9d8] sm:$0xff]
    %v6252 = vld [vmem:[#allocation2 + $0x9e0] sm:$0xff]
    %v6253 = vld [vmem:[#allocation2 + $0x9e8] sm:$0xff]
    %v6254 = vld [vmem:[#allocation2 + $0x9f0] sm:$0xff]
    %v6255 = vld [vmem:[#allocation2 + $0x9f8] sm:$0xff]
    %v6256 = vld [vmem:[#allocation2 + $0xa00] sm:$0xff]
    %v6257 = vld [vmem:[#allocation2 + $0xa08] sm:$0xff]
    %v6258 = vld [vmem:[#allocation2 + $0xa10] sm:$0xff]
    %v6259 = vld [vmem:[#allocation2 + $0xa18] sm:$0xff]
    %v6260 = vld [vmem:[#allocation2 + $0xa20] sm:$0xff]
    %v6261 = vld [vmem:[#allocation2 + $0xa28] sm:$0xff]
    %v6262 = vld [vmem:[#allocation2 + $0xa30] sm:$0xff]
    %v6263 = vld [vmem:[#allocation2 + $0xa38] sm:$0xff]
    %v6264 = vld [vmem:[#allocation2 + $0xa40] sm:$0xff]
    %v6265 = vld [vmem:[#allocation2 + $0xa48] sm:$0xff]
    %v6266 = vld [vmem:[#allocation2 + $0xa50] sm:$0xff]
    %v6267 = vld [vmem:[#allocation2 + $0xa58] sm:$0xff]
    %v6268 = vld [vmem:[#allocation2 + $0xa60] sm:$0xff]
    %v6269 = vld [vmem:[#allocation2 + $0xa68] sm:$0xff]
    %v6270 = vld [vmem:[#allocation2 + $0xa70] sm:$0xff]
    %v6271 = vld [vmem:[#allocation2 + $0xa78] sm:$0xff]
    %v6272 = vld [vmem:[#allocation2 + $0xa80] sm:$0xff]
    %v6273 = vld [vmem:[#allocation2 + $0xa88] sm:$0xff]
    %v6274 = vld [vmem:[#allocation2 + $0xa90] sm:$0xff]
    %v6275 = vld [vmem:[#allocation2 + $0xa98] sm:$0xff]
    %v6276 = vld [vmem:[#allocation2 + $0xaa0] sm:$0xff]
    %v6277 = vld [vmem:[#allocation2 + $0xaa8] sm:$0xff]
    %v6278 = vld [vmem:[#allocation2 + $0xab0] sm:$0xff]
    %v6279 = vld [vmem:[#allocation2 + $0xab8] sm:$0xff]
    %v6280 = vld [vmem:[#allocation2 + $0xac0] sm:$0xff]
    %v6281 = vld [vmem:[#allocation2 + $0xac8] sm:$0xff]
    %v6282 = vld [vmem:[#allocation2 + $0xad0] sm:$0xff]
    %v6283 = vld [vmem:[#allocation2 + $0xad8] sm:$0xff]
    %v6284 = vld [vmem:[#allocation2 + $0xae0] sm:$0xff]
    %v6285 = vld [vmem:[#allocation2 + $0xae8] sm:$0xff]
    %v6286 = vld [vmem:[#allocation2 + $0xaf0] sm:$0xff]
    %v6287 = vld [vmem:[#allocation2 + $0xaf8] sm:$0xff]
    %v6288 = vld [vmem:[#allocation2 + $0xb00] sm:$0xff]
    %v6289 = vld [vmem:[#allocation2 + $0xb08] sm:$0xff]
    %v6290 = vld [vmem:[#allocation2 + $0xb10] sm:$0xff]
    %v6291 = vld [vmem:[#allocation2 + $0xb18] sm:$0xff]
    %v6292 = vld [vmem:[#allocation2 + $0xb20] sm:$0xff]
    %v6293 = vld [vmem:[#allocation2 + $0xb28] sm:$0xff]
    %v6294 = vld [vmem:[#allocation2 + $0xb30] sm:$0xff]
    %v6295 = vld [vmem:[#allocation2 + $0xb38] sm:$0xff]
    %v6296 = vld [vmem:[#allocation2 + $0xb40] sm:$0xff]
    %v6297 = vld [vmem:[#allocation2 + $0xb48] sm:$0xff]
    %v6298 = vld [vmem:[#allocation2 + $0xb50] sm:$0xff]
    %v6299 = vld [vmem:[#allocation2 + $0xb58] sm:$0xff]
    %v6300 = vld [vmem:[#allocation2 + $0xb60] sm:$0xff]
    %v6301 = vld [vmem:[#allocation2 + $0xb68] sm:$0xff]
    %v6302 = vld [vmem:[#allocation2 + $0xb70] sm:$0xff]
    %v6303 = vld [vmem:[#allocation2 + $0xb78] sm:$0xff]
    %v6304 = vld [vmem:[#allocation2 + $0xb80] sm:$0xff]
    %v6305 = vld [vmem:[#allocation2 + $0xb88] sm:$0xff]
    %v6306 = vld [vmem:[#allocation2 + $0xb90] sm:$0xff]
    %v6307 = vld [vmem:[#allocation2 + $0xb98] sm:$0xff]
    %v6308 = vld [vmem:[#allocation2 + $0xba0] sm:$0xff]
    %v6309 = vld [vmem:[#allocation2 + $0xba8] sm:$0xff]
    %v6310 = vld [vmem:[#allocation2 + $0xbb0] sm:$0xff]
    %v6311 = vld [vmem:[#allocation2 + $0xbb8] sm:$0xff]
    %v6312 = vld [vmem:[#allocation2 + $0xbc0] sm:$0xff]
    %v6313 = vld [vmem:[#allocation2 + $0xbc8] sm:$0xff]
    %v6314 = vld [vmem:[#allocation2 + $0xbd0] sm:$0xff]
    %v6315 = vld [vmem:[#allocation2 + $0xbd8] sm:$0xff]
    %v6316 = vld [vmem:[#allocation2 + $0xbe0] sm:$0xff]
    %v6317 = vld [vmem:[#allocation2 + $0xbe8] sm:$0xff]
    %v6318 = vld [vmem:[#allocation2 + $0xbf0] sm:$0xff]
    %v6319 = vld [vmem:[#allocation2 + $0xbf8] sm:$0xff]
    %v6320 = vld [vmem:[#allocation2 + $0xc00] sm:$0xff]
    %v6321 = vld [vmem:[#allocation2 + $0xc08] sm:$0xff]
    %v6322 = vld [vmem:[#allocation2 + $0xc10] sm:$0xff]
    %v6323 = vld [vmem:[#allocation2 + $0xc18] sm:$0xff]
    %v6324 = vld [vmem:[#allocation2 + $0xc20] sm:$0xff]
    %v6325 = vld [vmem:[#allocation2 + $0xc28] sm:$0xff]
    %v6326 = vld [vmem:[#allocation2 + $0xc30] sm:$0xff]
    %v6327 = vld [vmem:[#allocation2 + $0xc38] sm:$0xff]
    %v6328 = vld [vmem:[#allocation2 + $0xc40] sm:$0xff]
    %v6329 = vld [vmem:[#allocation2 + $0xc48] sm:$0xff]
    %v6330 = vld [vmem:[#allocation2 + $0xc50] sm:$0xff]
    %v6331 = vld [vmem:[#allocation2 + $0xc58] sm:$0xff]
    %v6332 = vld [vmem:[#allocation2 + $0xc60] sm:$0xff]
    %v6333 = vld [vmem:[#allocation2 + $0xc68] sm:$0xff]
    %v6334 = vld [vmem:[#allocation2 + $0xc70] sm:$0xff]
    %v6335 = vld [vmem:[#allocation2 + $0xc78] sm:$0xff]
    %v6336 = vld [vmem:[#allocation2 + $0xc80] sm:$0xff]
    %v6337 = vld [vmem:[#allocation2 + $0xc88] sm:$0xff]
    %v6338 = vld [vmem:[#allocation2 + $0xc90] sm:$0xff]
    %v6339 = vld [vmem:[#allocation2 + $0xc98] sm:$0xff]
    %v6340 = vld [vmem:[#allocation2 + $0xca0] sm:$0xff]
    %v6341 = vld [vmem:[#allocation2 + $0xca8] sm:$0xff]
    %v6342 = vld [vmem:[#allocation2 + $0xcb0] sm:$0xff]
    %v6343 = vld [vmem:[#allocation2 + $0xcb8] sm:$0xff]
    %v6344 = vld [vmem:[#allocation2 + $0xcc0] sm:$0xff]
    %v6345 = vld [vmem:[#allocation2 + $0xcc8] sm:$0xff]
    %v6346 = vld [vmem:[#allocation2 + $0xcd0] sm:$0xff]
    %v6347 = vld [vmem:[#allocation2 + $0xcd8] sm:$0xff]
    %v6348 = vld [vmem:[#allocation2 + $0xce0] sm:$0xff]
    %v6349 = vld [vmem:[#allocation2 + $0xce8] sm:$0xff]
    %v6350 = vld [vmem:[#allocation2 + $0xcf0] sm:$0xff]
    %v6351 = vld [vmem:[#allocation2 + $0xcf8] sm:$0xff]
    %v6352 = vld [vmem:[#allocation2 + $0xd00] sm:$0xff]
    %v6353 = vld [vmem:[#allocation2 + $0xd08] sm:$0xff]
    %v6354 = vld [vmem:[#allocation2 + $0xd10] sm:$0xff]
    %v6355 = vld [vmem:[#allocation2 + $0xd18] sm:$0xff]
    %v6356 = vld [vmem:[#allocation2 + $0xd20] sm:$0xff]
    %v6357 = vld [vmem:[#allocation2 + $0xd28] sm:$0xff]
    %v6358 = vld [vmem:[#allocation2 + $0xd30] sm:$0xff]
    %v6359 = vld [vmem:[#allocation2 + $0xd38] sm:$0xff]
    %v6360 = vld [vmem:[#allocation2 + $0xd40] sm:$0xff]
    %v6361 = vld [vmem:[#allocation2 + $0xd48] sm:$0xff]
    %v6362 = vld [vmem:[#allocation2 + $0xd50] sm:$0xff]
    %v6363 = vld [vmem:[#allocation2 + $0xd58] sm:$0xff]
    %v6364 = vld [vmem:[#allocation2 + $0xd60] sm:$0xff]
    %v6365 = vld [vmem:[#allocation2 + $0xd68] sm:$0xff]
    %v6366 = vld [vmem:[#allocation2 + $0xd70] sm:$0xff]
    %v6367 = vld [vmem:[#allocation2 + $0xd78] sm:$0xff]
    %v6368 = vld [vmem:[#allocation2 + $0xd80] sm:$0xff]
    %v6369 = vld [vmem:[#allocation2 + $0xd88] sm:$0xff]
    %v6370 = vld [vmem:[#allocation2 + $0xd90] sm:$0xff]
    %v6371 = vld [vmem:[#allocation2 + $0xd98] sm:$0xff]
    %v6372 = vld [vmem:[#allocation2 + $0xda0] sm:$0xff]
    %v6373 = vld [vmem:[#allocation2 + $0xda8] sm:$0xff]
    %v6374 = vld [vmem:[#allocation2 + $0xdb0] sm:$0xff]
    %v6375 = vld [vmem:[#allocation2 + $0xdb8] sm:$0xff]
    %v6376 = vld [vmem:[#allocation2 + $0xdc0] sm:$0xff]
    %v6377 = vld [vmem:[#allocation2 + $0xdc8] sm:$0xff]
    %v6378 = vld [vmem:[#allocation2 + $0xdd0] sm:$0xff]
    %v6379 = vld [vmem:[#allocation2 + $0xdd8] sm:$0xff]
    %v6380 = vld [vmem:[#allocation2 + $0xde0] sm:$0xff]
    %v6381 = vld [vmem:[#allocation2 + $0xde8] sm:$0xff]
    %v6382 = vld [vmem:[#allocation2 + $0xdf0] sm:$0xff]
    %v6383 = vld [vmem:[#allocation2 + $0xdf8] sm:$0xff]
    %v6384 = vld [vmem:[#allocation2 + $0xe00] sm:$0xff]
    %v6385 = vld [vmem:[#allocation2 + $0xe08] sm:$0xff]
    %v6386 = vld [vmem:[#allocation2 + $0xe10] sm:$0xff]
    %v6387 = vld [vmem:[#allocation2 + $0xe18] sm:$0xff]
    %v6388 = vld [vmem:[#allocation2 + $0xe20] sm:$0xff]
    %v6389 = vld [vmem:[#allocation2 + $0xe28] sm:$0xff]
    %v6390 = vld [vmem:[#allocation2 + $0xe30] sm:$0xff]
    %v6391 = vld [vmem:[#allocation2 + $0xe38] sm:$0xff]
    %v6392 = vld [vmem:[#allocation2 + $0xe40] sm:$0xff]
    %v6393 = vld [vmem:[#allocation2 + $0xe48] sm:$0xff]
    %v6394 = vld [vmem:[#allocation2 + $0xe50] sm:$0xff]
    %v6395 = vld [vmem:[#allocation2 + $0xe58] sm:$0xff]
    %v6396 = vld [vmem:[#allocation2 + $0xe60] sm:$0xff]
    %v6397 = vld [vmem:[#allocation2 + $0xe68] sm:$0xff]
    %v6398 = vld [vmem:[#allocation2 + $0xe70] sm:$0xff]
    %v6399 = vld [vmem:[#allocation2 + $0xe78] sm:$0xff]
    %v6400 = vld [vmem:[#allocation2 + $0xe80] sm:$0xff]
    %v6401 = vld [vmem:[#allocation2 + $0xe88] sm:$0xff]
    %v6402 = vld [vmem:[#allocation2 + $0xe90] sm:$0xff]
    %v6403 = vld [vmem:[#allocation2 + $0xe98] sm:$0xff]
    %v6404 = vld [vmem:[#allocation2 + $0xea0] sm:$0xff]
    %v6405 = vld [vmem:[#allocation2 + $0xea8] sm:$0xff]
    %v6406 = vld [vmem:[#allocation2 + $0xeb0] sm:$0xff]
    %v6407 = vld [vmem:[#allocation2 + $0xeb8] sm:$0xff]
    %v6408 = vld [vmem:[#allocation2 + $0xec0] sm:$0xff]
    %v6409 = vld [vmem:[#allocation2 + $0xec8] sm:$0xff]
    %v6410 = vld [vmem:[#allocation2 + $0xed0] sm:$0xff]
    %v6411 = vld [vmem:[#allocation2 + $0xed8] sm:$0xff]
    %v6412 = vld [vmem:[#allocation2 + $0xee0] sm:$0xff]
    %v6413 = vld [vmem:[#allocation2 + $0xee8] sm:$0xff]
    %v6414 = vld [vmem:[#allocation2 + $0xef0] sm:$0xff]
    %v6415 = vld [vmem:[#allocation2 + $0xef8] sm:$0xff]
    %v6416 = vld [vmem:[#allocation2 + $0xf00] sm:$0xff]
    %v6417 = vld [vmem:[#allocation2 + $0xf08] sm:$0xff]
    %v6418 = vld [vmem:[#allocation2 + $0xf10] sm:$0xff]
    %v6419 = vld [vmem:[#allocation2 + $0xf18] sm:$0xff]
    %v6420 = vld [vmem:[#allocation2 + $0xf20] sm:$0xff]
    %v6421 = vld [vmem:[#allocation2 + $0xf28] sm:$0xff]
    %v6422 = vld [vmem:[#allocation2 + $0xf30] sm:$0xff]
    %v6423 = vld [vmem:[#allocation2 + $0xf38] sm:$0xff]
    %v6424 = vld [vmem:[#allocation2 + $0xf40] sm:$0xff]
    %v6425 = vld [vmem:[#allocation2 + $0xf48] sm:$0xff]
    %v6426 = vld [vmem:[#allocation2 + $0xf50] sm:$0xff]
    %v6427 = vld [vmem:[#allocation2 + $0xf58] sm:$0xff]
    %v6428 = vld [vmem:[#allocation2 + $0xf60] sm:$0xff]
    %v6429 = vld [vmem:[#allocation2 + $0xf68] sm:$0xff]
    %v6430 = vld [vmem:[#allocation2 + $0xf70] sm:$0xff]
    %v6431 = vld [vmem:[#allocation2 + $0xf78] sm:$0xff]
    %v6432 = vld [vmem:[#allocation2 + $0xf80] sm:$0xff]
    %v6433 = vld [vmem:[#allocation2 + $0xf88] sm:$0xff]
    %v6434 = vld [vmem:[#allocation2 + $0xf90] sm:$0xff]
    %v6435 = vld [vmem:[#allocation2 + $0xf98] sm:$0xff]
    %v6436 = vld [vmem:[#allocation2 + $0xfa0] sm:$0xff]
    %v6437 = vld [vmem:[#allocation2 + $0xfa8] sm:$0xff]
    %v6438 = vld [vmem:[#allocation2 + $0xfb0] sm:$0xff]
    %v6439 = vld [vmem:[#allocation2 + $0xfb8] sm:$0xff]
    %v6440 = vld [vmem:[#allocation2 + $0xfc0] sm:$0xff]
    %v6441 = vld [vmem:[#allocation2 + $0xfc8] sm:$0xff]
    %v6442 = vld [vmem:[#allocation2 + $0xfd0] sm:$0xff]
    %v6443 = vld [vmem:[#allocation2 + $0xfd8] sm:$0xff]
    %v6444 = vld [vmem:[#allocation2 + $0xfe0] sm:$0xff]
    %v6445 = vld [vmem:[#allocation2 + $0xfe8] sm:$0xff]
    %v6446 = vld [vmem:[#allocation2 + $0xff0] sm:$0xff]
    %v6447 = vld [vmem:[#allocation2 + $0xff8] sm:$0xff]
    %v6448 = vld [vmem:[%s2] sm:$0x1]
    %v6450 = vperm.slane %v6448, 0
    %v6452 = vadd.f32 %v5936, %v6450
    %v6453 = vadd.f32 %v5937, %v6450
    %v6454 = vadd.f32 %v5938, %v6450
    %v6455 = vadd.f32 %v5939, %v6450
    %v6456 = vadd.f32 %v5940, %v6450
    %v6457 = vadd.f32 %v5941, %v6450
    %v6458 = vadd.f32 %v5942, %v6450
    %v6459 = vadd.f32 %v5943, %v6450
    %v6460 = vadd.f32 %v5944, %v6450
    %v6461 = vadd.f32 %v5945, %v6450
    %v6462 = vadd.f32 %v5946, %v6450
    %v6463 = vadd.f32 %v5947, %v6450
    %v6464 = vadd.f32 %v5948, %v6450
    %v6465 = vadd.f32 %v5949, %v6450
    %v6466 = vadd.f32 %v5950, %v6450
    %v6467 = vadd.f32 %v5951, %v6450
    %v6468 = vadd.f32 %v5952, %v6450
    %v6469 = vadd.f32 %v5953, %v6450
    %v6470 = vadd.f32 %v5954, %v6450
    %v6471 = vadd.f32 %v5955, %v6450
    %v6472 = vadd.f32 %v5956, %v6450
    %v6473 = vadd.f32 %v5957, %v6450
    %v6474 = vadd.f32 %v5958, %v6450
    %v6475 = vadd.f32 %v5959, %v6450
    %v6476 = vadd.f32 %v5960, %v6450
    %v6477 = vadd.f32 %v5961, %v6450
    %v6478 = vadd.f32 %v5962, %v6450
    %v6479 = vadd.f32 %v5963, %v6450
    %v6480 = vadd.f32 %v5964, %v6450
    %v6481 = vadd.f32 %v5965, %v6450
    %v6482 = vadd.f32 %v5966, %v6450
    %v6483 = vadd.f32 %v5967, %v6450
    %v6484 = vadd.f32 %v5968, %v6450
    %v6485 = vadd.f32 %v5969, %v6450
    %v6486 = vadd.f32 %v5970, %v6450
    %v6487 = vadd.f32 %v5971, %v6450
    %v6488 = vadd.f32 %v5972, %v6450
    %v6489 = vadd.f32 %v5973, %v6450
    %v6490 = vadd.f32 %v5974, %v6450
    %v6491 = vadd.f32 %v5975, %v6450
    %v6492 = vadd.f32 %v5976, %v6450
    %v6493 = vadd.f32 %v5977, %v6450
    %v6494 = vadd.f32 %v5978, %v6450
    %v6495 = vadd.f32 %v5979, %v6450
    %v6496 = vadd.f32 %v5980, %v6450
    %v6497 = vadd.f32 %v5981, %v6450
    %v6498 = vadd.f32 %v5982, %v6450
    %v6499 = vadd.f32 %v5983, %v6450
    %v6500 = vadd.f32 %v5984, %v6450
    %v6501 = vadd.f32 %v5985, %v6450
    %v6502 = vadd.f32 %v5986, %v6450
    %v6503 = vadd.f32 %v5987, %v6450
    %v6504 = vadd.f32 %v5988, %v6450
    %v6505 = vadd.f32 %v5989, %v6450
    %v6506 = vadd.f32 %v5990, %v6450
    %v6507 = vadd.f32 %v5991, %v6450
    %v6508 = vadd.f32 %v5992, %v6450
    %v6509 = vadd.f32 %v5993, %v6450
    %v6510 = vadd.f32 %v5994, %v6450
    %v6511 = vadd.f32 %v5995, %v6450
    %v6512 = vadd.f32 %v5996, %v6450
    %v6513 = vadd.f32 %v5997, %v6450
    %v6514 = vadd.f32 %v5998, %v6450
    %v6515 = vadd.f32 %v5999, %v6450
    %v6516 = vadd.f32 %v6000, %v6450
    %v6517 = vadd.f32 %v6001, %v6450
    %v6518 = vadd.f32 %v6002, %v6450
    %v6519 = vadd.f32 %v6003, %v6450
    %v6520 = vadd.f32 %v6004, %v6450
    %v6521 = vadd.f32 %v6005, %v6450
    %v6522 = vadd.f32 %v6006, %v6450
    %v6523 = vadd.f32 %v6007, %v6450
    %v6524 = vadd.f32 %v6008, %v6450
    %v6525 = vadd.f32 %v6009, %v6450
    %v6526 = vadd.f32 %v6010, %v6450
    %v6527 = vadd.f32 %v6011, %v6450
    %v6528 = vadd.f32 %v6012, %v6450
    %v6529 = vadd.f32 %v6013, %v6450
    %v6530 = vadd.f32 %v6014, %v6450
    %v6531 = vadd.f32 %v6015, %v6450
    %v6532 = vadd.f32 %v6016, %v6450
    %v6533 = vadd.f32 %v6017, %v6450
    %v6534 = vadd.f32 %v6018, %v6450
    %v6535 = vadd.f32 %v6019, %v6450
    %v6536 = vadd.f32 %v6020, %v6450
    %v6537 = vadd.f32 %v6021, %v6450
    %v6538 = vadd.f32 %v6022, %v6450
    %v6539 = vadd.f32 %v6023, %v6450
    %v6540 = vadd.f32 %v6024, %v6450
    %v6541 = vadd.f32 %v6025, %v6450
    %v6542 = vadd.f32 %v6026, %v6450
    %v6543 = vadd.f32 %v6027, %v6450
    %v6544 = vadd.f32 %v6028, %v6450
    %v6545 = vadd.f32 %v6029, %v6450
    %v6546 = vadd.f32 %v6030, %v6450
    %v6547 = vadd.f32 %v6031, %v6450
    %v6548 = vadd.f32 %v6032, %v6450
    %v6549 = vadd.f32 %v6033, %v6450
    %v6550 = vadd.f32 %v6034, %v6450
    %v6551 = vadd.f32 %v6035, %v6450
    %v6552 = vadd.f32 %v6036, %v6450
    %v6553 = vadd.f32 %v6037, %v6450
    %v6554 = vadd.f32 %v6038, %v6450
    %v6555 = vadd.f32 %v6039, %v6450
    %v6556 = vadd.f32 %v6040, %v6450
    %v6557 = vadd.f32 %v6041, %v6450
    %v6558 = vadd.f32 %v6042, %v6450
    %v6559 = vadd.f32 %v6043, %v6450
    %v6560 = vadd.f32 %v6044, %v6450
    %v6561 = vadd.f32 %v6045, %v6450
    %v6562 = vadd.f32 %v6046, %v6450
    %v6563 = vadd.f32 %v6047, %v6450
    %v6564 = vadd.f32 %v6048, %v6450
    %v6565 = vadd.f32 %v6049, %v6450
    %v6566 = vadd.f32 %v6050, %v6450
    %v6567 = vadd.f32 %v6051, %v6450
    %v6568 = vadd.f32 %v6052, %v6450
    %v6569 = vadd.f32 %v6053, %v6450
    %v6570 = vadd.f32 %v6054, %v6450
    %v6571 = vadd.f32 %v6055, %v6450
    %v6572 = vadd.f32 %v6056, %v6450
    %v6573 = vadd.f32 %v6057, %v6450
    %v6574 = vadd.f32 %v6058, %v6450
    %v6575 = vadd.f32 %v6059, %v6450
    %v6576 = vadd.f32 %v6060, %v6450
    %v6577 = vadd.f32 %v6061, %v6450
    %v6578 = vadd.f32 %v6062, %v6450
    %v6579 = vadd.f32 %v6063, %v6450
    %v6580 = vadd.f32 %v6064, %v6450
    %v6581 = vadd.f32 %v6065, %v6450
    %v6582 = vadd.f32 %v6066, %v6450
    %v6583 = vadd.f32 %v6067, %v6450
    %v6584 = vadd.f32 %v6068, %v6450
    %v6585 = vadd.f32 %v6069, %v6450
    %v6586 = vadd.f32 %v6070, %v6450
    %v6587 = vadd.f32 %v6071, %v6450
    %v6588 = vadd.f32 %v6072, %v6450
    %v6589 = vadd.f32 %v6073, %v6450
    %v6590 = vadd.f32 %v6074, %v6450
    %v6591 = vadd.f32 %v6075, %v6450
    %v6592 = vadd.f32 %v6076, %v6450
    %v6593 = vadd.f32 %v6077, %v6450
    %v6594 = vadd.f32 %v6078, %v6450
    %v6595 = vadd.f32 %v6079, %v6450
    %v6596 = vadd.f32 %v6080, %v6450
    %v6597 = vadd.f32 %v6081, %v6450
    %v6598 = vadd.f32 %v6082, %v6450
    %v6599 = vadd.f32 %v6083, %v6450
    %v6600 = vadd.f32 %v6084, %v6450
    %v6601 = vadd.f32 %v6085, %v6450
    %v6602 = vadd.f32 %v6086, %v6450
    %v6603 = vadd.f32 %v6087, %v6450
    %v6604 = vadd.f32 %v6088, %v6450
    %v6605 = vadd.f32 %v6089, %v6450
    %v6606 = vadd.f32 %v6090, %v6450
    %v6607 = vadd.f32 %v6091, %v6450
    %v6608 = vadd.f32 %v6092, %v6450
    %v6609 = vadd.f32 %v6093, %v6450
    %v6610 = vadd.f32 %v6094, %v6450
    %v6611 = vadd.f32 %v6095, %v6450
    %v6612 = vadd.f32 %v6096, %v6450
    %v6613 = vadd.f32 %v6097, %v6450
    %v6614 = vadd.f32 %v6098, %v6450
    %v6615 = vadd.f32 %v6099, %v6450
    %v6616 = vadd.f32 %v6100, %v6450
    %v6617 = vadd.f32 %v6101, %v6450
    %v6618 = vadd.f32 %v6102, %v6450
    %v6619 = vadd.f32 %v6103, %v6450
    %v6620 = vadd.f32 %v6104, %v6450
    %v6621 = vadd.f32 %v6105, %v6450
    %v6622 = vadd.f32 %v6106, %v6450
    %v6623 = vadd.f32 %v6107, %v6450
    %v6624 = vadd.f32 %v6108, %v6450
    %v6625 = vadd.f32 %v6109, %v6450
    %v6626 = vadd.f32 %v6110, %v6450
    %v6627 = vadd.f32 %v6111, %v6450
    %v6628 = vadd.f32 %v6112, %v6450
    %v6629 = vadd.f32 %v6113, %v6450
    %v6630 = vadd.f32 %v6114, %v6450
    %v6631 = vadd.f32 %v6115, %v6450
    %v6632 = vadd.f32 %v6116, %v6450
    %v6633 = vadd.f32 %v6117, %v6450
    %v6634 = vadd.f32 %v6118, %v6450
    %v6635 = vadd.f32 %v6119, %v6450
    %v6636 = vadd.f32 %v6120, %v6450
    %v6637 = vadd.f32 %v6121, %v6450
    %v6638 = vadd.f32 %v6122, %v6450
    %v6639 = vadd.f32 %v6123, %v6450
    %v6640 = vadd.f32 %v6124, %v6450
    %v6641 = vadd.f32 %v6125, %v6450
    %v6642 = vadd.f32 %v6126, %v6450
    %v6643 = vadd.f32 %v6127, %v6450
    %v6644 = vadd.f32 %v6128, %v6450
    %v6645 = vadd.f32 %v6129, %v6450
    %v6646 = vadd.f32 %v6130, %v6450
    %v6647 = vadd.f32 %v6131, %v6450
    %v6648 = vadd.f32 %v6132, %v6450
    %v6649 = vadd.f32 %v6133, %v6450
    %v6650 = vadd.f32 %v6134, %v6450
    %v6651 = vadd.f32 %v6135, %v6450
    %v6652 = vadd.f32 %v6136, %v6450
    %v6653 = vadd.f32 %v6137, %v6450
    %v6654 = vadd.f32 %v6138, %v6450
    %v6655 = vadd.f32 %v6139, %v6450
    %v6656 = vadd.f32 %v6140, %v6450
    %v6657 = vadd.f32 %v6141, %v6450
    %v6658 = vadd.f32 %v6142, %v6450
    %v6659 = vadd.f32 %v6143, %v6450
    %v6660 = vadd.f32 %v6144, %v6450
    %v6661 = vadd.f32 %v6145, %v6450
    %v6662 = vadd.f32 %v6146, %v6450
    %v6663 = vadd.f32 %v6147, %v6450
    %v6664 = vadd.f32 %v6148, %v6450
    %v6665 = vadd.f32 %v6149, %v6450
    %v6666 = vadd.f32 %v6150, %v6450
    %v6667 = vadd.f32 %v6151, %v6450
    %v6668 = vadd.f32 %v6152, %v6450
    %v6669 = vadd.f32 %v6153, %v6450
    %v6670 = vadd.f32 %v6154, %v6450
    %v6671 = vadd.f32 %v6155, %v6450
    %v6672 = vadd.f32 %v6156, %v6450
    %v6673 = vadd.f32 %v6157, %v6450
    %v6674 = vadd.f32 %v6158, %v6450
    %v6675 = vadd.f32 %v6159, %v6450
    %v6676 = vadd.f32 %v6160, %v6450
    %v6677 = vadd.f32 %v6161, %v6450
    %v6678 = vadd.f32 %v6162, %v6450
    %v6679 = vadd.f32 %v6163, %v6450
    %v6680 = vadd.f32 %v6164, %v6450
    %v6681 = vadd.f32 %v6165, %v6450
    %v6682 = vadd.f32 %v6166, %v6450
    %v6683 = vadd.f32 %v6167, %v6450
    %v6684 = vadd.f32 %v6168, %v6450
    %v6685 = vadd.f32 %v6169, %v6450
    %v6686 = vadd.f32 %v6170, %v6450
    %v6687 = vadd.f32 %v6171, %v6450
    %v6688 = vadd.f32 %v6172, %v6450
    %v6689 = vadd.f32 %v6173, %v6450
    %v6690 = vadd.f32 %v6174, %v6450
    %v6691 = vadd.f32 %v6175, %v6450
    %v6692 = vadd.f32 %v6176, %v6450
    %v6693 = vadd.f32 %v6177, %v6450
    %v6694 = vadd.f32 %v6178, %v6450
    %v6695 = vadd.f32 %v6179, %v6450
    %v6696 = vadd.f32 %v6180, %v6450
    %v6697 = vadd.f32 %v6181, %v6450
    %v6698 = vadd.f32 %v6182, %v6450
    %v6699 = vadd.f32 %v6183, %v6450
    %v6700 = vadd.f32 %v6184, %v6450
    %v6701 = vadd.f32 %v6185, %v6450
    %v6702 = vadd.f32 %v6186, %v6450
    %v6703 = vadd.f32 %v6187, %v6450
    %v6704 = vadd.f32 %v6188, %v6450
    %v6705 = vadd.f32 %v6189, %v6450
    %v6706 = vadd.f32 %v6190, %v6450
    %v6707 = vadd.f32 %v6191, %v6450
    %v6708 = vadd.f32 %v6192, %v6450
    %v6709 = vadd.f32 %v6193, %v6450
    %v6710 = vadd.f32 %v6194, %v6450
    %v6711 = vadd.f32 %v6195, %v6450
    %v6712 = vadd.f32 %v6196, %v6450
    %v6713 = vadd.f32 %v6197, %v6450
    %v6714 = vadd.f32 %v6198, %v6450
    %v6715 = vadd.f32 %v6199, %v6450
    %v6716 = vadd.f32 %v6200, %v6450
    %v6717 = vadd.f32 %v6201, %v6450
    %v6718 = vadd.f32 %v6202, %v6450
    %v6719 = vadd.f32 %v6203, %v6450
    %v6720 = vadd.f32 %v6204, %v6450
    %v6721 = vadd.f32 %v6205, %v6450
    %v6722 = vadd.f32 %v6206, %v6450
    %v6723 = vadd.f32 %v6207, %v6450
    %v6724 = vadd.f32 %v6208, %v6450
    %v6725 = vadd.f32 %v6209, %v6450
    %v6726 = vadd.f32 %v6210, %v6450
    %v6727 = vadd.f32 %v6211, %v6450
    %v6728 = vadd.f32 %v6212, %v6450
    %v6729 = vadd.f32 %v6213, %v6450
    %v6730 = vadd.f32 %v6214, %v6450
    %v6731 = vadd.f32 %v6215, %v6450
    %v6732 = vadd.f32 %v6216, %v6450
    %v6733 = vadd.f32 %v6217, %v6450
    %v6734 = vadd.f32 %v6218, %v6450
    %v6735 = vadd.f32 %v6219, %v6450
    %v6736 = vadd.f32 %v6220, %v6450
    %v6737 = vadd.f32 %v6221, %v6450
    %v6738 = vadd.f32 %v6222, %v6450
    %v6739 = vadd.f32 %v6223, %v6450
    %v6740 = vadd.f32 %v6224, %v6450
    %v6741 = vadd.f32 %v6225, %v6450
    %v6742 = vadd.f32 %v6226, %v6450
    %v6743 = vadd.f32 %v6227, %v6450
    %v6744 = vadd.f32 %v6228, %v6450
    %v6745 = vadd.f32 %v6229, %v6450
    %v6746 = vadd.f32 %v6230, %v6450
    %v6747 = vadd.f32 %v6231, %v6450
    %v6748 = vadd.f32 %v6232, %v6450
    %v6749 = vadd.f32 %v6233, %v6450
    %v6750 = vadd.f32 %v6234, %v6450
    %v6751 = vadd.f32 %v6235, %v6450
    %v6752 = vadd.f32 %v6236, %v6450
    %v6753 = vadd.f32 %v6237, %v6450
    %v6754 = vadd.f32 %v6238, %v6450
    %v6755 = vadd.f32 %v6239, %v6450
    %v6756 = vadd.f32 %v6240, %v6450
    %v6757 = vadd.f32 %v6241, %v6450
    %v6758 = vadd.f32 %v6242, %v6450
    %v6759 = vadd.f32 %v6243, %v6450
    %v6760 = vadd.f32 %v6244, %v6450
    %v6761 = vadd.f32 %v6245, %v6450
    %v6762 = vadd.f32 %v6246, %v6450
    %v6763 = vadd.f32 %v6247, %v6450
    %v6764 = vadd.f32 %v6248, %v6450
    %v6765 = vadd.f32 %v6249, %v6450
    %v6766 = vadd.f32 %v6250, %v6450
    %v6767 = vadd.f32 %v6251, %v6450
    %v6768 = vadd.f32 %v6252, %v6450
    %v6769 = vadd.f32 %v6253, %v6450
    %v6770 = vadd.f32 %v6254, %v6450
    %v6771 = vadd.f32 %v6255, %v6450
    %v6772 = vadd.f32 %v6256, %v6450
    %v6773 = vadd.f32 %v6257, %v6450
    %v6774 = vadd.f32 %v6258, %v6450
    %v6775 = vadd.f32 %v6259, %v6450
    %v6776 = vadd.f32 %v6260, %v6450
    %v6777 = vadd.f32 %v6261, %v6450
    %v6778 = vadd.f32 %v6262, %v6450
    %v6779 = vadd.f32 %v6263, %v6450
    %v6780 = vadd.f32 %v6264, %v6450
    %v6781 = vadd.f32 %v6265, %v6450
    %v6782 = vadd.f32 %v6266, %v6450
    %v6783 = vadd.f32 %v6267, %v6450
    %v6784 = vadd.f32 %v6268, %v6450
    %v6785 = vadd.f32 %v6269, %v6450
    %v6786 = vadd.f32 %v6270, %v6450
    %v6787 = vadd.f32 %v6271, %v6450
    %v6788 = vadd.f32 %v6272, %v6450
    %v6789 = vadd.f32 %v6273, %v6450
    %v6790 = vadd.f32 %v6274, %v6450
    %v6791 = vadd.f32 %v6275, %v6450
    %v6792 = vadd.f32 %v6276, %v6450
    %v6793 = vadd.f32 %v6277, %v6450
    %v6794 = vadd.f32 %v6278, %v6450
    %v6795 = vadd.f32 %v6279, %v6450
    %v6796 = vadd.f32 %v6280, %v6450
    %v6797 = vadd.f32 %v6281, %v6450
    %v6798 = vadd.f32 %v6282, %v6450
    %v6799 = vadd.f32 %v6283, %v6450
    %v6800 = vadd.f32 %v6284, %v6450
    %v6801 = vadd.f32 %v6285, %v6450
    %v6802 = vadd.f32 %v6286, %v6450
    %v6803 = vadd.f32 %v6287, %v6450
    %v6804 = vadd.f32 %v6288, %v6450
    %v6805 = vadd.f32 %v6289, %v6450
    %v6806 = vadd.f32 %v6290, %v6450
    %v6807 = vadd.f32 %v6291, %v6450
    %v6808 = vadd.f32 %v6292, %v6450
    %v6809 = vadd.f32 %v6293, %v6450
    %v6810 = vadd.f32 %v6294, %v6450
    %v6811 = vadd.f32 %v6295, %v6450
    %v6812 = vadd.f32 %v6296, %v6450
    %v6813 = vadd.f32 %v6297, %v6450
    %v6814 = vadd.f32 %v6298, %v6450
    %v6815 = vadd.f32 %v6299, %v6450
    %v6816 = vadd.f32 %v6300, %v6450
    %v6817 = vadd.f32 %v6301, %v6450
    %v6818 = vadd.f32 %v6302, %v6450
    %v6819 = vadd.f32 %v6303, %v6450
    %v6820 = vadd.f32 %v6304, %v6450
    %v6821 = vadd.f32 %v6305, %v6450
    %v6822 = vadd.f32 %v6306, %v6450
    %v6823 = vadd.f32 %v6307, %v6450
    %v6824 = vadd.f32 %v6308, %v6450
    %v6825 = vadd.f32 %v6309, %v6450
    %v6826 = vadd.f32 %v6310, %v6450
    %v6827 = vadd.f32 %v6311, %v6450
    %v6828 = vadd.f32 %v6312, %v6450
    %v6829 = vadd.f32 %v6313, %v6450
    %v6830 = vadd.f32 %v6314, %v6450
    %v6831 = vadd.f32 %v6315, %v6450
    %v6832 = vadd.f32 %v6316, %v6450
    %v6833 = vadd.f32 %v6317, %v6450
    %v6834 = vadd.f32 %v6318, %v6450
    %v6835 = vadd.f32 %v6319, %v6450
    %v6836 = vadd.f32 %v6320, %v6450
    %v6837 = vadd.f32 %v6321, %v6450
    %v6838 = vadd.f32 %v6322, %v6450
    %v6839 = vadd.f32 %v6323, %v6450
    %v6840 = vadd.f32 %v6324, %v6450
    %v6841 = vadd.f32 %v6325, %v6450
    %v6842 = vadd.f32 %v6326, %v6450
    %v6843 = vadd.f32 %v6327, %v6450
    %v6844 = vadd.f32 %v6328, %v6450
    %v6845 = vadd.f32 %v6329, %v6450
    %v6846 = vadd.f32 %v6330, %v6450
    %v6847 = vadd.f32 %v6331, %v6450
    %v6848 = vadd.f32 %v6332, %v6450
    %v6849 = vadd.f32 %v6333, %v6450
    %v6850 = vadd.f32 %v6334, %v6450
    %v6851 = vadd.f32 %v6335, %v6450
    %v6852 = vadd.f32 %v6336, %v6450
    %v6853 = vadd.f32 %v6337, %v6450
    %v6854 = vadd.f32 %v6338, %v6450
    %v6855 = vadd.f32 %v6339, %v6450
    %v6856 = vadd.f32 %v6340, %v6450
    %v6857 = vadd.f32 %v6341, %v6450
    %v6858 = vadd.f32 %v6342, %v6450
    %v6859 = vadd.f32 %v6343, %v6450
    %v6860 = vadd.f32 %v6344, %v6450
    %v6861 = vadd.f32 %v6345, %v6450
    %v6862 = vadd.f32 %v6346, %v6450
    %v6863 = vadd.f32 %v6347, %v6450
    %v6864 = vadd.f32 %v6348, %v6450
    %v6865 = vadd.f32 %v6349, %v6450
    %v6866 = vadd.f32 %v6350, %v6450
    %v6867 = vadd.f32 %v6351, %v6450
    %v6868 = vadd.f32 %v6352, %v6450
    %v6869 = vadd.f32 %v6353, %v6450
    %v6870 = vadd.f32 %v6354, %v6450
    %v6871 = vadd.f32 %v6355, %v6450
    %v6872 = vadd.f32 %v6356, %v6450
    %v6873 = vadd.f32 %v6357, %v6450
    %v6874 = vadd.f32 %v6358, %v6450
    %v6875 = vadd.f32 %v6359, %v6450
    %v6876 = vadd.f32 %v6360, %v6450
    %v6877 = vadd.f32 %v6361, %v6450
    %v6878 = vadd.f32 %v6362, %v6450
    %v6879 = vadd.f32 %v6363, %v6450
    %v6880 = vadd.f32 %v6364, %v6450
    %v6881 = vadd.f32 %v6365, %v6450
    %v6882 = vadd.f32 %v6366, %v6450
    %v6883 = vadd.f32 %v6367, %v6450
    %v6884 = vadd.f32 %v6368, %v6450
    %v6885 = vadd.f32 %v6369, %v6450
    %v6886 = vadd.f32 %v6370, %v6450
    %v6887 = vadd.f32 %v6371, %v6450
    %v6888 = vadd.f32 %v6372, %v6450
    %v6889 = vadd.f32 %v6373, %v6450
    %v6890 = vadd.f32 %v6374, %v6450
    %v6891 = vadd.f32 %v6375, %v6450
    %v6892 = vadd.f32 %v6376, %v6450
    %v6893 = vadd.f32 %v6377, %v6450
    %v6894 = vadd.f32 %v6378, %v6450
    %v6895 = vadd.f32 %v6379, %v6450
    %v6896 = vadd.f32 %v6380, %v6450
    %v6897 = vadd.f32 %v6381, %v6450
    %v6898 = vadd.f32 %v6382, %v6450
    %v6899 = vadd.f32 %v6383, %v6450
    %v6900 = vadd.f32 %v6384, %v6450
    %v6901 = vadd.f32 %v6385, %v6450
    %v6902 = vadd.f32 %v6386, %v6450
    %v6903 = vadd.f32 %v6387, %v6450
    %v6904 = vadd.f32 %v6388, %v6450
    %v6905 = vadd.f32 %v6389, %v6450
    %v6906 = vadd.f32 %v6390, %v6450
    %v6907 = vadd.f32 %v6391, %v6450
    %v6908 = vadd.f32 %v6392, %v6450
    %v6909 = vadd.f32 %v6393, %v6450
    %v6910 = vadd.f32 %v6394, %v6450
    %v6911 = vadd.f32 %v6395, %v6450
    %v6912 = vadd.f32 %v6396, %v6450
    %v6913 = vadd.f32 %v6397, %v6450
    %v6914 = vadd.f32 %v6398, %v6450
    %v6915 = vadd.f32 %v6399, %v6450
    %v6916 = vadd.f32 %v6400, %v6450
    %v6917 = vadd.f32 %v6401, %v6450
    %v6918 = vadd.f32 %v6402, %v6450
    %v6919 = vadd.f32 %v6403, %v6450
    %v6920 = vadd.f32 %v6404, %v6450
    %v6921 = vadd.f32 %v6405, %v6450
    %v6922 = vadd.f32 %v6406, %v6450
    %v6923 = vadd.f32 %v6407, %v6450
    %v6924 = vadd.f32 %v6408, %v6450
    %v6925 = vadd.f32 %v6409, %v6450
    %v6926 = vadd.f32 %v6410, %v6450
    %v6927 = vadd.f32 %v6411, %v6450
    %v6928 = vadd.f32 %v6412, %v6450
    %v6929 = vadd.f32 %v6413, %v6450
    %v6930 = vadd.f32 %v6414, %v6450
    %v6931 = vadd.f32 %v6415, %v6450
    %v6932 = vadd.f32 %v6416, %v6450
    %v6933 = vadd.f32 %v6417, %v6450
    %v6934 = vadd.f32 %v6418, %v6450
    %v6935 = vadd.f32 %v6419, %v6450
    %v6936 = vadd.f32 %v6420, %v6450
    %v6937 = vadd.f32 %v6421, %v6450
    %v6938 = vadd.f32 %v6422, %v6450
    %v6939 = vadd.f32 %v6423, %v6450
    %v6940 = vadd.f32 %v6424, %v6450
    %v6941 = vadd.f32 %v6425, %v6450
    %v6942 = vadd.f32 %v6426, %v6450
    %v6943 = vadd.f32 %v6427, %v6450
    %v6944 = vadd.f32 %v6428, %v6450
    %v6945 = vadd.f32 %v6429, %v6450
    %v6946 = vadd.f32 %v6430, %v6450
    %v6947 = vadd.f32 %v6431, %v6450
    %v6948 = vadd.f32 %v6432, %v6450
    %v6949 = vadd.f32 %v6433, %v6450
    %v6950 = vadd.f32 %v6434, %v6450
    %v6951 = vadd.f32 %v6435, %v6450
    %v6952 = vadd.f32 %v6436, %v6450
    %v6953 = vadd.f32 %v6437, %v6450
    %v6954 = vadd.f32 %v6438, %v6450
    %v6955 = vadd.f32 %v6439, %v6450
    %v6956 = vadd.f32 %v6440, %v6450
    %v6957 = vadd.f32 %v6441, %v6450
    %v6958 = vadd.f32 %v6442, %v6450
    %v6959 = vadd.f32 %v6443, %v6450
    %v6960 = vadd.f32 %v6444, %v6450
    %v6961 = vadd.f32 %v6445, %v6450
    %v6962 = vadd.f32 %v6446, %v6450
    %v6963 = vadd.f32 %v6447, %v6450
    %v6964 = vadd.f32 %v6452, %v6453
    %v6965 = vadd.f32 %v6964, %v6454
    %v6966 = vadd.f32 %v6965, %v6455
    %v6967 = vadd.f32 %v6966, %v6456
    %v6968 = vadd.f32 %v6967, %v6457
    %v6969 = vadd.f32 %v6968, %v6458
    %v6970 = vadd.f32 %v6969, %v6459
    %v6971 = vadd.f32 %v6970, %v6460
    %v6972 = vadd.f32 %v6971, %v6461
    %v6973 = vadd.f32 %v6972, %v6462
    %v6974 = vadd.f32 %v6973, %v6463
    %v6975 = vadd.f32 %v6974, %v6464
    %v6976 = vadd.f32 %v6975, %v6465
    %v6977 = vadd.f32 %v6976, %v6466
    %v6978 = vadd.f32 %v6977, %v6467
    %v6979 = vadd.f32 %v6978, %v6468
    %v6980 = vadd.f32 %v6979, %v6469
    %v6981 = vadd.f32 %v6980, %v6470
    %v6982 = vadd.f32 %v6981, %v6471
    %v6983 = vadd.f32 %v6982, %v6472
    %v6984 = vadd.f32 %v6983, %v6473
    %v6985 = vadd.f32 %v6984, %v6474
    %v6986 = vadd.f32 %v6985, %v6475
    %v6987 = vadd.f32 %v6986, %v6476
    %v6988 = vadd.f32 %v6987, %v6477
    %v6989 = vadd.f32 %v6988, %v6478
    %v6990 = vadd.f32 %v6989, %v6479
    %v6991 = vadd.f32 %v6990, %v6480
    %v6992 = vadd.f32 %v6991, %v6481
    %v6993 = vadd.f32 %v6992, %v6482
    %v6994 = vadd.f32 %v6993, %v6483
    %v6995 = vadd.f32 %v6994, %v6484
    %v6996 = vadd.f32 %v6995, %v6485
    %v6997 = vadd.f32 %v6996, %v6486
    %v6998 = vadd.f32 %v6997, %v6487
    %v6999 = vadd.f32 %v6998, %v6488
    %v7000 = vadd.f32 %v6999, %v6489
    %v7001 = vadd.f32 %v7000, %v6490
    %v7002 = vadd.f32 %v7001, %v6491
    %v7003 = vadd.f32 %v7002, %v6492
    %v7004 = vadd.f32 %v7003, %v6493
    %v7005 = vadd.f32 %v7004, %v6494
    %v7006 = vadd.f32 %v7005, %v6495
    %v7007 = vadd.f32 %v7006, %v6496
    %v7008 = vadd.f32 %v7007, %v6497
    %v7009 = vadd.f32 %v7008, %v6498
    %v7010 = vadd.f32 %v7009, %v6499
    %v7011 = vadd.f32 %v7010, %v6500
    %v7012 = vadd.f32 %v7011, %v6501
    %v7013 = vadd.f32 %v7012, %v6502
    %v7014 = vadd.f32 %v7013, %v6503
    %v7015 = vadd.f32 %v7014, %v6504
    %v7016 = vadd.f32 %v7015, %v6505
    %v7017 = vadd.f32 %v7016, %v6506
    %v7018 = vadd.f32 %v7017, %v6507
    %v7019 = vadd.f32 %v7018, %v6508
    %v7020 = vadd.f32 %v7019, %v6509
    %v7021 = vadd.f32 %v7020, %v6510
    %v7022 = vadd.f32 %v7021, %v6511
    %v7023 = vadd.f32 %v7022, %v6512
    %v7024 = vadd.f32 %v7023, %v6513
    %v7025 = vadd.f32 %v7024, %v6514
    %v7026 = vadd.f32 %v7025, %v6515
    %v7027 = vadd.f32 %v7026, %v6516
    %v7028 = vadd.f32 %v7027, %v6517
    %v7029 = vadd.f32 %v7028, %v6518
    %v7030 = vadd.f32 %v7029, %v6519
    %v7031 = vadd.f32 %v7030, %v6520
    %v7032 = vadd.f32 %v7031, %v6521
    %v7033 = vadd.f32 %v7032, %v6522
    %v7034 = vadd.f32 %v7033, %v6523
    %v7035 = vadd.f32 %v7034, %v6524
    %v7036 = vadd.f32 %v7035, %v6525
    %v7037 = vadd.f32 %v7036, %v6526
    %v7038 = vadd.f32 %v7037, %v6527
    %v7039 = vadd.f32 %v7038, %v6528
    %v7040 = vadd.f32 %v7039, %v6529
    %v7041 = vadd.f32 %v7040, %v6530
    %v7042 = vadd.f32 %v7041, %v6531
    %v7043 = vadd.f32 %v7042, %v6532
    %v7044 = vadd.f32 %v7043, %v6533
    %v7045 = vadd.f32 %v7044, %v6534
    %v7046 = vadd.f32 %v7045, %v6535
    %v7047 = vadd.f32 %v7046, %v6536
    %v7048 = vadd.f32 %v7047, %v6537
    %v7049 = vadd.f32 %v7048, %v6538
    %v7050 = vadd.f32 %v7049, %v6539
    %v7051 = vadd.f32 %v7050, %v6540
    %v7052 = vadd.f32 %v7051, %v6541
    %v7053 = vadd.f32 %v7052, %v6542
    %v7054 = vadd.f32 %v7053, %v6543
    %v7055 = vadd.f32 %v7054, %v6544
    %v7056 = vadd.f32 %v7055, %v6545
    %v7057 = vadd.f32 %v7056, %v6546
    %v7058 = vadd.f32 %v7057, %v6547
    %v7059 = vadd.f32 %v7058, %v6548
    %v7060 = vadd.f32 %v7059, %v6549
    %v7061 = vadd.f32 %v7060, %v6550
    %v7062 = vadd.f32 %v7061, %v6551
    %v7063 = vadd.f32 %v7062, %v6552
    %v7064 = vadd.f32 %v7063, %v6553
    %v7065 = vadd.f32 %v7064, %v6554
    %v7066 = vadd.f32 %v7065, %v6555
    %v7067 = vadd.f32 %v7066, %v6556
    %v7068 = vadd.f32 %v7067, %v6557
    %v7069 = vadd.f32 %v7068, %v6558
    %v7070 = vadd.f32 %v7069, %v6559
    %v7071 = vadd.f32 %v7070, %v6560
    %v7072 = vadd.f32 %v7071, %v6561
    %v7073 = vadd.f32 %v7072, %v6562
    %v7074 = vadd.f32 %v7073, %v6563
    %v7075 = vadd.f32 %v7074, %v6564
    %v7076 = vadd.f32 %v7075, %v6565
    %v7077 = vadd.f32 %v7076, %v6566
    %v7078 = vadd.f32 %v7077, %v6567
    %v7079 = vadd.f32 %v7078, %v6568
    %v7080 = vadd.f32 %v7079, %v6569
    %v7081 = vadd.f32 %v7080, %v6570
    %v7082 = vadd.f32 %v7081, %v6571
    %v7083 = vadd.f32 %v7082, %v6572
    %v7084 = vadd.f32 %v7083, %v6573
    %v7085 = vadd.f32 %v7084, %v6574
    %v7086 = vadd.f32 %v7085, %v6575
    %v7087 = vadd.f32 %v7086, %v6576
    %v7088 = vadd.f32 %v7087, %v6577
    %v7089 = vadd.f32 %v7088, %v6578
    %v7090 = vadd.f32 %v7089, %v6579
    %v7091 = vadd.f32 %v7090, %v6580
    %v7092 = vadd.f32 %v7091, %v6581
    %v7093 = vadd.f32 %v7092, %v6582
    %v7094 = vadd.f32 %v7093, %v6583
    %v7095 = vadd.f32 %v7094, %v6584
    %v7096 = vadd.f32 %v7095, %v6585
    %v7097 = vadd.f32 %v7096, %v6586
    %v7098 = vadd.f32 %v7097, %v6587
    %v7099 = vadd.f32 %v7098, %v6588
    %v7100 = vadd.f32 %v7099, %v6589
    %v7101 = vadd.f32 %v7100, %v6590
    %v7102 = vadd.f32 %v7101, %v6591
    %v7103 = vadd.f32 %v7102, %v6592
    %v7104 = vadd.f32 %v7103, %v6593
    %v7105 = vadd.f32 %v7104, %v6594
    %v7106 = vadd.f32 %v7105, %v6595
    %v7107 = vadd.f32 %v7106, %v6596
    %v7108 = vadd.f32 %v7107, %v6597
    %v7109 = vadd.f32 %v7108, %v6598
    %v7110 = vadd.f32 %v7109, %v6599
    %v7111 = vadd.f32 %v7110, %v6600
    %v7112 = vadd.f32 %v7111, %v6601
    %v7113 = vadd.f32 %v7112, %v6602
    %v7114 = vadd.f32 %v7113, %v6603
    %v7115 = vadd.f32 %v7114, %v6604
    %v7116 = vadd.f32 %v7115, %v6605
    %v7117 = vadd.f32 %v7116, %v6606
    %v7118 = vadd.f32 %v7117, %v6607
    %v7119 = vadd.f32 %v7118, %v6608
    %v7120 = vadd.f32 %v7119, %v6609
    %v7121 = vadd.f32 %v7120, %v6610
    %v7122 = vadd.f32 %v7121, %v6611
    %v7123 = vadd.f32 %v7122, %v6612
    %v7124 = vadd.f32 %v7123, %v6613
    %v7125 = vadd.f32 %v7124, %v6614
    %v7126 = vadd.f32 %v7125, %v6615
    %v7127 = vadd.f32 %v7126, %v6616
    %v7128 = vadd.f32 %v7127, %v6617
    %v7129 = vadd.f32 %v7128, %v6618
    %v7130 = vadd.f32 %v7129, %v6619
    %v7131 = vadd.f32 %v7130, %v6620
    %v7132 = vadd.f32 %v7131, %v6621
    %v7133 = vadd.f32 %v7132, %v6622
    %v7134 = vadd.f32 %v7133, %v6623
    %v7135 = vadd.f32 %v7134, %v6624
    %v7136 = vadd.f32 %v7135, %v6625
    %v7137 = vadd.f32 %v7136, %v6626
    %v7138 = vadd.f32 %v7137, %v6627
    %v7139 = vadd.f32 %v7138, %v6628
    %v7140 = vadd.f32 %v7139, %v6629
    %v7141 = vadd.f32 %v7140, %v6630
    %v7142 = vadd.f32 %v7141, %v6631
    %v7143 = vadd.f32 %v7142, %v6632
    %v7144 = vadd.f32 %v7143, %v6633
    %v7145 = vadd.f32 %v7144, %v6634
    %v7146 = vadd.f32 %v7145, %v6635
    %v7147 = vadd.f32 %v7146, %v6636
    %v7148 = vadd.f32 %v7147, %v6637
    %v7149 = vadd.f32 %v7148, %v6638
    %v7150 = vadd.f32 %v7149, %v6639
    %v7151 = vadd.f32 %v7150, %v6640
    %v7152 = vadd.f32 %v7151, %v6641
    %v7153 = vadd.f32 %v7152, %v6642
    %v7154 = vadd.f32 %v7153, %v6643
    %v7155 = vadd.f32 %v7154, %v6644
    %v7156 = vadd.f32 %v7155, %v6645
    %v7157 = vadd.f32 %v7156, %v6646
    %v7158 = vadd.f32 %v7157, %v6647
    %v7159 = vadd.f32 %v7158, %v6648
    %v7160 = vadd.f32 %v7159, %v6649
    %v7161 = vadd.f32 %v7160, %v6650
    %v7162 = vadd.f32 %v7161, %v6651
    %v7163 = vadd.f32 %v7162, %v6652
    %v7164 = vadd.f32 %v7163, %v6653
    %v7165 = vadd.f32 %v7164, %v6654
    %v7166 = vadd.f32 %v7165, %v6655
    %v7167 = vadd.f32 %v7166, %v6656
    %v7168 = vadd.f32 %v7167, %v6657
    %v7169 = vadd.f32 %v7168, %v6658
    %v7170 = vadd.f32 %v7169, %v6659
    %v7171 = vadd.f32 %v7170, %v6660
    %v7172 = vadd.f32 %v7171, %v6661
    %v7173 = vadd.f32 %v7172, %v6662
    %v7174 = vadd.f32 %v7173, %v6663
    %v7175 = vadd.f32 %v7174, %v6664
    %v7176 = vadd.f32 %v7175, %v6665
    %v7177 = vadd.f32 %v7176, %v6666
    %v7178 = vadd.f32 %v7177, %v6667
    %v7179 = vadd.f32 %v7178, %v6668
    %v7180 = vadd.f32 %v7179, %v6669
    %v7181 = vadd.f32 %v7180, %v6670
    %v7182 = vadd.f32 %v7181, %v6671
    %v7183 = vadd.f32 %v7182, %v6672
    %v7184 = vadd.f32 %v7183, %v6673
    %v7185 = vadd.f32 %v7184, %v6674
    %v7186 = vadd.f32 %v7185, %v6675
    %v7187 = vadd.f32 %v7186, %v6676
    %v7188 = vadd.f32 %v7187, %v6677
    %v7189 = vadd.f32 %v7188, %v6678
    %v7190 = vadd.f32 %v7189, %v6679
    %v7191 = vadd.f32 %v7190, %v6680
    %v7192 = vadd.f32 %v7191, %v6681
    %v7193 = vadd.f32 %v7192, %v6682
    %v7194 = vadd.f32 %v7193, %v6683
    %v7195 = vadd.f32 %v7194, %v6684
    %v7196 = vadd.f32 %v7195, %v6685
    %v7197 = vadd.f32 %v7196, %v6686
    %v7198 = vadd.f32 %v7197, %v6687
    %v7199 = vadd.f32 %v7198, %v6688
    %v7200 = vadd.f32 %v7199, %v6689
    %v7201 = vadd.f32 %v7200, %v6690
    %v7202 = vadd.f32 %v7201, %v6691
    %v7203 = vadd.f32 %v7202, %v6692
    %v7204 = vadd.f32 %v7203, %v6693
    %v7205 = vadd.f32 %v7204, %v6694
    %v7206 = vadd.f32 %v7205, %v6695
    %v7207 = vadd.f32 %v7206, %v6696
    %v7208 = vadd.f32 %v7207, %v6697
    %v7209 = vadd.f32 %v7208, %v6698
    %v7210 = vadd.f32 %v7209, %v6699
    %v7211 = vadd.f32 %v7210, %v6700
    %v7212 = vadd.f32 %v7211, %v6701
    %v7213 = vadd.f32 %v7212, %v6702
    %v7214 = vadd.f32 %v7213, %v6703
    %v7215 = vadd.f32 %v7214, %v6704
    %v7216 = vadd.f32 %v7215, %v6705
    %v7217 = vadd.f32 %v7216, %v6706
    %v7218 = vadd.f32 %v7217, %v6707
    %v7219 = vadd.f32 %v7218, %v6708
    %v7220 = vadd.f32 %v7219, %v6709
    %v7221 = vadd.f32 %v7220, %v6710
    %v7222 = vadd.f32 %v7221, %v6711
    %v7223 = vadd.f32 %v7222, %v6712
    %v7224 = vadd.f32 %v7223, %v6713
    %v7225 = vadd.f32 %v7224, %v6714
    %v7226 = vadd.f32 %v7225, %v6715
    %v7227 = vadd.f32 %v7226, %v6716
    %v7228 = vadd.f32 %v7227, %v6717
    %v7229 = vadd.f32 %v7228, %v6718
    %v7230 = vadd.f32 %v7229, %v6719
    %v7231 = vadd.f32 %v7230, %v6720
    %v7232 = vadd.f32 %v7231, %v6721
    %v7233 = vadd.f32 %v7232, %v6722
    %v7234 = vadd.f32 %v7233, %v6723
    %v7235 = vadd.f32 %v7234, %v6724
    %v7236 = vadd.f32 %v7235, %v6725
    %v7237 = vadd.f32 %v7236, %v6726
    %v7238 = vadd.f32 %v7237, %v6727
    %v7239 = vadd.f32 %v7238, %v6728
    %v7240 = vadd.f32 %v7239, %v6729
    %v7241 = vadd.f32 %v7240, %v6730
    %v7242 = vadd.f32 %v7241, %v6731
    %v7243 = vadd.f32 %v7242, %v6732
    %v7244 = vadd.f32 %v7243, %v6733
    %v7245 = vadd.f32 %v7244, %v6734
    %v7246 = vadd.f32 %v7245, %v6735
    %v7247 = vadd.f32 %v7246, %v6736
    %v7248 = vadd.f32 %v7247, %v6737
    %v7249 = vadd.f32 %v7248, %v6738
    %v7250 = vadd.f32 %v7249, %v6739
    %v7251 = vadd.f32 %v7250, %v6740
    %v7252 = vadd.f32 %v7251, %v6741
    %v7253 = vadd.f32 %v7252, %v6742
    %v7254 = vadd.f32 %v7253, %v6743
    %v7255 = vadd.f32 %v7254, %v6744
    %v7256 = vadd.f32 %v7255, %v6745
    %v7257 = vadd.f32 %v7256, %v6746
    %v7258 = vadd.f32 %v7257, %v6747
    %v7259 = vadd.f32 %v7258, %v6748
    %v7260 = vadd.f32 %v7259, %v6749
    %v7261 = vadd.f32 %v7260, %v6750
    %v7262 = vadd.f32 %v7261, %v6751
    %v7263 = vadd.f32 %v7262, %v6752
    %v7264 = vadd.f32 %v7263, %v6753
    %v7265 = vadd.f32 %v7264, %v6754
    %v7266 = vadd.f32 %v7265, %v6755
    %v7267 = vadd.f32 %v7266, %v6756
    %v7268 = vadd.f32 %v7267, %v6757
    %v7269 = vadd.f32 %v7268, %v6758
    %v7270 = vadd.f32 %v7269, %v6759
    %v7271 = vadd.f32 %v7270, %v6760
    %v7272 = vadd.f32 %v7271, %v6761
    %v7273 = vadd.f32 %v7272, %v6762
    %v7274 = vadd.f32 %v7273, %v6763
    %v7275 = vadd.f32 %v7274, %v6764
    %v7276 = vadd.f32 %v7275, %v6765
    %v7277 = vadd.f32 %v7276, %v6766
    %v7278 = vadd.f32 %v7277, %v6767
    %v7279 = vadd.f32 %v7278, %v6768
    %v7280 = vadd.f32 %v7279, %v6769
    %v7281 = vadd.f32 %v7280, %v6770
    %v7282 = vadd.f32 %v7281, %v6771
    %v7283 = vadd.f32 %v7282, %v6772
    %v7284 = vadd.f32 %v7283, %v6773
    %v7285 = vadd.f32 %v7284, %v6774
    %v7286 = vadd.f32 %v7285, %v6775
    %v7287 = vadd.f32 %v7286, %v6776
    %v7288 = vadd.f32 %v7287, %v6777
    %v7289 = vadd.f32 %v7288, %v6778
    %v7290 = vadd.f32 %v7289, %v6779
    %v7291 = vadd.f32 %v7290, %v6780
    %v7292 = vadd.f32 %v7291, %v6781
    %v7293 = vadd.f32 %v7292, %v6782
    %v7294 = vadd.f32 %v7293, %v6783
    %v7295 = vadd.f32 %v7294, %v6784
    %v7296 = vadd.f32 %v7295, %v6785
    %v7297 = vadd.f32 %v7296, %v6786
    %v7298 = vadd.f32 %v7297, %v6787
    %v7299 = vadd.f32 %v7298, %v6788
    %v7300 = vadd.f32 %v7299, %v6789
    %v7301 = vadd.f32 %v7300, %v6790
    %v7302 = vadd.f32 %v7301, %v6791
    %v7303 = vadd.f32 %v7302, %v6792
    %v7304 = vadd.f32 %v7303, %v6793
    %v7305 = vadd.f32 %v7304, %v6794
    %v7306 = vadd.f32 %v7305, %v6795
    %v7307 = vadd.f32 %v7306, %v6796
    %v7308 = vadd.f32 %v7307, %v6797
    %v7309 = vadd.f32 %v7308, %v6798
    %v7310 = vadd.f32 %v7309, %v6799
    %v7311 = vadd.f32 %v7310, %v6800
    %v7312 = vadd.f32 %v7311, %v6801
    %v7313 = vadd.f32 %v7312, %v6802
    %v7314 = vadd.f32 %v7313, %v6803
    %v7315 = vadd.f32 %v7314, %v6804
    %v7316 = vadd.f32 %v7315, %v6805
    %v7317 = vadd.f32 %v7316, %v6806
    %v7318 = vadd.f32 %v7317, %v6807
    %v7319 = vadd.f32 %v7318, %v6808
    %v7320 = vadd.f32 %v7319, %v6809
    %v7321 = vadd.f32 %v7320, %v6810
    %v7322 = vadd.f32 %v7321, %v6811
    %v7323 = vadd.f32 %v7322, %v6812
    %v7324 = vadd.f32 %v7323, %v6813
    %v7325 = vadd.f32 %v7324, %v6814
    %v7326 = vadd.f32 %v7325, %v6815
    %v7327 = vadd.f32 %v7326, %v6816
    %v7328 = vadd.f32 %v7327, %v6817
    %v7329 = vadd.f32 %v7328, %v6818
    %v7330 = vadd.f32 %v7329, %v6819
    %v7331 = vadd.f32 %v7330, %v6820
    %v7332 = vadd.f32 %v7331, %v6821
    %v7333 = vadd.f32 %v7332, %v6822
    %v7334 = vadd.f32 %v7333, %v6823
    %v7335 = vadd.f32 %v7334, %v6824
    %v7336 = vadd.f32 %v7335, %v6825
    %v7337 = vadd.f32 %v7336, %v6826
    %v7338 = vadd.f32 %v7337, %v6827
    %v7339 = vadd.f32 %v7338, %v6828
    %v7340 = vadd.f32 %v7339, %v6829
    %v7341 = vadd.f32 %v7340, %v6830
    %v7342 = vadd.f32 %v7341, %v6831
    %v7343 = vadd.f32 %v7342, %v6832
    %v7344 = vadd.f32 %v7343, %v6833
    %v7345 = vadd.f32 %v7344, %v6834
    %v7346 = vadd.f32 %v7345, %v6835
    %v7347 = vadd.f32 %v7346, %v6836
    %v7348 = vadd.f32 %v7347, %v6837
    %v7349 = vadd.f32 %v7348, %v6838
    %v7350 = vadd.f32 %v7349, %v6839
    %v7351 = vadd.f32 %v7350, %v6840
    %v7352 = vadd.f32 %v7351, %v6841
    %v7353 = vadd.f32 %v7352, %v6842
    %v7354 = vadd.f32 %v7353, %v6843
    %v7355 = vadd.f32 %v7354, %v6844
    %v7356 = vadd.f32 %v7355, %v6845
    %v7357 = vadd.f32 %v7356, %v6846
    %v7358 = vadd.f32 %v7357, %v6847
    %v7359 = vadd.f32 %v7358, %v6848
    %v7360 = vadd.f32 %v7359, %v6849
    %v7361 = vadd.f32 %v7360, %v6850
    %v7362 = vadd.f32 %v7361, %v6851
    %v7363 = vadd.f32 %v7362, %v6852
    %v7364 = vadd.f32 %v7363, %v6853
    %v7365 = vadd.f32 %v7364, %v6854
    %v7366 = vadd.f32 %v7365, %v6855
    %v7367 = vadd.f32 %v7366, %v6856
    %v7368 = vadd.f32 %v7367, %v6857
    %v7369 = vadd.f32 %v7368, %v6858
    %v7370 = vadd.f32 %v7369, %v6859
    %v7371 = vadd.f32 %v7370, %v6860
    %v7372 = vadd.f32 %v7371, %v6861
    %v7373 = vadd.f32 %v7372, %v6862
    %v7374 = vadd.f32 %v7373, %v6863
    %v7375 = vadd.f32 %v7374, %v6864
    %v7376 = vadd.f32 %v7375, %v6865
    %v7377 = vadd.f32 %v7376, %v6866
    %v7378 = vadd.f32 %v7377, %v6867
    %v7379 = vadd.f32 %v7378, %v6868
    %v7380 = vadd.f32 %v7379, %v6869
    %v7381 = vadd.f32 %v7380, %v6870
    %v7382 = vadd.f32 %v7381, %v6871
    %v7383 = vadd.f32 %v7382, %v6872
    %v7384 = vadd.f32 %v7383, %v6873
    %v7385 = vadd.f32 %v7384, %v6874
    %v7386 = vadd.f32 %v7385, %v6875
    %v7387 = vadd.f32 %v7386, %v6876
    %v7388 = vadd.f32 %v7387, %v6877
    %v7389 = vadd.f32 %v7388, %v6878
    %v7390 = vadd.f32 %v7389, %v6879
    %v7391 = vadd.f32 %v7390, %v6880
    %v7392 = vadd.f32 %v7391, %v6881
    %v7393 = vadd.f32 %v7392, %v6882
    %v7394 = vadd.f32 %v7393, %v6883
    %v7395 = vadd.f32 %v7394, %v6884
    %v7396 = vadd.f32 %v7395, %v6885
    %v7397 = vadd.f32 %v7396, %v6886
    %v7398 = vadd.f32 %v7397, %v6887
    %v7399 = vadd.f32 %v7398, %v6888
    %v7400 = vadd.f32 %v7399, %v6889
    %v7401 = vadd.f32 %v7400, %v6890
    %v7402 = vadd.f32 %v7401, %v6891
    %v7403 = vadd.f32 %v7402, %v6892
    %v7404 = vadd.f32 %v7403, %v6893
    %v7405 = vadd.f32 %v7404, %v6894
    %v7406 = vadd.f32 %v7405, %v6895
    %v7407 = vadd.f32 %v7406, %v6896
    %v7408 = vadd.f32 %v7407, %v6897
    %v7409 = vadd.f32 %v7408, %v6898
    %v7410 = vadd.f32 %v7409, %v6899
    %v7411 = vadd.f32 %v7410, %v6900
    %v7412 = vadd.f32 %v7411, %v6901
    %v7413 = vadd.f32 %v7412, %v6902
    %v7414 = vadd.f32 %v7413, %v6903
    %v7415 = vadd.f32 %v7414, %v6904
    %v7416 = vadd.f32 %v7415, %v6905
    %v7417 = vadd.f32 %v7416, %v6906
    %v7418 = vadd.f32 %v7417, %v6907
    %v7419 = vadd.f32 %v7418, %v6908
    %v7420 = vadd.f32 %v7419, %v6909
    %v7421 = vadd.f32 %v7420, %v6910
    %v7422 = vadd.f32 %v7421, %v6911
    %v7423 = vadd.f32 %v7422, %v6912
    %v7424 = vadd.f32 %v7423, %v6913
    %v7425 = vadd.f32 %v7424, %v6914
    %v7426 = vadd.f32 %v7425, %v6915
    %v7427 = vadd.f32 %v7426, %v6916
    %v7428 = vadd.f32 %v7427, %v6917
    %v7429 = vadd.f32 %v7428, %v6918
    %v7430 = vadd.f32 %v7429, %v6919
    %v7431 = vadd.f32 %v7430, %v6920
    %v7432 = vadd.f32 %v7431, %v6921
    %v7433 = vadd.f32 %v7432, %v6922
    %v7434 = vadd.f32 %v7433, %v6923
    %v7435 = vadd.f32 %v7434, %v6924
    %v7436 = vadd.f32 %v7435, %v6925
    %v7437 = vadd.f32 %v7436, %v6926
    %v7438 = vadd.f32 %v7437, %v6927
    %v7439 = vadd.f32 %v7438, %v6928
    %v7440 = vadd.f32 %v7439, %v6929
    %v7441 = vadd.f32 %v7440, %v6930
    %v7442 = vadd.f32 %v7441, %v6931
    %v7443 = vadd.f32 %v7442, %v6932
    %v7444 = vadd.f32 %v7443, %v6933
    %v7445 = vadd.f32 %v7444, %v6934
    %v7446 = vadd.f32 %v7445, %v6935
    %v7447 = vadd.f32 %v7446, %v6936
    %v7448 = vadd.f32 %v7447, %v6937
    %v7449 = vadd.f32 %v7448, %v6938
    %v7450 = vadd.f32 %v7449, %v6939
    %v7451 = vadd.f32 %v7450, %v6940
    %v7452 = vadd.f32 %v7451, %v6941
    %v7453 = vadd.f32 %v7452, %v6942
    %v7454 = vadd.f32 %v7453, %v6943
    %v7455 = vadd.f32 %v7454, %v6944
    %v7456 = vadd.f32 %v7455, %v6945
    %v7457 = vadd.f32 %v7456, %v6946
    %v7458 = vadd.f32 %v7457, %v6947
    %v7459 = vadd.f32 %v7458, %v6948
    %v7460 = vadd.f32 %v7459, %v6949
    %v7461 = vadd.f32 %v7460, %v6950
    %v7462 = vadd.f32 %v7461, %v6951
    %v7463 = vadd.f32 %v7462, %v6952
    %v7464 = vadd.f32 %v7463, %v6953
    %v7465 = vadd.f32 %v7464, %v6954
    %v7466 = vadd.f32 %v7465, %v6955
    %v7467 = vadd.f32 %v7466, %v6956
    %v7468 = vadd.f32 %v7467, %v6957
    %v7469 = vadd.f32 %v7468, %v6958
    %v7470 = vadd.f32 %v7469, %v6959
    %v7471 = vadd.f32 %v7470, %v6960
    %v7472 = vadd.f32 %v7471, %v6961
    %v7473 = vadd.f32 %v7472, %v6962
    %v7474 = vadd.f32 %v7473, %v6963
    %v7475 = vrot.slane %v7474, 4
    %v7476 = vadd.f32 %v7474, %v7475
    %v7477 = vrot.slane %v7476, 2
    %v7478 = vadd.f32 %v7476, %v7477
    %v7479 = vrot.slane %v7478, 1
    %v7480 = vadd.f32 %v7478, %v7479
    %v7481 = vmul.f32 %v7480, 0.00024414063
    %v7482 = vmul.f32 %v6452, %v6452
    %v7483 = vmul.f32 %v6453, %v6453
    %v7484 = vmul.f32 %v6454, %v6454
    %v7485 = vmul.f32 %v6455, %v6455
    %v7486 = vmul.f32 %v6456, %v6456
    %v7487 = vmul.f32 %v6457, %v6457
    %v7488 = vmul.f32 %v6458, %v6458
    %v7489 = vmul.f32 %v6459, %v6459
    %v7490 = vmul.f32 %v6460, %v6460
    %v7491 = vmul.f32 %v6461, %v6461
    %v7492 = vmul.f32 %v6462, %v6462
    %v7493 = vmul.f32 %v6463, %v6463
    %v7494 = vmul.f32 %v6464, %v6464
    %v7495 = vmul.f32 %v6465, %v6465
    %v7496 = vmul.f32 %v6466, %v6466
    %v7497 = vmul.f32 %v6467, %v6467
    %v7498 = vmul.f32 %v6468, %v6468
    %v7499 = vmul.f32 %v6469, %v6469
    %v7500 = vmul.f32 %v6470, %v6470
    %v7501 = vmul.f32 %v6471, %v6471
    %v7502 = vmul.f32 %v6472, %v6472
    %v7503 = vmul.f32 %v6473, %v6473
    %v7504 = vmul.f32 %v6474, %v6474
    %v7505 = vmul.f32 %v6475, %v6475
    %v7506 = vmul.f32 %v6476, %v6476
    %v7507 = vmul.f32 %v6477, %v6477
    %v7508 = vmul.f32 %v6478, %v6478
    %v7509 = vmul.f32 %v6479, %v6479
    %v7510 = vmul.f32 %v6480, %v6480
    %v7511 = vmul.f32 %v6481, %v6481
    %v7512 = vmul.f32 %v6482, %v6482
    %v7513 = vmul.f32 %v6483, %v6483
    %v7514 = vmul.f32 %v6484, %v6484
    %v7515 = vmul.f32 %v6485, %v6485
    %v7516 = vmul.f32 %v6486, %v6486
    %v7517 = vmul.f32 %v6487, %v6487
    %v7518 = vmul.f32 %v6488, %v6488
    %v7519 = vmul.f32 %v6489, %v6489
    %v7520 = vmul.f32 %v6490, %v6490
    %v7521 = vmul.f32 %v6491, %v6491
    %v7522 = vmul.f32 %v6492, %v6492
    %v7523 = vmul.f32 %v6493, %v6493
    %v7524 = vmul.f32 %v6494, %v6494
    %v7525 = vmul.f32 %v6495, %v6495
    %v7526 = vmul.f32 %v6496, %v6496
    %v7527 = vmul.f32 %v6497, %v6497
    %v7528 = vmul.f32 %v6498, %v6498
    %v7529 = vmul.f32 %v6499, %v6499
    %v7530 = vmul.f32 %v6500, %v6500
    %v7531 = vmul.f32 %v6501, %v6501
    %v7532 = vmul.f32 %v6502, %v6502
    %v7533 = vmul.f32 %v6503, %v6503
    %v7534 = vmul.f32 %v6504, %v6504
    %v7535 = vmul.f32 %v6505, %v6505
    %v7536 = vmul.f32 %v6506, %v6506
    %v7537 = vmul.f32 %v6507, %v6507
    %v7538 = vmul.f32 %v6508, %v6508
    %v7539 = vmul.f32 %v6509, %v6509
    %v7540 = vmul.f32 %v6510, %v6510
    %v7541 = vmul.f32 %v6511, %v6511
    %v7542 = vmul.f32 %v6512, %v6512
    %v7543 = vmul.f32 %v6513, %v6513
    %v7544 = vmul.f32 %v6514, %v6514
    %v7545 = vmul.f32 %v6515, %v6515
    %v7546 = vmul.f32 %v6516, %v6516
    %v7547 = vmul.f32 %v6517, %v6517
    %v7548 = vmul.f32 %v6518, %v6518
    %v7549 = vmul.f32 %v6519, %v6519
    %v7550 = vmul.f32 %v6520, %v6520
    %v7551 = vmul.f32 %v6521, %v6521
    %v7552 = vmul.f32 %v6522, %v6522
    %v7553 = vmul.f32 %v6523, %v6523
    %v7554 = vmul.f32 %v6524, %v6524
    %v7555 = vmul.f32 %v6525, %v6525
    %v7556 = vmul.f32 %v6526, %v6526
    %v7557 = vmul.f32 %v6527, %v6527
    %v7558 = vmul.f32 %v6528, %v6528
    %v7559 = vmul.f32 %v6529, %v6529
    %v7560 = vmul.f32 %v6530, %v6530
    %v7561 = vmul.f32 %v6531, %v6531
    %v7562 = vmul.f32 %v6532, %v6532
    %v7563 = vmul.f32 %v6533, %v6533
    %v7564 = vmul.f32 %v6534, %v6534
    %v7565 = vmul.f32 %v6535, %v6535
    %v7566 = vmul.f32 %v6536, %v6536
    %v7567 = vmul.f32 %v6537, %v6537
    %v7568 = vmul.f32 %v6538, %v6538
    %v7569 = vmul.f32 %v6539, %v6539
    %v7570 = vmul.f32 %v6540, %v6540
    %v7571 = vmul.f32 %v6541, %v6541
    %v7572 = vmul.f32 %v6542, %v6542
    %v7573 = vmul.f32 %v6543, %v6543
    %v7574 = vmul.f32 %v6544, %v6544
    %v7575 = vmul.f32 %v6545, %v6545
    %v7576 = vmul.f32 %v6546, %v6546
    %v7577 = vmul.f32 %v6547, %v6547
    %v7578 = vmul.f32 %v6548, %v6548
    %v7579 = vmul.f32 %v6549, %v6549
    %v7580 = vmul.f32 %v6550, %v6550
    %v7581 = vmul.f32 %v6551, %v6551
    %v7582 = vmul.f32 %v6552, %v6552
    %v7583 = vmul.f32 %v6553, %v6553
    %v7584 = vmul.f32 %v6554, %v6554
    %v7585 = vmul.f32 %v6555, %v6555
    %v7586 = vmul.f32 %v6556, %v6556
    %v7587 = vmul.f32 %v6557, %v6557
    %v7588 = vmul.f32 %v6558, %v6558
    %v7589 = vmul.f32 %v6559, %v6559
    %v7590 = vmul.f32 %v6560, %v6560
    %v7591 = vmul.f32 %v6561, %v6561
    %v7592 = vmul.f32 %v6562, %v6562
    %v7593 = vmul.f32 %v6563, %v6563
    %v7594 = vmul.f32 %v6564, %v6564
    %v7595 = vmul.f32 %v6565, %v6565
    %v7596 = vmul.f32 %v6566, %v6566
    %v7597 = vmul.f32 %v6567, %v6567
    %v7598 = vmul.f32 %v6568, %v6568
    %v7599 = vmul.f32 %v6569, %v6569
    %v7600 = vmul.f32 %v6570, %v6570
    %v7601 = vmul.f32 %v6571, %v6571
    %v7602 = vmul.f32 %v6572, %v6572
    %v7603 = vmul.f32 %v6573, %v6573
    %v7604 = vmul.f32 %v6574, %v6574
    %v7605 = vmul.f32 %v6575, %v6575
    %v7606 = vmul.f32 %v6576, %v6576
    %v7607 = vmul.f32 %v6577, %v6577
    %v7608 = vmul.f32 %v6578, %v6578
    %v7609 = vmul.f32 %v6579, %v6579
    %v7610 = vmul.f32 %v6580, %v6580
    %v7611 = vmul.f32 %v6581, %v6581
    %v7612 = vmul.f32 %v6582, %v6582
    %v7613 = vmul.f32 %v6583, %v6583
    %v7614 = vmul.f32 %v6584, %v6584
    %v7615 = vmul.f32 %v6585, %v6585
    %v7616 = vmul.f32 %v6586, %v6586
    %v7617 = vmul.f32 %v6587, %v6587
    %v7618 = vmul.f32 %v6588, %v6588
    %v7619 = vmul.f32 %v6589, %v6589
    %v7620 = vmul.f32 %v6590, %v6590
    %v7621 = vmul.f32 %v6591, %v6591
    %v7622 = vmul.f32 %v6592, %v6592
    %v7623 = vmul.f32 %v6593, %v6593
    %v7624 = vmul.f32 %v6594, %v6594
    %v7625 = vmul.f32 %v6595, %v6595
    %v7626 = vmul.f32 %v6596, %v6596
    %v7627 = vmul.f32 %v6597, %v6597
    %v7628 = vmul.f32 %v6598, %v6598
    %v7629 = vmul.f32 %v6599, %v6599
    %v7630 = vmul.f32 %v6600, %v6600
    %v7631 = vmul.f32 %v6601, %v6601
    %v7632 = vmul.f32 %v6602, %v6602
    %v7633 = vmul.f32 %v6603, %v6603
    %v7634 = vmul.f32 %v6604, %v6604
    %v7635 = vmul.f32 %v6605, %v6605
    %v7636 = vmul.f32 %v6606, %v6606
    %v7637 = vmul.f32 %v6607, %v6607
    %v7638 = vmul.f32 %v6608, %v6608
    %v7639 = vmul.f32 %v6609, %v6609
    %v7640 = vmul.f32 %v6610, %v6610
    %v7641 = vmul.f32 %v6611, %v6611
    %v7642 = vmul.f32 %v6612, %v6612
    %v7643 = vmul.f32 %v6613, %v6613
    %v7644 = vmul.f32 %v6614, %v6614
    %v7645 = vmul.f32 %v6615, %v6615
    %v7646 = vmul.f32 %v6616, %v6616
    %v7647 = vmul.f32 %v6617, %v6617
    %v7648 = vmul.f32 %v6618, %v6618
    %v7649 = vmul.f32 %v6619, %v6619
    %v7650 = vmul.f32 %v6620, %v6620
    %v7651 = vmul.f32 %v6621, %v6621
    %v7652 = vmul.f32 %v6622, %v6622
    %v7653 = vmul.f32 %v6623, %v6623
    %v7654 = vmul.f32 %v6624, %v6624
    %v7655 = vmul.f32 %v6625, %v6625
    %v7656 = vmul.f32 %v6626, %v6626
    %v7657 = vmul.f32 %v6627, %v6627
    %v7658 = vmul.f32 %v6628, %v6628
    %v7659 = vmul.f32 %v6629, %v6629
    %v7660 = vmul.f32 %v6630, %v6630
    %v7661 = vmul.f32 %v6631, %v6631
    %v7662 = vmul.f32 %v6632, %v6632
    %v7663 = vmul.f32 %v6633, %v6633
    %v7664 = vmul.f32 %v6634, %v6634
    %v7665 = vmul.f32 %v6635, %v6635
    %v7666 = vmul.f32 %v6636, %v6636
    %v7667 = vmul.f32 %v6637, %v6637
    %v7668 = vmul.f32 %v6638, %v6638
    %v7669 = vmul.f32 %v6639, %v6639
    %v7670 = vmul.f32 %v6640, %v6640
    %v7671 = vmul.f32 %v6641, %v6641
    %v7672 = vmul.f32 %v6642, %v6642
    %v7673 = vmul.f32 %v6643, %v6643
    %v7674 = vmul.f32 %v6644, %v6644
    %v7675 = vmul.f32 %v6645, %v6645
    %v7676 = vmul.f32 %v6646, %v6646
    %v7677 = vmul.f32 %v6647, %v6647
    %v7678 = vmul.f32 %v6648, %v6648
    %v7679 = vmul.f32 %v6649, %v6649
    %v7680 = vmul.f32 %v6650, %v6650
    %v7681 = vmul.f32 %v6651, %v6651
    %v7682 = vmul.f32 %v6652, %v6652
    %v7683 = vmul.f32 %v6653, %v6653
    %v7684 = vmul.f32 %v6654, %v6654
    %v7685 = vmul.f32 %v6655, %v6655
    %v7686 = vmul.f32 %v6656, %v6656
    %v7687 = vmul.f32 %v6657, %v6657
    %v7688 = vmul.f32 %v6658, %v6658
    %v7689 = vmul.f32 %v6659, %v6659
    %v7690 = vmul.f32 %v6660, %v6660
    %v7691 = vmul.f32 %v6661, %v6661
    %v7692 = vmul.f32 %v6662, %v6662
    %v7693 = vmul.f32 %v6663, %v6663
    %v7694 = vmul.f32 %v6664, %v6664
    %v7695 = vmul.f32 %v6665, %v6665
    %v7696 = vmul.f32 %v6666, %v6666
    %v7697 = vmul.f32 %v6667, %v6667
    %v7698 = vmul.f32 %v6668, %v6668
    %v7699 = vmul.f32 %v6669, %v6669
    %v7700 = vmul.f32 %v6670, %v6670
    %v7701 = vmul.f32 %v6671, %v6671
    %v7702 = vmul.f32 %v6672, %v6672
    %v7703 = vmul.f32 %v6673, %v6673
    %v7704 = vmul.f32 %v6674, %v6674
    %v7705 = vmul.f32 %v6675, %v6675
    %v7706 = vmul.f32 %v6676, %v6676
    %v7707 = vmul.f32 %v6677, %v6677
    %v7708 = vmul.f32 %v6678, %v6678
    %v7709 = vmul.f32 %v6679, %v6679
    %v7710 = vmul.f32 %v6680, %v6680
    %v7711 = vmul.f32 %v6681, %v6681
    %v7712 = vmul.f32 %v6682, %v6682
    %v7713 = vmul.f32 %v6683, %v6683
    %v7714 = vmul.f32 %v6684, %v6684
    %v7715 = vmul.f32 %v6685, %v6685
    %v7716 = vmul.f32 %v6686, %v6686
    %v7717 = vmul.f32 %v6687, %v6687
    %v7718 = vmul.f32 %v6688, %v6688
    %v7719 = vmul.f32 %v6689, %v6689
    %v7720 = vmul.f32 %v6690, %v6690
    %v7721 = vmul.f32 %v6691, %v6691
    %v7722 = vmul.f32 %v6692, %v6692
    %v7723 = vmul.f32 %v6693, %v6693
    %v7724 = vmul.f32 %v6694, %v6694
    %v7725 = vmul.f32 %v6695, %v6695
    %v7726 = vmul.f32 %v6696, %v6696
    %v7727 = vmul.f32 %v6697, %v6697
    %v7728 = vmul.f32 %v6698, %v6698
    %v7729 = vmul.f32 %v6699, %v6699
    %v7730 = vmul.f32 %v6700, %v6700
    %v7731 = vmul.f32 %v6701, %v6701
    %v7732 = vmul.f32 %v6702, %v6702
    %v7733 = vmul.f32 %v6703, %v6703
    %v7734 = vmul.f32 %v6704, %v6704
    %v7735 = vmul.f32 %v6705, %v6705
    %v7736 = vmul.f32 %v6706, %v6706
    %v7737 = vmul.f32 %v6707, %v6707
    %v7738 = vmul.f32 %v6708, %v6708
    %v7739 = vmul.f32 %v6709, %v6709
    %v7740 = vmul.f32 %v6710, %v6710
    %v7741 = vmul.f32 %v6711, %v6711
    %v7742 = vmul.f32 %v6712, %v6712
    %v7743 = vmul.f32 %v6713, %v6713
    %v7744 = vmul.f32 %v6714, %v6714
    %v7745 = vmul.f32 %v6715, %v6715
    %v7746 = vmul.f32 %v6716, %v6716
    %v7747 = vmul.f32 %v6717, %v6717
    %v7748 = vmul.f32 %v6718, %v6718
    %v7749 = vmul.f32 %v6719, %v6719
    %v7750 = vmul.f32 %v6720, %v6720
    %v7751 = vmul.f32 %v6721, %v6721
    %v7752 = vmul.f32 %v6722, %v6722
    %v7753 = vmul.f32 %v6723, %v6723
    %v7754 = vmul.f32 %v6724, %v6724
    %v7755 = vmul.f32 %v6725, %v6725
    %v7756 = vmul.f32 %v6726, %v6726
    %v7757 = vmul.f32 %v6727, %v6727
    %v7758 = vmul.f32 %v6728, %v6728
    %v7759 = vmul.f32 %v6729, %v6729
    %v7760 = vmul.f32 %v6730, %v6730
    %v7761 = vmul.f32 %v6731, %v6731
    %v7762 = vmul.f32 %v6732, %v6732
    %v7763 = vmul.f32 %v6733, %v6733
    %v7764 = vmul.f32 %v6734, %v6734
    %v7765 = vmul.f32 %v6735, %v6735
    %v7766 = vmul.f32 %v6736, %v6736
    %v7767 = vmul.f32 %v6737, %v6737
    %v7768 = vmul.f32 %v6738, %v6738
    %v7769 = vmul.f32 %v6739, %v6739
    %v7770 = vmul.f32 %v6740, %v6740
    %v7771 = vmul.f32 %v6741, %v6741
    %v7772 = vmul.f32 %v6742, %v6742
    %v7773 = vmul.f32 %v6743, %v6743
    %v7774 = vmul.f32 %v6744, %v6744
    %v7775 = vmul.f32 %v6745, %v6745
    %v7776 = vmul.f32 %v6746, %v6746
    %v7777 = vmul.f32 %v6747, %v6747
    %v7778 = vmul.f32 %v6748, %v6748
    %v7779 = vmul.f32 %v6749, %v6749
    %v7780 = vmul.f32 %v6750, %v6750
    %v7781 = vmul.f32 %v6751, %v6751
    %v7782 = vmul.f32 %v6752, %v6752
    %v7783 = vmul.f32 %v6753, %v6753
    %v7784 = vmul.f32 %v6754, %v6754
    %v7785 = vmul.f32 %v6755, %v6755
    %v7786 = vmul.f32 %v6756, %v6756
    %v7787 = vmul.f32 %v6757, %v6757
    %v7788 = vmul.f32 %v6758, %v6758
    %v7789 = vmul.f32 %v6759, %v6759
    %v7790 = vmul.f32 %v6760, %v6760
    %v7791 = vmul.f32 %v6761, %v6761
    %v7792 = vmul.f32 %v6762, %v6762
    %v7793 = vmul.f32 %v6763, %v6763
    %v7794 = vmul.f32 %v6764, %v6764
    %v7795 = vmul.f32 %v6765, %v6765
    %v7796 = vmul.f32 %v6766, %v6766
    %v7797 = vmul.f32 %v6767, %v6767
    %v7798 = vmul.f32 %v6768, %v6768
    %v7799 = vmul.f32 %v6769, %v6769
    %v7800 = vmul.f32 %v6770, %v6770
    %v7801 = vmul.f32 %v6771, %v6771
    %v7802 = vmul.f32 %v6772, %v6772
    %v7803 = vmul.f32 %v6773, %v6773
    %v7804 = vmul.f32 %v6774, %v6774
    %v7805 = vmul.f32 %v6775, %v6775
    %v7806 = vmul.f32 %v6776, %v6776
    %v7807 = vmul.f32 %v6777, %v6777
    %v7808 = vmul.f32 %v6778, %v6778
    %v7809 = vmul.f32 %v6779, %v6779
    %v7810 = vmul.f32 %v6780, %v6780
    %v7811 = vmul.f32 %v6781, %v6781
    %v7812 = vmul.f32 %v6782, %v6782
    %v7813 = vmul.f32 %v6783, %v6783
    %v7814 = vmul.f32 %v6784, %v6784
    %v7815 = vmul.f32 %v6785, %v6785
    %v7816 = vmul.f32 %v6786, %v6786
    %v7817 = vmul.f32 %v6787, %v6787
    %v7818 = vmul.f32 %v6788, %v6788
    %v7819 = vmul.f32 %v6789, %v6789
    %v7820 = vmul.f32 %v6790, %v6790
    %v7821 = vmul.f32 %v6791, %v6791
    %v7822 = vmul.f32 %v6792, %v6792
    %v7823 = vmul.f32 %v6793, %v6793
    %v7824 = vmul.f32 %v6794, %v6794
    %v7825 = vmul.f32 %v6795, %v6795
    %v7826 = vmul.f32 %v6796, %v6796
    %v7827 = vmul.f32 %v6797, %v6797
    %v7828 = vmul.f32 %v6798, %v6798
    %v7829 = vmul.f32 %v6799, %v6799
    %v7830 = vmul.f32 %v6800, %v6800
    %v7831 = vmul.f32 %v6801, %v6801
    %v7832 = vmul.f32 %v6802, %v6802
    %v7833 = vmul.f32 %v6803, %v6803
    %v7834 = vmul.f32 %v6804, %v6804
    %v7835 = vmul.f32 %v6805, %v6805
    %v7836 = vmul.f32 %v6806, %v6806
    %v7837 = vmul.f32 %v6807, %v6807
    %v7838 = vmul.f32 %v6808, %v6808
    %v7839 = vmul.f32 %v6809, %v6809
    %v7840 = vmul.f32 %v6810, %v6810
    %v7841 = vmul.f32 %v6811, %v6811
    %v7842 = vmul.f32 %v6812, %v6812
    %v7843 = vmul.f32 %v6813, %v6813
    %v7844 = vmul.f32 %v6814, %v6814
    %v7845 = vmul.f32 %v6815, %v6815
    %v7846 = vmul.f32 %v6816, %v6816
    %v7847 = vmul.f32 %v6817, %v6817
    %v7848 = vmul.f32 %v6818, %v6818
    %v7849 = vmul.f32 %v6819, %v6819
    %v7850 = vmul.f32 %v6820, %v6820
    %v7851 = vmul.f32 %v6821, %v6821
    %v7852 = vmul.f32 %v6822, %v6822
    %v7853 = vmul.f32 %v6823, %v6823
    %v7854 = vmul.f32 %v6824, %v6824
    %v7855 = vmul.f32 %v6825, %v6825
    %v7856 = vmul.f32 %v6826, %v6826
    %v7857 = vmul.f32 %v6827, %v6827
    %v7858 = vmul.f32 %v6828, %v6828
    %v7859 = vmul.f32 %v6829, %v6829
    %v7860 = vmul.f32 %v6830, %v6830
    %v7861 = vmul.f32 %v6831, %v6831
    %v7862 = vmul.f32 %v6832, %v6832
    %v7863 = vmul.f32 %v6833, %v6833
    %v7864 = vmul.f32 %v6834, %v6834
    %v7865 = vmul.f32 %v6835, %v6835
    %v7866 = vmul.f32 %v6836, %v6836
    %v7867 = vmul.f32 %v6837, %v6837
    %v7868 = vmul.f32 %v6838, %v6838
    %v7869 = vmul.f32 %v6839, %v6839
    %v7870 = vmul.f32 %v6840, %v6840
    %v7871 = vmul.f32 %v6841, %v6841
    %v7872 = vmul.f32 %v6842, %v6842
    %v7873 = vmul.f32 %v6843, %v6843
    %v7874 = vmul.f32 %v6844, %v6844
    %v7875 = vmul.f32 %v6845, %v6845
    %v7876 = vmul.f32 %v6846, %v6846
    %v7877 = vmul.f32 %v6847, %v6847
    %v7878 = vmul.f32 %v6848, %v6848
    %v7879 = vmul.f32 %v6849, %v6849
    %v7880 = vmul.f32 %v6850, %v6850
    %v7881 = vmul.f32 %v6851, %v6851
    %v7882 = vmul.f32 %v6852, %v6852
    %v7883 = vmul.f32 %v6853, %v6853
    %v7884 = vmul.f32 %v6854, %v6854
    %v7885 = vmul.f32 %v6855, %v6855
    %v7886 = vmul.f32 %v6856, %v6856
    %v7887 = vmul.f32 %v6857, %v6857
    %v7888 = vmul.f32 %v6858, %v6858
    %v7889 = vmul.f32 %v6859, %v6859
    %v7890 = vmul.f32 %v6860, %v6860
    %v7891 = vmul.f32 %v6861, %v6861
    %v7892 = vmul.f32 %v6862, %v6862
    %v7893 = vmul.f32 %v6863, %v6863
    %v7894 = vmul.f32 %v6864, %v6864
    %v7895 = vmul.f32 %v6865, %v6865
    %v7896 = vmul.f32 %v6866, %v6866
    %v7897 = vmul.f32 %v6867, %v6867
    %v7898 = vmul.f32 %v6868, %v6868
    %v7899 = vmul.f32 %v6869, %v6869
    %v7900 = vmul.f32 %v6870, %v6870
    %v7901 = vmul.f32 %v6871, %v6871
    %v7902 = vmul.f32 %v6872, %v6872
    %v7903 = vmul.f32 %v6873, %v6873
    %v7904 = vmul.f32 %v6874, %v6874
    %v7905 = vmul.f32 %v6875, %v6875
    %v7906 = vmul.f32 %v6876, %v6876
    %v7907 = vmul.f32 %v6877, %v6877
    %v7908 = vmul.f32 %v6878, %v6878
    %v7909 = vmul.f32 %v6879, %v6879
    %v7910 = vmul.f32 %v6880, %v6880
    %v7911 = vmul.f32 %v6881, %v6881
    %v7912 = vmul.f32 %v6882, %v6882
    %v7913 = vmul.f32 %v6883, %v6883
    %v7914 = vmul.f32 %v6884, %v6884
    %v7915 = vmul.f32 %v6885, %v6885
    %v7916 = vmul.f32 %v6886, %v6886
    %v7917 = vmul.f32 %v6887, %v6887
    %v7918 = vmul.f32 %v6888, %v6888
    %v7919 = vmul.f32 %v6889, %v6889
    %v7920 = vmul.f32 %v6890, %v6890
    %v7921 = vmul.f32 %v6891, %v6891
    %v7922 = vmul.f32 %v6892, %v6892
    %v7923 = vmul.f32 %v6893, %v6893
    %v7924 = vmul.f32 %v6894, %v6894
    %v7925 = vmul.f32 %v6895, %v6895
    %v7926 = vmul.f32 %v6896, %v6896
    %v7927 = vmul.f32 %v6897, %v6897
    %v7928 = vmul.f32 %v6898, %v6898
    %v7929 = vmul.f32 %v6899, %v6899
    %v7930 = vmul.f32 %v6900, %v6900
    %v7931 = vmul.f32 %v6901, %v6901
    %v7932 = vmul.f32 %v6902, %v6902
    %v7933 = vmul.f32 %v6903, %v6903
    %v7934 = vmul.f32 %v6904, %v6904
    %v7935 = vmul.f32 %v6905, %v6905
    %v7936 = vmul.f32 %v6906, %v6906
    %v7937 = vmul.f32 %v6907, %v6907
    %v7938 = vmul.f32 %v6908, %v6908
    %v7939 = vmul.f32 %v6909, %v6909
    %v7940 = vmul.f32 %v6910, %v6910
    %v7941 = vmul.f32 %v6911, %v6911
    %v7942 = vmul.f32 %v6912, %v6912
    %v7943 = vmul.f32 %v6913, %v6913
    %v7944 = vmul.f32 %v6914, %v6914
    %v7945 = vmul.f32 %v6915, %v6915
    %v7946 = vmul.f32 %v6916, %v6916
    %v7947 = vmul.f32 %v6917, %v6917
    %v7948 = vmul.f32 %v6918, %v6918
    %v7949 = vmul.f32 %v6919, %v6919
    %v7950 = vmul.f32 %v6920, %v6920
    %v7951 = vmul.f32 %v6921, %v6921
    %v7952 = vmul.f32 %v6922, %v6922
    %v7953 = vmul.f32 %v6923, %v6923
    %v7954 = vmul.f32 %v6924, %v6924
    %v7955 = vmul.f32 %v6925, %v6925
    %v7956 = vmul.f32 %v6926, %v6926
    %v7957 = vmul.f32 %v6927, %v6927
    %v7958 = vmul.f32 %v6928, %v6928
    %v7959 = vmul.f32 %v6929, %v6929
    %v7960 = vmul.f32 %v6930, %v6930
    %v7961 = vmul.f32 %v6931, %v6931
    %v7962 = vmul.f32 %v6932, %v6932
    %v7963 = vmul.f32 %v6933, %v6933
    %v7964 = vmul.f32 %v6934, %v6934
    %v7965 = vmul.f32 %v6935, %v6935
    %v7966 = vmul.f32 %v6936, %v6936
    %v7967 = vmul.f32 %v6937, %v6937
    %v7968 = vmul.f32 %v6938, %v6938
    %v7969 = vmul.f32 %v6939, %v6939
    %v7970 = vmul.f32 %v6940, %v6940
    %v7971 = vmul.f32 %v6941, %v6941
    %v7972 = vmul.f32 %v6942, %v6942
    %v7973 = vmul.f32 %v6943, %v6943
    %v7974 = vmul.f32 %v6944, %v6944
    %v7975 = vmul.f32 %v6945, %v6945
    %v7976 = vmul.f32 %v6946, %v6946
    %v7977 = vmul.f32 %v6947, %v6947
    %v7978 = vmul.f32 %v6948, %v6948
    %v7979 = vmul.f32 %v6949, %v6949
    %v7980 = vmul.f32 %v6950, %v6950
    %v7981 = vmul.f32 %v6951, %v6951
    %v7982 = vmul.f32 %v6952, %v6952
    %v7983 = vmul.f32 %v6953, %v6953
    %v7984 = vmul.f32 %v6954, %v6954
    %v7985 = vmul.f32 %v6955, %v6955
    %v7986 = vmul.f32 %v6956, %v6956
    %v7987 = vmul.f32 %v6957, %v6957
    %v7988 = vmul.f32 %v6958, %v6958
    %v7989 = vmul.f32 %v6959, %v6959
    %v7990 = vmul.f32 %v6960, %v6960
    %v7991 = vmul.f32 %v6961, %v6961
    %v7992 = vmul.f32 %v6962, %v6962
    %v7993 = vmul.f32 %v6963, %v6963
    %v7994 = vadd.f32 %v7482, %v7483
    %v7995 = vadd.f32 %v7994, %v7484
    %v7996 = vadd.f32 %v7995, %v7485
    %v7997 = vadd.f32 %v7996, %v7486
    %v7998 = vadd.f32 %v7997, %v7487
    %v7999 = vadd.f32 %v7998, %v7488
    %v8000 = vadd.f32 %v7999, %v7489
    %v8001 = vadd.f32 %v8000, %v7490
    %v8002 = vadd.f32 %v8001, %v7491
    %v8003 = vadd.f32 %v8002, %v7492
    %v8004 = vadd.f32 %v8003, %v7493
    %v8005 = vadd.f32 %v8004, %v7494
    %v8006 = vadd.f32 %v8005, %v7495
    %v8007 = vadd.f32 %v8006, %v7496
    %v8008 = vadd.f32 %v8007, %v7497
    %v8009 = vadd.f32 %v8008, %v7498
    %v8010 = vadd.f32 %v8009, %v7499
    %v8011 = vadd.f32 %v8010, %v7500
    %v8012 = vadd.f32 %v8011, %v7501
    %v8013 = vadd.f32 %v8012, %v7502
    %v8014 = vadd.f32 %v8013, %v7503
    %v8015 = vadd.f32 %v8014, %v7504
    %v8016 = vadd.f32 %v8015, %v7505
    %v8017 = vadd.f32 %v8016, %v7506
    %v8018 = vadd.f32 %v8017, %v7507
    %v8019 = vadd.f32 %v8018, %v7508
    %v8020 = vadd.f32 %v8019, %v7509
    %v8021 = vadd.f32 %v8020, %v7510
    %v8022 = vadd.f32 %v8021, %v7511
    %v8023 = vadd.f32 %v8022, %v7512
    %v8024 = vadd.f32 %v8023, %v7513
    %v8025 = vadd.f32 %v8024, %v7514
    %v8026 = vadd.f32 %v8025, %v7515
    %v8027 = vadd.f32 %v8026, %v7516
    %v8028 = vadd.f32 %v8027, %v7517
    %v8029 = vadd.f32 %v8028, %v7518
    %v8030 = vadd.f32 %v8029, %v7519
    %v8031 = vadd.f32 %v8030, %v7520
    %v8032 = vadd.f32 %v8031, %v7521
    %v8033 = vadd.f32 %v8032, %v7522
    %v8034 = vadd.f32 %v8033, %v7523
    %v8035 = vadd.f32 %v8034, %v7524
    %v8036 = vadd.f32 %v8035, %v7525
    %v8037 = vadd.f32 %v8036, %v7526
    %v8038 = vadd.f32 %v8037, %v7527
    %v8039 = vadd.f32 %v8038, %v7528
    %v8040 = vadd.f32 %v8039, %v7529
    %v8041 = vadd.f32 %v8040, %v7530
    %v8042 = vadd.f32 %v8041, %v7531
    %v8043 = vadd.f32 %v8042, %v7532
    %v8044 = vadd.f32 %v8043, %v7533
    %v8045 = vadd.f32 %v8044, %v7534
    %v8046 = vadd.f32 %v8045, %v7535
    %v8047 = vadd.f32 %v8046, %v7536
    %v8048 = vadd.f32 %v8047, %v7537
    %v8049 = vadd.f32 %v8048, %v7538
    %v8050 = vadd.f32 %v8049, %v7539
    %v8051 = vadd.f32 %v8050, %v7540
    %v8052 = vadd.f32 %v8051, %v7541
    %v8053 = vadd.f32 %v8052, %v7542
    %v8054 = vadd.f32 %v8053, %v7543
    %v8055 = vadd.f32 %v8054, %v7544
    %v8056 = vadd.f32 %v8055, %v7545
    %v8057 = vadd.f32 %v8056, %v7546
    %v8058 = vadd.f32 %v8057, %v7547
    %v8059 = vadd.f32 %v8058, %v7548
    %v8060 = vadd.f32 %v8059, %v7549
    %v8061 = vadd.f32 %v8060, %v7550
    %v8062 = vadd.f32 %v8061, %v7551
    %v8063 = vadd.f32 %v8062, %v7552
    %v8064 = vadd.f32 %v8063, %v7553
    %v8065 = vadd.f32 %v8064, %v7554
    %v8066 = vadd.f32 %v8065, %v7555
    %v8067 = vadd.f32 %v8066, %v7556
    %v8068 = vadd.f32 %v8067, %v7557
    %v8069 = vadd.f32 %v8068, %v7558
    %v8070 = vadd.f32 %v8069, %v7559
    %v8071 = vadd.f32 %v8070, %v7560
    %v8072 = vadd.f32 %v8071, %v7561
    %v8073 = vadd.f32 %v8072, %v7562
    %v8074 = vadd.f32 %v8073, %v7563
    %v8075 = vadd.f32 %v8074, %v7564
    %v8076 = vadd.f32 %v8075, %v7565
    %v8077 = vadd.f32 %v8076, %v7566
    %v8078 = vadd.f32 %v8077, %v7567
    %v8079 = vadd.f32 %v8078, %v7568
    %v8080 = vadd.f32 %v8079, %v7569
    %v8081 = vadd.f32 %v8080, %v7570
    %v8082 = vadd.f32 %v8081, %v7571
    %v8083 = vadd.f32 %v8082, %v7572
    %v8084 = vadd.f32 %v8083, %v7573
    %v8085 = vadd.f32 %v8084, %v7574
    %v8086 = vadd.f32 %v8085, %v7575
    %v8087 = vadd.f32 %v8086, %v7576
    %v8088 = vadd.f32 %v8087, %v7577
    %v8089 = vadd.f32 %v8088, %v7578
    %v8090 = vadd.f32 %v8089, %v7579
    %v8091 = vadd.f32 %v8090, %v7580
    %v8092 = vadd.f32 %v8091, %v7581
    %v8093 = vadd.f32 %v8092, %v7582
    %v8094 = vadd.f32 %v8093, %v7583
    %v8095 = vadd.f32 %v8094, %v7584
    %v8096 = vadd.f32 %v8095, %v7585
    %v8097 = vadd.f32 %v8096, %v7586
    %v8098 = vadd.f32 %v8097, %v7587
    %v8099 = vadd.f32 %v8098, %v7588
    %v8100 = vadd.f32 %v8099, %v7589
    %v8101 = vadd.f32 %v8100, %v7590
    %v8102 = vadd.f32 %v8101, %v7591
    %v8103 = vadd.f32 %v8102, %v7592
    %v8104 = vadd.f32 %v8103, %v7593
    %v8105 = vadd.f32 %v8104, %v7594
    %v8106 = vadd.f32 %v8105, %v7595
    %v8107 = vadd.f32 %v8106, %v7596
    %v8108 = vadd.f32 %v8107, %v7597
    %v8109 = vadd.f32 %v8108, %v7598
    %v8110 = vadd.f32 %v8109, %v7599
    %v8111 = vadd.f32 %v8110, %v7600
    %v8112 = vadd.f32 %v8111, %v7601
    %v8113 = vadd.f32 %v8112, %v7602
    %v8114 = vadd.f32 %v8113, %v7603
    %v8115 = vadd.f32 %v8114, %v7604
    %v8116 = vadd.f32 %v8115, %v7605
    %v8117 = vadd.f32 %v8116, %v7606
    %v8118 = vadd.f32 %v8117, %v7607
    %v8119 = vadd.f32 %v8118, %v7608
    %v8120 = vadd.f32 %v8119, %v7609
    %v8121 = vadd.f32 %v8120, %v7610
    %v8122 = vadd.f32 %v8121, %v7611
    %v8123 = vadd.f32 %v8122, %v7612
    %v8124 = vadd.f32 %v8123, %v7613
    %v8125 = vadd.f32 %v8124, %v7614
    %v8126 = vadd.f32 %v8125, %v7615
    %v8127 = vadd.f32 %v8126, %v7616
    %v8128 = vadd.f32 %v8127, %v7617
    %v8129 = vadd.f32 %v8128, %v7618
    %v8130 = vadd.f32 %v8129, %v7619
    %v8131 = vadd.f32 %v8130, %v7620
    %v8132 = vadd.f32 %v8131, %v7621
    %v8133 = vadd.f32 %v8132, %v7622
    %v8134 = vadd.f32 %v8133, %v7623
    %v8135 = vadd.f32 %v8134, %v7624
    %v8136 = vadd.f32 %v8135, %v7625
    %v8137 = vadd.f32 %v8136, %v7626
    %v8138 = vadd.f32 %v8137, %v7627
    %v8139 = vadd.f32 %v8138, %v7628
    %v8140 = vadd.f32 %v8139, %v7629
    %v8141 = vadd.f32 %v8140, %v7630
    %v8142 = vadd.f32 %v8141, %v7631
    %v8143 = vadd.f32 %v8142, %v7632
    %v8144 = vadd.f32 %v8143, %v7633
    %v8145 = vadd.f32 %v8144, %v7634
    %v8146 = vadd.f32 %v8145, %v7635
    %v8147 = vadd.f32 %v8146, %v7636
    %v8148 = vadd.f32 %v8147, %v7637
    %v8149 = vadd.f32 %v8148, %v7638
    %v8150 = vadd.f32 %v8149, %v7639
    %v8151 = vadd.f32 %v8150, %v7640
    %v8152 = vadd.f32 %v8151, %v7641
    %v8153 = vadd.f32 %v8152, %v7642
    %v8154 = vadd.f32 %v8153, %v7643
    %v8155 = vadd.f32 %v8154, %v7644
    %v8156 = vadd.f32 %v8155, %v7645
    %v8157 = vadd.f32 %v8156, %v7646
    %v8158 = vadd.f32 %v8157, %v7647
    %v8159 = vadd.f32 %v8158, %v7648
    %v8160 = vadd.f32 %v8159, %v7649
    %v8161 = vadd.f32 %v8160, %v7650
    %v8162 = vadd.f32 %v8161, %v7651
    %v8163 = vadd.f32 %v8162, %v7652
    %v8164 = vadd.f32 %v8163, %v7653
    %v8165 = vadd.f32 %v8164, %v7654
    %v8166 = vadd.f32 %v8165, %v7655
    %v8167 = vadd.f32 %v8166, %v7656
    %v8168 = vadd.f32 %v8167, %v7657
    %v8169 = vadd.f32 %v8168, %v7658
    %v8170 = vadd.f32 %v8169, %v7659
    %v8171 = vadd.f32 %v8170, %v7660
    %v8172 = vadd.f32 %v8171, %v7661
    %v8173 = vadd.f32 %v8172, %v7662
    %v8174 = vadd.f32 %v8173, %v7663
    %v8175 = vadd.f32 %v8174, %v7664
    %v8176 = vadd.f32 %v8175, %v7665
    %v8177 = vadd.f32 %v8176, %v7666
    %v8178 = vadd.f32 %v8177, %v7667
    %v8179 = vadd.f32 %v8178, %v7668
    %v8180 = vadd.f32 %v8179, %v7669
    %v8181 = vadd.f32 %v8180, %v7670
    %v8182 = vadd.f32 %v8181, %v7671
    %v8183 = vadd.f32 %v8182, %v7672
    %v8184 = vadd.f32 %v8183, %v7673
    %v8185 = vadd.f32 %v8184, %v7674
    %v8186 = vadd.f32 %v8185, %v7675
    %v8187 = vadd.f32 %v8186, %v7676
    %v8188 = vadd.f32 %v8187, %v7677
    %v8189 = vadd.f32 %v8188, %v7678
    %v8190 = vadd.f32 %v8189, %v7679
    %v8191 = vadd.f32 %v8190, %v7680
    %v8192 = vadd.f32 %v8191, %v7681
    %v8193 = vadd.f32 %v8192, %v7682
    %v8194 = vadd.f32 %v8193, %v7683
    %v8195 = vadd.f32 %v8194, %v7684
    %v8196 = vadd.f32 %v8195, %v7685
    %v8197 = vadd.f32 %v8196, %v7686
    %v8198 = vadd.f32 %v8197, %v7687
    %v8199 = vadd.f32 %v8198, %v7688
    %v8200 = vadd.f32 %v8199, %v7689
    %v8201 = vadd.f32 %v8200, %v7690
    %v8202 = vadd.f32 %v8201, %v7691
    %v8203 = vadd.f32 %v8202, %v7692
    %v8204 = vadd.f32 %v8203, %v7693
    %v8205 = vadd.f32 %v8204, %v7694
    %v8206 = vadd.f32 %v8205, %v7695
    %v8207 = vadd.f32 %v8206, %v7696
    %v8208 = vadd.f32 %v8207, %v7697
    %v8209 = vadd.f32 %v8208, %v7698
    %v8210 = vadd.f32 %v8209, %v7699
    %v8211 = vadd.f32 %v8210, %v7700
    %v8212 = vadd.f32 %v8211, %v7701
    %v8213 = vadd.f32 %v8212, %v7702
    %v8214 = vadd.f32 %v8213, %v7703
    %v8215 = vadd.f32 %v8214, %v7704
    %v8216 = vadd.f32 %v8215, %v7705
    %v8217 = vadd.f32 %v8216, %v7706
    %v8218 = vadd.f32 %v8217, %v7707
    %v8219 = vadd.f32 %v8218, %v7708
    %v8220 = vadd.f32 %v8219, %v7709
    %v8221 = vadd.f32 %v8220, %v7710
    %v8222 = vadd.f32 %v8221, %v7711
    %v8223 = vadd.f32 %v8222, %v7712
    %v8224 = vadd.f32 %v8223, %v7713
    %v8225 = vadd.f32 %v8224, %v7714
    %v8226 = vadd.f32 %v8225, %v7715
    %v8227 = vadd.f32 %v8226, %v7716
    %v8228 = vadd.f32 %v8227, %v7717
    %v8229 = vadd.f32 %v8228, %v7718
    %v8230 = vadd.f32 %v8229, %v7719
    %v8231 = vadd.f32 %v8230, %v7720
    %v8232 = vadd.f32 %v8231, %v7721
    %v8233 = vadd.f32 %v8232, %v7722
    %v8234 = vadd.f32 %v8233, %v7723
    %v8235 = vadd.f32 %v8234, %v7724
    %v8236 = vadd.f32 %v8235, %v7725
    %v8237 = vadd.f32 %v8236, %v7726
    %v8238 = vadd.f32 %v8237, %v7727
    %v8239 = vadd.f32 %v8238, %v7728
    %v8240 = vadd.f32 %v8239, %v7729
    %v8241 = vadd.f32 %v8240, %v7730
    %v8242 = vadd.f32 %v8241, %v7731
    %v8243 = vadd.f32 %v8242, %v7732
    %v8244 = vadd.f32 %v8243, %v7733
    %v8245 = vadd.f32 %v8244, %v7734
    %v8246 = vadd.f32 %v8245, %v7735
    %v8247 = vadd.f32 %v8246, %v7736
    %v8248 = vadd.f32 %v8247, %v7737
    %v8249 = vadd.f32 %v8248, %v7738
    %v8250 = vadd.f32 %v8249, %v7739
    %v8251 = vadd.f32 %v8250, %v7740
    %v8252 = vadd.f32 %v8251, %v7741
    %v8253 = vadd.f32 %v8252, %v7742
    %v8254 = vadd.f32 %v8253, %v7743
    %v8255 = vadd.f32 %v8254, %v7744
    %v8256 = vadd.f32 %v8255, %v7745
    %v8257 = vadd.f32 %v8256, %v7746
    %v8258 = vadd.f32 %v8257, %v7747
    %v8259 = vadd.f32 %v8258, %v7748
    %v8260 = vadd.f32 %v8259, %v7749
    %v8261 = vadd.f32 %v8260, %v7750
    %v8262 = vadd.f32 %v8261, %v7751
    %v8263 = vadd.f32 %v8262, %v7752
    %v8264 = vadd.f32 %v8263, %v7753
    %v8265 = vadd.f32 %v8264, %v7754
    %v8266 = vadd.f32 %v8265, %v7755
    %v8267 = vadd.f32 %v8266, %v7756
    %v8268 = vadd.f32 %v8267, %v7757
    %v8269 = vadd.f32 %v8268, %v7758
    %v8270 = vadd.f32 %v8269, %v7759
    %v8271 = vadd.f32 %v8270, %v7760
    %v8272 = vadd.f32 %v8271, %v7761
    %v8273 = vadd.f32 %v8272, %v7762
    %v8274 = vadd.f32 %v8273, %v7763
    %v8275 = vadd.f32 %v8274, %v7764
    %v8276 = vadd.f32 %v8275, %v7765
    %v8277 = vadd.f32 %v8276, %v7766
    %v8278 = vadd.f32 %v8277, %v7767
    %v8279 = vadd.f32 %v8278, %v7768
    %v8280 = vadd.f32 %v8279, %v7769
    %v8281 = vadd.f32 %v8280, %v7770
    %v8282 = vadd.f32 %v8281, %v7771
    %v8283 = vadd.f32 %v8282, %v7772
    %v8284 = vadd.f32 %v8283, %v7773
    %v8285 = vadd.f32 %v8284, %v7774
    %v8286 = vadd.f32 %v8285, %v7775
    %v8287 = vadd.f32 %v8286, %v7776
    %v8288 = vadd.f32 %v8287, %v7777
    %v8289 = vadd.f32 %v8288, %v7778
    %v8290 = vadd.f32 %v8289, %v7779
    %v8291 = vadd.f32 %v8290, %v7780
    %v8292 = vadd.f32 %v8291, %v7781
    %v8293 = vadd.f32 %v8292, %v7782
    %v8294 = vadd.f32 %v8293, %v7783
    %v8295 = vadd.f32 %v8294, %v7784
    %v8296 = vadd.f32 %v8295, %v7785
    %v8297 = vadd.f32 %v8296, %v7786
    %v8298 = vadd.f32 %v8297, %v7787
    %v8299 = vadd.f32 %v8298, %v7788
    %v8300 = vadd.f32 %v8299, %v7789
    %v8301 = vadd.f32 %v8300, %v7790
    %v8302 = vadd.f32 %v8301, %v7791
    %v8303 = vadd.f32 %v8302, %v7792
    %v8304 = vadd.f32 %v8303, %v7793
    %v8305 = vadd.f32 %v8304, %v7794
    %v8306 = vadd.f32 %v8305, %v7795
    %v8307 = vadd.f32 %v8306, %v7796
    %v8308 = vadd.f32 %v8307, %v7797
    %v8309 = vadd.f32 %v8308, %v7798
    %v8310 = vadd.f32 %v8309, %v7799
    %v8311 = vadd.f32 %v8310, %v7800
    %v8312 = vadd.f32 %v8311, %v7801
    %v8313 = vadd.f32 %v8312, %v7802
    %v8314 = vadd.f32 %v8313, %v7803
    %v8315 = vadd.f32 %v8314, %v7804
    %v8316 = vadd.f32 %v8315, %v7805
    %v8317 = vadd.f32 %v8316, %v7806
    %v8318 = vadd.f32 %v8317, %v7807
    %v8319 = vadd.f32 %v8318, %v7808
    %v8320 = vadd.f32 %v8319, %v7809
    %v8321 = vadd.f32 %v8320, %v7810
    %v8322 = vadd.f32 %v8321, %v7811
    %v8323 = vadd.f32 %v8322, %v7812
    %v8324 = vadd.f32 %v8323, %v7813
    %v8325 = vadd.f32 %v8324, %v7814
    %v8326 = vadd.f32 %v8325, %v7815
    %v8327 = vadd.f32 %v8326, %v7816
    %v8328 = vadd.f32 %v8327, %v7817
    %v8329 = vadd.f32 %v8328, %v7818
    %v8330 = vadd.f32 %v8329, %v7819
    %v8331 = vadd.f32 %v8330, %v7820
    %v8332 = vadd.f32 %v8331, %v7821
    %v8333 = vadd.f32 %v8332, %v7822
    %v8334 = vadd.f32 %v8333, %v7823
    %v8335 = vadd.f32 %v8334, %v7824
    %v8336 = vadd.f32 %v8335, %v7825
    %v8337 = vadd.f32 %v8336, %v7826
    %v8338 = vadd.f32 %v8337, %v7827
    %v8339 = vadd.f32 %v8338, %v7828
    %v8340 = vadd.f32 %v8339, %v7829
    %v8341 = vadd.f32 %v8340, %v7830
    %v8342 = vadd.f32 %v8341, %v7831
    %v8343 = vadd.f32 %v8342, %v7832
    %v8344 = vadd.f32 %v8343, %v7833
    %v8345 = vadd.f32 %v8344, %v7834
    %v8346 = vadd.f32 %v8345, %v7835
    %v8347 = vadd.f32 %v8346, %v7836
    %v8348 = vadd.f32 %v8347, %v7837
    %v8349 = vadd.f32 %v8348, %v7838
    %v8350 = vadd.f32 %v8349, %v7839
    %v8351 = vadd.f32 %v8350, %v7840
    %v8352 = vadd.f32 %v8351, %v7841
    %v8353 = vadd.f32 %v8352, %v7842
    %v8354 = vadd.f32 %v8353, %v7843
    %v8355 = vadd.f32 %v8354, %v7844
    %v8356 = vadd.f32 %v8355, %v7845
    %v8357 = vadd.f32 %v8356, %v7846
    %v8358 = vadd.f32 %v8357, %v7847
    %v8359 = vadd.f32 %v8358, %v7848
    %v8360 = vadd.f32 %v8359, %v7849
    %v8361 = vadd.f32 %v8360, %v7850
    %v8362 = vadd.f32 %v8361, %v7851
    %v8363 = vadd.f32 %v8362, %v7852
    %v8364 = vadd.f32 %v8363, %v7853
    %v8365 = vadd.f32 %v8364, %v7854
    %v8366 = vadd.f32 %v8365, %v7855
    %v8367 = vadd.f32 %v8366, %v7856
    %v8368 = vadd.f32 %v8367, %v7857
    %v8369 = vadd.f32 %v8368, %v7858
    %v8370 = vadd.f32 %v8369, %v7859
    %v8371 = vadd.f32 %v8370, %v7860
    %v8372 = vadd.f32 %v8371, %v7861
    %v8373 = vadd.f32 %v8372, %v7862
    %v8374 = vadd.f32 %v8373, %v7863
    %v8375 = vadd.f32 %v8374, %v7864
    %v8376 = vadd.f32 %v8375, %v7865
    %v8377 = vadd.f32 %v8376, %v7866
    %v8378 = vadd.f32 %v8377, %v7867
    %v8379 = vadd.f32 %v8378, %v7868
    %v8380 = vadd.f32 %v8379, %v7869
    %v8381 = vadd.f32 %v8380, %v7870
    %v8382 = vadd.f32 %v8381, %v7871
    %v8383 = vadd.f32 %v8382, %v7872
    %v8384 = vadd.f32 %v8383, %v7873
    %v8385 = vadd.f32 %v8384, %v7874
    %v8386 = vadd.f32 %v8385, %v7875
    %v8387 = vadd.f32 %v8386, %v7876
    %v8388 = vadd.f32 %v8387, %v7877
    %v8389 = vadd.f32 %v8388, %v7878
    %v8390 = vadd.f32 %v8389, %v7879
    %v8391 = vadd.f32 %v8390, %v7880
    %v8392 = vadd.f32 %v8391, %v7881
    %v8393 = vadd.f32 %v8392, %v7882
    %v8394 = vadd.f32 %v8393, %v7883
    %v8395 = vadd.f32 %v8394, %v7884
    %v8396 = vadd.f32 %v8395, %v7885
    %v8397 = vadd.f32 %v8396, %v7886
    %v8398 = vadd.f32 %v8397, %v7887
    %v8399 = vadd.f32 %v8398, %v7888
    %v8400 = vadd.f32 %v8399, %v7889
    %v8401 = vadd.f32 %v8400, %v7890
    %v8402 = vadd.f32 %v8401, %v7891
    %v8403 = vadd.f32 %v8402, %v7892
    %v8404 = vadd.f32 %v8403, %v7893
    %v8405 = vadd.f32 %v8404, %v7894
    %v8406 = vadd.f32 %v8405, %v7895
    %v8407 = vadd.f32 %v8406, %v7896
    %v8408 = vadd.f32 %v8407, %v7897
    %v8409 = vadd.f32 %v8408, %v7898
    %v8410 = vadd.f32 %v8409, %v7899
    %v8411 = vadd.f32 %v8410, %v7900
    %v8412 = vadd.f32 %v8411, %v7901
    %v8413 = vadd.f32 %v8412, %v7902
    %v8414 = vadd.f32 %v8413, %v7903
    %v8415 = vadd.f32 %v8414, %v7904
    %v8416 = vadd.f32 %v8415, %v7905
    %v8417 = vadd.f32 %v8416, %v7906
    %v8418 = vadd.f32 %v8417, %v7907
    %v8419 = vadd.f32 %v8418, %v7908
    %v8420 = vadd.f32 %v8419, %v7909
    %v8421 = vadd.f32 %v8420, %v7910
    %v8422 = vadd.f32 %v8421, %v7911
    %v8423 = vadd.f32 %v8422, %v7912
    %v8424 = vadd.f32 %v8423, %v7913
    %v8425 = vadd.f32 %v8424, %v7914
    %v8426 = vadd.f32 %v8425, %v7915
    %v8427 = vadd.f32 %v8426, %v7916
    %v8428 = vadd.f32 %v8427, %v7917
    %v8429 = vadd.f32 %v8428, %v7918
    %v8430 = vadd.f32 %v8429, %v7919
    %v8431 = vadd.f32 %v8430, %v7920
    %v8432 = vadd.f32 %v8431, %v7921
    %v8433 = vadd.f32 %v8432, %v7922
    %v8434 = vadd.f32 %v8433, %v7923
    %v8435 = vadd.f32 %v8434, %v7924
    %v8436 = vadd.f32 %v8435, %v7925
    %v8437 = vadd.f32 %v8436, %v7926
    %v8438 = vadd.f32 %v8437, %v7927
    %v8439 = vadd.f32 %v8438, %v7928
    %v8440 = vadd.f32 %v8439, %v7929
    %v8441 = vadd.f32 %v8440, %v7930
    %v8442 = vadd.f32 %v8441, %v7931
    %v8443 = vadd.f32 %v8442, %v7932
    %v8444 = vadd.f32 %v8443, %v7933
    %v8445 = vadd.f32 %v8444, %v7934
    %v8446 = vadd.f32 %v8445, %v7935
    %v8447 = vadd.f32 %v8446, %v7936
    %v8448 = vadd.f32 %v8447, %v7937
    %v8449 = vadd.f32 %v8448, %v7938
    %v8450 = vadd.f32 %v8449, %v7939
    %v8451 = vadd.f32 %v8450, %v7940
    %v8452 = vadd.f32 %v8451, %v7941
    %v8453 = vadd.f32 %v8452, %v7942
    %v8454 = vadd.f32 %v8453, %v7943
    %v8455 = vadd.f32 %v8454, %v7944
    %v8456 = vadd.f32 %v8455, %v7945
    %v8457 = vadd.f32 %v8456, %v7946
    %v8458 = vadd.f32 %v8457, %v7947
    %v8459 = vadd.f32 %v8458, %v7948
    %v8460 = vadd.f32 %v8459, %v7949
    %v8461 = vadd.f32 %v8460, %v7950
    %v8462 = vadd.f32 %v8461, %v7951
    %v8463 = vadd.f32 %v8462, %v7952
    %v8464 = vadd.f32 %v8463, %v7953
    %v8465 = vadd.f32 %v8464, %v7954
    %v8466 = vadd.f32 %v8465, %v7955
    %v8467 = vadd.f32 %v8466, %v7956
    %v8468 = vadd.f32 %v8467, %v7957
    %v8469 = vadd.f32 %v8468, %v7958
    %v8470 = vadd.f32 %v8469, %v7959
    %v8471 = vadd.f32 %v8470, %v7960
    %v8472 = vadd.f32 %v8471, %v7961
    %v8473 = vadd.f32 %v8472, %v7962
    %v8474 = vadd.f32 %v8473, %v7963
    %v8475 = vadd.f32 %v8474, %v7964
    %v8476 = vadd.f32 %v8475, %v7965
    %v8477 = vadd.f32 %v8476, %v7966
    %v8478 = vadd.f32 %v8477, %v7967
    %v8479 = vadd.f32 %v8478, %v7968
    %v8480 = vadd.f32 %v8479, %v7969
    %v8481 = vadd.f32 %v8480, %v7970
    %v8482 = vadd.f32 %v8481, %v7971
    %v8483 = vadd.f32 %v8482, %v7972
    %v8484 = vadd.f32 %v8483, %v7973
    %v8485 = vadd.f32 %v8484, %v7974
    %v8486 = vadd.f32 %v8485, %v7975
    %v8487 = vadd.f32 %v8486, %v7976
    %v8488 = vadd.f32 %v8487, %v7977
    %v8489 = vadd.f32 %v8488, %v7978
    %v8490 = vadd.f32 %v8489, %v7979
    %v8491 = vadd.f32 %v8490, %v7980
    %v8492 = vadd.f32 %v8491, %v7981
    %v8493 = vadd.f32 %v8492, %v7982
    %v8494 = vadd.f32 %v8493, %v7983
    %v8495 = vadd.f32 %v8494, %v7984
    %v8496 = vadd.f32 %v8495, %v7985
    %v8497 = vadd.f32 %v8496, %v7986
    %v8498 = vadd.f32 %v8497, %v7987
    %v8499 = vadd.f32 %v8498, %v7988
    %v8500 = vadd.f32 %v8499, %v7989
    %v8501 = vadd.f32 %v8500, %v7990
    %v8502 = vadd.f32 %v8501, %v7991
    %v8503 = vadd.f32 %v8502, %v7992
    %v8504 = vadd.f32 %v8503, %v7993
    %v8505 = vrot.slane %v8504, 4
    %v8506 = vadd.f32 %v8504, %v8505
    %v8507 = vrot.slane %v8506, 2
    %v8508 = vadd.f32 %v8506, %v8507
    %v8509 = vrot.slane %v8508, 1
    %v8510 = vadd.f32 %v8508, %v8509
    %v8511 = vmul.f32 %v8510, 0.00024414063
    %v8512 = vmul.f32 %v7481, %v7481
    %v8513 = vsub.f32 %v8511, %v8512
    %v8514 = vmax.f32 %v8513, 0.0
    %v8515 = vsub.f32 %v6452, %v7481
    %v8516 = vsub.f32 %v6453, %v7481
    %v8517 = vsub.f32 %v6454, %v7481
    %v8518 = vsub.f32 %v6455, %v7481
    %v8519 = vsub.f32 %v6456, %v7481
    %v8520 = vsub.f32 %v6457, %v7481
    %v8521 = vsub.f32 %v6458, %v7481
    %v8522 = vsub.f32 %v6459, %v7481
    %v8523 = vsub.f32 %v6460, %v7481
    %v8524 = vsub.f32 %v6461, %v7481
    %v8525 = vsub.f32 %v6462, %v7481
    %v8526 = vsub.f32 %v6463, %v7481
    %v8527 = vsub.f32 %v6464, %v7481
    %v8528 = vsub.f32 %v6465, %v7481
    %v8529 = vsub.f32 %v6466, %v7481
    %v8530 = vsub.f32 %v6467, %v7481
    %v8531 = vsub.f32 %v6468, %v7481
    %v8532 = vsub.f32 %v6469, %v7481
    %v8533 = vsub.f32 %v6470, %v7481
    %v8534 = vsub.f32 %v6471, %v7481
    %v8535 = vsub.f32 %v6472, %v7481
    %v8536 = vsub.f32 %v6473, %v7481
    %v8537 = vsub.f32 %v6474, %v7481
    %v8538 = vsub.f32 %v6475, %v7481
    %v8539 = vsub.f32 %v6476, %v7481
    %v8540 = vsub.f32 %v6477, %v7481
    %v8541 = vsub.f32 %v6478, %v7481
    %v8542 = vsub.f32 %v6479, %v7481
    %v8543 = vsub.f32 %v6480, %v7481
    %v8544 = vsub.f32 %v6481, %v7481
    %v8545 = vsub.f32 %v6482, %v7481
    %v8546 = vsub.f32 %v6483, %v7481
    %v8547 = vsub.f32 %v6484, %v7481
    %v8548 = vsub.f32 %v6485, %v7481
    %v8549 = vsub.f32 %v6486, %v7481
    %v8550 = vsub.f32 %v6487, %v7481
    %v8551 = vsub.f32 %v6488, %v7481
    %v8552 = vsub.f32 %v6489, %v7481
    %v8553 = vsub.f32 %v6490, %v7481
    %v8554 = vsub.f32 %v6491, %v7481
    %v8555 = vsub.f32 %v6492, %v7481
    %v8556 = vsub.f32 %v6493, %v7481
    %v8557 = vsub.f32 %v6494, %v7481
    %v8558 = vsub.f32 %v6495, %v7481
    %v8559 = vsub.f32 %v6496, %v7481
    %v8560 = vsub.f32 %v6497, %v7481
    %v8561 = vsub.f32 %v6498, %v7481
    %v8562 = vsub.f32 %v6499, %v7481
    %v8563 = vsub.f32 %v6500, %v7481
    %v8564 = vsub.f32 %v6501, %v7481
    %v8565 = vsub.f32 %v6502, %v7481
    %v8566 = vsub.f32 %v6503, %v7481
    %v8567 = vsub.f32 %v6504, %v7481
    %v8568 = vsub.f32 %v6505, %v7481
    %v8569 = vsub.f32 %v6506, %v7481
    %v8570 = vsub.f32 %v6507, %v7481
    %v8571 = vsub.f32 %v6508, %v7481
    %v8572 = vsub.f32 %v6509, %v7481
    %v8573 = vsub.f32 %v6510, %v7481
    %v8574 = vsub.f32 %v6511, %v7481
    %v8575 = vsub.f32 %v6512, %v7481
    %v8576 = vsub.f32 %v6513, %v7481
    %v8577 = vsub.f32 %v6514, %v7481
    %v8578 = vsub.f32 %v6515, %v7481
    %v8579 = vsub.f32 %v6516, %v7481
    %v8580 = vsub.f32 %v6517, %v7481
    %v8581 = vsub.f32 %v6518, %v7481
    %v8582 = vsub.f32 %v6519, %v7481
    %v8583 = vsub.f32 %v6520, %v7481
    %v8584 = vsub.f32 %v6521, %v7481
    %v8585 = vsub.f32 %v6522, %v7481
    %v8586 = vsub.f32 %v6523, %v7481
    %v8587 = vsub.f32 %v6524, %v7481
    %v8588 = vsub.f32 %v6525, %v7481
    %v8589 = vsub.f32 %v6526, %v7481
    %v8590 = vsub.f32 %v6527, %v7481
    %v8591 = vsub.f32 %v6528, %v7481
    %v8592 = vsub.f32 %v6529, %v7481
    %v8593 = vsub.f32 %v6530, %v7481
    %v8594 = vsub.f32 %v6531, %v7481
    %v8595 = vsub.f32 %v6532, %v7481
    %v8596 = vsub.f32 %v6533, %v7481
    %v8597 = vsub.f32 %v6534, %v7481
    %v8598 = vsub.f32 %v6535, %v7481
    %v8599 = vsub.f32 %v6536, %v7481
    %v8600 = vsub.f32 %v6537, %v7481
    %v8601 = vsub.f32 %v6538, %v7481
    %v8602 = vsub.f32 %v6539, %v7481
    %v8603 = vsub.f32 %v6540, %v7481
    %v8604 = vsub.f32 %v6541, %v7481
    %v8605 = vsub.f32 %v6542, %v7481
    %v8606 = vsub.f32 %v6543, %v7481
    %v8607 = vsub.f32 %v6544, %v7481
    %v8608 = vsub.f32 %v6545, %v7481
    %v8609 = vsub.f32 %v6546, %v7481
    %v8610 = vsub.f32 %v6547, %v7481
    %v8611 = vsub.f32 %v6548, %v7481
    %v8612 = vsub.f32 %v6549, %v7481
    %v8613 = vsub.f32 %v6550, %v7481
    %v8614 = vsub.f32 %v6551, %v7481
    %v8615 = vsub.f32 %v6552, %v7481
    %v8616 = vsub.f32 %v6553, %v7481
    %v8617 = vsub.f32 %v6554, %v7481
    %v8618 = vsub.f32 %v6555, %v7481
    %v8619 = vsub.f32 %v6556, %v7481
    %v8620 = vsub.f32 %v6557, %v7481
    %v8621 = vsub.f32 %v6558, %v7481
    %v8622 = vsub.f32 %v6559, %v7481
    %v8623 = vsub.f32 %v6560, %v7481
    %v8624 = vsub.f32 %v6561, %v7481
    %v8625 = vsub.f32 %v6562, %v7481
    %v8626 = vsub.f32 %v6563, %v7481
    %v8627 = vsub.f32 %v6564, %v7481
    %v8628 = vsub.f32 %v6565, %v7481
    %v8629 = vsub.f32 %v6566, %v7481
    %v8630 = vsub.f32 %v6567, %v7481
    %v8631 = vsub.f32 %v6568, %v7481
    %v8632 = vsub.f32 %v6569, %v7481
    %v8633 = vsub.f32 %v6570, %v7481
    %v8634 = vsub.f32 %v6571, %v7481
    %v8635 = vsub.f32 %v6572, %v7481
    %v8636 = vsub.f32 %v6573, %v7481
    %v8637 = vsub.f32 %v6574, %v7481
    %v8638 = vsub.f32 %v6575, %v7481
    %v8639 = vsub.f32 %v6576, %v7481
    %v8640 = vsub.f32 %v6577, %v7481
    %v8641 = vsub.f32 %v6578, %v7481
    %v8642 = vsub.f32 %v6579, %v7481
    %v8643 = vsub.f32 %v6580, %v7481
    %v8644 = vsub.f32 %v6581, %v7481
    %v8645 = vsub.f32 %v6582, %v7481
    %v8646 = vsub.f32 %v6583, %v7481
    %v8647 = vsub.f32 %v6584, %v7481
    %v8648 = vsub.f32 %v6585, %v7481
    %v8649 = vsub.f32 %v6586, %v7481
    %v8650 = vsub.f32 %v6587, %v7481
    %v8651 = vsub.f32 %v6588, %v7481
    %v8652 = vsub.f32 %v6589, %v7481
    %v8653 = vsub.f32 %v6590, %v7481
    %v8654 = vsub.f32 %v6591, %v7481
    %v8655 = vsub.f32 %v6592, %v7481
    %v8656 = vsub.f32 %v6593, %v7481
    %v8657 = vsub.f32 %v6594, %v7481
    %v8658 = vsub.f32 %v6595, %v7481
    %v8659 = vsub.f32 %v6596, %v7481
    %v8660 = vsub.f32 %v6597, %v7481
    %v8661 = vsub.f32 %v6598, %v7481
    %v8662 = vsub.f32 %v6599, %v7481
    %v8663 = vsub.f32 %v6600, %v7481
    %v8664 = vsub.f32 %v6601, %v7481
    %v8665 = vsub.f32 %v6602, %v7481
    %v8666 = vsub.f32 %v6603, %v7481
    %v8667 = vsub.f32 %v6604, %v7481
    %v8668 = vsub.f32 %v6605, %v7481
    %v8669 = vsub.f32 %v6606, %v7481
    %v8670 = vsub.f32 %v6607, %v7481
    %v8671 = vsub.f32 %v6608, %v7481
    %v8672 = vsub.f32 %v6609, %v7481
    %v8673 = vsub.f32 %v6610, %v7481
    %v8674 = vsub.f32 %v6611, %v7481
    %v8675 = vsub.f32 %v6612, %v7481
    %v8676 = vsub.f32 %v6613, %v7481
    %v8677 = vsub.f32 %v6614, %v7481
    %v8678 = vsub.f32 %v6615, %v7481
    %v8679 = vsub.f32 %v6616, %v7481
    %v8680 = vsub.f32 %v6617, %v7481
    %v8681 = vsub.f32 %v6618, %v7481
    %v8682 = vsub.f32 %v6619, %v7481
    %v8683 = vsub.f32 %v6620, %v7481
    %v8684 = vsub.f32 %v6621, %v7481
    %v8685 = vsub.f32 %v6622, %v7481
    %v8686 = vsub.f32 %v6623, %v7481
    %v8687 = vsub.f32 %v6624, %v7481
    %v8688 = vsub.f32 %v6625, %v7481
    %v8689 = vsub.f32 %v6626, %v7481
    %v8690 = vsub.f32 %v6627, %v7481
    %v8691 = vsub.f32 %v6628, %v7481
    %v8692 = vsub.f32 %v6629, %v7481
    %v8693 = vsub.f32 %v6630, %v7481
    %v8694 = vsub.f32 %v6631, %v7481
    %v8695 = vsub.f32 %v6632, %v7481
    %v8696 = vsub.f32 %v6633, %v7481
    %v8697 = vsub.f32 %v6634, %v7481
    %v8698 = vsub.f32 %v6635, %v7481
    %v8699 = vsub.f32 %v6636, %v7481
    %v8700 = vsub.f32 %v6637, %v7481
    %v8701 = vsub.f32 %v6638, %v7481
    %v8702 = vsub.f32 %v6639, %v7481
    %v8703 = vsub.f32 %v6640, %v7481
    %v8704 = vsub.f32 %v6641, %v7481
    %v8705 = vsub.f32 %v6642, %v7481
    %v8706 = vsub.f32 %v6643, %v7481
    %v8707 = vsub.f32 %v6644, %v7481
    %v8708 = vsub.f32 %v6645, %v7481
    %v8709 = vsub.f32 %v6646, %v7481
    %v8710 = vsub.f32 %v6647, %v7481
    %v8711 = vsub.f32 %v6648, %v7481
    %v8712 = vsub.f32 %v6649, %v7481
    %v8713 = vsub.f32 %v6650, %v7481
    %v8714 = vsub.f32 %v6651, %v7481
    %v8715 = vsub.f32 %v6652, %v7481
    %v8716 = vsub.f32 %v6653, %v7481
    %v8717 = vsub.f32 %v6654, %v7481
    %v8718 = vsub.f32 %v6655, %v7481
    %v8719 = vsub.f32 %v6656, %v7481
    %v8720 = vsub.f32 %v6657, %v7481
    %v8721 = vsub.f32 %v6658, %v7481
    %v8722 = vsub.f32 %v6659, %v7481
    %v8723 = vsub.f32 %v6660, %v7481
    %v8724 = vsub.f32 %v6661, %v7481
    %v8725 = vsub.f32 %v6662, %v7481
    %v8726 = vsub.f32 %v6663, %v7481
    %v8727 = vsub.f32 %v6664, %v7481
    %v8728 = vsub.f32 %v6665, %v7481
    %v8729 = vsub.f32 %v6666, %v7481
    %v8730 = vsub.f32 %v6667, %v7481
    %v8731 = vsub.f32 %v6668, %v7481
    %v8732 = vsub.f32 %v6669, %v7481
    %v8733 = vsub.f32 %v6670, %v7481
    %v8734 = vsub.f32 %v6671, %v7481
    %v8735 = vsub.f32 %v6672, %v7481
    %v8736 = vsub.f32 %v6673, %v7481
    %v8737 = vsub.f32 %v6674, %v7481
    %v8738 = vsub.f32 %v6675, %v7481
    %v8739 = vsub.f32 %v6676, %v7481
    %v8740 = vsub.f32 %v6677, %v7481
    %v8741 = vsub.f32 %v6678, %v7481
    %v8742 = vsub.f32 %v6679, %v7481
    %v8743 = vsub.f32 %v6680, %v7481
    %v8744 = vsub.f32 %v6681, %v7481
    %v8745 = vsub.f32 %v6682, %v7481
    %v8746 = vsub.f32 %v6683, %v7481
    %v8747 = vsub.f32 %v6684, %v7481
    %v8748 = vsub.f32 %v6685, %v7481
    %v8749 = vsub.f32 %v6686, %v7481
    %v8750 = vsub.f32 %v6687, %v7481
    %v8751 = vsub.f32 %v6688, %v7481
    %v8752 = vsub.f32 %v6689, %v7481
    %v8753 = vsub.f32 %v6690, %v7481
    %v8754 = vsub.f32 %v6691, %v7481
    %v8755 = vsub.f32 %v6692, %v7481
    %v8756 = vsub.f32 %v6693, %v7481
    %v8757 = vsub.f32 %v6694, %v7481
    %v8758 = vsub.f32 %v6695, %v7481
    %v8759 = vsub.f32 %v6696, %v7481
    %v8760 = vsub.f32 %v6697, %v7481
    %v8761 = vsub.f32 %v6698, %v7481
    %v8762 = vsub.f32 %v6699, %v7481
    %v8763 = vsub.f32 %v6700, %v7481
    %v8764 = vsub.f32 %v6701, %v7481
    %v8765 = vsub.f32 %v6702, %v7481
    %v8766 = vsub.f32 %v6703, %v7481
    %v8767 = vsub.f32 %v6704, %v7481
    %v8768 = vsub.f32 %v6705, %v7481
    %v8769 = vsub.f32 %v6706, %v7481
    %v8770 = vsub.f32 %v6707, %v7481
    %v8771 = vsub.f32 %v6708, %v7481
    %v8772 = vsub.f32 %v6709, %v7481
    %v8773 = vsub.f32 %v6710, %v7481
    %v8774 = vsub.f32 %v6711, %v7481
    %v8775 = vsub.f32 %v6712, %v7481
    %v8776 = vsub.f32 %v6713, %v7481
    %v8777 = vsub.f32 %v6714, %v7481
    %v8778 = vsub.f32 %v6715, %v7481
    %v8779 = vsub.f32 %v6716, %v7481
    %v8780 = vsub.f32 %v6717, %v7481
    %v8781 = vsub.f32 %v6718, %v7481
    %v8782 = vsub.f32 %v6719, %v7481
    %v8783 = vsub.f32 %v6720, %v7481
    %v8784 = vsub.f32 %v6721, %v7481
    %v8785 = vsub.f32 %v6722, %v7481
    %v8786 = vsub.f32 %v6723, %v7481
    %v8787 = vsub.f32 %v6724, %v7481
    %v8788 = vsub.f32 %v6725, %v7481
    %v8789 = vsub.f32 %v6726, %v7481
    %v8790 = vsub.f32 %v6727, %v7481
    %v8791 = vsub.f32 %v6728, %v7481
    %v8792 = vsub.f32 %v6729, %v7481
    %v8793 = vsub.f32 %v6730, %v7481
    %v8794 = vsub.f32 %v6731, %v7481
    %v8795 = vsub.f32 %v6732, %v7481
    %v8796 = vsub.f32 %v6733, %v7481
    %v8797 = vsub.f32 %v6734, %v7481
    %v8798 = vsub.f32 %v6735, %v7481
    %v8799 = vsub.f32 %v6736, %v7481
    %v8800 = vsub.f32 %v6737, %v7481
    %v8801 = vsub.f32 %v6738, %v7481
    %v8802 = vsub.f32 %v6739, %v7481
    %v8803 = vsub.f32 %v6740, %v7481
    %v8804 = vsub.f32 %v6741, %v7481
    %v8805 = vsub.f32 %v6742, %v7481
    %v8806 = vsub.f32 %v6743, %v7481
    %v8807 = vsub.f32 %v6744, %v7481
    %v8808 = vsub.f32 %v6745, %v7481
    %v8809 = vsub.f32 %v6746, %v7481
    %v8810 = vsub.f32 %v6747, %v7481
    %v8811 = vsub.f32 %v6748, %v7481
    %v8812 = vsub.f32 %v6749, %v7481
    %v8813 = vsub.f32 %v6750, %v7481
    %v8814 = vsub.f32 %v6751, %v7481
    %v8815 = vsub.f32 %v6752, %v7481
    %v8816 = vsub.f32 %v6753, %v7481
    %v8817 = vsub.f32 %v6754, %v7481
    %v8818 = vsub.f32 %v6755, %v7481
    %v8819 = vsub.f32 %v6756, %v7481
    %v8820 = vsub.f32 %v6757, %v7481
    %v8821 = vsub.f32 %v6758, %v7481
    %v8822 = vsub.f32 %v6759, %v7481
    %v8823 = vsub.f32 %v6760, %v7481
    %v8824 = vsub.f32 %v6761, %v7481
    %v8825 = vsub.f32 %v6762, %v7481
    %v8826 = vsub.f32 %v6763, %v7481
    %v8827 = vsub.f32 %v6764, %v7481
    %v8828 = vsub.f32 %v6765, %v7481
    %v8829 = vsub.f32 %v6766, %v7481
    %v8830 = vsub.f32 %v6767, %v7481
    %v8831 = vsub.f32 %v6768, %v7481
    %v8832 = vsub.f32 %v6769, %v7481
    %v8833 = vsub.f32 %v6770, %v7481
    %v8834 = vsub.f32 %v6771, %v7481
    %v8835 = vsub.f32 %v6772, %v7481
    %v8836 = vsub.f32 %v6773, %v7481
    %v8837 = vsub.f32 %v6774, %v7481
    %v8838 = vsub.f32 %v6775, %v7481
    %v8839 = vsub.f32 %v6776, %v7481
    %v8840 = vsub.f32 %v6777, %v7481
    %v8841 = vsub.f32 %v6778, %v7481
    %v8842 = vsub.f32 %v6779, %v7481
    %v8843 = vsub.f32 %v6780, %v7481
    %v8844 = vsub.f32 %v6781, %v7481
    %v8845 = vsub.f32 %v6782, %v7481
    %v8846 = vsub.f32 %v6783, %v7481
    %v8847 = vsub.f32 %v6784, %v7481
    %v8848 = vsub.f32 %v6785, %v7481
    %v8849 = vsub.f32 %v6786, %v7481
    %v8850 = vsub.f32 %v6787, %v7481
    %v8851 = vsub.f32 %v6788, %v7481
    %v8852 = vsub.f32 %v6789, %v7481
    %v8853 = vsub.f32 %v6790, %v7481
    %v8854 = vsub.f32 %v6791, %v7481
    %v8855 = vsub.f32 %v6792, %v7481
    %v8856 = vsub.f32 %v6793, %v7481
    %v8857 = vsub.f32 %v6794, %v7481
    %v8858 = vsub.f32 %v6795, %v7481
    %v8859 = vsub.f32 %v6796, %v7481
    %v8860 = vsub.f32 %v6797, %v7481
    %v8861 = vsub.f32 %v6798, %v7481
    %v8862 = vsub.f32 %v6799, %v7481
    %v8863 = vsub.f32 %v6800, %v7481
    %v8864 = vsub.f32 %v6801, %v7481
    %v8865 = vsub.f32 %v6802, %v7481
    %v8866 = vsub.f32 %v6803, %v7481
    %v8867 = vsub.f32 %v6804, %v7481
    %v8868 = vsub.f32 %v6805, %v7481
    %v8869 = vsub.f32 %v6806, %v7481
    %v8870 = vsub.f32 %v6807, %v7481
    %v8871 = vsub.f32 %v6808, %v7481
    %v8872 = vsub.f32 %v6809, %v7481
    %v8873 = vsub.f32 %v6810, %v7481
    %v8874 = vsub.f32 %v6811, %v7481
    %v8875 = vsub.f32 %v6812, %v7481
    %v8876 = vsub.f32 %v6813, %v7481
    %v8877 = vsub.f32 %v6814, %v7481
    %v8878 = vsub.f32 %v6815, %v7481
    %v8879 = vsub.f32 %v6816, %v7481
    %v8880 = vsub.f32 %v6817, %v7481
    %v8881 = vsub.f32 %v6818, %v7481
    %v8882 = vsub.f32 %v6819, %v7481
    %v8883 = vsub.f32 %v6820, %v7481
    %v8884 = vsub.f32 %v6821, %v7481
    %v8885 = vsub.f32 %v6822, %v7481
    %v8886 = vsub.f32 %v6823, %v7481
    %v8887 = vsub.f32 %v6824, %v7481
    %v8888 = vsub.f32 %v6825, %v7481
    %v8889 = vsub.f32 %v6826, %v7481
    %v8890 = vsub.f32 %v6827, %v7481
    %v8891 = vsub.f32 %v6828, %v7481
    %v8892 = vsub.f32 %v6829, %v7481
    %v8893 = vsub.f32 %v6830, %v7481
    %v8894 = vsub.f32 %v6831, %v7481
    %v8895 = vsub.f32 %v6832, %v7481
    %v8896 = vsub.f32 %v6833, %v7481
    %v8897 = vsub.f32 %v6834, %v7481
    %v8898 = vsub.f32 %v6835, %v7481
    %v8899 = vsub.f32 %v6836, %v7481
    %v8900 = vsub.f32 %v6837, %v7481
    %v8901 = vsub.f32 %v6838, %v7481
    %v8902 = vsub.f32 %v6839, %v7481
    %v8903 = vsub.f32 %v6840, %v7481
    %v8904 = vsub.f32 %v6841, %v7481
    %v8905 = vsub.f32 %v6842, %v7481
    %v8906 = vsub.f32 %v6843, %v7481
    %v8907 = vsub.f32 %v6844, %v7481
    %v8908 = vsub.f32 %v6845, %v7481
    %v8909 = vsub.f32 %v6846, %v7481
    %v8910 = vsub.f32 %v6847, %v7481
    %v8911 = vsub.f32 %v6848, %v7481
    %v8912 = vsub.f32 %v6849, %v7481
    %v8913 = vsub.f32 %v6850, %v7481
    %v8914 = vsub.f32 %v6851, %v7481
    %v8915 = vsub.f32 %v6852, %v7481
    %v8916 = vsub.f32 %v6853, %v7481
    %v8917 = vsub.f32 %v6854, %v7481
    %v8918 = vsub.f32 %v6855, %v7481
    %v8919 = vsub.f32 %v6856, %v7481
    %v8920 = vsub.f32 %v6857, %v7481
    %v8921 = vsub.f32 %v6858, %v7481
    %v8922 = vsub.f32 %v6859, %v7481
    %v8923 = vsub.f32 %v6860, %v7481
    %v8924 = vsub.f32 %v6861, %v7481
    %v8925 = vsub.f32 %v6862, %v7481
    %v8926 = vsub.f32 %v6863, %v7481
    %v8927 = vsub.f32 %v6864, %v7481
    %v8928 = vsub.f32 %v6865, %v7481
    %v8929 = vsub.f32 %v6866, %v7481
    %v8930 = vsub.f32 %v6867, %v7481
    %v8931 = vsub.f32 %v6868, %v7481
    %v8932 = vsub.f32 %v6869, %v7481
    %v8933 = vsub.f32 %v6870, %v7481
    %v8934 = vsub.f32 %v6871, %v7481
    %v8935 = vsub.f32 %v6872, %v7481
    %v8936 = vsub.f32 %v6873, %v7481
    %v8937 = vsub.f32 %v6874, %v7481
    %v8938 = vsub.f32 %v6875, %v7481
    %v8939 = vsub.f32 %v6876, %v7481
    %v8940 = vsub.f32 %v6877, %v7481
    %v8941 = vsub.f32 %v6878, %v7481
    %v8942 = vsub.f32 %v6879, %v7481
    %v8943 = vsub.f32 %v6880, %v7481
    %v8944 = vsub.f32 %v6881, %v7481
    %v8945 = vsub.f32 %v6882, %v7481
    %v8946 = vsub.f32 %v6883, %v7481
    %v8947 = vsub.f32 %v6884, %v7481
    %v8948 = vsub.f32 %v6885, %v7481
    %v8949 = vsub.f32 %v6886, %v7481
    %v8950 = vsub.f32 %v6887, %v7481
    %v8951 = vsub.f32 %v6888, %v7481
    %v8952 = vsub.f32 %v6889, %v7481
    %v8953 = vsub.f32 %v6890, %v7481
    %v8954 = vsub.f32 %v6891, %v7481
    %v8955 = vsub.f32 %v6892, %v7481
    %v8956 = vsub.f32 %v6893, %v7481
    %v8957 = vsub.f32 %v6894, %v7481
    %v8958 = vsub.f32 %v6895, %v7481
    %v8959 = vsub.f32 %v6896, %v7481
    %v8960 = vsub.f32 %v6897, %v7481
    %v8961 = vsub.f32 %v6898, %v7481
    %v8962 = vsub.f32 %v6899, %v7481
    %v8963 = vsub.f32 %v6900, %v7481
    %v8964 = vsub.f32 %v6901, %v7481
    %v8965 = vsub.f32 %v6902, %v7481
    %v8966 = vsub.f32 %v6903, %v7481
    %v8967 = vsub.f32 %v6904, %v7481
    %v8968 = vsub.f32 %v6905, %v7481
    %v8969 = vsub.f32 %v6906, %v7481
    %v8970 = vsub.f32 %v6907, %v7481
    %v8971 = vsub.f32 %v6908, %v7481
    %v8972 = vsub.f32 %v6909, %v7481
    %v8973 = vsub.f32 %v6910, %v7481
    %v8974 = vsub.f32 %v6911, %v7481
    %v8975 = vsub.f32 %v6912, %v7481
    %v8976 = vsub.f32 %v6913, %v7481
    %v8977 = vsub.f32 %v6914, %v7481
    %v8978 = vsub.f32 %v6915, %v7481
    %v8979 = vsub.f32 %v6916, %v7481
    %v8980 = vsub.f32 %v6917, %v7481
    %v8981 = vsub.f32 %v6918, %v7481
    %v8982 = vsub.f32 %v6919, %v7481
    %v8983 = vsub.f32 %v6920, %v7481
    %v8984 = vsub.f32 %v6921, %v7481
    %v8985 = vsub.f32 %v6922, %v7481
    %v8986 = vsub.f32 %v6923, %v7481
    %v8987 = vsub.f32 %v6924, %v7481
    %v8988 = vsub.f32 %v6925, %v7481
    %v8989 = vsub.f32 %v6926, %v7481
    %v8990 = vsub.f32 %v6927, %v7481
    %v8991 = vsub.f32 %v6928, %v7481
    %v8992 = vsub.f32 %v6929, %v7481
    %v8993 = vsub.f32 %v6930, %v7481
    %v8994 = vsub.f32 %v6931, %v7481
    %v8995 = vsub.f32 %v6932, %v7481
    %v8996 = vsub.f32 %v6933, %v7481
    %v8997 = vsub.f32 %v6934, %v7481
    %v8998 = vsub.f32 %v6935, %v7481
    %v8999 = vsub.f32 %v6936, %v7481
    %v9000 = vsub.f32 %v6937, %v7481
    %v9001 = vsub.f32 %v6938, %v7481
    %v9002 = vsub.f32 %v6939, %v7481
    %v9003 = vsub.f32 %v6940, %v7481
    %v9004 = vsub.f32 %v6941, %v7481
    %v9005 = vsub.f32 %v6942, %v7481
    %v9006 = vsub.f32 %v6943, %v7481
    %v9007 = vsub.f32 %v6944, %v7481
    %v9008 = vsub.f32 %v6945, %v7481
    %v9009 = vsub.f32 %v6946, %v7481
    %v9010 = vsub.f32 %v6947, %v7481
    %v9011 = vsub.f32 %v6948, %v7481
    %v9012 = vsub.f32 %v6949, %v7481
    %v9013 = vsub.f32 %v6950, %v7481
    %v9014 = vsub.f32 %v6951, %v7481
    %v9015 = vsub.f32 %v6952, %v7481
    %v9016 = vsub.f32 %v6953, %v7481
    %v9017 = vsub.f32 %v6954, %v7481
    %v9018 = vsub.f32 %v6955, %v7481
    %v9019 = vsub.f32 %v6956, %v7481
    %v9020 = vsub.f32 %v6957, %v7481
    %v9021 = vsub.f32 %v6958, %v7481
    %v9022 = vsub.f32 %v6959, %v7481
    %v9023 = vsub.f32 %v6960, %v7481
    %v9024 = vsub.f32 %v6961, %v7481
    %v9025 = vsub.f32 %v6962, %v7481
    %v9026 = vsub.f32 %v6963, %v7481
    %v9027 = vadd.f32 %v8514, 1e-05
    %v9028 = vrsqrt.pop %v9027
    %v9029 = vmul.f32 %v9028, %v9027
    %v9030 = vmul.f32 %v9029, %v9028
    %v9031 = vmul.f32 0.5, %v9030
    %v9032 = vsub.f32 1.5, %v9031
    %v9033 = vmul.f32 %v9028, %v9032
    %vm9034 = vweird.f32 %v9027
    %vm9035 = vweird.f32 %v9028
    %vm9036 = vmor %vm9034, %vm9035
    %v9037 = vsel %vm9036, %v9028, %v9033
    %v9038 = vmul.f32 %v8515, %v9037
    %v9039 = vmul.f32 %v8516, %v9037
    %v9040 = vmul.f32 %v8517, %v9037
    %v9041 = vmul.f32 %v8518, %v9037
    %v9042 = vmul.f32 %v8519, %v9037
    %v9043 = vmul.f32 %v8520, %v9037
    %v9044 = vmul.f32 %v8521, %v9037
    %v9045 = vmul.f32 %v8522, %v9037
    %v9046 = vmul.f32 %v8523, %v9037
    %v9047 = vmul.f32 %v8524, %v9037
    %v9048 = vmul.f32 %v8525, %v9037
    %v9049 = vmul.f32 %v8526, %v9037
    %v9050 = vmul.f32 %v8527, %v9037
    %v9051 = vmul.f32 %v8528, %v9037
    %v9052 = vmul.f32 %v8529, %v9037
    %v9053 = vmul.f32 %v8530, %v9037
    %v9054 = vmul.f32 %v8531, %v9037
    %v9055 = vmul.f32 %v8532, %v9037
    %v9056 = vmul.f32 %v8533, %v9037
    %v9057 = vmul.f32 %v8534, %v9037
    %v9058 = vmul.f32 %v8535, %v9037
    %v9059 = vmul.f32 %v8536, %v9037
    %v9060 = vmul.f32 %v8537, %v9037
    %v9061 = vmul.f32 %v8538, %v9037
    %v9062 = vmul.f32 %v8539, %v9037
    %v9063 = vmul.f32 %v8540, %v9037
    %v9064 = vmul.f32 %v8541, %v9037
    %v9065 = vmul.f32 %v8542, %v9037
    %v9066 = vmul.f32 %v8543, %v9037
    %v9067 = vmul.f32 %v8544, %v9037
    %v9068 = vmul.f32 %v8545, %v9037
    %v9069 = vmul.f32 %v8546, %v9037
    %v9070 = vmul.f32 %v8547, %v9037
    %v9071 = vmul.f32 %v8548, %v9037
    %v9072 = vmul.f32 %v8549, %v9037
    %v9073 = vmul.f32 %v8550, %v9037
    %v9074 = vmul.f32 %v8551, %v9037
    %v9075 = vmul.f32 %v8552, %v9037
    %v9076 = vmul.f32 %v8553, %v9037
    %v9077 = vmul.f32 %v8554, %v9037
    %v9078 = vmul.f32 %v8555, %v9037
    %v9079 = vmul.f32 %v8556, %v9037
    %v9080 = vmul.f32 %v8557, %v9037
    %v9081 = vmul.f32 %v8558, %v9037
    %v9082 = vmul.f32 %v8559, %v9037
    %v9083 = vmul.f32 %v8560, %v9037
    %v9084 = vmul.f32 %v8561, %v9037
    %v9085 = vmul.f32 %v8562, %v9037
    %v9086 = vmul.f32 %v8563, %v9037
    %v9087 = vmul.f32 %v8564, %v9037
    %v9088 = vmul.f32 %v8565, %v9037
    %v9089 = vmul.f32 %v8566, %v9037
    %v9090 = vmul.f32 %v8567, %v9037
    %v9091 = vmul.f32 %v8568, %v9037
    %v9092 = vmul.f32 %v8569, %v9037
    %v9093 = vmul.f32 %v8570, %v9037
    %v9094 = vmul.f32 %v8571, %v9037
    %v9095 = vmul.f32 %v8572, %v9037
    %v9096 = vmul.f32 %v8573, %v9037
    %v9097 = vmul.f32 %v8574, %v9037
    %v9098 = vmul.f32 %v8575, %v9037
    %v9099 = vmul.f32 %v8576, %v9037
    %v9100 = vmul.f32 %v8577, %v9037
    %v9101 = vmul.f32 %v8578, %v9037
    %v9102 = vmul.f32 %v8579, %v9037
    %v9103 = vmul.f32 %v8580, %v9037
    %v9104 = vmul.f32 %v8581, %v9037
    %v9105 = vmul.f32 %v8582, %v9037
    %v9106 = vmul.f32 %v8583, %v9037
    %v9107 = vmul.f32 %v8584, %v9037
    %v9108 = vmul.f32 %v8585, %v9037
    %v9109 = vmul.f32 %v8586, %v9037
    %v9110 = vmul.f32 %v8587, %v9037
    %v9111 = vmul.f32 %v8588, %v9037
    %v9112 = vmul.f32 %v8589, %v9037
    %v9113 = vmul.f32 %v8590, %v9037
    %v9114 = vmul.f32 %v8591, %v9037
    %v9115 = vmul.f32 %v8592, %v9037
    %v9116 = vmul.f32 %v8593, %v9037
    %v9117 = vmul.f32 %v8594, %v9037
    %v9118 = vmul.f32 %v8595, %v9037
    %v9119 = vmul.f32 %v8596, %v9037
    %v9120 = vmul.f32 %v8597, %v9037
    %v9121 = vmul.f32 %v8598, %v9037
    %v9122 = vmul.f32 %v8599, %v9037
    %v9123 = vmul.f32 %v8600, %v9037
    %v9124 = vmul.f32 %v8601, %v9037
    %v9125 = vmul.f32 %v8602, %v9037
    %v9126 = vmul.f32 %v8603, %v9037
    %v9127 = vmul.f32 %v8604, %v9037
    %v9128 = vmul.f32 %v8605, %v9037
    %v9129 = vmul.f32 %v8606, %v9037
    %v9130 = vmul.f32 %v8607, %v9037
    %v9131 = vmul.f32 %v8608, %v9037
    %v9132 = vmul.f32 %v8609, %v9037
    %v9133 = vmul.f32 %v8610, %v9037
    %v9134 = vmul.f32 %v8611, %v9037
    %v9135 = vmul.f32 %v8612, %v9037
    %v9136 = vmul.f32 %v8613, %v9037
    %v9137 = vmul.f32 %v8614, %v9037
    %v9138 = vmul.f32 %v8615, %v9037
    %v9139 = vmul.f32 %v8616, %v9037
    %v9140 = vmul.f32 %v8617, %v9037
    %v9141 = vmul.f32 %v8618, %v9037
    %v9142 = vmul.f32 %v8619, %v9037
    %v9143 = vmul.f32 %v8620, %v9037
    %v9144 = vmul.f32 %v8621, %v9037
    %v9145 = vmul.f32 %v8622, %v9037
    %v9146 = vmul.f32 %v8623, %v9037
    %v9147 = vmul.f32 %v8624, %v9037
    %v9148 = vmul.f32 %v8625, %v9037
    %v9149 = vmul.f32 %v8626, %v9037
    %v9150 = vmul.f32 %v8627, %v9037
    %v9151 = vmul.f32 %v8628, %v9037
    %v9152 = vmul.f32 %v8629, %v9037
    %v9153 = vmul.f32 %v8630, %v9037
    %v9154 = vmul.f32 %v8631, %v9037
    %v9155 = vmul.f32 %v8632, %v9037
    %v9156 = vmul.f32 %v8633, %v9037
    %v9157 = vmul.f32 %v8634, %v9037
    %v9158 = vmul.f32 %v8635, %v9037
    %v9159 = vmul.f32 %v8636, %v9037
    %v9160 = vmul.f32 %v8637, %v9037
    %v9161 = vmul.f32 %v8638, %v9037
    %v9162 = vmul.f32 %v8639, %v9037
    %v9163 = vmul.f32 %v8640, %v9037
    %v9164 = vmul.f32 %v8641, %v9037
    %v9165 = vmul.f32 %v8642, %v9037
    %v9166 = vmul.f32 %v8643, %v9037
    %v9167 = vmul.f32 %v8644, %v9037
    %v9168 = vmul.f32 %v8645, %v9037
    %v9169 = vmul.f32 %v8646, %v9037
    %v9170 = vmul.f32 %v8647, %v9037
    %v9171 = vmul.f32 %v8648, %v9037
    %v9172 = vmul.f32 %v8649, %v9037
    %v9173 = vmul.f32 %v8650, %v9037
    %v9174 = vmul.f32 %v8651, %v9037
    %v9175 = vmul.f32 %v8652, %v9037
    %v9176 = vmul.f32 %v8653, %v9037
    %v9177 = vmul.f32 %v8654, %v9037
    %v9178 = vmul.f32 %v8655, %v9037
    %v9179 = vmul.f32 %v8656, %v9037
    %v9180 = vmul.f32 %v8657, %v9037
    %v9181 = vmul.f32 %v8658, %v9037
    %v9182 = vmul.f32 %v8659, %v9037
    %v9183 = vmul.f32 %v8660, %v9037
    %v9184 = vmul.f32 %v8661, %v9037
    %v9185 = vmul.f32 %v8662, %v9037
    %v9186 = vmul.f32 %v8663, %v9037
    %v9187 = vmul.f32 %v8664, %v9037
    %v9188 = vmul.f32 %v8665, %v9037
    %v9189 = vmul.f32 %v8666, %v9037
    %v9190 = vmul.f32 %v8667, %v9037
    %v9191 = vmul.f32 %v8668, %v9037
    %v9192 = vmul.f32 %v8669, %v9037
    %v9193 = vmul.f32 %v8670, %v9037
    %v9194 = vmul.f32 %v8671, %v9037
    %v9195 = vmul.f32 %v8672, %v9037
    %v9196 = vmul.f32 %v8673, %v9037
    %v9197 = vmul.f32 %v8674, %v9037
    %v9198 = vmul.f32 %v8675, %v9037
    %v9199 = vmul.f32 %v8676, %v9037
    %v9200 = vmul.f32 %v8677, %v9037
    %v9201 = vmul.f32 %v8678, %v9037
    %v9202 = vmul.f32 %v8679, %v9037
    %v9203 = vmul.f32 %v8680, %v9037
    %v9204 = vmul.f32 %v8681, %v9037
    %v9205 = vmul.f32 %v8682, %v9037
    %v9206 = vmul.f32 %v8683, %v9037
    %v9207 = vmul.f32 %v8684, %v9037
    %v9208 = vmul.f32 %v8685, %v9037
    %v9209 = vmul.f32 %v8686, %v9037
    %v9210 = vmul.f32 %v8687, %v9037
    %v9211 = vmul.f32 %v8688, %v9037
    %v9212 = vmul.f32 %v8689, %v9037
    %v9213 = vmul.f32 %v8690, %v9037
    %v9214 = vmul.f32 %v8691, %v9037
    %v9215 = vmul.f32 %v8692, %v9037
    %v9216 = vmul.f32 %v8693, %v9037
    %v9217 = vmul.f32 %v8694, %v9037
    %v9218 = vmul.f32 %v8695, %v9037
    %v9219 = vmul.f32 %v8696, %v9037
    %v9220 = vmul.f32 %v8697, %v9037
    %v9221 = vmul.f32 %v8698, %v9037
    %v9222 = vmul.f32 %v8699, %v9037
    %v9223 = vmul.f32 %v8700, %v9037
    %v9224 = vmul.f32 %v8701, %v9037
    %v9225 = vmul.f32 %v8702, %v9037
    %v9226 = vmul.f32 %v8703, %v9037
    %v9227 = vmul.f32 %v8704, %v9037
    %v9228 = vmul.f32 %v8705, %v9037
    %v9229 = vmul.f32 %v8706, %v9037
    %v9230 = vmul.f32 %v8707, %v9037
    %v9231 = vmul.f32 %v8708, %v9037
    %v9232 = vmul.f32 %v8709, %v9037
    %v9233 = vmul.f32 %v8710, %v9037
    %v9234 = vmul.f32 %v8711, %v9037
    %v9235 = vmul.f32 %v8712, %v9037
    %v9236 = vmul.f32 %v8713, %v9037
    %v9237 = vmul.f32 %v8714, %v9037
    %v9238 = vmul.f32 %v8715, %v9037
    %v9239 = vmul.f32 %v8716, %v9037
    %v9240 = vmul.f32 %v8717, %v9037
    %v9241 = vmul.f32 %v8718, %v9037
    %v9242 = vmul.f32 %v8719, %v9037
    %v9243 = vmul.f32 %v8720, %v9037
    %v9244 = vmul.f32 %v8721, %v9037
    %v9245 = vmul.f32 %v8722, %v9037
    %v9246 = vmul.f32 %v8723, %v9037
    %v9247 = vmul.f32 %v8724, %v9037
    %v9248 = vmul.f32 %v8725, %v9037
    %v9249 = vmul.f32 %v8726, %v9037
    %v9250 = vmul.f32 %v8727, %v9037
    %v9251 = vmul.f32 %v8728, %v9037
    %v9252 = vmul.f32 %v8729, %v9037
    %v9253 = vmul.f32 %v8730, %v9037
    %v9254 = vmul.f32 %v8731, %v9037
    %v9255 = vmul.f32 %v8732, %v9037
    %v9256 = vmul.f32 %v8733, %v9037
    %v9257 = vmul.f32 %v8734, %v9037
    %v9258 = vmul.f32 %v8735, %v9037
    %v9259 = vmul.f32 %v8736, %v9037
    %v9260 = vmul.f32 %v8737, %v9037
    %v9261 = vmul.f32 %v8738, %v9037
    %v9262 = vmul.f32 %v8739, %v9037
    %v9263 = vmul.f32 %v8740, %v9037
    %v9264 = vmul.f32 %v8741, %v9037
    %v9265 = vmul.f32 %v8742, %v9037
    %v9266 = vmul.f32 %v8743, %v9037
    %v9267 = vmul.f32 %v8744, %v9037
    %v9268 = vmul.f32 %v8745, %v9037
    %v9269 = vmul.f32 %v8746, %v9037
    %v9270 = vmul.f32 %v8747, %v9037
    %v9271 = vmul.f32 %v8748, %v9037
    %v9272 = vmul.f32 %v8749, %v9037
    %v9273 = vmul.f32 %v8750, %v9037
    %v9274 = vmul.f32 %v8751, %v9037
    %v9275 = vmul.f32 %v8752, %v9037
    %v9276 = vmul.f32 %v8753, %v9037
    %v9277 = vmul.f32 %v8754, %v9037
    %v9278 = vmul.f32 %v8755, %v9037
    %v9279 = vmul.f32 %v8756, %v9037
    %v9280 = vmul.f32 %v8757, %v9037
    %v9281 = vmul.f32 %v8758, %v9037
    %v9282 = vmul.f32 %v8759, %v9037
    %v9283 = vmul.f32 %v8760, %v9037
    %v9284 = vmul.f32 %v8761, %v9037
    %v9285 = vmul.f32 %v8762, %v9037
    %v9286 = vmul.f32 %v8763, %v9037
    %v9287 = vmul.f32 %v8764, %v9037
    %v9288 = vmul.f32 %v8765, %v9037
    %v9289 = vmul.f32 %v8766, %v9037
    %v9290 = vmul.f32 %v8767, %v9037
    %v9291 = vmul.f32 %v8768, %v9037
    %v9292 = vmul.f32 %v8769, %v9037
    %v9293 = vmul.f32 %v8770, %v9037
    %v9294 = vmul.f32 %v8771, %v9037
    %v9295 = vmul.f32 %v8772, %v9037
    %v9296 = vmul.f32 %v8773, %v9037
    %v9297 = vmul.f32 %v8774, %v9037
    %v9298 = vmul.f32 %v8775, %v9037
    %v9299 = vmul.f32 %v8776, %v9037
    %v9300 = vmul.f32 %v8777, %v9037
    %v9301 = vmul.f32 %v8778, %v9037
    %v9302 = vmul.f32 %v8779, %v9037
    %v9303 = vmul.f32 %v8780, %v9037
    %v9304 = vmul.f32 %v8781, %v9037
    %v9305 = vmul.f32 %v8782, %v9037
    %v9306 = vmul.f32 %v8783, %v9037
    %v9307 = vmul.f32 %v8784, %v9037
    %v9308 = vmul.f32 %v8785, %v9037
    %v9309 = vmul.f32 %v8786, %v9037
    %v9310 = vmul.f32 %v8787, %v9037
    %v9311 = vmul.f32 %v8788, %v9037
    %v9312 = vmul.f32 %v8789, %v9037
    %v9313 = vmul.f32 %v8790, %v9037
    %v9314 = vmul.f32 %v8791, %v9037
    %v9315 = vmul.f32 %v8792, %v9037
    %v9316 = vmul.f32 %v8793, %v9037
    %v9317 = vmul.f32 %v8794, %v9037
    %v9318 = vmul.f32 %v8795, %v9037
    %v9319 = vmul.f32 %v8796, %v9037
    %v9320 = vmul.f32 %v8797, %v9037
    %v9321 = vmul.f32 %v8798, %v9037
    %v9322 = vmul.f32 %v8799, %v9037
    %v9323 = vmul.f32 %v8800, %v9037
    %v9324 = vmul.f32 %v8801, %v9037
    %v9325 = vmul.f32 %v8802, %v9037
    %v9326 = vmul.f32 %v8803, %v9037
    %v9327 = vmul.f32 %v8804, %v9037
    %v9328 = vmul.f32 %v8805, %v9037
    %v9329 = vmul.f32 %v8806, %v9037
    %v9330 = vmul.f32 %v8807, %v9037
    %v9331 = vmul.f32 %v8808, %v9037
    %v9332 = vmul.f32 %v8809, %v9037
    %v9333 = vmul.f32 %v8810, %v9037
    %v9334 = vmul.f32 %v8811, %v9037
    %v9335 = vmul.f32 %v8812, %v9037
    %v9336 = vmul.f32 %v8813, %v9037
    %v9337 = vmul.f32 %v8814, %v9037
    %v9338 = vmul.f32 %v8815, %v9037
    %v9339 = vmul.f32 %v8816, %v9037
    %v9340 = vmul.f32 %v8817, %v9037
    %v9341 = vmul.f32 %v8818, %v9037
    %v9342 = vmul.f32 %v8819, %v9037
    %v9343 = vmul.f32 %v8820, %v9037
    %v9344 = vmul.f32 %v8821, %v9037
    %v9345 = vmul.f32 %v8822, %v9037
    %v9346 = vmul.f32 %v8823, %v9037
    %v9347 = vmul.f32 %v8824, %v9037
    %v9348 = vmul.f32 %v8825, %v9037
    %v9349 = vmul.f32 %v8826, %v9037
    %v9350 = vmul.f32 %v8827, %v9037
    %v9351 = vmul.f32 %v8828, %v9037
    %v9352 = vmul.f32 %v8829, %v9037
    %v9353 = vmul.f32 %v8830, %v9037
    %v9354 = vmul.f32 %v8831, %v9037
    %v9355 = vmul.f32 %v8832, %v9037
    %v9356 = vmul.f32 %v8833, %v9037
    %v9357 = vmul.f32 %v8834, %v9037
    %v9358 = vmul.f32 %v8835, %v9037
    %v9359 = vmul.f32 %v8836, %v9037
    %v9360 = vmul.f32 %v8837, %v9037
    %v9361 = vmul.f32 %v8838, %v9037
    %v9362 = vmul.f32 %v8839, %v9037
    %v9363 = vmul.f32 %v8840, %v9037
    %v9364 = vmul.f32 %v8841, %v9037
    %v9365 = vmul.f32 %v8842, %v9037
    %v9366 = vmul.f32 %v8843, %v9037
    %v9367 = vmul.f32 %v8844, %v9037
    %v9368 = vmul.f32 %v8845, %v9037
    %v9369 = vmul.f32 %v8846, %v9037
    %v9370 = vmul.f32 %v8847, %v9037
    %v9371 = vmul.f32 %v8848, %v9037
    %v9372 = vmul.f32 %v8849, %v9037
    %v9373 = vmul.f32 %v8850, %v9037
    %v9374 = vmul.f32 %v8851, %v9037
    %v9375 = vmul.f32 %v8852, %v9037
    %v9376 = vmul.f32 %v8853, %v9037
    %v9377 = vmul.f32 %v8854, %v9037
    %v9378 = vmul.f32 %v8855, %v9037
    %v9379 = vmul.f32 %v8856, %v9037
    %v9380 = vmul.f32 %v8857, %v9037
    %v9381 = vmul.f32 %v8858, %v9037
    %v9382 = vmul.f32 %v8859, %v9037
    %v9383 = vmul.f32 %v8860, %v9037
    %v9384 = vmul.f32 %v8861, %v9037
    %v9385 = vmul.f32 %v8862, %v9037
    %v9386 = vmul.f32 %v8863, %v9037
    %v9387 = vmul.f32 %v8864, %v9037
    %v9388 = vmul.f32 %v8865, %v9037
    %v9389 = vmul.f32 %v8866, %v9037
    %v9390 = vmul.f32 %v8867, %v9037
    %v9391 = vmul.f32 %v8868, %v9037
    %v9392 = vmul.f32 %v8869, %v9037
    %v9393 = vmul.f32 %v8870, %v9037
    %v9394 = vmul.f32 %v8871, %v9037
    %v9395 = vmul.f32 %v8872, %v9037
    %v9396 = vmul.f32 %v8873, %v9037
    %v9397 = vmul.f32 %v8874, %v9037
    %v9398 = vmul.f32 %v8875, %v9037
    %v9399 = vmul.f32 %v8876, %v9037
    %v9400 = vmul.f32 %v8877, %v9037
    %v9401 = vmul.f32 %v8878, %v9037
    %v9402 = vmul.f32 %v8879, %v9037
    %v9403 = vmul.f32 %v8880, %v9037
    %v9404 = vmul.f32 %v8881, %v9037
    %v9405 = vmul.f32 %v8882, %v9037
    %v9406 = vmul.f32 %v8883, %v9037
    %v9407 = vmul.f32 %v8884, %v9037
    %v9408 = vmul.f32 %v8885, %v9037
    %v9409 = vmul.f32 %v8886, %v9037
    %v9410 = vmul.f32 %v8887, %v9037
    %v9411 = vmul.f32 %v8888, %v9037
    %v9412 = vmul.f32 %v8889, %v9037
    %v9413 = vmul.f32 %v8890, %v9037
    %v9414 = vmul.f32 %v8891, %v9037
    %v9415 = vmul.f32 %v8892, %v9037
    %v9416 = vmul.f32 %v8893, %v9037
    %v9417 = vmul.f32 %v8894, %v9037
    %v9418 = vmul.f32 %v8895, %v9037
    %v9419 = vmul.f32 %v8896, %v9037
    %v9420 = vmul.f32 %v8897, %v9037
    %v9421 = vmul.f32 %v8898, %v9037
    %v9422 = vmul.f32 %v8899, %v9037
    %v9423 = vmul.f32 %v8900, %v9037
    %v9424 = vmul.f32 %v8901, %v9037
    %v9425 = vmul.f32 %v8902, %v9037
    %v9426 = vmul.f32 %v8903, %v9037
    %v9427 = vmul.f32 %v8904, %v9037
    %v9428 = vmul.f32 %v8905, %v9037
    %v9429 = vmul.f32 %v8906, %v9037
    %v9430 = vmul.f32 %v8907, %v9037
    %v9431 = vmul.f32 %v8908, %v9037
    %v9432 = vmul.f32 %v8909, %v9037
    %v9433 = vmul.f32 %v8910, %v9037
    %v9434 = vmul.f32 %v8911, %v9037
    %v9435 = vmul.f32 %v8912, %v9037
    %v9436 = vmul.f32 %v8913, %v9037
    %v9437 = vmul.f32 %v8914, %v9037
    %v9438 = vmul.f32 %v8915, %v9037
    %v9439 = vmul.f32 %v8916, %v9037
    %v9440 = vmul.f32 %v8917, %v9037
    %v9441 = vmul.f32 %v8918, %v9037
    %v9442 = vmul.f32 %v8919, %v9037
    %v9443 = vmul.f32 %v8920, %v9037
    %v9444 = vmul.f32 %v8921, %v9037
    %v9445 = vmul.f32 %v8922, %v9037
    %v9446 = vmul.f32 %v8923, %v9037
    %v9447 = vmul.f32 %v8924, %v9037
    %v9448 = vmul.f32 %v8925, %v9037
    %v9449 = vmul.f32 %v8926, %v9037
    %v9450 = vmul.f32 %v8927, %v9037
    %v9451 = vmul.f32 %v8928, %v9037
    %v9452 = vmul.f32 %v8929, %v9037
    %v9453 = vmul.f32 %v8930, %v9037
    %v9454 = vmul.f32 %v8931, %v9037
    %v9455 = vmul.f32 %v8932, %v9037
    %v9456 = vmul.f32 %v8933, %v9037
    %v9457 = vmul.f32 %v8934, %v9037
    %v9458 = vmul.f32 %v8935, %v9037
    %v9459 = vmul.f32 %v8936, %v9037
    %v9460 = vmul.f32 %v8937, %v9037
    %v9461 = vmul.f32 %v8938, %v9037
    %v9462 = vmul.f32 %v8939, %v9037
    %v9463 = vmul.f32 %v8940, %v9037
    %v9464 = vmul.f32 %v8941, %v9037
    %v9465 = vmul.f32 %v8942, %v9037
    %v9466 = vmul.f32 %v8943, %v9037
    %v9467 = vmul.f32 %v8944, %v9037
    %v9468 = vmul.f32 %v8945, %v9037
    %v9469 = vmul.f32 %v8946, %v9037
    %v9470 = vmul.f32 %v8947, %v9037
    %v9471 = vmul.f32 %v8948, %v9037
    %v9472 = vmul.f32 %v8949, %v9037
    %v9473 = vmul.f32 %v8950, %v9037
    %v9474 = vmul.f32 %v8951, %v9037
    %v9475 = vmul.f32 %v8952, %v9037
    %v9476 = vmul.f32 %v8953, %v9037
    %v9477 = vmul.f32 %v8954, %v9037
    %v9478 = vmul.f32 %v8955, %v9037
    %v9479 = vmul.f32 %v8956, %v9037
    %v9480 = vmul.f32 %v8957, %v9037
    %v9481 = vmul.f32 %v8958, %v9037
    %v9482 = vmul.f32 %v8959, %v9037
    %v9483 = vmul.f32 %v8960, %v9037
    %v9484 = vmul.f32 %v8961, %v9037
    %v9485 = vmul.f32 %v8962, %v9037
    %v9486 = vmul.f32 %v8963, %v9037
    %v9487 = vmul.f32 %v8964, %v9037
    %v9488 = vmul.f32 %v8965, %v9037
    %v9489 = vmul.f32 %v8966, %v9037
    %v9490 = vmul.f32 %v8967, %v9037
    %v9491 = vmul.f32 %v8968, %v9037
    %v9492 = vmul.f32 %v8969, %v9037
    %v9493 = vmul.f32 %v8970, %v9037
    %v9494 = vmul.f32 %v8971, %v9037
    %v9495 = vmul.f32 %v8972, %v9037
    %v9496 = vmul.f32 %v8973, %v9037
    %v9497 = vmul.f32 %v8974, %v9037
    %v9498 = vmul.f32 %v8975, %v9037
    %v9499 = vmul.f32 %v8976, %v9037
    %v9500 = vmul.f32 %v8977, %v9037
    %v9501 = vmul.f32 %v8978, %v9037
    %v9502 = vmul.f32 %v8979, %v9037
    %v9503 = vmul.f32 %v8980, %v9037
    %v9504 = vmul.f32 %v8981, %v9037
    %v9505 = vmul.f32 %v8982, %v9037
    %v9506 = vmul.f32 %v8983, %v9037
    %v9507 = vmul.f32 %v8984, %v9037
    %v9508 = vmul.f32 %v8985, %v9037
    %v9509 = vmul.f32 %v8986, %v9037
    %v9510 = vmul.f32 %v8987, %v9037
    %v9511 = vmul.f32 %v8988, %v9037
    %v9512 = vmul.f32 %v8989, %v9037
    %v9513 = vmul.f32 %v8990, %v9037
    %v9514 = vmul.f32 %v8991, %v9037
    %v9515 = vmul.f32 %v8992, %v9037
    %v9516 = vmul.f32 %v8993, %v9037
    %v9517 = vmul.f32 %v8994, %v9037
    %v9518 = vmul.f32 %v8995, %v9037
    %v9519 = vmul.f32 %v8996, %v9037
    %v9520 = vmul.f32 %v8997, %v9037
    %v9521 = vmul.f32 %v8998, %v9037
    %v9522 = vmul.f32 %v8999, %v9037
    %v9523 = vmul.f32 %v9000, %v9037
    %v9524 = vmul.f32 %v9001, %v9037
    %v9525 = vmul.f32 %v9002, %v9037
    %v9526 = vmul.f32 %v9003, %v9037
    %v9527 = vmul.f32 %v9004, %v9037
    %v9528 = vmul.f32 %v9005, %v9037
    %v9529 = vmul.f32 %v9006, %v9037
    %v9530 = vmul.f32 %v9007, %v9037
    %v9531 = vmul.f32 %v9008, %v9037
    %v9532 = vmul.f32 %v9009, %v9037
    %v9533 = vmul.f32 %v9010, %v9037
    %v9534 = vmul.f32 %v9011, %v9037
    %v9535 = vmul.f32 %v9012, %v9037
    %v9536 = vmul.f32 %v9013, %v9037
    %v9537 = vmul.f32 %v9014, %v9037
    %v9538 = vmul.f32 %v9015, %v9037
    %v9539 = vmul.f32 %v9016, %v9037
    %v9540 = vmul.f32 %v9017, %v9037
    %v9541 = vmul.f32 %v9018, %v9037
    %v9542 = vmul.f32 %v9019, %v9037
    %v9543 = vmul.f32 %v9020, %v9037
    %v9544 = vmul.f32 %v9021, %v9037
    %v9545 = vmul.f32 %v9022, %v9037
    %v9546 = vmul.f32 %v9023, %v9037
    %v9547 = vmul.f32 %v9024, %v9037
    %v9548 = vmul.f32 %v9025, %v9037
    %v9549 = vmul.f32 %v9026, %v9037
    %v9550 = vmax.f32 %v9038, 0.0
    %v9551 = vmax.f32 %v9039, 0.0
    %v9552 = vmax.f32 %v9040, 0.0
    %v9553 = vmax.f32 %v9041, 0.0
    %v9554 = vmax.f32 %v9042, 0.0
    %v9555 = vmax.f32 %v9043, 0.0
    %v9556 = vmax.f32 %v9044, 0.0
    %v9557 = vmax.f32 %v9045, 0.0
    %v9558 = vmax.f32 %v9046, 0.0
    %v9559 = vmax.f32 %v9047, 0.0
    %v9560 = vmax.f32 %v9048, 0.0
    %v9561 = vmax.f32 %v9049, 0.0
    %v9562 = vmax.f32 %v9050, 0.0
    %v9563 = vmax.f32 %v9051, 0.0
    %v9564 = vmax.f32 %v9052, 0.0
    %v9565 = vmax.f32 %v9053, 0.0
    %v9566 = vmax.f32 %v9054, 0.0
    %v9567 = vmax.f32 %v9055, 0.0
    %v9568 = vmax.f32 %v9056, 0.0
    %v9569 = vmax.f32 %v9057, 0.0
    %v9570 = vmax.f32 %v9058, 0.0
    %v9571 = vmax.f32 %v9059, 0.0
    %v9572 = vmax.f32 %v9060, 0.0
    %v9573 = vmax.f32 %v9061, 0.0
    %v9574 = vmax.f32 %v9062, 0.0
    %v9575 = vmax.f32 %v9063, 0.0
    %v9576 = vmax.f32 %v9064, 0.0
    %v9577 = vmax.f32 %v9065, 0.0
    %v9578 = vmax.f32 %v9066, 0.0
    %v9579 = vmax.f32 %v9067, 0.0
    %v9580 = vmax.f32 %v9068, 0.0
    %v9581 = vmax.f32 %v9069, 0.0
    %v9582 = vmax.f32 %v9070, 0.0
    %v9583 = vmax.f32 %v9071, 0.0
    %v9584 = vmax.f32 %v9072, 0.0
    %v9585 = vmax.f32 %v9073, 0.0
    %v9586 = vmax.f32 %v9074, 0.0
    %v9587 = vmax.f32 %v9075, 0.0
    %v9588 = vmax.f32 %v9076, 0.0
    %v9589 = vmax.f32 %v9077, 0.0
    %v9590 = vmax.f32 %v9078, 0.0
    %v9591 = vmax.f32 %v9079, 0.0
    %v9592 = vmax.f32 %v9080, 0.0
    %v9593 = vmax.f32 %v9081, 0.0
    %v9594 = vmax.f32 %v9082, 0.0
    %v9595 = vmax.f32 %v9083, 0.0
    %v9596 = vmax.f32 %v9084, 0.0
    %v9597 = vmax.f32 %v9085, 0.0
    %v9598 = vmax.f32 %v9086, 0.0
    %v9599 = vmax.f32 %v9087, 0.0
    %v9600 = vmax.f32 %v9088, 0.0
    %v9601 = vmax.f32 %v9089, 0.0
    %v9602 = vmax.f32 %v9090, 0.0
    %v9603 = vmax.f32 %v9091, 0.0
    %v9604 = vmax.f32 %v9092, 0.0
    %v9605 = vmax.f32 %v9093, 0.0
    %v9606 = vmax.f32 %v9094, 0.0
    %v9607 = vmax.f32 %v9095, 0.0
    %v9608 = vmax.f32 %v9096, 0.0
    %v9609 = vmax.f32 %v9097, 0.0
    %v9610 = vmax.f32 %v9098, 0.0
    %v9611 = vmax.f32 %v9099, 0.0
    %v9612 = vmax.f32 %v9100, 0.0
    %v9613 = vmax.f32 %v9101, 0.0
    %v9614 = vmax.f32 %v9102, 0.0
    %v9615 = vmax.f32 %v9103, 0.0
    %v9616 = vmax.f32 %v9104, 0.0
    %v9617 = vmax.f32 %v9105, 0.0
    %v9618 = vmax.f32 %v9106, 0.0
    %v9619 = vmax.f32 %v9107, 0.0
    %v9620 = vmax.f32 %v9108, 0.0
    %v9621 = vmax.f32 %v9109, 0.0
    %v9622 = vmax.f32 %v9110, 0.0
    %v9623 = vmax.f32 %v9111, 0.0
    %v9624 = vmax.f32 %v9112, 0.0
    %v9625 = vmax.f32 %v9113, 0.0
    %v9626 = vmax.f32 %v9114, 0.0
    %v9627 = vmax.f32 %v9115, 0.0
    %v9628 = vmax.f32 %v9116, 0.0
    %v9629 = vmax.f32 %v9117, 0.0
    %v9630 = vmax.f32 %v9118, 0.0
    %v9631 = vmax.f32 %v9119, 0.0
    %v9632 = vmax.f32 %v9120, 0.0
    %v9633 = vmax.f32 %v9121, 0.0
    %v9634 = vmax.f32 %v9122, 0.0
    %v9635 = vmax.f32 %v9123, 0.0
    %v9636 = vmax.f32 %v9124, 0.0
    %v9637 = vmax.f32 %v9125, 0.0
    %v9638 = vmax.f32 %v9126, 0.0
    %v9639 = vmax.f32 %v9127, 0.0
    %v9640 = vmax.f32 %v9128, 0.0
    %v9641 = vmax.f32 %v9129, 0.0
    %v9642 = vmax.f32 %v9130, 0.0
    %v9643 = vmax.f32 %v9131, 0.0
    %v9644 = vmax.f32 %v9132, 0.0
    %v9645 = vmax.f32 %v9133, 0.0
    %v9646 = vmax.f32 %v9134, 0.0
    %v9647 = vmax.f32 %v9135, 0.0
    %v9648 = vmax.f32 %v9136, 0.0
    %v9649 = vmax.f32 %v9137, 0.0
    %v9650 = vmax.f32 %v9138, 0.0
    %v9651 = vmax.f32 %v9139, 0.0
    %v9652 = vmax.f32 %v9140, 0.0
    %v9653 = vmax.f32 %v9141, 0.0
    %v9654 = vmax.f32 %v9142, 0.0
    %v9655 = vmax.f32 %v9143, 0.0
    %v9656 = vmax.f32 %v9144, 0.0
    %v9657 = vmax.f32 %v9145, 0.0
    %v9658 = vmax.f32 %v9146, 0.0
    %v9659 = vmax.f32 %v9147, 0.0
    %v9660 = vmax.f32 %v9148, 0.0
    %v9661 = vmax.f32 %v9149, 0.0
    %v9662 = vmax.f32 %v9150, 0.0
    %v9663 = vmax.f32 %v9151, 0.0
    %v9664 = vmax.f32 %v9152, 0.0
    %v9665 = vmax.f32 %v9153, 0.0
    %v9666 = vmax.f32 %v9154, 0.0
    %v9667 = vmax.f32 %v9155, 0.0
    %v9668 = vmax.f32 %v9156, 0.0
    %v9669 = vmax.f32 %v9157, 0.0
    %v9670 = vmax.f32 %v9158, 0.0
    %v9671 = vmax.f32 %v9159, 0.0
    %v9672 = vmax.f32 %v9160, 0.0
    %v9673 = vmax.f32 %v9161, 0.0
    %v9674 = vmax.f32 %v9162, 0.0
    %v9675 = vmax.f32 %v9163, 0.0
    %v9676 = vmax.f32 %v9164, 0.0
    %v9677 = vmax.f32 %v9165, 0.0
    %v9678 = vmax.f32 %v9166, 0.0
    %v9679 = vmax.f32 %v9167, 0.0
    %v9680 = vmax.f32 %v9168, 0.0
    %v9681 = vmax.f32 %v9169, 0.0
    %v9682 = vmax.f32 %v9170, 0.0
    %v9683 = vmax.f32 %v9171, 0.0
    %v9684 = vmax.f32 %v9172, 0.0
    %v9685 = vmax.f32 %v9173, 0.0
    %v9686 = vmax.f32 %v9174, 0.0
    %v9687 = vmax.f32 %v9175, 0.0
    %v9688 = vmax.f32 %v9176, 0.0
    %v9689 = vmax.f32 %v9177, 0.0
    %v9690 = vmax.f32 %v9178, 0.0
    %v9691 = vmax.f32 %v9179, 0.0
    %v9692 = vmax.f32 %v9180, 0.0
    %v9693 = vmax.f32 %v9181, 0.0
    %v9694 = vmax.f32 %v9182, 0.0
    %v9695 = vmax.f32 %v9183, 0.0
    %v9696 = vmax.f32 %v9184, 0.0
    %v9697 = vmax.f32 %v9185, 0.0
    %v9698 = vmax.f32 %v9186, 0.0
    %v9699 = vmax.f32 %v9187, 0.0
    %v9700 = vmax.f32 %v9188, 0.0
    %v9701 = vmax.f32 %v9189, 0.0
    %v9702 = vmax.f32 %v9190, 0.0
    %v9703 = vmax.f32 %v9191, 0.0
    %v9704 = vmax.f32 %v9192, 0.0
    %v9705 = vmax.f32 %v9193, 0.0
    %v9706 = vmax.f32 %v9194, 0.0
    %v9707 = vmax.f32 %v9195, 0.0
    %v9708 = vmax.f32 %v9196, 0.0
    %v9709 = vmax.f32 %v9197, 0.0
    %v9710 = vmax.f32 %v9198, 0.0
    %v9711 = vmax.f32 %v9199, 0.0
    %v9712 = vmax.f32 %v9200, 0.0
    %v9713 = vmax.f32 %v9201, 0.0
    %v9714 = vmax.f32 %v9202, 0.0
    %v9715 = vmax.f32 %v9203, 0.0
    %v9716 = vmax.f32 %v9204, 0.0
    %v9717 = vmax.f32 %v9205, 0.0
    %v9718 = vmax.f32 %v9206, 0.0
    %v9719 = vmax.f32 %v9207, 0.0
    %v9720 = vmax.f32 %v9208, 0.0
    %v9721 = vmax.f32 %v9209, 0.0
    %v9722 = vmax.f32 %v9210, 0.0
    %v9723 = vmax.f32 %v9211, 0.0
    %v9724 = vmax.f32 %v9212, 0.0
    %v9725 = vmax.f32 %v9213, 0.0
    %v9726 = vmax.f32 %v9214, 0.0
    %v9727 = vmax.f32 %v9215, 0.0
    %v9728 = vmax.f32 %v9216, 0.0
    %v9729 = vmax.f32 %v9217, 0.0
    %v9730 = vmax.f32 %v9218, 0.0
    %v9731 = vmax.f32 %v9219, 0.0
    %v9732 = vmax.f32 %v9220, 0.0
    %v9733 = vmax.f32 %v9221, 0.0
    %v9734 = vmax.f32 %v9222, 0.0
    %v9735 = vmax.f32 %v9223, 0.0
    %v9736 = vmax.f32 %v9224, 0.0
    %v9737 = vmax.f32 %v9225, 0.0
    %v9738 = vmax.f32 %v9226, 0.0
    %v9739 = vmax.f32 %v9227, 0.0
    %v9740 = vmax.f32 %v9228, 0.0
    %v9741 = vmax.f32 %v9229, 0.0
    %v9742 = vmax.f32 %v9230, 0.0
    %v9743 = vmax.f32 %v9231, 0.0
    %v9744 = vmax.f32 %v9232, 0.0
    %v9745 = vmax.f32 %v9233, 0.0
    %v9746 = vmax.f32 %v9234, 0.0
    %v9747 = vmax.f32 %v9235, 0.0
    %v9748 = vmax.f32 %v9236, 0.0
    %v9749 = vmax.f32 %v9237, 0.0
    %v9750 = vmax.f32 %v9238, 0.0
    %v9751 = vmax.f32 %v9239, 0.0
    %v9752 = vmax.f32 %v9240, 0.0
    %v9753 = vmax.f32 %v9241, 0.0
    %v9754 = vmax.f32 %v9242, 0.0
    %v9755 = vmax.f32 %v9243, 0.0
    %v9756 = vmax.f32 %v9244, 0.0
    %v9757 = vmax.f32 %v9245, 0.0
    %v9758 = vmax.f32 %v9246, 0.0
    %v9759 = vmax.f32 %v9247, 0.0
    %v9760 = vmax.f32 %v9248, 0.0
    %v9761 = vmax.f32 %v9249, 0.0
    %v9762 = vmax.f32 %v9250, 0.0
    %v9763 = vmax.f32 %v9251, 0.0
    %v9764 = vmax.f32 %v9252, 0.0
    %v9765 = vmax.f32 %v9253, 0.0
    %v9766 = vmax.f32 %v9254, 0.0
    %v9767 = vmax.f32 %v9255, 0.0
    %v9768 = vmax.f32 %v9256, 0.0
    %v9769 = vmax.f32 %v9257, 0.0
    %v9770 = vmax.f32 %v9258, 0.0
    %v9771 = vmax.f32 %v9259, 0.0
    %v9772 = vmax.f32 %v9260, 0.0
    %v9773 = vmax.f32 %v9261, 0.0
    %v9774 = vmax.f32 %v9262, 0.0
    %v9775 = vmax.f32 %v9263, 0.0
    %v9776 = vmax.f32 %v9264, 0.0
    %v9777 = vmax.f32 %v9265, 0.0
    %v9778 = vmax.f32 %v9266, 0.0
    %v9779 = vmax.f32 %v9267, 0.0
    %v9780 = vmax.f32 %v9268, 0.0
    %v9781 = vmax.f32 %v9269, 0.0
    %v9782 = vmax.f32 %v9270, 0.0
    %v9783 = vmax.f32 %v9271, 0.0
    %v9784 = vmax.f32 %v9272, 0.0
    %v9785 = vmax.f32 %v9273, 0.0
    %v9786 = vmax.f32 %v9274, 0.0
    %v9787 = vmax.f32 %v9275, 0.0
    %v9788 = vmax.f32 %v9276, 0.0
    %v9789 = vmax.f32 %v9277, 0.0
    %v9790 = vmax.f32 %v9278, 0.0
    %v9791 = vmax.f32 %v9279, 0.0
    %v9792 = vmax.f32 %v9280, 0.0
    %v9793 = vmax.f32 %v9281, 0.0
    %v9794 = vmax.f32 %v9282, 0.0
    %v9795 = vmax.f32 %v9283, 0.0
    %v9796 = vmax.f32 %v9284, 0.0
    %v9797 = vmax.f32 %v9285, 0.0
    %v9798 = vmax.f32 %v9286, 0.0
    %v9799 = vmax.f32 %v9287, 0.0
    %v9800 = vmax.f32 %v9288, 0.0
    %v9801 = vmax.f32 %v9289, 0.0
    %v9802 = vmax.f32 %v9290, 0.0
    %v9803 = vmax.f32 %v9291, 0.0
    %v9804 = vmax.f32 %v9292, 0.0
    %v9805 = vmax.f32 %v9293, 0.0
    %v9806 = vmax.f32 %v9294, 0.0
    %v9807 = vmax.f32 %v9295, 0.0
    %v9808 = vmax.f32 %v9296, 0.0
    %v9809 = vmax.f32 %v9297, 0.0
    %v9810 = vmax.f32 %v9298, 0.0
    %v9811 = vmax.f32 %v9299, 0.0
    %v9812 = vmax.f32 %v9300, 0.0
    %v9813 = vmax.f32 %v9301, 0.0
    %v9814 = vmax.f32 %v9302, 0.0
    %v9815 = vmax.f32 %v9303, 0.0
    %v9816 = vmax.f32 %v9304, 0.0
    %v9817 = vmax.f32 %v9305, 0.0
    %v9818 = vmax.f32 %v9306, 0.0
    %v9819 = vmax.f32 %v9307, 0.0
    %v9820 = vmax.f32 %v9308, 0.0
    %v9821 = vmax.f32 %v9309, 0.0
    %v9822 = vmax.f32 %v9310, 0.0
    %v9823 = vmax.f32 %v9311, 0.0
    %v9824 = vmax.f32 %v9312, 0.0
    %v9825 = vmax.f32 %v9313, 0.0
    %v9826 = vmax.f32 %v9314, 0.0
    %v9827 = vmax.f32 %v9315, 0.0
    %v9828 = vmax.f32 %v9316, 0.0
    %v9829 = vmax.f32 %v9317, 0.0
    %v9830 = vmax.f32 %v9318, 0.0
    %v9831 = vmax.f32 %v9319, 0.0
    %v9832 = vmax.f32 %v9320, 0.0
    %v9833 = vmax.f32 %v9321, 0.0
    %v9834 = vmax.f32 %v9322, 0.0
    %v9835 = vmax.f32 %v9323, 0.0
    %v9836 = vmax.f32 %v9324, 0.0
    %v9837 = vmax.f32 %v9325, 0.0
    %v9838 = vmax.f32 %v9326, 0.0
    %v9839 = vmax.f32 %v9327, 0.0
    %v9840 = vmax.f32 %v9328, 0.0
    %v9841 = vmax.f32 %v9329, 0.0
    %v9842 = vmax.f32 %v9330, 0.0
    %v9843 = vmax.f32 %v9331, 0.0
    %v9844 = vmax.f32 %v9332, 0.0
    %v9845 = vmax.f32 %v9333, 0.0
    %v9846 = vmax.f32 %v9334, 0.0
    %v9847 = vmax.f32 %v9335, 0.0
    %v9848 = vmax.f32 %v9336, 0.0
    %v9849 = vmax.f32 %v9337, 0.0
    %v9850 = vmax.f32 %v9338, 0.0
    %v9851 = vmax.f32 %v9339, 0.0
    %v9852 = vmax.f32 %v9340, 0.0
    %v9853 = vmax.f32 %v9341, 0.0
    %v9854 = vmax.f32 %v9342, 0.0
    %v9855 = vmax.f32 %v9343, 0.0
    %v9856 = vmax.f32 %v9344, 0.0
    %v9857 = vmax.f32 %v9345, 0.0
    %v9858 = vmax.f32 %v9346, 0.0
    %v9859 = vmax.f32 %v9347, 0.0
    %v9860 = vmax.f32 %v9348, 0.0
    %v9861 = vmax.f32 %v9349, 0.0
    %v9862 = vmax.f32 %v9350, 0.0
    %v9863 = vmax.f32 %v9351, 0.0
    %v9864 = vmax.f32 %v9352, 0.0
    %v9865 = vmax.f32 %v9353, 0.0
    %v9866 = vmax.f32 %v9354, 0.0
    %v9867 = vmax.f32 %v9355, 0.0
    %v9868 = vmax.f32 %v9356, 0.0
    %v9869 = vmax.f32 %v9357, 0.0
    %v9870 = vmax.f32 %v9358, 0.0
    %v9871 = vmax.f32 %v9359, 0.0
    %v9872 = vmax.f32 %v9360, 0.0
    %v9873 = vmax.f32 %v9361, 0.0
    %v9874 = vmax.f32 %v9362, 0.0
    %v9875 = vmax.f32 %v9363, 0.0
    %v9876 = vmax.f32 %v9364, 0.0
    %v9877 = vmax.f32 %v9365, 0.0
    %v9878 = vmax.f32 %v9366, 0.0
    %v9879 = vmax.f32 %v9367, 0.0
    %v9880 = vmax.f32 %v9368, 0.0
    %v9881 = vmax.f32 %v9369, 0.0
    %v9882 = vmax.f32 %v9370, 0.0
    %v9883 = vmax.f32 %v9371, 0.0
    %v9884 = vmax.f32 %v9372, 0.0
    %v9885 = vmax.f32 %v9373, 0.0
    %v9886 = vmax.f32 %v9374, 0.0
    %v9887 = vmax.f32 %v9375, 0.0
    %v9888 = vmax.f32 %v9376, 0.0
    %v9889 = vmax.f32 %v9377, 0.0
    %v9890 = vmax.f32 %v9378, 0.0
    %v9891 = vmax.f32 %v9379, 0.0
    %v9892 = vmax.f32 %v9380, 0.0
    %v9893 = vmax.f32 %v9381, 0.0
    %v9894 = vmax.f32 %v9382, 0.0
    %v9895 = vmax.f32 %v9383, 0.0
    %v9896 = vmax.f32 %v9384, 0.0
    %v9897 = vmax.f32 %v9385, 0.0
    %v9898 = vmax.f32 %v9386, 0.0
    %v9899 = vmax.f32 %v9387, 0.0
    %v9900 = vmax.f32 %v9388, 0.0
    %v9901 = vmax.f32 %v9389, 0.0
    %v9902 = vmax.f32 %v9390, 0.0
    %v9903 = vmax.f32 %v9391, 0.0
    %v9904 = vmax.f32 %v9392, 0.0
    %v9905 = vmax.f32 %v9393, 0.0
    %v9906 = vmax.f32 %v9394, 0.0
    %v9907 = vmax.f32 %v9395, 0.0
    %v9908 = vmax.f32 %v9396, 0.0
    %v9909 = vmax.f32 %v9397, 0.0
    %v9910 = vmax.f32 %v9398, 0.0
    %v9911 = vmax.f32 %v9399, 0.0
    %v9912 = vmax.f32 %v9400, 0.0
    %v9913 = vmax.f32 %v9401, 0.0
    %v9914 = vmax.f32 %v9402, 0.0
    %v9915 = vmax.f32 %v9403, 0.0
    %v9916 = vmax.f32 %v9404, 0.0
    %v9917 = vmax.f32 %v9405, 0.0
    %v9918 = vmax.f32 %v9406, 0.0
    %v9919 = vmax.f32 %v9407, 0.0
    %v9920 = vmax.f32 %v9408, 0.0
    %v9921 = vmax.f32 %v9409, 0.0
    %v9922 = vmax.f32 %v9410, 0.0
    %v9923 = vmax.f32 %v9411, 0.0
    %v9924 = vmax.f32 %v9412, 0.0
    %v9925 = vmax.f32 %v9413, 0.0
    %v9926 = vmax.f32 %v9414, 0.0
    %v9927 = vmax.f32 %v9415, 0.0
    %v9928 = vmax.f32 %v9416, 0.0
    %v9929 = vmax.f32 %v9417, 0.0
    %v9930 = vmax.f32 %v9418, 0.0
    %v9931 = vmax.f32 %v9419, 0.0
    %v9932 = vmax.f32 %v9420, 0.0
    %v9933 = vmax.f32 %v9421, 0.0
    %v9934 = vmax.f32 %v9422, 0.0
    %v9935 = vmax.f32 %v9423, 0.0
    %v9936 = vmax.f32 %v9424, 0.0
    %v9937 = vmax.f32 %v9425, 0.0
    %v9938 = vmax.f32 %v9426, 0.0
    %v9939 = vmax.f32 %v9427, 0.0
    %v9940 = vmax.f32 %v9428, 0.0
    %v9941 = vmax.f32 %v9429, 0.0
    %v9942 = vmax.f32 %v9430, 0.0
    %v9943 = vmax.f32 %v9431, 0.0
    %v9944 = vmax.f32 %v9432, 0.0
    %v9945 = vmax.f32 %v9433, 0.0
    %v9946 = vmax.f32 %v9434, 0.0
    %v9947 = vmax.f32 %v9435, 0.0
    %v9948 = vmax.f32 %v9436, 0.0
    %v9949 = vmax.f32 %v9437, 0.0
    %v9950 = vmax.f32 %v9438, 0.0
    %v9951 = vmax.f32 %v9439, 0.0
    %v9952 = vmax.f32 %v9440, 0.0
    %v9953 = vmax.f32 %v9441, 0.0
    %v9954 = vmax.f32 %v9442, 0.0
    %v9955 = vmax.f32 %v9443, 0.0
    %v9956 = vmax.f32 %v9444, 0.0
    %v9957 = vmax.f32 %v9445, 0.0
    %v9958 = vmax.f32 %v9446, 0.0
    %v9959 = vmax.f32 %v9447, 0.0
    %v9960 = vmax.f32 %v9448, 0.0
    %v9961 = vmax.f32 %v9449, 0.0
    %v9962 = vmax.f32 %v9450, 0.0
    %v9963 = vmax.f32 %v9451, 0.0
    %v9964 = vmax.f32 %v9452, 0.0
    %v9965 = vmax.f32 %v9453, 0.0
    %v9966 = vmax.f32 %v9454, 0.0
    %v9967 = vmax.f32 %v9455, 0.0
    %v9968 = vmax.f32 %v9456, 0.0
    %v9969 = vmax.f32 %v9457, 0.0
    %v9970 = vmax.f32 %v9458, 0.0
    %v9971 = vmax.f32 %v9459, 0.0
    %v9972 = vmax.f32 %v9460, 0.0
    %v9973 = vmax.f32 %v9461, 0.0
    %v9974 = vmax.f32 %v9462, 0.0
    %v9975 = vmax.f32 %v9463, 0.0
    %v9976 = vmax.f32 %v9464, 0.0
    %v9977 = vmax.f32 %v9465, 0.0
    %v9978 = vmax.f32 %v9466, 0.0
    %v9979 = vmax.f32 %v9467, 0.0
    %v9980 = vmax.f32 %v9468, 0.0
    %v9981 = vmax.f32 %v9469, 0.0
    %v9982 = vmax.f32 %v9470, 0.0
    %v9983 = vmax.f32 %v9471, 0.0
    %v9984 = vmax.f32 %v9472, 0.0
    %v9985 = vmax.f32 %v9473, 0.0
    %v9986 = vmax.f32 %v9474, 0.0
    %v9987 = vmax.f32 %v9475, 0.0
    %v9988 = vmax.f32 %v9476, 0.0
    %v9989 = vmax.f32 %v9477, 0.0
    %v9990 = vmax.f32 %v9478, 0.0
    %v9991 = vmax.f32 %v9479, 0.0
    %v9992 = vmax.f32 %v9480, 0.0
    %v9993 = vmax.f32 %v9481, 0.0
    %v9994 = vmax.f32 %v9482, 0.0
    %v9995 = vmax.f32 %v9483, 0.0
    %v9996 = vmax.f32 %v9484, 0.0
    %v9997 = vmax.f32 %v9485, 0.0
    %v9998 = vmax.f32 %v9486, 0.0
    %v9999 = vmax.f32 %v9487, 0.0
    %v10000 = vmax.f32 %v9488, 0.0
    %v10001 = vmax.f32 %v9489, 0.0
    %v10002 = vmax.f32 %v9490, 0.0
    %v10003 = vmax.f32 %v9491, 0.0
    %v10004 = vmax.f32 %v9492, 0.0
    %v10005 = vmax.f32 %v9493, 0.0
    %v10006 = vmax.f32 %v9494, 0.0
    %v10007 = vmax.f32 %v9495, 0.0
    %v10008 = vmax.f32 %v9496, 0.0
    %v10009 = vmax.f32 %v9497, 0.0
    %v10010 = vmax.f32 %v9498, 0.0
    %v10011 = vmax.f32 %v9499, 0.0
    %v10012 = vmax.f32 %v9500, 0.0
    %v10013 = vmax.f32 %v9501, 0.0
    %v10014 = vmax.f32 %v9502, 0.0
    %v10015 = vmax.f32 %v9503, 0.0
    %v10016 = vmax.f32 %v9504, 0.0
    %v10017 = vmax.f32 %v9505, 0.0
    %v10018 = vmax.f32 %v9506, 0.0
    %v10019 = vmax.f32 %v9507, 0.0
    %v10020 = vmax.f32 %v9508, 0.0
    %v10021 = vmax.f32 %v9509, 0.0
    %v10022 = vmax.f32 %v9510, 0.0
    %v10023 = vmax.f32 %v9511, 0.0
    %v10024 = vmax.f32 %v9512, 0.0
    %v10025 = vmax.f32 %v9513, 0.0
    %v10026 = vmax.f32 %v9514, 0.0
    %v10027 = vmax.f32 %v9515, 0.0
    %v10028 = vmax.f32 %v9516, 0.0
    %v10029 = vmax.f32 %v9517, 0.0
    %v10030 = vmax.f32 %v9518, 0.0
    %v10031 = vmax.f32 %v9519, 0.0
    %v10032 = vmax.f32 %v9520, 0.0
    %v10033 = vmax.f32 %v9521, 0.0
    %v10034 = vmax.f32 %v9522, 0.0
    %v10035 = vmax.f32 %v9523, 0.0
    %v10036 = vmax.f32 %v9524, 0.0
    %v10037 = vmax.f32 %v9525, 0.0
    %v10038 = vmax.f32 %v9526, 0.0
    %v10039 = vmax.f32 %v9527, 0.0
    %v10040 = vmax.f32 %v9528, 0.0
    %v10041 = vmax.f32 %v9529, 0.0
    %v10042 = vmax.f32 %v9530, 0.0
    %v10043 = vmax.f32 %v9531, 0.0
    %v10044 = vmax.f32 %v9532, 0.0
    %v10045 = vmax.f32 %v9533, 0.0
    %v10046 = vmax.f32 %v9534, 0.0
    %v10047 = vmax.f32 %v9535, 0.0
    %v10048 = vmax.f32 %v9536, 0.0
    %v10049 = vmax.f32 %v9537, 0.0
    %v10050 = vmax.f32 %v9538, 0.0
    %v10051 = vmax.f32 %v9539, 0.0
    %v10052 = vmax.f32 %v9540, 0.0
    %v10053 = vmax.f32 %v9541, 0.0
    %v10054 = vmax.f32 %v9542, 0.0
    %v10055 = vmax.f32 %v9543, 0.0
    %v10056 = vmax.f32 %v9544, 0.0
    %v10057 = vmax.f32 %v9545, 0.0
    %v10058 = vmax.f32 %v9546, 0.0
    %v10059 = vmax.f32 %v9547, 0.0
    %v10060 = vmax.f32 %v9548, 0.0
    %v10061 = vmax.f32 %v9549, 0.0
    %10062 = vst [vmem:[%s3] sm:$0xff] %v9550
    %10063 = vst [vmem:[%s3 + $0x8] sm:$0xff] %v9551
    %10064 = vst [vmem:[%s3 + $0x10] sm:$0xff] %v9552
    %10065 = vst [vmem:[%s3 + $0x18] sm:$0xff] %v9553
    %10066 = vst [vmem:[%s3 + $0x20] sm:$0xff] %v9554
    %10067 = vst [vmem:[%s3 + $0x28] sm:$0xff] %v9555
    %10068 = vst [vmem:[%s3 + $0x30] sm:$0xff] %v9556
    %10069 = vst [vmem:[%s3 + $0x38] sm:$0xff] %v9557
    %10070 = vst [vmem:[%s3 + $0x40] sm:$0xff] %v9558
    %10071 = vst [vmem:[%s3 + $0x48] sm:$0xff] %v9559
    %10072 = vst [vmem:[%s3 + $0x50] sm:$0xff] %v9560
    %10073 = vst [vmem:[%s3 + $0x58] sm:$0xff] %v9561
    %10074 = vst [vmem:[%s3 + $0x60] sm:$0xff] %v9562
    %10075 = vst [vmem:[%s3 + $0x68] sm:$0xff] %v9563
    %10076 = vst [vmem:[%s3 + $0x70] sm:$0xff] %v9564
    %10077 = vst [vmem:[%s3 + $0x78] sm:$0xff] %v9565
    %10078 = vst [vmem:[%s3 + $0x80] sm:$0xff] %v9566
    %10079 = vst [vmem:[%s3 + $0x88] sm:$0xff] %v9567
    %10080 = vst [vmem:[%s3 + $0x90] sm:$0xff] %v9568
    %10081 = vst [vmem:[%s3 + $0x98] sm:$0xff] %v9569
    %10082 = vst [vmem:[%s3 + $0xa0] sm:$0xff] %v9570
    %10083 = vst [vmem:[%s3 + $0xa8] sm:$0xff] %v9571
    %10084 = vst [vmem:[%s3 + $0xb0] sm:$0xff] %v9572
    %10085 = vst [vmem:[%s3 + $0xb8] sm:$0xff] %v9573
    %10086 = vst [vmem:[%s3 + $0xc0] sm:$0xff] %v9574
    %10087 = vst [vmem:[%s3 + $0xc8] sm:$0xff] %v9575
    %10088 = vst [vmem:[%s3 + $0xd0] sm:$0xff] %v9576
    %10089 = vst [vmem:[%s3 + $0xd8] sm:$0xff] %v9577
    %10090 = vst [vmem:[%s3 + $0xe0] sm:$0xff] %v9578
    %10091 = vst [vmem:[%s3 + $0xe8] sm:$0xff] %v9579
    %10092 = vst [vmem:[%s3 + $0xf0] sm:$0xff] %v9580
    %10093 = vst [vmem:[%s3 + $0xf8] sm:$0xff] %v9581
    %10094 = vst [vmem:[%s3 + $0x100] sm:$0xff] %v9582
    %10095 = vst [vmem:[%s3 + $0x108] sm:$0xff] %v9583
    %10096 = vst [vmem:[%s3 + $0x110] sm:$0xff] %v9584
    %10097 = vst [vmem:[%s3 + $0x118] sm:$0xff] %v9585
    %10098 = vst [vmem:[%s3 + $0x120] sm:$0xff] %v9586
    %10099 = vst [vmem:[%s3 + $0x128] sm:$0xff] %v9587
    %10100 = vst [vmem:[%s3 + $0x130] sm:$0xff] %v9588
    %10101 = vst [vmem:[%s3 + $0x138] sm:$0xff] %v9589
    %10102 = vst [vmem:[%s3 + $0x140] sm:$0xff] %v9590
    %10103 = vst [vmem:[%s3 + $0x148] sm:$0xff] %v9591
    %10104 = vst [vmem:[%s3 + $0x150] sm:$0xff] %v9592
    %10105 = vst [vmem:[%s3 + $0x158] sm:$0xff] %v9593
    %10106 = vst [vmem:[%s3 + $0x160] sm:$0xff] %v9594
    %10107 = vst [vmem:[%s3 + $0x168] sm:$0xff] %v9595
    %10108 = vst [vmem:[%s3 + $0x170] sm:$0xff] %v9596
    %10109 = vst [vmem:[%s3 + $0x178] sm:$0xff] %v9597
    %10110 = vst [vmem:[%s3 + $0x180] sm:$0xff] %v9598
    %10111 = vst [vmem:[%s3 + $0x188] sm:$0xff] %v9599
    %10112 = vst [vmem:[%s3 + $0x190] sm:$0xff] %v9600
    %10113 = vst [vmem:[%s3 + $0x198] sm:$0xff] %v9601
    %10114 = vst [vmem:[%s3 + $0x1a0] sm:$0xff] %v9602
    %10115 = vst [vmem:[%s3 + $0x1a8] sm:$0xff] %v9603
    %10116 = vst [vmem:[%s3 + $0x1b0] sm:$0xff] %v9604
    %10117 = vst [vmem:[%s3 + $0x1b8] sm:$0xff] %v9605
    %10118 = vst [vmem:[%s3 + $0x1c0] sm:$0xff] %v9606
    %10119 = vst [vmem:[%s3 + $0x1c8] sm:$0xff] %v9607
    %10120 = vst [vmem:[%s3 + $0x1d0] sm:$0xff] %v9608
    %10121 = vst [vmem:[%s3 + $0x1d8] sm:$0xff] %v9609
    %10122 = vst [vmem:[%s3 + $0x1e0] sm:$0xff] %v9610
    %10123 = vst [vmem:[%s3 + $0x1e8] sm:$0xff] %v9611
    %10124 = vst [vmem:[%s3 + $0x1f0] sm:$0xff] %v9612
    %10125 = vst [vmem:[%s3 + $0x1f8] sm:$0xff] %v9613
    %10126 = vst [vmem:[%s3 + $0x200] sm:$0xff] %v9614
    %10127 = vst [vmem:[%s3 + $0x208] sm:$0xff] %v9615
    %10128 = vst [vmem:[%s3 + $0x210] sm:$0xff] %v9616
    %10129 = vst [vmem:[%s3 + $0x218] sm:$0xff] %v9617
    %10130 = vst [vmem:[%s3 + $0x220] sm:$0xff] %v9618
    %10131 = vst [vmem:[%s3 + $0x228] sm:$0xff] %v9619
    %10132 = vst [vmem:[%s3 + $0x230] sm:$0xff] %v9620
    %10133 = vst [vmem:[%s3 + $0x238] sm:$0xff] %v9621
    %10134 = vst [vmem:[%s3 + $0x240] sm:$0xff] %v9622
    %10135 = vst [vmem:[%s3 + $0x248] sm:$0xff] %v9623
    %10136 = vst [vmem:[%s3 + $0x250] sm:$0xff] %v9624
    %10137 = vst [vmem:[%s3 + $0x258] sm:$0xff] %v9625
    %10138 = vst [vmem:[%s3 + $0x260] sm:$0xff] %v9626
    %10139 = vst [vmem:[%s3 + $0x268] sm:$0xff] %v9627
    %10140 = vst [vmem:[%s3 + $0x270] sm:$0xff] %v9628
    %10141 = vst [vmem:[%s3 + $0x278] sm:$0xff] %v9629
    %10142 = vst [vmem:[%s3 + $0x280] sm:$0xff] %v9630
    %10143 = vst [vmem:[%s3 + $0x288] sm:$0xff] %v9631
    %10144 = vst [vmem:[%s3 + $0x290] sm:$0xff] %v9632
    %10145 = vst [vmem:[%s3 + $0x298] sm:$0xff] %v9633
    %10146 = vst [vmem:[%s3 + $0x2a0] sm:$0xff] %v9634
    %10147 = vst [vmem:[%s3 + $0x2a8] sm:$0xff] %v9635
    %10148 = vst [vmem:[%s3 + $0x2b0] sm:$0xff] %v9636
    %10149 = vst [vmem:[%s3 + $0x2b8] sm:$0xff] %v9637
    %10150 = vst [vmem:[%s3 + $0x2c0] sm:$0xff] %v9638
    %10151 = vst [vmem:[%s3 + $0x2c8] sm:$0xff] %v9639
    %10152 = vst [vmem:[%s3 + $0x2d0] sm:$0xff] %v9640
    %10153 = vst [vmem:[%s3 + $0x2d8] sm:$0xff] %v9641
    %10154 = vst [vmem:[%s3 + $0x2e0] sm:$0xff] %v9642
    %10155 = vst [vmem:[%s3 + $0x2e8] sm:$0xff] %v9643
    %10156 = vst [vmem:[%s3 + $0x2f0] sm:$0xff] %v9644
    %10157 = vst [vmem:[%s3 + $0x2f8] sm:$0xff] %v9645
    %10158 = vst [vmem:[%s3 + $0x300] sm:$0xff] %v9646
    %10159 = vst [vmem:[%s3 + $0x308] sm:$0xff] %v9647
    %10160 = vst [vmem:[%s3 + $0x310] sm:$0xff] %v9648
    %10161 = vst [vmem:[%s3 + $0x318] sm:$0xff] %v9649
    %10162 = vst [vmem:[%s3 + $0x320] sm:$0xff] %v9650
    %10163 = vst [vmem:[%s3 + $0x328] sm:$0xff] %v9651
    %10164 = vst [vmem:[%s3 + $0x330] sm:$0xff] %v9652
    %10165 = vst [vmem:[%s3 + $0x338] sm:$0xff] %v9653
    %10166 = vst [vmem:[%s3 + $0x340] sm:$0xff] %v9654
    %10167 = vst [vmem:[%s3 + $0x348] sm:$0xff] %v9655
    %10168 = vst [vmem:[%s3 + $0x350] sm:$0xff] %v9656
    %10169 = vst [vmem:[%s3 + $0x358] sm:$0xff] %v9657
    %10170 = vst [vmem:[%s3 + $0x360] sm:$0xff] %v9658
    %10171 = vst [vmem:[%s3 + $0x368] sm:$0xff] %v9659
    %10172 = vst [vmem:[%s3 + $0x370] sm:$0xff] %v9660
    %10173 = vst [vmem:[%s3 + $0x378] sm:$0xff] %v9661
    %10174 = vst [vmem:[%s3 + $0x380] sm:$0xff] %v9662
    %10175 = vst [vmem:[%s3 + $0x388] sm:$0xff] %v9663
    %10176 = vst [vmem:[%s3 + $0x390] sm:$0xff] %v9664
    %10177 = vst [vmem:[%s3 + $0x398] sm:$0xff] %v9665
    %10178 = vst [vmem:[%s3 + $0x3a0] sm:$0xff] %v9666
    %10179 = vst [vmem:[%s3 + $0x3a8] sm:$0xff] %v9667
    %10180 = vst [vmem:[%s3 + $0x3b0] sm:$0xff] %v9668
    %10181 = vst [vmem:[%s3 + $0x3b8] sm:$0xff] %v9669
    %10182 = vst [vmem:[%s3 + $0x3c0] sm:$0xff] %v9670
    %10183 = vst [vmem:[%s3 + $0x3c8] sm:$0xff] %v9671
    %10184 = vst [vmem:[%s3 + $0x3d0] sm:$0xff] %v9672
    %10185 = vst [vmem:[%s3 + $0x3d8] sm:$0xff] %v9673
    %10186 = vst [vmem:[%s3 + $0x3e0] sm:$0xff] %v9674
    %10187 = vst [vmem:[%s3 + $0x3e8] sm:$0xff] %v9675
    %10188 = vst [vmem:[%s3 + $0x3f0] sm:$0xff] %v9676
    %10189 = vst [vmem:[%s3 + $0x3f8] sm:$0xff] %v9677
    %10190 = vst [vmem:[%s3 + $0x400] sm:$0xff] %v9678
    %10191 = vst [vmem:[%s3 + $0x408] sm:$0xff] %v9679
    %10192 = vst [vmem:[%s3 + $0x410] sm:$0xff] %v9680
    %10193 = vst [vmem:[%s3 + $0x418] sm:$0xff] %v9681
    %10194 = vst [vmem:[%s3 + $0x420] sm:$0xff] %v9682
    %10195 = vst [vmem:[%s3 + $0x428] sm:$0xff] %v9683
    %10196 = vst [vmem:[%s3 + $0x430] sm:$0xff] %v9684
    %10197 = vst [vmem:[%s3 + $0x438] sm:$0xff] %v9685
    %10198 = vst [vmem:[%s3 + $0x440] sm:$0xff] %v9686
    %10199 = vst [vmem:[%s3 + $0x448] sm:$0xff] %v9687
    %10200 = vst [vmem:[%s3 + $0x450] sm:$0xff] %v9688
    %10201 = vst [vmem:[%s3 + $0x458] sm:$0xff] %v9689
    %10202 = vst [vmem:[%s3 + $0x460] sm:$0xff] %v9690
    %10203 = vst [vmem:[%s3 + $0x468] sm:$0xff] %v9691
    %10204 = vst [vmem:[%s3 + $0x470] sm:$0xff] %v9692
    %10205 = vst [vmem:[%s3 + $0x478] sm:$0xff] %v9693
    %10206 = vst [vmem:[%s3 + $0x480] sm:$0xff] %v9694
    %10207 = vst [vmem:[%s3 + $0x488] sm:$0xff] %v9695
    %10208 = vst [vmem:[%s3 + $0x490] sm:$0xff] %v9696
    %10209 = vst [vmem:[%s3 + $0x498] sm:$0xff] %v9697
    %10210 = vst [vmem:[%s3 + $0x4a0] sm:$0xff] %v9698
    %10211 = vst [vmem:[%s3 + $0x4a8] sm:$0xff] %v9699
    %10212 = vst [vmem:[%s3 + $0x4b0] sm:$0xff] %v9700
    %10213 = vst [vmem:[%s3 + $0x4b8] sm:$0xff] %v9701
    %10214 = vst [vmem:[%s3 + $0x4c0] sm:$0xff] %v9702
    %10215 = vst [vmem:[%s3 + $0x4c8] sm:$0xff] %v9703
    %10216 = vst [vmem:[%s3 + $0x4d0] sm:$0xff] %v9704
    %10217 = vst [vmem:[%s3 + $0x4d8] sm:$0xff] %v9705
    %10218 = vst [vmem:[%s3 + $0x4e0] sm:$0xff] %v9706
    %10219 = vst [vmem:[%s3 + $0x4e8] sm:$0xff] %v9707
    %10220 = vst [vmem:[%s3 + $0x4f0] sm:$0xff] %v9708
    %10221 = vst [vmem:[%s3 + $0x4f8] sm:$0xff] %v9709
    %10222 = vst [vmem:[%s3 + $0x500] sm:$0xff] %v9710
    %10223 = vst [vmem:[%s3 + $0x508] sm:$0xff] %v9711
    %10224 = vst [vmem:[%s3 + $0x510] sm:$0xff] %v9712
    %10225 = vst [vmem:[%s3 + $0x518] sm:$0xff] %v9713
    %10226 = vst [vmem:[%s3 + $0x520] sm:$0xff] %v9714
    %10227 = vst [vmem:[%s3 + $0x528] sm:$0xff] %v9715
    %10228 = vst [vmem:[%s3 + $0x530] sm:$0xff] %v9716
    %10229 = vst [vmem:[%s3 + $0x538] sm:$0xff] %v9717
    %10230 = vst [vmem:[%s3 + $0x540] sm:$0xff] %v9718
    %10231 = vst [vmem:[%s3 + $0x548] sm:$0xff] %v9719
    %10232 = vst [vmem:[%s3 + $0x550] sm:$0xff] %v9720
    %10233 = vst [vmem:[%s3 + $0x558] sm:$0xff] %v9721
    %10234 = vst [vmem:[%s3 + $0x560] sm:$0xff] %v9722
    %10235 = vst [vmem:[%s3 + $0x568] sm:$0xff] %v9723
    %10236 = vst [vmem:[%s3 + $0x570] sm:$0xff] %v9724
    %10237 = vst [vmem:[%s3 + $0x578] sm:$0xff] %v9725
    %10238 = vst [vmem:[%s3 + $0x580] sm:$0xff] %v9726
    %10239 = vst [vmem:[%s3 + $0x588] sm:$0xff] %v9727
    %10240 = vst [vmem:[%s3 + $0x590] sm:$0xff] %v9728
    %10241 = vst [vmem:[%s3 + $0x598] sm:$0xff] %v9729
    %10242 = vst [vmem:[%s3 + $0x5a0] sm:$0xff] %v9730
    %10243 = vst [vmem:[%s3 + $0x5a8] sm:$0xff] %v9731
    %10244 = vst [vmem:[%s3 + $0x5b0] sm:$0xff] %v9732
    %10245 = vst [vmem:[%s3 + $0x5b8] sm:$0xff] %v9733
    %10246 = vst [vmem:[%s3 + $0x5c0] sm:$0xff] %v9734
    %10247 = vst [vmem:[%s3 + $0x5c8] sm:$0xff] %v9735
    %10248 = vst [vmem:[%s3 + $0x5d0] sm:$0xff] %v9736
    %10249 = vst [vmem:[%s3 + $0x5d8] sm:$0xff] %v9737
    %10250 = vst [vmem:[%s3 + $0x5e0] sm:$0xff] %v9738
    %10251 = vst [vmem:[%s3 + $0x5e8] sm:$0xff] %v9739
    %10252 = vst [vmem:[%s3 + $0x5f0] sm:$0xff] %v9740
    %10253 = vst [vmem:[%s3 + $0x5f8] sm:$0xff] %v9741
    %10254 = vst [vmem:[%s3 + $0x600] sm:$0xff] %v9742
    %10255 = vst [vmem:[%s3 + $0x608] sm:$0xff] %v9743
    %10256 = vst [vmem:[%s3 + $0x610] sm:$0xff] %v9744
    %10257 = vst [vmem:[%s3 + $0x618] sm:$0xff] %v9745
    %10258 = vst [vmem:[%s3 + $0x620] sm:$0xff] %v9746
    %10259 = vst [vmem:[%s3 + $0x628] sm:$0xff] %v9747
    %10260 = vst [vmem:[%s3 + $0x630] sm:$0xff] %v9748
    %10261 = vst [vmem:[%s3 + $0x638] sm:$0xff] %v9749
    %10262 = vst [vmem:[%s3 + $0x640] sm:$0xff] %v9750
    %10263 = vst [vmem:[%s3 + $0x648] sm:$0xff] %v9751
    %10264 = vst [vmem:[%s3 + $0x650] sm:$0xff] %v9752
    %10265 = vst [vmem:[%s3 + $0x658] sm:$0xff] %v9753
    %10266 = vst [vmem:[%s3 + $0x660] sm:$0xff] %v9754
    %10267 = vst [vmem:[%s3 + $0x668] sm:$0xff] %v9755
    %10268 = vst [vmem:[%s3 + $0x670] sm:$0xff] %v9756
    %10269 = vst [vmem:[%s3 + $0x678] sm:$0xff] %v9757
    %10270 = vst [vmem:[%s3 + $0x680] sm:$0xff] %v9758
    %10271 = vst [vmem:[%s3 + $0x688] sm:$0xff] %v9759
    %10272 = vst [vmem:[%s3 + $0x690] sm:$0xff] %v9760
    %10273 = vst [vmem:[%s3 + $0x698] sm:$0xff] %v9761
    %10274 = vst [vmem:[%s3 + $0x6a0] sm:$0xff] %v9762
    %10275 = vst [vmem:[%s3 + $0x6a8] sm:$0xff] %v9763
    %10276 = vst [vmem:[%s3 + $0x6b0] sm:$0xff] %v9764
    %10277 = vst [vmem:[%s3 + $0x6b8] sm:$0xff] %v9765
    %10278 = vst [vmem:[%s3 + $0x6c0] sm:$0xff] %v9766
    %10279 = vst [vmem:[%s3 + $0x6c8] sm:$0xff] %v9767
    %10280 = vst [vmem:[%s3 + $0x6d0] sm:$0xff] %v9768
    %10281 = vst [vmem:[%s3 + $0x6d8] sm:$0xff] %v9769
    %10282 = vst [vmem:[%s3 + $0x6e0] sm:$0xff] %v9770
    %10283 = vst [vmem:[%s3 + $0x6e8] sm:$0xff] %v9771
    %10284 = vst [vmem:[%s3 + $0x6f0] sm:$0xff] %v9772
    %10285 = vst [vmem:[%s3 + $0x6f8] sm:$0xff] %v9773
    %10286 = vst [vmem:[%s3 + $0x700] sm:$0xff] %v9774
    %10287 = vst [vmem:[%s3 + $0x708] sm:$0xff] %v9775
    %10288 = vst [vmem:[%s3 + $0x710] sm:$0xff] %v9776
    %10289 = vst [vmem:[%s3 + $0x718] sm:$0xff] %v9777
    %10290 = vst [vmem:[%s3 + $0x720] sm:$0xff] %v9778
    %10291 = vst [vmem:[%s3 + $0x728] sm:$0xff] %v9779
    %10292 = vst [vmem:[%s3 + $0x730] sm:$0xff] %v9780
    %10293 = vst [vmem:[%s3 + $0x738] sm:$0xff] %v9781
    %10294 = vst [vmem:[%s3 + $0x740] sm:$0xff] %v9782
    %10295 = vst [vmem:[%s3 + $0x748] sm:$0xff] %v9783
    %10296 = vst [vmem:[%s3 + $0x750] sm:$0xff] %v9784
    %10297 = vst [vmem:[%s3 + $0x758] sm:$0xff] %v9785
    %10298 = vst [vmem:[%s3 + $0x760] sm:$0xff] %v9786
    %10299 = vst [vmem:[%s3 + $0x768] sm:$0xff] %v9787
    %10300 = vst [vmem:[%s3 + $0x770] sm:$0xff] %v9788
    %10301 = vst [vmem:[%s3 + $0x778] sm:$0xff] %v9789
    %10302 = vst [vmem:[%s3 + $0x780] sm:$0xff] %v9790
    %10303 = vst [vmem:[%s3 + $0x788] sm:$0xff] %v9791
    %10304 = vst [vmem:[%s3 + $0x790] sm:$0xff] %v9792
    %10305 = vst [vmem:[%s3 + $0x798] sm:$0xff] %v9793
    %10306 = vst [vmem:[%s3 + $0x7a0] sm:$0xff] %v9794
    %10307 = vst [vmem:[%s3 + $0x7a8] sm:$0xff] %v9795
    %10308 = vst [vmem:[%s3 + $0x7b0] sm:$0xff] %v9796
    %10309 = vst [vmem:[%s3 + $0x7b8] sm:$0xff] %v9797
    %10310 = vst [vmem:[%s3 + $0x7c0] sm:$0xff] %v9798
    %10311 = vst [vmem:[%s3 + $0x7c8] sm:$0xff] %v9799
    %10312 = vst [vmem:[%s3 + $0x7d0] sm:$0xff] %v9800
    %10313 = vst [vmem:[%s3 + $0x7d8] sm:$0xff] %v9801
    %10314 = vst [vmem:[%s3 + $0x7e0] sm:$0xff] %v9802
    %10315 = vst [vmem:[%s3 + $0x7e8] sm:$0xff] %v9803
    %10316 = vst [vmem:[%s3 + $0x7f0] sm:$0xff] %v9804
    %10317 = vst [vmem:[%s3 + $0x7f8] sm:$0xff] %v9805
    %10318 = vst [vmem:[%s3 + $0x800] sm:$0xff] %v9806
    %10319 = vst [vmem:[%s3 + $0x808] sm:$0xff] %v9807
    %10320 = vst [vmem:[%s3 + $0x810] sm:$0xff] %v9808
    %10321 = vst [vmem:[%s3 + $0x818] sm:$0xff] %v9809
    %10322 = vst [vmem:[%s3 + $0x820] sm:$0xff] %v9810
    %10323 = vst [vmem:[%s3 + $0x828] sm:$0xff] %v9811
    %10324 = vst [vmem:[%s3 + $0x830] sm:$0xff] %v9812
    %10325 = vst [vmem:[%s3 + $0x838] sm:$0xff] %v9813
    %10326 = vst [vmem:[%s3 + $0x840] sm:$0xff] %v9814
    %10327 = vst [vmem:[%s3 + $0x848] sm:$0xff] %v9815
    %10328 = vst [vmem:[%s3 + $0x850] sm:$0xff] %v9816
    %10329 = vst [vmem:[%s3 + $0x858] sm:$0xff] %v9817
    %10330 = vst [vmem:[%s3 + $0x860] sm:$0xff] %v9818
    %10331 = vst [vmem:[%s3 + $0x868] sm:$0xff] %v9819
    %10332 = vst [vmem:[%s3 + $0x870] sm:$0xff] %v9820
    %10333 = vst [vmem:[%s3 + $0x878] sm:$0xff] %v9821
    %10334 = vst [vmem:[%s3 + $0x880] sm:$0xff] %v9822
    %10335 = vst [vmem:[%s3 + $0x888] sm:$0xff] %v9823
    %10336 = vst [vmem:[%s3 + $0x890] sm:$0xff] %v9824
    %10337 = vst [vmem:[%s3 + $0x898] sm:$0xff] %v9825
    %10338 = vst [vmem:[%s3 + $0x8a0] sm:$0xff] %v9826
    %10339 = vst [vmem:[%s3 + $0x8a8] sm:$0xff] %v9827
    %10340 = vst [vmem:[%s3 + $0x8b0] sm:$0xff] %v9828
    %10341 = vst [vmem:[%s3 + $0x8b8] sm:$0xff] %v9829
    %10342 = vst [vmem:[%s3 + $0x8c0] sm:$0xff] %v9830
    %10343 = vst [vmem:[%s3 + $0x8c8] sm:$0xff] %v9831
    %10344 = vst [vmem:[%s3 + $0x8d0] sm:$0xff] %v9832
    %10345 = vst [vmem:[%s3 + $0x8d8] sm:$0xff] %v9833
    %10346 = vst [vmem:[%s3 + $0x8e0] sm:$0xff] %v9834
    %10347 = vst [vmem:[%s3 + $0x8e8] sm:$0xff] %v9835
    %10348 = vst [vmem:[%s3 + $0x8f0] sm:$0xff] %v9836
    %10349 = vst [vmem:[%s3 + $0x8f8] sm:$0xff] %v9837
    %10350 = vst [vmem:[%s3 + $0x900] sm:$0xff] %v9838
    %10351 = vst [vmem:[%s3 + $0x908] sm:$0xff] %v9839
    %10352 = vst [vmem:[%s3 + $0x910] sm:$0xff] %v9840
    %10353 = vst [vmem:[%s3 + $0x918] sm:$0xff] %v9841
    %10354 = vst [vmem:[%s3 + $0x920] sm:$0xff] %v9842
    %10355 = vst [vmem:[%s3 + $0x928] sm:$0xff] %v9843
    %10356 = vst [vmem:[%s3 + $0x930] sm:$0xff] %v9844
    %10357 = vst [vmem:[%s3 + $0x938] sm:$0xff] %v9845
    %10358 = vst [vmem:[%s3 + $0x940] sm:$0xff] %v9846
    %10359 = vst [vmem:[%s3 + $0x948] sm:$0xff] %v9847
    %10360 = vst [vmem:[%s3 + $0x950] sm:$0xff] %v9848
    %10361 = vst [vmem:[%s3 + $0x958] sm:$0xff] %v9849
    %10362 = vst [vmem:[%s3 + $0x960] sm:$0xff] %v9850
    %10363 = vst [vmem:[%s3 + $0x968] sm:$0xff] %v9851
    %10364 = vst [vmem:[%s3 + $0x970] sm:$0xff] %v9852
    %10365 = vst [vmem:[%s3 + $0x978] sm:$0xff] %v9853
    %10366 = vst [vmem:[%s3 + $0x980] sm:$0xff] %v9854
    %10367 = vst [vmem:[%s3 + $0x988] sm:$0xff] %v9855
    %10368 = vst [vmem:[%s3 + $0x990] sm:$0xff] %v9856
    %10369 = vst [vmem:[%s3 + $0x998] sm:$0xff] %v9857
    %10370 = vst [vmem:[%s3 + $0x9a0] sm:$0xff] %v9858
    %10371 = vst [vmem:[%s3 + $0x9a8] sm:$0xff] %v9859
    %10372 = vst [vmem:[%s3 + $0x9b0] sm:$0xff] %v9860
    %10373 = vst [vmem:[%s3 + $0x9b8] sm:$0xff] %v9861
    %10374 = vst [vmem:[%s3 + $0x9c0] sm:$0xff] %v9862
    %10375 = vst [vmem:[%s3 + $0x9c8] sm:$0xff] %v9863
    %10376 = vst [vmem:[%s3 + $0x9d0] sm:$0xff] %v9864
    %10377 = vst [vmem:[%s3 + $0x9d8] sm:$0xff] %v9865
    %10378 = vst [vmem:[%s3 + $0x9e0] sm:$0xff] %v9866
    %10379 = vst [vmem:[%s3 + $0x9e8] sm:$0xff] %v9867
    %10380 = vst [vmem:[%s3 + $0x9f0] sm:$0xff] %v9868
    %10381 = vst [vmem:[%s3 + $0x9f8] sm:$0xff] %v9869
    %10382 = vst [vmem:[%s3 + $0xa00] sm:$0xff] %v9870
    %10383 = vst [vmem:[%s3 + $0xa08] sm:$0xff] %v9871
    %10384 = vst [vmem:[%s3 + $0xa10] sm:$0xff] %v9872
    %10385 = vst [vmem:[%s3 + $0xa18] sm:$0xff] %v9873
    %10386 = vst [vmem:[%s3 + $0xa20] sm:$0xff] %v9874
    %10387 = vst [vmem:[%s3 + $0xa28] sm:$0xff] %v9875
    %10388 = vst [vmem:[%s3 + $0xa30] sm:$0xff] %v9876
    %10389 = vst [vmem:[%s3 + $0xa38] sm:$0xff] %v9877
    %10390 = vst [vmem:[%s3 + $0xa40] sm:$0xff] %v9878
    %10391 = vst [vmem:[%s3 + $0xa48] sm:$0xff] %v9879
    %10392 = vst [vmem:[%s3 + $0xa50] sm:$0xff] %v9880
    %10393 = vst [vmem:[%s3 + $0xa58] sm:$0xff] %v9881
    %10394 = vst [vmem:[%s3 + $0xa60] sm:$0xff] %v9882
    %10395 = vst [vmem:[%s3 + $0xa68] sm:$0xff] %v9883
    %10396 = vst [vmem:[%s3 + $0xa70] sm:$0xff] %v9884
    %10397 = vst [vmem:[%s3 + $0xa78] sm:$0xff] %v9885
    %10398 = vst [vmem:[%s3 + $0xa80] sm:$0xff] %v9886
    %10399 = vst [vmem:[%s3 + $0xa88] sm:$0xff] %v9887
    %10400 = vst [vmem:[%s3 + $0xa90] sm:$0xff] %v9888
    %10401 = vst [vmem:[%s3 + $0xa98] sm:$0xff] %v9889
    %10402 = vst [vmem:[%s3 + $0xaa0] sm:$0xff] %v9890
    %10403 = vst [vmem:[%s3 + $0xaa8] sm:$0xff] %v9891
    %10404 = vst [vmem:[%s3 + $0xab0] sm:$0xff] %v9892
    %10405 = vst [vmem:[%s3 + $0xab8] sm:$0xff] %v9893
    %10406 = vst [vmem:[%s3 + $0xac0] sm:$0xff] %v9894
    %10407 = vst [vmem:[%s3 + $0xac8] sm:$0xff] %v9895
    %10408 = vst [vmem:[%s3 + $0xad0] sm:$0xff] %v9896
    %10409 = vst [vmem:[%s3 + $0xad8] sm:$0xff] %v9897
    %10410 = vst [vmem:[%s3 + $0xae0] sm:$0xff] %v9898
    %10411 = vst [vmem:[%s3 + $0xae8] sm:$0xff] %v9899
    %10412 = vst [vmem:[%s3 + $0xaf0] sm:$0xff] %v9900
    %10413 = vst [vmem:[%s3 + $0xaf8] sm:$0xff] %v9901
    %10414 = vst [vmem:[%s3 + $0xb00] sm:$0xff] %v9902
    %10415 = vst [vmem:[%s3 + $0xb08] sm:$0xff] %v9903
    %10416 = vst [vmem:[%s3 + $0xb10] sm:$0xff] %v9904
    %10417 = vst [vmem:[%s3 + $0xb18] sm:$0xff] %v9905
    %10418 = vst [vmem:[%s3 + $0xb20] sm:$0xff] %v9906
    %10419 = vst [vmem:[%s3 + $0xb28] sm:$0xff] %v9907
    %10420 = vst [vmem:[%s3 + $0xb30] sm:$0xff] %v9908
    %10421 = vst [vmem:[%s3 + $0xb38] sm:$0xff] %v9909
    %10422 = vst [vmem:[%s3 + $0xb40] sm:$0xff] %v9910
    %10423 = vst [vmem:[%s3 + $0xb48] sm:$0xff] %v9911
    %10424 = vst [vmem:[%s3 + $0xb50] sm:$0xff] %v9912
    %10425 = vst [vmem:[%s3 + $0xb58] sm:$0xff] %v9913
    %10426 = vst [vmem:[%s3 + $0xb60] sm:$0xff] %v9914
    %10427 = vst [vmem:[%s3 + $0xb68] sm:$0xff] %v9915
    %10428 = vst [vmem:[%s3 + $0xb70] sm:$0xff] %v9916
    %10429 = vst [vmem:[%s3 + $0xb78] sm:$0xff] %v9917
    %10430 = vst [vmem:[%s3 + $0xb80] sm:$0xff] %v9918
    %10431 = vst [vmem:[%s3 + $0xb88] sm:$0xff] %v9919
    %10432 = vst [vmem:[%s3 + $0xb90] sm:$0xff] %v9920
    %10433 = vst [vmem:[%s3 + $0xb98] sm:$0xff] %v9921
    %10434 = vst [vmem:[%s3 + $0xba0] sm:$0xff] %v9922
    %10435 = vst [vmem:[%s3 + $0xba8] sm:$0xff] %v9923
    %10436 = vst [vmem:[%s3 + $0xbb0] sm:$0xff] %v9924
    %10437 = vst [vmem:[%s3 + $0xbb8] sm:$0xff] %v9925
    %10438 = vst [vmem:[%s3 + $0xbc0] sm:$0xff] %v9926
    %10439 = vst [vmem:[%s3 + $0xbc8] sm:$0xff] %v9927
    %10440 = vst [vmem:[%s3 + $0xbd0] sm:$0xff] %v9928
    %10441 = vst [vmem:[%s3 + $0xbd8] sm:$0xff] %v9929
    %10442 = vst [vmem:[%s3 + $0xbe0] sm:$0xff] %v9930
    %10443 = vst [vmem:[%s3 + $0xbe8] sm:$0xff] %v9931
    %10444 = vst [vmem:[%s3 + $0xbf0] sm:$0xff] %v9932
    %10445 = vst [vmem:[%s3 + $0xbf8] sm:$0xff] %v9933
    %10446 = vst [vmem:[%s3 + $0xc00] sm:$0xff] %v9934
    %10447 = vst [vmem:[%s3 + $0xc08] sm:$0xff] %v9935
    %10448 = vst [vmem:[%s3 + $0xc10] sm:$0xff] %v9936
    %10449 = vst [vmem:[%s3 + $0xc18] sm:$0xff] %v9937
    %10450 = vst [vmem:[%s3 + $0xc20] sm:$0xff] %v9938
    %10451 = vst [vmem:[%s3 + $0xc28] sm:$0xff] %v9939
    %10452 = vst [vmem:[%s3 + $0xc30] sm:$0xff] %v9940
    %10453 = vst [vmem:[%s3 + $0xc38] sm:$0xff] %v9941
    %10454 = vst [vmem:[%s3 + $0xc40] sm:$0xff] %v9942
    %10455 = vst [vmem:[%s3 + $0xc48] sm:$0xff] %v9943
    %10456 = vst [vmem:[%s3 + $0xc50] sm:$0xff] %v9944
    %10457 = vst [vmem:[%s3 + $0xc58] sm:$0xff] %v9945
    %10458 = vst [vmem:[%s3 + $0xc60] sm:$0xff] %v9946
    %10459 = vst [vmem:[%s3 + $0xc68] sm:$0xff] %v9947
    %10460 = vst [vmem:[%s3 + $0xc70] sm:$0xff] %v9948
    %10461 = vst [vmem:[%s3 + $0xc78] sm:$0xff] %v9949
    %10462 = vst [vmem:[%s3 + $0xc80] sm:$0xff] %v9950
    %10463 = vst [vmem:[%s3 + $0xc88] sm:$0xff] %v9951
    %10464 = vst [vmem:[%s3 + $0xc90] sm:$0xff] %v9952
    %10465 = vst [vmem:[%s3 + $0xc98] sm:$0xff] %v9953
    %10466 = vst [vmem:[%s3 + $0xca0] sm:$0xff] %v9954
    %10467 = vst [vmem:[%s3 + $0xca8] sm:$0xff] %v9955
    %10468 = vst [vmem:[%s3 + $0xcb0] sm:$0xff] %v9956
    %10469 = vst [vmem:[%s3 + $0xcb8] sm:$0xff] %v9957
    %10470 = vst [vmem:[%s3 + $0xcc0] sm:$0xff] %v9958
    %10471 = vst [vmem:[%s3 + $0xcc8] sm:$0xff] %v9959
    %10472 = vst [vmem:[%s3 + $0xcd0] sm:$0xff] %v9960
    %10473 = vst [vmem:[%s3 + $0xcd8] sm:$0xff] %v9961
    %10474 = vst [vmem:[%s3 + $0xce0] sm:$0xff] %v9962
    %10475 = vst [vmem:[%s3 + $0xce8] sm:$0xff] %v9963
    %10476 = vst [vmem:[%s3 + $0xcf0] sm:$0xff] %v9964
    %10477 = vst [vmem:[%s3 + $0xcf8] sm:$0xff] %v9965
    %10478 = vst [vmem:[%s3 + $0xd00] sm:$0xff] %v9966
    %10479 = vst [vmem:[%s3 + $0xd08] sm:$0xff] %v9967
    %10480 = vst [vmem:[%s3 + $0xd10] sm:$0xff] %v9968
    %10481 = vst [vmem:[%s3 + $0xd18] sm:$0xff] %v9969
    %10482 = vst [vmem:[%s3 + $0xd20] sm:$0xff] %v9970
    %10483 = vst [vmem:[%s3 + $0xd28] sm:$0xff] %v9971
    %10484 = vst [vmem:[%s3 + $0xd30] sm:$0xff] %v9972
    %10485 = vst [vmem:[%s3 + $0xd38] sm:$0xff] %v9973
    %10486 = vst [vmem:[%s3 + $0xd40] sm:$0xff] %v9974
    %10487 = vst [vmem:[%s3 + $0xd48] sm:$0xff] %v9975
    %10488 = vst [vmem:[%s3 + $0xd50] sm:$0xff] %v9976
    %10489 = vst [vmem:[%s3 + $0xd58] sm:$0xff] %v9977
    %10490 = vst [vmem:[%s3 + $0xd60] sm:$0xff] %v9978
    %10491 = vst [vmem:[%s3 + $0xd68] sm:$0xff] %v9979
    %10492 = vst [vmem:[%s3 + $0xd70] sm:$0xff] %v9980
    %10493 = vst [vmem:[%s3 + $0xd78] sm:$0xff] %v9981
    %10494 = vst [vmem:[%s3 + $0xd80] sm:$0xff] %v9982
    %10495 = vst [vmem:[%s3 + $0xd88] sm:$0xff] %v9983
    %10496 = vst [vmem:[%s3 + $0xd90] sm:$0xff] %v9984
    %10497 = vst [vmem:[%s3 + $0xd98] sm:$0xff] %v9985
    %10498 = vst [vmem:[%s3 + $0xda0] sm:$0xff] %v9986
    %10499 = vst [vmem:[%s3 + $0xda8] sm:$0xff] %v9987
    %10500 = vst [vmem:[%s3 + $0xdb0] sm:$0xff] %v9988
    %10501 = vst [vmem:[%s3 + $0xdb8] sm:$0xff] %v9989
    %10502 = vst [vmem:[%s3 + $0xdc0] sm:$0xff] %v9990
    %10503 = vst [vmem:[%s3 + $0xdc8] sm:$0xff] %v9991
    %10504 = vst [vmem:[%s3 + $0xdd0] sm:$0xff] %v9992
    %10505 = vst [vmem:[%s3 + $0xdd8] sm:$0xff] %v9993
    %10506 = vst [vmem:[%s3 + $0xde0] sm:$0xff] %v9994
    %10507 = vst [vmem:[%s3 + $0xde8] sm:$0xff] %v9995
    %10508 = vst [vmem:[%s3 + $0xdf0] sm:$0xff] %v9996
    %10509 = vst [vmem:[%s3 + $0xdf8] sm:$0xff] %v9997
    %10510 = vst [vmem:[%s3 + $0xe00] sm:$0xff] %v9998
    %10511 = vst [vmem:[%s3 + $0xe08] sm:$0xff] %v9999
    %10512 = vst [vmem:[%s3 + $0xe10] sm:$0xff] %v10000
    %10513 = vst [vmem:[%s3 + $0xe18] sm:$0xff] %v10001
    %10514 = vst [vmem:[%s3 + $0xe20] sm:$0xff] %v10002
    %10515 = vst [vmem:[%s3 + $0xe28] sm:$0xff] %v10003
    %10516 = vst [vmem:[%s3 + $0xe30] sm:$0xff] %v10004
    %10517 = vst [vmem:[%s3 + $0xe38] sm:$0xff] %v10005
    %10518 = vst [vmem:[%s3 + $0xe40] sm:$0xff] %v10006
    %10519 = vst [vmem:[%s3 + $0xe48] sm:$0xff] %v10007
    %10520 = vst [vmem:[%s3 + $0xe50] sm:$0xff] %v10008
    %10521 = vst [vmem:[%s3 + $0xe58] sm:$0xff] %v10009
    %10522 = vst [vmem:[%s3 + $0xe60] sm:$0xff] %v10010
    %10523 = vst [vmem:[%s3 + $0xe68] sm:$0xff] %v10011
    %10524 = vst [vmem:[%s3 + $0xe70] sm:$0xff] %v10012
    %10525 = vst [vmem:[%s3 + $0xe78] sm:$0xff] %v10013
    %10526 = vst [vmem:[%s3 + $0xe80] sm:$0xff] %v10014
    %10527 = vst [vmem:[%s3 + $0xe88] sm:$0xff] %v10015
    %10528 = vst [vmem:[%s3 + $0xe90] sm:$0xff] %v10016
    %10529 = vst [vmem:[%s3 + $0xe98] sm:$0xff] %v10017
    %10530 = vst [vmem:[%s3 + $0xea0] sm:$0xff] %v10018
    %10531 = vst [vmem:[%s3 + $0xea8] sm:$0xff] %v10019
    %10532 = vst [vmem:[%s3 + $0xeb0] sm:$0xff] %v10020
    %10533 = vst [vmem:[%s3 + $0xeb8] sm:$0xff] %v10021
    %10534 = vst [vmem:[%s3 + $0xec0] sm:$0xff] %v10022
    %10535 = vst [vmem:[%s3 + $0xec8] sm:$0xff] %v10023
    %10536 = vst [vmem:[%s3 + $0xed0] sm:$0xff] %v10024
    %10537 = vst [vmem:[%s3 + $0xed8] sm:$0xff] %v10025
    %10538 = vst [vmem:[%s3 + $0xee0] sm:$0xff] %v10026
    %10539 = vst [vmem:[%s3 + $0xee8] sm:$0xff] %v10027
    %10540 = vst [vmem:[%s3 + $0xef0] sm:$0xff] %v10028
    %10541 = vst [vmem:[%s3 + $0xef8] sm:$0xff] %v10029
    %10542 = vst [vmem:[%s3 + $0xf00] sm:$0xff] %v10030
    %10543 = vst [vmem:[%s3 + $0xf08] sm:$0xff] %v10031
    %10544 = vst [vmem:[%s3 + $0xf10] sm:$0xff] %v10032
    %10545 = vst [vmem:[%s3 + $0xf18] sm:$0xff] %v10033
    %10546 = vst [vmem:[%s3 + $0xf20] sm:$0xff] %v10034
    %10547 = vst [vmem:[%s3 + $0xf28] sm:$0xff] %v10035
    %10548 = vst [vmem:[%s3 + $0xf30] sm:$0xff] %v10036
    %10549 = vst [vmem:[%s3 + $0xf38] sm:$0xff] %v10037
    %10550 = vst [vmem:[%s3 + $0xf40] sm:$0xff] %v10038
    %10551 = vst [vmem:[%s3 + $0xf48] sm:$0xff] %v10039
    %10552 = vst [vmem:[%s3 + $0xf50] sm:$0xff] %v10040
    %10553 = vst [vmem:[%s3 + $0xf58] sm:$0xff] %v10041
    %10554 = vst [vmem:[%s3 + $0xf60] sm:$0xff] %v10042
    %10555 = vst [vmem:[%s3 + $0xf68] sm:$0xff] %v10043
    %10556 = vst [vmem:[%s3 + $0xf70] sm:$0xff] %v10044
    %10557 = vst [vmem:[%s3 + $0xf78] sm:$0xff] %v10045
    %10558 = vst [vmem:[%s3 + $0xf80] sm:$0xff] %v10046
    %10559 = vst [vmem:[%s3 + $0xf88] sm:$0xff] %v10047
    %10560 = vst [vmem:[%s3 + $0xf90] sm:$0xff] %v10048
    %10561 = vst [vmem:[%s3 + $0xf98] sm:$0xff] %v10049
    %10562 = vst [vmem:[%s3 + $0xfa0] sm:$0xff] %v10050
    %10563 = vst [vmem:[%s3 + $0xfa8] sm:$0xff] %v10051
    %10564 = vst [vmem:[%s3 + $0xfb0] sm:$0xff] %v10052
    %10565 = vst [vmem:[%s3 + $0xfb8] sm:$0xff] %v10053
    %10566 = vst [vmem:[%s3 + $0xfc0] sm:$0xff] %v10054
    %10567 = vst [vmem:[%s3 + $0xfc8] sm:$0xff] %v10055
    %10568 = vst [vmem:[%s3 + $0xfd0] sm:$0xff] %v10056
    %10569 = vst [vmem:[%s3 + $0xfd8] sm:$0xff] %v10057
    %10570 = vst [vmem:[%s3 + $0xfe0] sm:$0xff] %v10058
    %10571 = vst [vmem:[%s3 + $0xfe8] sm:$0xff] %v10059
    %10572 = vst [vmem:[%s3 + $0xff0] sm:$0xff] %v10060
    %10573 = vst [vmem:[%s3 + $0xff8] sm:$0xff] %v10061
  $region21: #{_conv3d_nores.1} parent=0 // pred_fallthru
    _
  // Predicated region
  $region22: #{_conv3d_nores.1} parent=0 // pred_check
    _
  $region23: #{_conv3d_nores.1} parent=0 // pred_check_branch
    %10575 = sbr.rel (0) target = $region25
  $region24: #{_conv3d_nores.1} parent=0 // pred_region
    _
  $region25: #{_conv3d_nores.1} parent=0 // pred_fallthru
    _
  // Predicated region
  $region26: #{_conv3d_nores.1} parent=0 // pred_check
    _
  $region27: #{_conv3d_nores.1} parent=0 // pred_check_branch
    %10577 = sbr.rel (0) target = $region29
  $region28: #{_conv3d_nores.1} parent=0 // pred_region
    _
  $region29: #{_conv3d_nores.1} parent=0 // pred_fallthru
    _

</llo_original>
